<compile_context>
chip_gen: v7x
topology: tpu7x:2x2x1
jax: 0.10.0
libtpu: 0.0.40
codegen_flags: <defaults>
</compile_context>

<pallas_src>
import functools

import jax
import jax.numpy as jnp
from jax.experimental import pallas as pl
from jax.experimental.pallas import tpu as pltpu

_CPAD = 128  # pad Cin to the 128-lane width so im2col concat stays lane-aligned


def _conv_relu_pool(pad_ref, src, w_ref, b_ref):
    """One fused layer, fully in VMEM.

    pad_ref : (nb, h+2, w+2, 128) f32 VMEM scratch (zero border / zero extra lanes)
    src     : (nb, h, w, cin) f32 value, cin <= 128
    w_ref   : (9*128, cout) bf16  (taps-major, channel-minor; padded rows are 0)
    b_ref   : (1, cout) f32
    returns : (nb, h//2, w//2, cout) f32 pooled activation
    """
    nb, hp, wp, cpad = pad_ref.shape
    h, w = hp - 2, wp - 2
    cin = src.shape[-1]
    cout = w_ref.shape[1]

    # Zero every step (borders + unused channel lanes must be 0; re-zero each
    # grid step so megacore-sharded grids never see stale scratch), then write
    # the activation into the interior.  Pure VMEM traffic, no HBM pad copy.
    pad_ref[...] = jnp.zeros_like(pad_ref)
    pad_ref[:, 1:h + 1, 1:w + 1, 0:cin] = src

    # im2col: 9 shifted views, each a lane-aligned (nb*h*w, 128) bf16 slab,
    # concatenated along K -> (nb*h*w, 1152).  One relayout, one matmul.
    cols = [
        pad_ref[:, dy:dy + h, dx:dx + w, :]
        .reshape(nb * h * w, cpad)
        .astype(jnp.bfloat16)
        for dy in range(3) for dx in range(3)
    ]
    patches = jnp.concatenate(cols, axis=-1)                 # (M, 9*128) bf16

    # Single MXU matmul with f32 accumulation; bias + ReLU on the VPU in f32.
    acc = jnp.dot(patches, w_ref[...], preferred_element_type=jnp.float32)
    acc = jnp.maximum(acc + b_ref[...], 0.0)                 # (M, cout) f32

    # 2x2 max pool, stride 2.
    y = acc.reshape(nb, h // 2, 2, w // 2, 2, cout)
    y = jnp.max(y, axis=4)
    return jnp.max(y, axis=2)                                # (nb, h/2, w/2, cout)


def _backbone_kernel(x_ref, w1_ref, b1_ref, w2_ref, b2_ref, w3_ref, b3_ref,
                     o_ref, pad1_ref, pad2_ref, pad3_ref):
    y = _conv_relu_pool(pad1_ref, x_ref[...], w1_ref, b1_ref)   # (nb, H/2, W/2,  64)
    y = _conv_relu_pool(pad2_ref, y, w2_ref, b2_ref)            # (nb, H/4, W/4, 128)
    y = _conv_relu_pool(pad3_ref, y, w3_ref, b3_ref)            # (nb, H/8, W/8, 256)
    o_ref[...] = y.astype(o_ref.dtype)


def _prep_weight(w_hwio):
    """(3,3,Cin,Cout) f32 -> (9*128, Cout) bf16 with zero rows for padded channels."""
    kh, kw, cin, cout = w_hwio.shape
    w = jnp.pad(w_hwio, ((0, 0), (0, 0), (0, _CPAD - cin), (0, 0)))
    return w.reshape(kh * kw * _CPAD, cout).astype(jnp.bfloat16)


@functools.partial(jax.jit, static_argnames=("block_n",))
def backbone_forward(x_nchw, params, block_n=1):
    N, C, H, W = x_nchw.shape
    c1 = params["w1"].shape[-1]
    c2 = params["w2"].shape[-1]
    c3 = params["w3"].shape[-1]
    assert C == params["w1"].shape[2], "input channels must match conv1"
    # Three 2x2 pools -> spatial dims must be divisible by 8 (fail loudly).
    assert H % 8 == 0 and W % 8 == 0, "H and W must be divisible by 8"
    assert N % block_n == 0, "batch must be divisible by block_n"

    x = jnp.transpose(x_nchw, (0, 2, 3, 1))                  # NCHW -> NHWC
    w1, w2, w3 = (_prep_weight(params["w1"]), _prep_weight(params["w2"]),
                  _prep_weight(params["w3"]))
    b1 = params["b1"].reshape(1, c1).astype(jnp.float32)
    b2 = params["b2"].reshape(1, c2).astype(jnp.float32)
    b3 = params["b3"].reshape(1, c3).astype(jnp.float32)

    Ho, Wo = H // 8, W // 8
    out = pl.pallas_call(
        _backbone_kernel,
        out_shape=jax.ShapeDtypeStruct((N, Ho, Wo, c3), jnp.float32),
        grid=(N // block_n,),
        in_specs=[
            pl.BlockSpec((block_n, H, W, C), lambda n: (n, 0, 0, 0)),
            pl.BlockSpec((9 * _CPAD, c1), lambda n: (0, 0)),
            pl.BlockSpec((1, c1), lambda n: (0, 0)),
            pl.BlockSpec((9 * _CPAD, c2), lambda n: (0, 0)),
            pl.BlockSpec((1, c2), lambda n: (0, 0)),
            pl.BlockSpec((9 * _CPAD, c3), lambda n: (0, 0)),
            pl.BlockSpec((1, c3), lambda n: (0, 0)),
        ],
        out_specs=pl.BlockSpec((block_n, Ho, Wo, c3), lambda n: (n, 0, 0, 0)),
        scratch_shapes=[
            pltpu.VMEM((block_n, H + 2, W + 2, _CPAD), jnp.float32),
            pltpu.VMEM((block_n, H // 2 + 2, W // 2 + 2, _CPAD), jnp.float32),
            pltpu.VMEM((block_n, H // 4 + 2, W // 4 + 2, _CPAD), jnp.float32),
        ],
        compiler_params=pltpu.CompilerParams(
            dimension_semantics=("parallel",),      # shards batch across v7x TCs
            vmem_limit_bytes=32 * 1024 * 1024,      # ~4 MiB used; safe on v7x 64 MiB
        ),
    )(x, w1, b1, w2, b2, w3, b3)
    return jnp.transpose(out, (0, 3, 1, 2))                  # NHWC -> NCHW


def init_backbone_params(key):
    """Deterministic params mirroring nn.Conv2d default (uniform +-1/sqrt(fan_in))."""
    params = {}
    specs = [("1", 3, 64), ("2", 64, 128), ("3", 128, 256)]
    for name, cin, cout in specs:
        key, kw, kb = jax.random.split(key, 3)
        bound = 1.0 / jnp.sqrt(cin * 3.0 * 3.0)
        params["w" + name] = jax.random.uniform(
            kw, (3, 3, cin, cout), jnp.float32, -bound, bound)   # HWIO
        params["b" + name] = jax.random.uniform(
            kb, (cout,), jnp.float32, -bound, bound)
    return params


def backbone_reference(x_nchw, params, compute_dtype=jnp.float32):
    """Pure-JAX reference (lax conv + reduce_window).  compute_dtype lets us
    check against both full-f32 math and the kernel's bf16-operand math."""
    def layer(x, w, b):
        y = jax.lax.conv_general_dilated(
            x.astype(compute_dtype), w.astype(compute_dtype),
            window_strides=(1, 1), padding="SAME",
            dimension_numbers=("NHWC", "HWIO", "NHWC"),
            preferred_element_type=jnp.float32)
        y = jnp.maximum(y + b[None, None, None, :], 0.0)
        return jax.lax.reduce_window(
            y, -jnp.inf, jax.lax.max, (1, 2, 2, 1), (1, 2, 2, 1), "VALID")

    x = jnp.transpose(x_nchw, (0, 2, 3, 1))
    x = layer(x, params["w1"], params["b1"])
    x = layer(x, params["w2"], params["b2"])
    x = layer(x, params["w3"], params["b3"])
    return jnp.transpose(x, (0, 3, 1, 2))


if __name__ == "__main__":
    key = jax.random.PRNGKey(0)
    key, kx = jax.random.split(key)
    params = init_backbone_params(key)

    # Small NCHW input consistent with Conv2d(3, ...): (batch=2, C=3, H=W=16).
    x = jax.random.normal(kx, (2, 3, 16, 16), dtype=jnp.float32)

    out = jax.block_until_ready(backbone_forward(x, params))            # 1 image / step
    assert out.shape == (2, 256, 2, 2), out.shape

    out2 = jax.block_until_ready(backbone_forward(x, params, block_n=2))  # 2 images / step
    assert out2.shape == (2, 256, 2, 2), out2.shape

    ref_bf16 = jax.block_until_ready(backbone_reference(x, params, jnp.bfloat16))
    ref_f32 = jax.block_until_ready(backbone_reference(x, params, jnp.float32))

    assert jnp.allclose(out, ref_bf16, atol=2e-2, rtol=2e-2), (
        float(jnp.max(jnp.abs(out - ref_bf16))))
    assert jnp.allclose(out2, ref_bf16, atol=2e-2, rtol=2e-2), (
        float(jnp.max(jnp.abs(out2 - ref_bf16))))
    assert jnp.allclose(out, ref_f32, atol=5e-2, rtol=5e-2), (
        float(jnp.max(jnp.abs(out - ref_f32))))

    print("KERNEL_OK")
</pallas_src>

<mosaic_0001>
module attributes {stable_mosaic.version = 11 : i64} {
  func.func @_backbone_kernel(%arg0: i32, %arg1: memref<1x16x16x3xf32, #tpu.memory_space<vmem>>, %arg2: memref<1152x64xbf16, #tpu.memory_space<vmem>>, %arg3: memref<1x64xf32, #tpu.memory_space<vmem>>, %arg4: memref<1152x128xbf16, #tpu.memory_space<vmem>>, %arg5: memref<1x128xf32, #tpu.memory_space<vmem>>, %arg6: memref<1152x256xbf16, #tpu.memory_space<vmem>>, %arg7: memref<1x256xf32, #tpu.memory_space<vmem>>, %arg8: memref<1x2x2x256xf32, #tpu.memory_space<vmem>>, %arg9: memref<1x18x18x128xf32, #tpu.memory_space<vmem>>, %arg10: memref<1x10x10x128xf32, #tpu.memory_space<vmem>>, %arg11: memref<1x6x6x128xf32, #tpu.memory_space<vmem>>) attributes {dimension_semantics = [#tpu.dimension_semantics<parallel>], iteration_bounds = array<i64: 2>, scalar_prefetch = 0 : i64, scratch_operands = 3 : i64, tpu.core_type = #tpu.core_type<tc>, window_params = [{transform_indices = @transform_0, window_bounds = array<i64: 1, 16, 16, 3>}, {pipeline_mode = #tpu.pipeline_mode<synchronous>, transform_indices = @transform_1, window_bounds = array<i64: 1152, 64>}, {pipeline_mode = #tpu.pipeline_mode<synchronous>, transform_indices = @transform_2, window_bounds = array<i64: 1, 64>}, {pipeline_mode = #tpu.pipeline_mode<synchronous>, transform_indices = @transform_3, window_bounds = array<i64: 1152, 128>}, {pipeline_mode = #tpu.pipeline_mode<synchronous>, transform_indices = @transform_4, window_bounds = array<i64: 1, 128>}, {pipeline_mode = #tpu.pipeline_mode<synchronous>, transform_indices = @transform_5, window_bounds = array<i64: 1152, 256>}, {pipeline_mode = #tpu.pipeline_mode<synchronous>, transform_indices = @transform_6, window_bounds = array<i64: 1, 256>}, {transform_indices = @transform_7, window_bounds = array<i64: 1, 2, 2, 256>}]} {
    %c0 = arith.constant 0 : index
    %c0_0 = arith.constant 0 : index
    %c0_1 = arith.constant 0 : index
    %c0_2 = arith.constant 0 : index
    %0 = vector.load %arg1[%c0, %c0_0, %c0_1, %c0_2] : memref<1x16x16x3xf32, #tpu.memory_space<vmem>>, vector<1x16x16x3xf32>
    %cst = arith.constant 0.000000e+00 : f32
    %1 = vector.broadcast %cst : f32 to vector<1x18x18x128xf32>
    %c0_3 = arith.constant 0 : index
    %c0_4 = arith.constant 0 : index
    %c0_5 = arith.constant 0 : index
    %c0_6 = arith.constant 0 : index
    %2 = vector.load %arg9[%c0_3, %c0_4, %c0_5, %c0_6] : memref<1x18x18x128xf32, #tpu.memory_space<vmem>>, vector<1x18x18x128xf32>
    tpu.vector_store %arg9[%c0_3, %c0_4, %c0_5, %c0_6], %1 {strides = array<i32>} : memref<1x18x18x128xf32, #tpu.memory_space<vmem>>, vector<1x18x18x128xf32>,
    %c0_7 = arith.constant 0 : index
    %c1 = arith.constant 1 : index
    %c1_8 = arith.constant 1 : index
    %c0_9 = arith.constant 0 : index
    %3 = vector.load %arg9[%c0_7, %c1, %c1_8, %c0_9] : memref<1x18x18x128xf32, #tpu.memory_space<vmem>>, vector<1x16x16x3xf32>
    tpu.vector_store %arg9[%c0_7, %c1, %c1_8, %c0_9], %0 {strides = array<i32>} : memref<1x18x18x128xf32, #tpu.memory_space<vmem>>, vector<1x16x16x3xf32>,
    %c0_10 = arith.constant 0 : index
    %c0_11 = arith.constant 0 : index
    %c0_12 = arith.constant 0 : index
    %c0_13 = arith.constant 0 : index
    %4 = vector.load %arg9[%c0_10, %c0_11, %c0_12, %c0_13] : memref<1x18x18x128xf32, #tpu.memory_space<vmem>>, vector<1x16x16x128xf32>
    %5 = vector.shape_cast %4 : vector<1x16x16x128xf32> to vector<256x128xf32>
    %6 = arith.truncf %5 : vector<256x128xf32> to vector<256x128xbf16>
    %c0_14 = arith.constant 0 : index
    %c0_15 = arith.constant 0 : index
    %c1_16 = arith.constant 1 : index
    %c0_17 = arith.constant 0 : index
    %7 = vector.load %arg9[%c0_14, %c0_15, %c1_16, %c0_17] : memref<1x18x18x128xf32, #tpu.memory_space<vmem>>, vector<1x16x16x128xf32>
    %8 = vector.shape_cast %7 : vector<1x16x16x128xf32> to vector<256x128xf32>
    %9 = arith.truncf %8 : vector<256x128xf32> to vector<256x128xbf16>
    %c0_18 = arith.constant 0 : index
    %c0_19 = arith.constant 0 : index
    %c2 = arith.constant 2 : index
    %c0_20 = arith.constant 0 : index
    %10 = vector.load %arg9[%c0_18, %c0_19, %c2, %c0_20] : memref<1x18x18x128xf32, #tpu.memory_space<vmem>>, vector<1x16x16x128xf32>
    %11 = vector.shape_cast %10 : vector<1x16x16x128xf32> to vector<256x128xf32>
    %12 = arith.truncf %11 : vector<256x128xf32> to vector<256x128xbf16>
    %c0_21 = arith.constant 0 : index
    %c1_22 = arith.constant 1 : index
    %c0_23 = arith.constant 0 : index
    %c0_24 = arith.constant 0 : index
    %13 = vector.load %arg9[%c0_21, %c1_22, %c0_23, %c0_24] : memref<1x18x18x128xf32, #tpu.memory_space<vmem>>, vector<1x16x16x128xf32>
    %14 = vector.shape_cast %13 : vector<1x16x16x128xf32> to vector<256x128xf32>
    %15 = arith.truncf %14 : vector<256x128xf32> to vector<256x128xbf16>
    %c0_25 = arith.constant 0 : index
    %c1_26 = arith.constant 1 : index
    %c1_27 = arith.constant 1 : index
    %c0_28 = arith.constant 0 : index
    %16 = vector.load %arg9[%c0_25, %c1_26, %c1_27, %c0_28] : memref<1x18x18x128xf32, #tpu.memory_space<vmem>>, vector<1x16x16x128xf32>
    %17 = vector.shape_cast %16 : vector<1x16x16x128xf32> to vector<256x128xf32>
    %18 = arith.truncf %17 : vector<256x128xf32> to vector<256x128xbf16>
    %c0_29 = arith.constant 0 : index
    %c1_30 = arith.constant 1 : index
    %c2_31 = arith.constant 2 : index
    %c0_32 = arith.constant 0 : index
    %19 = vector.load %arg9[%c0_29, %c1_30, %c2_31, %c0_32] : memref<1x18x18x128xf32, #tpu.memory_space<vmem>>, vector<1x16x16x128xf32>
    %20 = vector.shape_cast %19 : vector<1x16x16x128xf32> to vector<256x128xf32>
    %21 = arith.truncf %20 : vector<256x128xf32> to vector<256x128xbf16>
    %c0_33 = arith.constant 0 : index
    %c2_34 = arith.constant 2 : index
    %c0_35 = arith.constant 0 : index
    %c0_36 = arith.constant 0 : index
    %22 = vector.load %arg9[%c0_33, %c2_34, %c0_35, %c0_36] : memref<1x18x18x128xf32, #tpu.memory_space<vmem>>, vector<1x16x16x128xf32>
    %23 = vector.shape_cast %22 : vector<1x16x16x128xf32> to vector<256x128xf32>
    %24 = arith.truncf %23 : vector<256x128xf32> to vector<256x128xbf16>
    %c0_37 = arith.constant 0 : index
    %c2_38 = arith.constant 2 : index
    %c1_39 = arith.constant 1 : index
    %c0_40 = arith.constant 0 : index
    %25 = vector.load %arg9[%c0_37, %c2_38, %c1_39, %c0_40] : memref<1x18x18x128xf32, #tpu.memory_space<vmem>>, vector<1x16x16x128xf32>
    %26 = vector.shape_cast %25 : vector<1x16x16x128xf32> to vector<256x128xf32>
    %27 = arith.truncf %26 : vector<256x128xf32> to vector<256x128xbf16>
    %c0_41 = arith.constant 0 : index
    %c2_42 = arith.constant 2 : index
    %c2_43 = arith.constant 2 : index
    %c0_44 = arith.constant 0 : index
    %28 = vector.load %arg9[%c0_41, %c2_42, %c2_43, %c0_44] : memref<1x18x18x128xf32, #tpu.memory_space<vmem>>, vector<1x16x16x128xf32>
    %29 = vector.shape_cast %28 : vector<1x16x16x128xf32> to vector<256x128xf32>
    %30 = arith.truncf %29 : vector<256x128xf32> to vector<256x128xbf16>
    %31 = tpu.concatenate %6, %9, %12, %15, %18, %21, %24, %27, %30 in 1 : vector<256x128xbf16>, vector<256x128xbf16>, vector<256x128xbf16>, vector<256x128xbf16>, vector<256x128xbf16>, vector<256x128xbf16>, vector<256x128xbf16>, vector<256x128xbf16>, vector<256x128xbf16> -> vector<256x1152xbf16>
    %c0_45 = arith.constant 0 : index
    %c0_46 = arith.constant 0 : index
    %32 = vector.load %arg2[%c0_45, %c0_46] : memref<1152x64xbf16, #tpu.memory_space<vmem>>, vector<1152x64xbf16>
    %cst_47 = arith.constant dense<0.000000e+00> : vector<256x64xf32>
    %33 = tpu.matmul %31, %32, %cst_47 {dimension_numbers = #tpu.dot_dimension_numbers<[1], [0], [0], [1], [0, 0, 1, 1], [], []>} : vector<256x1152xbf16>, vector<1152x64xbf16>, vector<256x64xf32> -> vector<256x64xf32>
    %c0_48 = arith.constant 0 : index
    %c0_49 = arith.constant 0 : index
    %34 = vector.load %arg3[%c0_48, %c0_49] : memref<1x64xf32, #tpu.memory_space<vmem>>, vector<1x64xf32>
    %35 = vector.broadcast %34 : vector<1x64xf32> to vector<256x64xf32>
    %36 = arith.addf %33, %35 : vector<256x64xf32>
    %cst_50 = arith.constant 0.000000e+00 : f32
    %37 = vector.broadcast %cst_50 : f32 to vector<256x64xf32>
    %38 = arith.maximumf %36, %37 : vector<256x64xf32>
    %39 = vector.shape_cast %38 : vector<256x64xf32> to vector<1x8x2x8x2x64xf32>
    %cst_51 = arith.constant dense<0xFF800000> : vector<1x8x2x8x64xf32>
    %40 = vector.multi_reduction <maximumf>, %39, %cst_51 [4] : vector<1x8x2x8x2x64xf32> to vector<1x8x2x8x64xf32>
    %cst_52 = arith.constant dense<0xFF800000> : vector<1x8x8x64xf32>
    %41 = vector.multi_reduction <maximumf>, %40, %cst_52 [2] : vector<1x8x2x8x64xf32> to vector<1x8x8x64xf32>
    %cst_53 = arith.constant 0.000000e+00 : f32
    %42 = vector.broadcast %cst_53 : f32 to vector<1x10x10x128xf32>
    %c0_54 = arith.constant 0 : index
    %c0_55 = arith.constant 0 : index
    %c0_56 = arith.constant 0 : index
    %c0_57 = arith.constant 0 : index
    %43 = vector.load %arg10[%c0_54, %c0_55, %c0_56, %c0_57] : memref<1x10x10x128xf32, #tpu.memory_space<vmem>>, vector<1x10x10x128xf32>
    tpu.vector_store %arg10[%c0_54, %c0_55, %c0_56, %c0_57], %42 {strides = array<i32>} : memref<1x10x10x128xf32, #tpu.memory_space<vmem>>, vector<1x10x10x128xf32>,
    %c0_58 = arith.constant 0 : index
    %c1_59 = arith.constant 1 : index
    %c1_60 = arith.constant 1 : index
    %c0_61 = arith.constant 0 : index
    %44 = vector.load %arg10[%c0_58, %c1_59, %c1_60, %c0_61] : memref<1x10x10x128xf32, #tpu.memory_space<vmem>>, vector<1x8x8x64xf32>
    tpu.vector_store %arg10[%c0_58, %c1_59, %c1_60, %c0_61], %41 {strides = array<i32>} : memref<1x10x10x128xf32, #tpu.memory_space<vmem>>, vector<1x8x8x64xf32>,
    %c0_62 = arith.constant 0 : index
    %c0_63 = arith.constant 0 : index
    %c0_64 = arith.constant 0 : index
    %c0_65 = arith.constant 0 : index
    %45 = vector.load %arg10[%c0_62, %c0_63, %c0_64, %c0_65] : memref<1x10x10x128xf32, #tpu.memory_space<vmem>>, vector<1x8x8x128xf32>
    %46 = vector.shape_cast %45 : vector<1x8x8x128xf32> to vector<64x128xf32>
    %47 = arith.truncf %46 : vector<64x128xf32> to vector<64x128xbf16>
    %c0_66 = arith.constant 0 : index
    %c0_67 = arith.constant 0 : index
    %c1_68 = arith.constant 1 : index
    %c0_69 = arith.constant 0 : index
    %48 = vector.load %arg10[%c0_66, %c0_67, %c1_68, %c0_69] : memref<1x10x10x128xf32, #tpu.memory_space<vmem>>, vector<1x8x8x128xf32>
    %49 = vector.shape_cast %48 : vector<1x8x8x128xf32> to vector<64x128xf32>
    %50 = arith.truncf %49 : vector<64x128xf32> to vector<64x128xbf16>
    %c0_70 = arith.constant 0 : index
    %c0_71 = arith.constant 0 : index
    %c2_72 = arith.constant 2 : index
    %c0_73 = arith.constant 0 : index
    %51 = vector.load %arg10[%c0_70, %c0_71, %c2_72, %c0_73] : memref<1x10x10x128xf32, #tpu.memory_space<vmem>>, vector<1x8x8x128xf32>
    %52 = vector.shape_cast %51 : vector<1x8x8x128xf32> to vector<64x128xf32>
    %53 = arith.truncf %52 : vector<64x128xf32> to vector<64x128xbf16>
    %c0_74 = arith.constant 0 : index
    %c1_75 = arith.constant 1 : index
    %c0_76 = arith.constant 0 : index
    %c0_77 = arith.constant 0 : index
    %54 = vector.load %arg10[%c0_74, %c1_75, %c0_76, %c0_77] : memref<1x10x10x128xf32, #tpu.memory_space<vmem>>, vector<1x8x8x128xf32>
    %55 = vector.shape_cast %54 : vector<1x8x8x128xf32> to vector<64x128xf32>
    %56 = arith.truncf %55 : vector<64x128xf32> to vector<64x128xbf16>
    %c0_78 = arith.constant 0 : index
    %c1_79 = arith.constant 1 : index
    %c1_80 = arith.constant 1 : index
    %c0_81 = arith.constant 0 : index
    %57 = vector.load %arg10[%c0_78, %c1_79, %c1_80, %c0_81] : memref<1x10x10x128xf32, #tpu.memory_space<vmem>>, vector<1x8x8x128xf32>
    %58 = vector.shape_cast %57 : vector<1x8x8x128xf32> to vector<64x128xf32>
    %59 = arith.truncf %58 : vector<64x128xf32> to vector<64x128xbf16>
    %c0_82 = arith.constant 0 : index
    %c1_83 = arith.constant 1 : index
    %c2_84 = arith.constant 2 : index
    %c0_85 = arith.constant 0 : index
    %60 = vector.load %arg10[%c0_82, %c1_83, %c2_84, %c0_85] : memref<1x10x10x128xf32, #tpu.memory_space<vmem>>, vector<1x8x8x128xf32>
    %61 = vector.shape_cast %60 : vector<1x8x8x128xf32> to vector<64x128xf32>
    %62 = arith.truncf %61 : vector<64x128xf32> to vector<64x128xbf16>
    %c0_86 = arith.constant 0 : index
    %c2_87 = arith.constant 2 : index
    %c0_88 = arith.constant 0 : index
    %c0_89 = arith.constant 0 : index
    %63 = vector.load %arg10[%c0_86, %c2_87, %c0_88, %c0_89] : memref<1x10x10x128xf32, #tpu.memory_space<vmem>>, vector<1x8x8x128xf32>
    %64 = vector.shape_cast %63 : vector<1x8x8x128xf32> to vector<64x128xf32>
    %65 = arith.truncf %64 : vector<64x128xf32> to vector<64x128xbf16>
    %c0_90 = arith.constant 0 : index
    %c2_91 = arith.constant 2 : index
    %c1_92 = arith.constant 1 : index
    %c0_93 = arith.constant 0 : index
    %66 = vector.load %arg10[%c0_90, %c2_91, %c1_92, %c0_93] : memref<1x10x10x128xf32, #tpu.memory_space<vmem>>, vector<1x8x8x128xf32>
    %67 = vector.shape_cast %66 : vector<1x8x8x128xf32> to vector<64x128xf32>
    %68 = arith.truncf %67 : vector<64x128xf32> to vector<64x128xbf16>
    %c0_94 = arith.constant 0 : index
    %c2_95 = arith.constant 2 : index
    %c2_96 = arith.constant 2 : index
    %c0_97 = arith.constant 0 : index
    %69 = vector.load %arg10[%c0_94, %c2_95, %c2_96, %c0_97] : memref<1x10x10x128xf32, #tpu.memory_space<vmem>>, vector<1x8x8x128xf32>
    %70 = vector.shape_cast %69 : vector<1x8x8x128xf32> to vector<64x128xf32>
    %71 = arith.truncf %70 : vector<64x128xf32> to vector<64x128xbf16>
    %72 = tpu.concatenate %47, %50, %53, %56, %59, %62, %65, %68, %71 in 1 : vector<64x128xbf16>, vector<64x128xbf16>, vector<64x128xbf16>, vector<64x128xbf16>, vector<64x128xbf16>, vector<64x128xbf16>, vector<64x128xbf16>, vector<64x128xbf16>, vector<64x128xbf16> -> vector<64x1152xbf16>
    %c0_98 = arith.constant 0 : index
    %c0_99 = arith.constant 0 : index
    %73 = vector.load %arg4[%c0_98, %c0_99] : memref<1152x128xbf16, #tpu.memory_space<vmem>>, vector<1152x128xbf16>
    %cst_100 = arith.constant dense<0.000000e+00> : vector<64x128xf32>
    %74 = tpu.matmul %72, %73, %cst_100 {dimension_numbers = #tpu.dot_dimension_numbers<[1], [0], [0], [1], [0, 0, 1, 1], [], []>} : vector<64x1152xbf16>, vector<1152x128xbf16>, vector<64x128xf32> -> vector<64x128xf32>
    %c0_101 = arith.constant 0 : index
    %c0_102 = arith.constant 0 : index
    %75 = vector.load %arg5[%c0_101, %c0_102] : memref<1x128xf32, #tpu.memory_space<vmem>>, vector<1x128xf32>
    %76 = vector.broadcast %75 : vector<1x128xf32> to vector<64x128xf32>
    %77 = arith.addf %74, %76 : vector<64x128xf32>
    %cst_103 = arith.constant 0.000000e+00 : f32
    %78 = vector.broadcast %cst_103 : f32 to vector<64x128xf32>
    %79 = arith.maximumf %77, %78 : vector<64x128xf32>
    %80 = vector.shape_cast %79 : vector<64x128xf32> to vector<1x4x2x4x2x128xf32>
    %cst_104 = arith.constant dense<0xFF800000> : vector<1x4x2x4x128xf32>
    %81 = vector.multi_reduction <maximumf>, %80, %cst_104 [4] : vector<1x4x2x4x2x128xf32> to vector<1x4x2x4x128xf32>
    %cst_105 = arith.constant dense<0xFF800000> : vector<1x4x4x128xf32>
    %82 = vector.multi_reduction <maximumf>, %81, %cst_105 [2] : vector<1x4x2x4x128xf32> to vector<1x4x4x128xf32>
    %cst_106 = arith.constant 0.000000e+00 : f32
    %83 = vector.broadcast %cst_106 : f32 to vector<1x6x6x128xf32>
    %c0_107 = arith.constant 0 : index
    %c0_108 = arith.constant 0 : index
    %c0_109 = arith.constant 0 : index
    %c0_110 = arith.constant 0 : index
    %84 = vector.load %arg11[%c0_107, %c0_108, %c0_109, %c0_110] : memref<1x6x6x128xf32, #tpu.memory_space<vmem>>, vector<1x6x6x128xf32>
    tpu.vector_store %arg11[%c0_107, %c0_108, %c0_109, %c0_110], %83 {strides = array<i32>} : memref<1x6x6x128xf32, #tpu.memory_space<vmem>>, vector<1x6x6x128xf32>,
    %c0_111 = arith.constant 0 : index
    %c1_112 = arith.constant 1 : index
    %c1_113 = arith.constant 1 : index
    %c0_114 = arith.constant 0 : index
    %85 = vector.load %arg11[%c0_111, %c1_112, %c1_113, %c0_114] : memref<1x6x6x128xf32, #tpu.memory_space<vmem>>, vector<1x4x4x128xf32>
    tpu.vector_store %arg11[%c0_111, %c1_112, %c1_113, %c0_114], %82 {strides = array<i32>} : memref<1x6x6x128xf32, #tpu.memory_space<vmem>>, vector<1x4x4x128xf32>,
    %c0_115 = arith.constant 0 : index
    %c0_116 = arith.constant 0 : index
    %c0_117 = arith.constant 0 : index
    %c0_118 = arith.constant 0 : index
    %86 = vector.load %arg11[%c0_115, %c0_116, %c0_117, %c0_118] : memref<1x6x6x128xf32, #tpu.memory_space<vmem>>, vector<1x4x4x128xf32>
    %87 = vector.shape_cast %86 : vector<1x4x4x128xf32> to vector<16x128xf32>
    %88 = arith.truncf %87 : vector<16x128xf32> to vector<16x128xbf16>
    %c0_119 = arith.constant 0 : index
    %c0_120 = arith.constant 0 : index
    %c1_121 = arith.constant 1 : index
    %c0_122 = arith.constant 0 : index
    %89 = vector.load %arg11[%c0_119, %c0_120, %c1_121, %c0_122] : memref<1x6x6x128xf32, #tpu.memory_space<vmem>>, vector<1x4x4x128xf32>
    %90 = vector.shape_cast %89 : vector<1x4x4x128xf32> to vector<16x128xf32>
    %91 = arith.truncf %90 : vector<16x128xf32> to vector<16x128xbf16>
    %c0_123 = arith.constant 0 : index
    %c0_124 = arith.constant 0 : index
    %c2_125 = arith.constant 2 : index
    %c0_126 = arith.constant 0 : index
    %92 = vector.load %arg11[%c0_123, %c0_124, %c2_125, %c0_126] : memref<1x6x6x128xf32, #tpu.memory_space<vmem>>, vector<1x4x4x128xf32>
    %93 = vector.shape_cast %92 : vector<1x4x4x128xf32> to vector<16x128xf32>
    %94 = arith.truncf %93 : vector<16x128xf32> to vector<16x128xbf16>
    %c0_127 = arith.constant 0 : index
    %c1_128 = arith.constant 1 : index
    %c0_129 = arith.constant 0 : index
    %c0_130 = arith.constant 0 : index
    %95 = vector.load %arg11[%c0_127, %c1_128, %c0_129, %c0_130] : memref<1x6x6x128xf32, #tpu.memory_space<vmem>>, vector<1x4x4x128xf32>
    %96 = vector.shape_cast %95 : vector<1x4x4x128xf32> to vector<16x128xf32>
    %97 = arith.truncf %96 : vector<16x128xf32> to vector<16x128xbf16>
    %c0_131 = arith.constant 0 : index
    %c1_132 = arith.constant 1 : index
    %c1_133 = arith.constant 1 : index
    %c0_134 = arith.constant 0 : index
    %98 = vector.load %arg11[%c0_131, %c1_132, %c1_133, %c0_134] : memref<1x6x6x128xf32, #tpu.memory_space<vmem>>, vector<1x4x4x128xf32>
    %99 = vector.shape_cast %98 : vector<1x4x4x128xf32> to vector<16x128xf32>
    %100 = arith.truncf %99 : vector<16x128xf32> to vector<16x128xbf16>
    %c0_135 = arith.constant 0 : index
    %c1_136 = arith.constant 1 : index
    %c2_137 = arith.constant 2 : index
    %c0_138 = arith.constant 0 : index
    %101 = vector.load %arg11[%c0_135, %c1_136, %c2_137, %c0_138] : memref<1x6x6x128xf32, #tpu.memory_space<vmem>>, vector<1x4x4x128xf32>
    %102 = vector.shape_cast %101 : vector<1x4x4x128xf32> to vector<16x128xf32>
    %103 = arith.truncf %102 : vector<16x128xf32> to vector<16x128xbf16>
    %c0_139 = arith.constant 0 : index
    %c2_140 = arith.constant 2 : index
    %c0_141 = arith.constant 0 : index
    %c0_142 = arith.constant 0 : index
    %104 = vector.load %arg11[%c0_139, %c2_140, %c0_141, %c0_142] : memref<1x6x6x128xf32, #tpu.memory_space<vmem>>, vector<1x4x4x128xf32>
    %105 = vector.shape_cast %104 : vector<1x4x4x128xf32> to vector<16x128xf32>
    %106 = arith.truncf %105 : vector<16x128xf32> to vector<16x128xbf16>
    %c0_143 = arith.constant 0 : index
    %c2_144 = arith.constant 2 : index
    %c1_145 = arith.constant 1 : index
    %c0_146 = arith.constant 0 : index
    %107 = vector.load %arg11[%c0_143, %c2_144, %c1_145, %c0_146] : memref<1x6x6x128xf32, #tpu.memory_space<vmem>>, vector<1x4x4x128xf32>
    %108 = vector.shape_cast %107 : vector<1x4x4x128xf32> to vector<16x128xf32>
    %109 = arith.truncf %108 : vector<16x128xf32> to vector<16x128xbf16>
    %c0_147 = arith.constant 0 : index
    %c2_148 = arith.constant 2 : index
    %c2_149 = arith.constant 2 : index
    %c0_150 = arith.constant 0 : index
    %110 = vector.load %arg11[%c0_147, %c2_148, %c2_149, %c0_150] : memref<1x6x6x128xf32, #tpu.memory_space<vmem>>, vector<1x4x4x128xf32>
    %111 = vector.shape_cast %110 : vector<1x4x4x128xf32> to vector<16x128xf32>
    %112 = arith.truncf %111 : vector<16x128xf32> to vector<16x128xbf16>
    %113 = tpu.concatenate %88, %91, %94, %97, %100, %103, %106, %109, %112 in 1 : vector<16x128xbf16>, vector<16x128xbf16>, vector<16x128xbf16>, vector<16x128xbf16>, vector<16x128xbf16>, vector<16x128xbf16>, vector<16x128xbf16>, vector<16x128xbf16>, vector<16x128xbf16> -> vector<16x1152xbf16>
    %c0_151 = arith.constant 0 : index
    %c0_152 = arith.constant 0 : index
    %114 = vector.load %arg6[%c0_151, %c0_152] : memref<1152x256xbf16, #tpu.memory_space<vmem>>, vector<1152x256xbf16>
    %cst_153 = arith.constant dense<0.000000e+00> : vector<16x256xf32>
    %115 = tpu.matmul %113, %114, %cst_153 {dimension_numbers = #tpu.dot_dimension_numbers<[1], [0], [0], [1], [0, 0, 1, 1], [], []>} : vector<16x1152xbf16>, vector<1152x256xbf16>, vector<16x256xf32> -> vector<16x256xf32>
    %c0_154 = arith.constant 0 : index
    %c0_155 = arith.constant 0 : index
    %116 = vector.load %arg7[%c0_154, %c0_155] : memref<1x256xf32, #tpu.memory_space<vmem>>, vector<1x256xf32>
    %117 = vector.broadcast %116 : vector<1x256xf32> to vector<16x256xf32>
    %118 = arith.addf %115, %117 : vector<16x256xf32>
    %cst_156 = arith.constant 0.000000e+00 : f32
    %119 = vector.broadcast %cst_156 : f32 to vector<16x256xf32>
    %120 = arith.maximumf %118, %119 : vector<16x256xf32>
    %121 = vector.shape_cast %120 : vector<16x256xf32> to vector<1x2x2x2x2x256xf32>
    %cst_157 = arith.constant dense<0xFF800000> : vector<1x2x2x2x256xf32>
    %122 = vector.multi_reduction <maximumf>, %121, %cst_157 [4] : vector<1x2x2x2x2x256xf32> to vector<1x2x2x2x256xf32>
    %cst_158 = arith.constant dense<0xFF800000> : vector<1x2x2x256xf32>
    %123 = vector.multi_reduction <maximumf>, %122, %cst_158 [2] : vector<1x2x2x2x256xf32> to vector<1x2x2x256xf32>
    %c0_159 = arith.constant 0 : index
    %c0_160 = arith.constant 0 : index
    %c0_161 = arith.constant 0 : index
    %c0_162 = arith.constant 0 : index
    %124 = vector.load %arg8[%c0_159, %c0_160, %c0_161, %c0_162] : memref<1x2x2x256xf32, #tpu.memory_space<vmem>>, vector<1x2x2x256xf32>
    tpu.vector_store %arg8[%c0_159, %c0_160, %c0_161, %c0_162], %123 {strides = array<i32>} : memref<1x2x2x256xf32, #tpu.memory_space<vmem>>, vector<1x2x2x256xf32>,
    return
  }
  func.func @transform_0(%arg0: i32) -> (i32, i32, i32, i32) {
    %c0_i32 = arith.constant 0 : i32
    %c0_i32_0 = arith.constant 0 : i32
    %c0_i32_1 = arith.constant 0 : i32
    %c0_i32_2 = arith.constant 0 : i32
    return %arg0, %c0_i32, %c0_i32_0, %c0_i32_1 : i32, i32, i32, i32
  }
  func.func @transform_1(%arg0: i32) -> (i32, i32) {
    %c0_i32 = arith.constant 0 : i32
    %c0_i32_0 = arith.constant 0 : i32
    %c0_i32_1 = arith.constant 0 : i32
    return %c0_i32, %c0_i32_0 : i32, i32
  }
  func.func @transform_2(%arg0: i32) -> (i32, i32) {
    %c0_i32 = arith.constant 0 : i32
    %c0_i32_0 = arith.constant 0 : i32
    %c0_i32_1 = arith.constant 0 : i32
    return %c0_i32, %c0_i32_0 : i32, i32
  }
  func.func @transform_3(%arg0: i32) -> (i32, i32) {
    %c0_i32 = arith.constant 0 : i32
    %c0_i32_0 = arith.constant 0 : i32
    %c0_i32_1 = arith.constant 0 : i32
    return %c0_i32, %c0_i32_0 : i32, i32
  }
  func.func @transform_4(%arg0: i32) -> (i32, i32) {
    %c0_i32 = arith.constant 0 : i32
    %c0_i32_0 = arith.constant 0 : i32
    %c0_i32_1 = arith.constant 0 : i32
    return %c0_i32, %c0_i32_0 : i32, i32
  }
  func.func @transform_5(%arg0: i32) -> (i32, i32) {
    %c0_i32 = arith.constant 0 : i32
    %c0_i32_0 = arith.constant 0 : i32
    %c0_i32_1 = arith.constant 0 : i32
    return %c0_i32, %c0_i32_0 : i32, i32
  }
  func.func @transform_6(%arg0: i32) -> (i32, i32) {
    %c0_i32 = arith.constant 0 : i32
    %c0_i32_0 = arith.constant 0 : i32
    %c0_i32_1 = arith.constant 0 : i32
    return %c0_i32, %c0_i32_0 : i32, i32
  }
  func.func @transform_7(%arg0: i32) -> (i32, i32, i32, i32) {
    %c0_i32 = arith.constant 0 : i32
    %c0_i32_0 = arith.constant 0 : i32
    %c0_i32_1 = arith.constant 0 : i32
    %c0_i32_2 = arith.constant 0 : i32
    return %arg0, %c0_i32, %c0_i32_0, %c0_i32_1 : i32, i32, i32, i32
  }
}

</mosaic_0001>

<llo_original>
// kernel: backbone_forward.1
$region0: #{backbone_forward.1}
  #allocation0 [shape = 'u32[]', space=smem, size = 0x4, offset = 0x4, fixed_abs, tag = 'smem constant byte address 0x4 - core index']
  #allocation1 [shape = 'u32[144,128]{1,0:T(1,128)}', space=vmem, size = 0x12000, scoped, tag = 'internal scratch']
  #allocation2 [shape = 'f32[1,18,18,128]{3,2,1,0:T(8,128)}', space=vmem, size = 0x36000, scoped, tag = 'scratch operand']
  #allocation3 [shape = 'f32[1,10,10,128]{3,2,1,0:T(8,128)}', space=vmem, size = 0x14000, scoped, tag = 'scratch operand']
  #allocation4 [shape = 'f32[1,6,6,128]{3,2,1,0:T(8,128)}', space=vmem, size = 0x6000, scoped, tag = 'scratch operand']
  %s0 = inlined_call_operand.vmem [shape: f32[2,16,16,3], index: 0, kind: input, shape index: {}]
  %s1 = inlined_call_operand.vmem [shape: bf16[1152,64], index: 1, kind: input, shape index: {}]
  %s2 = inlined_call_operand.vmem [shape: f32[1,64], index: 2, kind: input, shape index: {}]
  %s3 = inlined_call_operand.vmem [shape: bf16[1152,128], index: 3, kind: input, shape index: {}]
  %s4 = inlined_call_operand.vmem [shape: f32[1,128], index: 4, kind: input, shape index: {}]
  %s5 = inlined_call_operand.vmem [shape: bf16[1152,256], index: 5, kind: input, shape index: {}]
  %s6 = inlined_call_operand.vmem [shape: f32[1,256], index: 6, kind: input, shape index: {}]
  %s7 = inlined_call_operand.hbm [shape: f32[2,2,2,256], index: 7, kind: output, shape index: {}]
  %s8 = sld [smem:[#allocation0]]
  $region61: #{backbone_forward.1} parent=0
    _
  %s10 = ssub.s32 1, %s8
  %s11 = scalar_select 0, %s10, %s8
  $region1: #{backbone_forward.1} parent=0
    #allocation5 [shape = 'u8[8192]{0}', space=vmem, size = 0x2000, scoped, tag = 'output window, operand 0']
    #allocation6 [shape = 's32[2]{0}', space=sflag, size = 0x8, scoped, tag = 'scoped memory for backbone_forward.1']
    %12 = vsyncpa [#allocation6], 0
    %s13 = scalar_lea.sflag [#allocation6], 1
    %14 = vsyncpa %s13, 0
    loop: start=0, step=1, limit=4
    $region2: #{backbone_forward.1} parent=1 // loop_pre_header
      _
    $region3: #{backbone_forward.1} parent=1 // loop_header
      %s16 = sphi 0, %s20
      %p17 = scmp.ge.s32.totalorder %s16, 4
      %s26 = sphi 0, %s28
      %s29 = sphi 0, %s26
      %s30 = sphi 0, %s29
      %s46 = sphi 0, %s30
      %s50 = sphi 0, %s50
      %s52 = sphi 0, %s50
      %s53 = sphi 0, %s52
      %s67 = sphi 0, %s53
      %s71 = sphi 0, %s71
      %s73 = sphi 0, %s71
      %s74 = sphi 0, %s73
      %s88 = sphi 0, %s74
      %s92 = sphi 0, %s92
      %s94 = sphi 0, %s92
      %s95 = sphi 0, %s94
      %s109 = sphi 0, %s95
      %s113 = sphi 0, %s113
      %s115 = sphi 0, %s113
      %s116 = sphi 0, %s115
      %s130 = sphi 0, %s116
      %s134 = sphi 0, %s134
      %s136 = sphi 0, %s134
      %s137 = sphi 0, %s136
      %s151 = sphi 0, %s137
      %s155 = sphi 0, %s155
      %s157 = sphi 0, %s155
      %s158 = sphi 0, %s157
      %s172 = sphi 0, %s158
      %s178 = sphi 0, %s180
      %s181 = sphi 0, %s178
      %s182 = sphi 0, %s181
      %s198 = sphi 0, %s182
    $region4: #{backbone_forward.1} parent=1 // loop_header_branch
      %19 = sbr.rel (%p17) target = $region8
    $region5: #{backbone_forward.1} parent=1 // loop_body
      %s21 = ssub.s32 %s16, 1
      %s22 = ssub.s32 %s16, 2
      %s23 = sadd.s32 %s16, 1
      %s24 = ssub.s32 %s16, %s23
      %p25 = scmp.eq.s32.totalorder %s24, 0
      %s27 = sadd.s32 %s26, 1
      %s28 = scalar_select %p25, %s26, %s27
      %p31 = pneg %p25
      %p32 = scmp.eq.s32.totalorder %s16, 1
      %p33 = por %p31, %p32
      %p34 = scmp.ne.s32.totalorder %s26, %s29
      %p35 = scmp.eq.s32.totalorder %s16, 0
      %p36 = por %p34, %p35
      %p37 = scmp.ne.s32.totalorder %s26, %s29
      %p38 = scmp.eq.s32.totalorder %s21, 1
      %p39 = por %p37, %p38
      %p40 = scmp.ne.s32.totalorder %s29, %s30
      %p41 = scmp.eq.s32.totalorder %s21, 0
      %p42 = por %p40, %p41
      %p43 = scmp.ne.s32.totalorder %s29, %s30
      %p44 = scmp.eq.s32.totalorder %s22, 1
      %p45 = por %p43, %p44
      %p47 = scmp.ne.s32.totalorder %s30, %s46
      %p48 = scmp.eq.s32.totalorder %s22, 0
      %p49 = por %p47, %p48
      %s51 = sadd.s32 %s50, 1
      %p54 = scmp.eq.s32.totalorder %s16, 1
      %p55 = scmp.ne.s32.totalorder %s50, %s52
      %p56 = scmp.eq.s32.totalorder %s16, 0
      %p57 = por %p55, %p56
      %p58 = scmp.ne.s32.totalorder %s50, %s52
      %p59 = scmp.eq.s32.totalorder %s21, 1
      %p60 = por %p58, %p59
      %p61 = scmp.ne.s32.totalorder %s52, %s53
      %p62 = scmp.eq.s32.totalorder %s21, 0
      %p63 = por %p61, %p62
      %p64 = scmp.ne.s32.totalorder %s52, %s53
      %p65 = scmp.eq.s32.totalorder %s22, 1
      %p66 = por %p64, %p65
      %p68 = scmp.ne.s32.totalorder %s53, %s67
      %p69 = scmp.eq.s32.totalorder %s22, 0
      %p70 = por %p68, %p69
      %s72 = sadd.s32 %s71, 1
      %p75 = scmp.eq.s32.totalorder %s16, 1
      %p76 = scmp.ne.s32.totalorder %s71, %s73
      %p77 = scmp.eq.s32.totalorder %s16, 0
      %p78 = por %p76, %p77
      %p79 = scmp.ne.s32.totalorder %s71, %s73
      %p80 = scmp.eq.s32.totalorder %s21, 1
      %p81 = por %p79, %p80
      %p82 = scmp.ne.s32.totalorder %s73, %s74
      %p83 = scmp.eq.s32.totalorder %s21, 0
      %p84 = por %p82, %p83
      %p85 = scmp.ne.s32.totalorder %s73, %s74
      %p86 = scmp.eq.s32.totalorder %s22, 1
      %p87 = por %p85, %p86
      %p89 = scmp.ne.s32.totalorder %s74, %s88
      %p90 = scmp.eq.s32.totalorder %s22, 0
      %p91 = por %p89, %p90
      %s93 = sadd.s32 %s92, 1
      %p96 = scmp.eq.s32.totalorder %s16, 1
      %p97 = scmp.ne.s32.totalorder %s92, %s94
      %p98 = scmp.eq.s32.totalorder %s16, 0
      %p99 = por %p97, %p98
      %p100 = scmp.ne.s32.totalorder %s92, %s94
      %p101 = scmp.eq.s32.totalorder %s21, 1
      %p102 = por %p100, %p101
      %p103 = scmp.ne.s32.totalorder %s94, %s95
      %p104 = scmp.eq.s32.totalorder %s21, 0
      %p105 = por %p103, %p104
      %p106 = scmp.ne.s32.totalorder %s94, %s95
      %p107 = scmp.eq.s32.totalorder %s22, 1
      %p108 = por %p106, %p107
      %p110 = scmp.ne.s32.totalorder %s95, %s109
      %p111 = scmp.eq.s32.totalorder %s22, 0
      %p112 = por %p110, %p111
      %s114 = sadd.s32 %s113, 1
      %p117 = scmp.eq.s32.totalorder %s16, 1
      %p118 = scmp.ne.s32.totalorder %s113, %s115
      %p119 = scmp.eq.s32.totalorder %s16, 0
      %p120 = por %p118, %p119
      %p121 = scmp.ne.s32.totalorder %s113, %s115
      %p122 = scmp.eq.s32.totalorder %s21, 1
      %p123 = por %p121, %p122
      %p124 = scmp.ne.s32.totalorder %s115, %s116
      %p125 = scmp.eq.s32.totalorder %s21, 0
      %p126 = por %p124, %p125
      %p127 = scmp.ne.s32.totalorder %s115, %s116
      %p128 = scmp.eq.s32.totalorder %s22, 1
      %p129 = por %p127, %p128
      %p131 = scmp.ne.s32.totalorder %s116, %s130
      %p132 = scmp.eq.s32.totalorder %s22, 0
      %p133 = por %p131, %p132
      %s135 = sadd.s32 %s134, 1
      %p138 = scmp.eq.s32.totalorder %s16, 1
      %p139 = scmp.ne.s32.totalorder %s134, %s136
      %p140 = scmp.eq.s32.totalorder %s16, 0
      %p141 = por %p139, %p140
      %p142 = scmp.ne.s32.totalorder %s134, %s136
      %p143 = scmp.eq.s32.totalorder %s21, 1
      %p144 = por %p142, %p143
      %p145 = scmp.ne.s32.totalorder %s136, %s137
      %p146 = scmp.eq.s32.totalorder %s21, 0
      %p147 = por %p145, %p146
      %p148 = scmp.ne.s32.totalorder %s136, %s137
      %p149 = scmp.eq.s32.totalorder %s22, 1
      %p150 = por %p148, %p149
      %p152 = scmp.ne.s32.totalorder %s137, %s151
      %p153 = scmp.eq.s32.totalorder %s22, 0
      %p154 = por %p152, %p153
      %s156 = sadd.s32 %s155, 1
      %p159 = scmp.eq.s32.totalorder %s16, 1
      %p160 = scmp.ne.s32.totalorder %s155, %s157
      %p161 = scmp.eq.s32.totalorder %s16, 0
      %p162 = por %p160, %p161
      %p163 = scmp.ne.s32.totalorder %s155, %s157
      %p164 = scmp.eq.s32.totalorder %s21, 1
      %p165 = por %p163, %p164
      %p166 = scmp.ne.s32.totalorder %s157, %s158
      %p167 = scmp.eq.s32.totalorder %s21, 0
      %p168 = por %p166, %p167
      %p169 = scmp.ne.s32.totalorder %s157, %s158
      %p170 = scmp.eq.s32.totalorder %s22, 1
      %p171 = por %p169, %p170
      %p173 = scmp.ne.s32.totalorder %s158, %s172
      %p174 = scmp.eq.s32.totalorder %s22, 0
      %p175 = por %p173, %p174
      %s176 = ssub.s32 %s16, %s23
      %p177 = scmp.eq.s32.totalorder %s176, 0
      %s179 = sadd.s32 %s178, 1
      %s180 = scalar_select %p177, %s178, %s179
      %p183 = pneg %p177
      %p184 = scmp.eq.s32.totalorder %s16, 1
      %p185 = por %p183, %p184
      %p186 = scmp.ne.s32.totalorder %s178, %s181
      %p187 = scmp.eq.s32.totalorder %s16, 0
      %p188 = por %p186, %p187
      %p189 = scmp.ne.s32.totalorder %s178, %s181
      %p190 = scmp.eq.s32.totalorder %s21, 1
      %p191 = por %p189, %p190
      %p192 = scmp.ne.s32.totalorder %s181, %s182
      %p193 = scmp.eq.s32.totalorder %s21, 0
      %p194 = por %p192, %p193
      %p195 = scmp.ne.s32.totalorder %s181, %s182
      %p196 = scmp.eq.s32.totalorder %s22, 1
      %p197 = por %p195, %p196
      %p199 = scmp.ne.s32.totalorder %s182, %s198
      %p200 = scmp.eq.s32.totalorder %s22, 0
      %p201 = por %p199, %p200
      %p202 = scmp.le.s32.totalorder 1, %s16
      %p203 = scmp.lt.s32.totalorder %s16, 3
      %p204 = pnand %p202, %p203
      %p205 = pneg %p204
      // Predicated region
      $region9: #{backbone_forward.1} parent=5 // pred_check
        _
      $region10: #{backbone_forward.1} parent=5 // pred_check_branch
        %207 = sbr.rel (%p204) target = $region12
      $region11: #{backbone_forward.1} parent=5 // pred_region
        %s208 = ssub.s32 %s16, 1
        // Predicated region
        $region13: #{backbone_forward.1} parent=11 // pred_check
          %p209 = pneg %p63
        $region14: #{backbone_forward.1} parent=11 // pred_check_branch
          %211 = sbr.rel (%p209) target = $region16
        $region15: #{backbone_forward.1} parent=11 // pred_region
          _
        $region16: #{backbone_forward.1} parent=11 // pred_fallthru
          _
        // Predicated region
        $region17: #{backbone_forward.1} parent=11 // pred_check
          %p212 = pneg %p84
        $region18: #{backbone_forward.1} parent=11 // pred_check_branch
          %214 = sbr.rel (%p212) target = $region20
        $region19: #{backbone_forward.1} parent=11 // pred_region
          _
        $region20: #{backbone_forward.1} parent=11 // pred_fallthru
          _
        // Predicated region
        $region21: #{backbone_forward.1} parent=11 // pred_check
          %p215 = pneg %p105
        $region22: #{backbone_forward.1} parent=11 // pred_check_branch
          %217 = sbr.rel (%p215) target = $region24
        $region23: #{backbone_forward.1} parent=11 // pred_region
          _
        $region24: #{backbone_forward.1} parent=11 // pred_fallthru
          _
        // Predicated region
        $region25: #{backbone_forward.1} parent=11 // pred_check
          %p218 = pneg %p126
        $region26: #{backbone_forward.1} parent=11 // pred_check_branch
          %220 = sbr.rel (%p218) target = $region28
        $region27: #{backbone_forward.1} parent=11 // pred_region
          _
        $region28: #{backbone_forward.1} parent=11 // pred_fallthru
          _
        // Predicated region
        $region29: #{backbone_forward.1} parent=11 // pred_check
          %p221 = pneg %p147
        $region30: #{backbone_forward.1} parent=11 // pred_check_branch
          %223 = sbr.rel (%p221) target = $region32
        $region31: #{backbone_forward.1} parent=11 // pred_region
          _
        $region32: #{backbone_forward.1} parent=11 // pred_fallthru
          _
        // Predicated region
        $region33: #{backbone_forward.1} parent=11 // pred_check
          %p224 = pneg %p168
        $region34: #{backbone_forward.1} parent=11 // pred_check_branch
          %226 = sbr.rel (%p224) target = $region36
        $region35: #{backbone_forward.1} parent=11 // pred_region
          _
        $region36: #{backbone_forward.1} parent=11 // pred_fallthru
          _
      $region12: #{backbone_forward.1} parent=5 // pred_fallthru
        _
      %p227 = scmp.lt.s32.totalorder %s16, 2
      // Predicated region
      $region37: #{backbone_forward.1} parent=5 // pred_check
        %p228 = pneg %p227
      $region38: #{backbone_forward.1} parent=5 // pred_check_branch
        %230 = sbr.rel (%p228) target = $region40
      $region39: #{backbone_forward.1} parent=5 // pred_region
        // Predicated region
        $region41: #{backbone_forward.1} parent=39 // pred_check
          %p231 = pneg %p36
        $region42: #{backbone_forward.1} parent=39 // pred_check_branch
          %233 = sbr.rel (%p231) target = $region44
        $region43: #{backbone_forward.1} parent=39 // pred_region
          %p234 = scmp.lt.s32.totalorder %s16, 1
          %s235 = scalar_select %p234, %s16, 1
          %s236 = smul.addr %s235, 32
          %s237 = smul.addr %s236, 8
          %s238 = scalar_lea.vmem %s0, %s237
        $region44: #{backbone_forward.1} parent=39 // pred_fallthru
          _
      $region40: #{backbone_forward.1} parent=5 // pred_fallthru
        _
      %p239 = scmp.le.s32.totalorder 1, %s16
      %p240 = scmp.lt.s32.totalorder %s16, 3
      %p241 = pnand %p239, %p240
      %p242 = pneg %p241
      // Predicated region
      $region45: #{backbone_forward.1} parent=5 // pred_check
        _
      $region46: #{backbone_forward.1} parent=5 // pred_check_branch
        %244 = sbr.rel (%p241) target = $region48
      $region47: #{backbone_forward.1} parent=5 // pred_region
        %s245 = ssub.s32 %s16, 1
        %p246 = scmp.lt.s32.totalorder %s21, 1
        %s247 = scalar_select %p246, %s21, 1
        %s248 = smul.addr %s247, 32
        %s249 = smul.addr %s248, 8
        %s250 = scalar_lea.vmem %s0, %s249
        %p251 = pneg %p42
        %p252 = pneg %p39
        %p253 = pneg %p63
        %p254 = pneg %p60
        %p255 = pneg %p84
        %p256 = pneg %p81
        %p257 = pneg %p105
        %p258 = pneg %p102
        %p259 = pneg %p126
        %p260 = pneg %p123
        %p261 = pneg %p147
        %p262 = pneg %p144
        %p263 = pneg %p168
        %p264 = pneg %p165
        %p265 = pneg %p194
        %p266 = pneg %p191
        %s267 = sand.u32 %s181, 1
        %s268 = scalar_lea.sflag [#allocation6], %s267
        %s269 = sand.u32 %s181, 1
        %s270 = smul.addr %s269, 8
        %s271 = scalar_lea.vmem [#allocation5], %s270
        %p272 = scmp.lt.s32.totalorder %s21, 1
        %s273 = scalar_select %p272, %s21, 1
        %s274 = smul.addr %s273, 32
        %s275 = smul.addr %s274, 8
        %s276 = scalar_lea.vmem %s0, %s275
        %v278 = vld [vmem:[%s276] sm:$0xff]
        %v279 = vld [vmem:[%s276 + $0x8] sm:$0xff]
        %v280 = vld [vmem:[%s276 + $0x10] sm:$0xff]
        %v281 = vld [vmem:[%s276 + $0x18] sm:$0xff]
        %v282 = vld [vmem:[%s276 + $0x20] sm:$0xff]
        %v283 = vld [vmem:[%s276 + $0x28] sm:$0xff]
        %v284 = vld [vmem:[%s276 + $0x30] sm:$0xff]
        %v285 = vld [vmem:[%s276 + $0x38] sm:$0xff]
        %v286 = vld [vmem:[%s276 + $0x40] sm:$0xff]
        %v287 = vld [vmem:[%s276 + $0x48] sm:$0xff]
        %v288 = vld [vmem:[%s276 + $0x50] sm:$0xff]
        %v289 = vld [vmem:[%s276 + $0x58] sm:$0xff]
        %v290 = vld [vmem:[%s276 + $0x60] sm:$0xff]
        %v291 = vld [vmem:[%s276 + $0x68] sm:$0xff]
        %v292 = vld [vmem:[%s276 + $0x70] sm:$0xff]
        %v293 = vld [vmem:[%s276 + $0x78] sm:$0xff]
        %v294 = vld [vmem:[%s276 + $0x80] sm:$0xff]
        %v295 = vld [vmem:[%s276 + $0x88] sm:$0xff]
        %v296 = vld [vmem:[%s276 + $0x90] sm:$0xff]
        %v297 = vld [vmem:[%s276 + $0x98] sm:$0xff]
        %v298 = vld [vmem:[%s276 + $0xa0] sm:$0xff]
        %v299 = vld [vmem:[%s276 + $0xa8] sm:$0xff]
        %v300 = vld [vmem:[%s276 + $0xb0] sm:$0xff]
        %v301 = vld [vmem:[%s276 + $0xb8] sm:$0xff]
        %v302 = vld [vmem:[%s276 + $0xc0] sm:$0xff]
        %v303 = vld [vmem:[%s276 + $0xc8] sm:$0xff]
        %v304 = vld [vmem:[%s276 + $0xd0] sm:$0xff]
        %v305 = vld [vmem:[%s276 + $0xd8] sm:$0xff]
        %v306 = vld [vmem:[%s276 + $0xe0] sm:$0xff]
        %v307 = vld [vmem:[%s276 + $0xe8] sm:$0xff]
        %v308 = vld [vmem:[%s276 + $0xf0] sm:$0xff]
        %v309 = vld [vmem:[%s276 + $0xf8] sm:$0xff]
        %310 = vst [vmem:[#allocation2] sm:$0xff] 0.0
        %311 = vst [vmem:[#allocation2 + $0x8] sm:$0xff] 0.0
        %312 = vst [vmem:[#allocation2 + $0x10] sm:$0x3] 0.0
        %313 = vst [vmem:[#allocation2 + $0x18] sm:$0xff] 0.0
        %314 = vst [vmem:[#allocation2 + $0x20] sm:$0xff] 0.0
        %315 = vst [vmem:[#allocation2 + $0x28] sm:$0x3] 0.0
        %316 = vst [vmem:[#allocation2 + $0x30] sm:$0xff] 0.0
        %317 = vst [vmem:[#allocation2 + $0x38] sm:$0xff] 0.0
        %318 = vst [vmem:[#allocation2 + $0x40] sm:$0x3] 0.0
        %319 = vst [vmem:[#allocation2 + $0x48] sm:$0xff] 0.0
        %320 = vst [vmem:[#allocation2 + $0x50] sm:$0xff] 0.0
        %321 = vst [vmem:[#allocation2 + $0x58] sm:$0x3] 0.0
        %322 = vst [vmem:[#allocation2 + $0x60] sm:$0xff] 0.0
        %323 = vst [vmem:[#allocation2 + $0x68] sm:$0xff] 0.0
        %324 = vst [vmem:[#allocation2 + $0x70] sm:$0x3] 0.0
        %325 = vst [vmem:[#allocation2 + $0x78] sm:$0xff] 0.0
        %326 = vst [vmem:[#allocation2 + $0x80] sm:$0xff] 0.0
        %327 = vst [vmem:[#allocation2 + $0x88] sm:$0x3] 0.0
        %328 = vst [vmem:[#allocation2 + $0x90] sm:$0xff] 0.0
        %329 = vst [vmem:[#allocation2 + $0x98] sm:$0xff] 0.0
        %330 = vst [vmem:[#allocation2 + $0xa0] sm:$0x3] 0.0
        %331 = vst [vmem:[#allocation2 + $0xa8] sm:$0xff] 0.0
        %332 = vst [vmem:[#allocation2 + $0xb0] sm:$0xff] 0.0
        %333 = vst [vmem:[#allocation2 + $0xb8] sm:$0x3] 0.0
        %334 = vst [vmem:[#allocation2 + $0xc0] sm:$0xff] 0.0
        %335 = vst [vmem:[#allocation2 + $0xc8] sm:$0xff] 0.0
        %336 = vst [vmem:[#allocation2 + $0xd0] sm:$0x3] 0.0
        %337 = vst [vmem:[#allocation2 + $0xd8] sm:$0xff] 0.0
        %338 = vst [vmem:[#allocation2 + $0xe0] sm:$0xff] 0.0
        %339 = vst [vmem:[#allocation2 + $0xe8] sm:$0x3] 0.0
        %340 = vst [vmem:[#allocation2 + $0xf0] sm:$0xff] 0.0
        %341 = vst [vmem:[#allocation2 + $0xf8] sm:$0xff] 0.0
        %342 = vst [vmem:[#allocation2 + $0x100] sm:$0x3] 0.0
        %343 = vst [vmem:[#allocation2 + $0x108] sm:$0xff] 0.0
        %344 = vst [vmem:[#allocation2 + $0x110] sm:$0xff] 0.0
        %345 = vst [vmem:[#allocation2 + $0x118] sm:$0x3] 0.0
        %346 = vst [vmem:[#allocation2 + $0x120] sm:$0xff] 0.0
        %347 = vst [vmem:[#allocation2 + $0x128] sm:$0xff] 0.0
        %348 = vst [vmem:[#allocation2 + $0x130] sm:$0x3] 0.0
        %349 = vst [vmem:[#allocation2 + $0x138] sm:$0xff] 0.0
        %350 = vst [vmem:[#allocation2 + $0x140] sm:$0xff] 0.0
        %351 = vst [vmem:[#allocation2 + $0x148] sm:$0x3] 0.0
        %352 = vst [vmem:[#allocation2 + $0x150] sm:$0xff] 0.0
        %353 = vst [vmem:[#allocation2 + $0x158] sm:$0xff] 0.0
        %354 = vst [vmem:[#allocation2 + $0x160] sm:$0x3] 0.0
        %355 = vst [vmem:[#allocation2 + $0x168] sm:$0xff] 0.0
        %356 = vst [vmem:[#allocation2 + $0x170] sm:$0xff] 0.0
        %357 = vst [vmem:[#allocation2 + $0x178] sm:$0x3] 0.0
        %358 = vst [vmem:[#allocation2 + $0x180] sm:$0xff] 0.0
        %359 = vst [vmem:[#allocation2 + $0x188] sm:$0xff] 0.0
        %360 = vst [vmem:[#allocation2 + $0x190] sm:$0x3] 0.0
        %361 = vst [vmem:[#allocation2 + $0x198] sm:$0xff] 0.0
        %362 = vst [vmem:[#allocation2 + $0x1a0] sm:$0xff] 0.0
        %363 = vst [vmem:[#allocation2 + $0x1a8] sm:$0x3] 0.0
        %s364 = scalar_lea.vmem [#allocation2], 24
        %vm365 = vcmask 23552
        %366 = vst.msk [vmem:[%s364 + $0x1] sm:$0xff] %vm365, %v278
        %367 = vst.msk [vmem:[%s364 + $0x9] sm:$0xff] %vm365, %v279
        %368 = vst.msk [vmem:[%s364 + $0x19] sm:$0xff] %vm365, %v280
        %369 = vst.msk [vmem:[%s364 + $0x21] sm:$0xff] %vm365, %v281
        %370 = vst.msk [vmem:[%s364 + $0x31] sm:$0xff] %vm365, %v282
        %371 = vst.msk [vmem:[%s364 + $0x39] sm:$0xff] %vm365, %v283
        %372 = vst.msk [vmem:[%s364 + $0x49] sm:$0xff] %vm365, %v284
        %373 = vst.msk [vmem:[%s364 + $0x51] sm:$0xff] %vm365, %v285
        %374 = vst.msk [vmem:[%s364 + $0x61] sm:$0xff] %vm365, %v286
        %375 = vst.msk [vmem:[%s364 + $0x69] sm:$0xff] %vm365, %v287
        %376 = vst.msk [vmem:[%s364 + $0x79] sm:$0xff] %vm365, %v288
        %377 = vst.msk [vmem:[%s364 + $0x81] sm:$0xff] %vm365, %v289
        %378 = vst.msk [vmem:[%s364 + $0x91] sm:$0xff] %vm365, %v290
        %379 = vst.msk [vmem:[%s364 + $0x99] sm:$0xff] %vm365, %v291
        %380 = vst.msk [vmem:[%s364 + $0xa9] sm:$0xff] %vm365, %v292
        %381 = vst.msk [vmem:[%s364 + $0xb1] sm:$0xff] %vm365, %v293
        %382 = vst.msk [vmem:[%s364 + $0xc1] sm:$0xff] %vm365, %v294
        %383 = vst.msk [vmem:[%s364 + $0xc9] sm:$0xff] %vm365, %v295
        %384 = vst.msk [vmem:[%s364 + $0xd9] sm:$0xff] %vm365, %v296
        %385 = vst.msk [vmem:[%s364 + $0xe1] sm:$0xff] %vm365, %v297
        %386 = vst.msk [vmem:[%s364 + $0xf1] sm:$0xff] %vm365, %v298
        %387 = vst.msk [vmem:[%s364 + $0xf9] sm:$0xff] %vm365, %v299
        %388 = vst.msk [vmem:[%s364 + $0x109] sm:$0xff] %vm365, %v300
        %389 = vst.msk [vmem:[%s364 + $0x111] sm:$0xff] %vm365, %v301
        %390 = vst.msk [vmem:[%s364 + $0x121] sm:$0xff] %vm365, %v302
        %391 = vst.msk [vmem:[%s364 + $0x129] sm:$0xff] %vm365, %v303
        %392 = vst.msk [vmem:[%s364 + $0x139] sm:$0xff] %vm365, %v304
        %393 = vst.msk [vmem:[%s364 + $0x141] sm:$0xff] %vm365, %v305
        %394 = vst.msk [vmem:[%s364 + $0x151] sm:$0xff] %vm365, %v306
        %395 = vst.msk [vmem:[%s364 + $0x159] sm:$0xff] %vm365, %v307
        %396 = vst.msk [vmem:[%s364 + $0x169] sm:$0xff] %vm365, %v308
        %397 = vst.msk [vmem:[%s364 + $0x171] sm:$0xff] %vm365, %v309
        %v398 = vld [vmem:[#allocation2] sm:$0xff]
        %v399 = vld [vmem:[#allocation2 + $0x8] sm:$0xff]
        %v400 = vld [vmem:[#allocation2 + $0x18] sm:$0xff]
        %v401 = vld [vmem:[#allocation2 + $0x20] sm:$0xff]
        %v402 = vld [vmem:[#allocation2 + $0x30] sm:$0xff]
        %v403 = vld [vmem:[#allocation2 + $0x38] sm:$0xff]
        %v404 = vld [vmem:[#allocation2 + $0x48] sm:$0xff]
        %v405 = vld [vmem:[#allocation2 + $0x50] sm:$0xff]
        %v406 = vld [vmem:[#allocation2 + $0x60] sm:$0xff]
        %v407 = vld [vmem:[#allocation2 + $0x68] sm:$0xff]
        %v408 = vld [vmem:[#allocation2 + $0x78] sm:$0xff]
        %v409 = vld [vmem:[#allocation2 + $0x80] sm:$0xff]
        %v410 = vld [vmem:[#allocation2 + $0x90] sm:$0xff]
        %v411 = vld [vmem:[#allocation2 + $0x98] sm:$0xff]
        %v412 = vld [vmem:[#allocation2 + $0xa8] sm:$0xff]
        %v413 = vld [vmem:[#allocation2 + $0xb0] sm:$0xff]
        %v414 = vld [vmem:[#allocation2 + $0xc0] sm:$0xff]
        %v415 = vld [vmem:[#allocation2 + $0xc8] sm:$0xff]
        %v416 = vld [vmem:[#allocation2 + $0xd8] sm:$0xff]
        %v417 = vld [vmem:[#allocation2 + $0xe0] sm:$0xff]
        %v418 = vld [vmem:[#allocation2 + $0xf0] sm:$0xff]
        %v419 = vld [vmem:[#allocation2 + $0xf8] sm:$0xff]
        %v420 = vld [vmem:[#allocation2 + $0x108] sm:$0xff]
        %v421 = vld [vmem:[#allocation2 + $0x110] sm:$0xff]
        %v422 = vld [vmem:[#allocation2 + $0x120] sm:$0xff]
        %v423 = vld [vmem:[#allocation2 + $0x128] sm:$0xff]
        %v424 = vld [vmem:[#allocation2 + $0x138] sm:$0xff]
        %v425 = vld [vmem:[#allocation2 + $0x140] sm:$0xff]
        %v426 = vld [vmem:[#allocation2 + $0x150] sm:$0xff]
        %v427 = vld [vmem:[#allocation2 + $0x158] sm:$0xff]
        %v428 = vld [vmem:[#allocation2 + $0x168] sm:$0xff]
        %v429 = vld [vmem:[#allocation2 + $0x170] sm:$0xff]
        %v430 = vpack.c.bf16 %v399, %v398
        %v431 = vpack.c.bf16 %v401, %v400
        %v432 = vpack.c.bf16 %v403, %v402
        %v433 = vpack.c.bf16 %v405, %v404
        %v434 = vpack.c.bf16 %v407, %v406
        %v435 = vpack.c.bf16 %v409, %v408
        %v436 = vpack.c.bf16 %v411, %v410
        %v437 = vpack.c.bf16 %v413, %v412
        %v438 = vpack.c.bf16 %v415, %v414
        %v439 = vpack.c.bf16 %v417, %v416
        %v440 = vpack.c.bf16 %v419, %v418
        %v441 = vpack.c.bf16 %v421, %v420
        %v442 = vpack.c.bf16 %v423, %v422
        %v443 = vpack.c.bf16 %v425, %v424
        %v444 = vpack.c.bf16 %v427, %v426
        %v445 = vpack.c.bf16 %v429, %v428
        %v446 = vld [vmem:[#allocation2 + $0x1] sm:$0xff]
        %v447 = vld [vmem:[#allocation2 + $0x9] sm:$0xff]
        %v448 = vld [vmem:[#allocation2 + $0x19] sm:$0xff]
        %v449 = vld [vmem:[#allocation2 + $0x21] sm:$0xff]
        %v450 = vld [vmem:[#allocation2 + $0x31] sm:$0xff]
        %v451 = vld [vmem:[#allocation2 + $0x39] sm:$0xff]
        %v452 = vld [vmem:[#allocation2 + $0x49] sm:$0xff]
        %v453 = vld [vmem:[#allocation2 + $0x51] sm:$0xff]
        %v454 = vld [vmem:[#allocation2 + $0x61] sm:$0xff]
        %v455 = vld [vmem:[#allocation2 + $0x69] sm:$0xff]
        %v456 = vld [vmem:[#allocation2 + $0x79] sm:$0xff]
        %v457 = vld [vmem:[#allocation2 + $0x81] sm:$0xff]
        %v458 = vld [vmem:[#allocation2 + $0x91] sm:$0xff]
        %v459 = vld [vmem:[#allocation2 + $0x99] sm:$0xff]
        %v460 = vld [vmem:[#allocation2 + $0xa9] sm:$0xff]
        %v461 = vld [vmem:[#allocation2 + $0xb1] sm:$0xff]
        %v462 = vld [vmem:[#allocation2 + $0xc1] sm:$0xff]
        %v463 = vld [vmem:[#allocation2 + $0xc9] sm:$0xff]
        %v464 = vld [vmem:[#allocation2 + $0xd9] sm:$0xff]
        %v465 = vld [vmem:[#allocation2 + $0xe1] sm:$0xff]
        %v466 = vld [vmem:[#allocation2 + $0xf1] sm:$0xff]
        %v467 = vld [vmem:[#allocation2 + $0xf9] sm:$0xff]
        %v468 = vld [vmem:[#allocation2 + $0x109] sm:$0xff]
        %v469 = vld [vmem:[#allocation2 + $0x111] sm:$0xff]
        %v470 = vld [vmem:[#allocation2 + $0x121] sm:$0xff]
        %v471 = vld [vmem:[#allocation2 + $0x129] sm:$0xff]
        %v472 = vld [vmem:[#allocation2 + $0x139] sm:$0xff]
        %v473 = vld [vmem:[#allocation2 + $0x141] sm:$0xff]
        %v474 = vld [vmem:[#allocation2 + $0x151] sm:$0xff]
        %v475 = vld [vmem:[#allocation2 + $0x159] sm:$0xff]
        %v476 = vld [vmem:[#allocation2 + $0x169] sm:$0xff]
        %v477 = vld [vmem:[#allocation2 + $0x171] sm:$0xff]
        %v478 = vpack.c.bf16 %v447, %v446
        %v479 = vpack.c.bf16 %v449, %v448
        %v480 = vpack.c.bf16 %v451, %v450
        %v481 = vpack.c.bf16 %v453, %v452
        %v482 = vpack.c.bf16 %v455, %v454
        %v483 = vpack.c.bf16 %v457, %v456
        %v484 = vpack.c.bf16 %v459, %v458
        %v485 = vpack.c.bf16 %v461, %v460
        %v486 = vpack.c.bf16 %v463, %v462
        %v487 = vpack.c.bf16 %v465, %v464
        %v488 = vpack.c.bf16 %v467, %v466
        %v489 = vpack.c.bf16 %v469, %v468
        %v490 = vpack.c.bf16 %v471, %v470
        %v491 = vpack.c.bf16 %v473, %v472
        %v492 = vpack.c.bf16 %v475, %v474
        %v493 = vpack.c.bf16 %v477, %v476
        %v494 = vld [vmem:[#allocation2 + $0x2] sm:$0xff]
        %v495 = vld [vmem:[#allocation2 + $0xa] sm:$0xff]
        %v496 = vld [vmem:[#allocation2 + $0x1a] sm:$0xff]
        %v497 = vld [vmem:[#allocation2 + $0x22] sm:$0xff]
        %v498 = vld [vmem:[#allocation2 + $0x32] sm:$0xff]
        %v499 = vld [vmem:[#allocation2 + $0x3a] sm:$0xff]
        %v500 = vld [vmem:[#allocation2 + $0x4a] sm:$0xff]
        %v501 = vld [vmem:[#allocation2 + $0x52] sm:$0xff]
        %v502 = vld [vmem:[#allocation2 + $0x62] sm:$0xff]
        %v503 = vld [vmem:[#allocation2 + $0x6a] sm:$0xff]
        %v504 = vld [vmem:[#allocation2 + $0x7a] sm:$0xff]
        %v505 = vld [vmem:[#allocation2 + $0x82] sm:$0xff]
        %v506 = vld [vmem:[#allocation2 + $0x92] sm:$0xff]
        %v507 = vld [vmem:[#allocation2 + $0x9a] sm:$0xff]
        %v508 = vld [vmem:[#allocation2 + $0xaa] sm:$0xff]
        %v509 = vld [vmem:[#allocation2 + $0xb2] sm:$0xff]
        %v510 = vld [vmem:[#allocation2 + $0xc2] sm:$0xff]
        %v511 = vld [vmem:[#allocation2 + $0xca] sm:$0xff]
        %v512 = vld [vmem:[#allocation2 + $0xda] sm:$0xff]
        %v513 = vld [vmem:[#allocation2 + $0xe2] sm:$0xff]
        %v514 = vld [vmem:[#allocation2 + $0xf2] sm:$0xff]
        %v515 = vld [vmem:[#allocation2 + $0xfa] sm:$0xff]
        %v516 = vld [vmem:[#allocation2 + $0x10a] sm:$0xff]
        %v517 = vld [vmem:[#allocation2 + $0x112] sm:$0xff]
        %v518 = vld [vmem:[#allocation2 + $0x122] sm:$0xff]
        %v519 = vld [vmem:[#allocation2 + $0x12a] sm:$0xff]
        %v520 = vld [vmem:[#allocation2 + $0x13a] sm:$0xff]
        %v521 = vld [vmem:[#allocation2 + $0x142] sm:$0xff]
        %v522 = vld [vmem:[#allocation2 + $0x152] sm:$0xff]
        %v523 = vld [vmem:[#allocation2 + $0x15a] sm:$0xff]
        %v524 = vld [vmem:[#allocation2 + $0x16a] sm:$0xff]
        %v525 = vld [vmem:[#allocation2 + $0x172] sm:$0xff]
        %v526 = vpack.c.bf16 %v495, %v494
        %v527 = vpack.c.bf16 %v497, %v496
        %v528 = vpack.c.bf16 %v499, %v498
        %v529 = vpack.c.bf16 %v501, %v500
        %v530 = vpack.c.bf16 %v503, %v502
        %v531 = vpack.c.bf16 %v505, %v504
        %v532 = vpack.c.bf16 %v507, %v506
        %v533 = vpack.c.bf16 %v509, %v508
        %v534 = vpack.c.bf16 %v511, %v510
        %v535 = vpack.c.bf16 %v513, %v512
        %v536 = vpack.c.bf16 %v515, %v514
        %v537 = vpack.c.bf16 %v517, %v516
        %v538 = vpack.c.bf16 %v519, %v518
        %v539 = vpack.c.bf16 %v521, %v520
        %v540 = vpack.c.bf16 %v523, %v522
        %v541 = vpack.c.bf16 %v525, %v524
        %v542 = vld [vmem:[%s364] sm:$0xff]
        %v543 = vld [vmem:[%s364 + $0x8] sm:$0xff]
        %v544 = vld [vmem:[%s364 + $0x18] sm:$0xff]
        %v545 = vld [vmem:[%s364 + $0x20] sm:$0xff]
        %v546 = vld [vmem:[%s364 + $0x30] sm:$0xff]
        %v547 = vld [vmem:[%s364 + $0x38] sm:$0xff]
        %v548 = vld [vmem:[%s364 + $0x48] sm:$0xff]
        %v549 = vld [vmem:[%s364 + $0x50] sm:$0xff]
        %v550 = vld [vmem:[%s364 + $0x60] sm:$0xff]
        %v551 = vld [vmem:[%s364 + $0x68] sm:$0xff]
        %v552 = vld [vmem:[%s364 + $0x78] sm:$0xff]
        %v553 = vld [vmem:[%s364 + $0x80] sm:$0xff]
        %v554 = vld [vmem:[%s364 + $0x90] sm:$0xff]
        %v555 = vld [vmem:[%s364 + $0x98] sm:$0xff]
        %v556 = vld [vmem:[%s364 + $0xa8] sm:$0xff]
        %v557 = vld [vmem:[%s364 + $0xb0] sm:$0xff]
        %v558 = vld [vmem:[%s364 + $0xc0] sm:$0xff]
        %v559 = vld [vmem:[%s364 + $0xc8] sm:$0xff]
        %v560 = vld [vmem:[%s364 + $0xd8] sm:$0xff]
        %v561 = vld [vmem:[%s364 + $0xe0] sm:$0xff]
        %v562 = vld [vmem:[%s364 + $0xf0] sm:$0xff]
        %v563 = vld [vmem:[%s364 + $0xf8] sm:$0xff]
        %v564 = vld [vmem:[%s364 + $0x108] sm:$0xff]
        %v565 = vld [vmem:[%s364 + $0x110] sm:$0xff]
        %v566 = vld [vmem:[%s364 + $0x120] sm:$0xff]
        %v567 = vld [vmem:[%s364 + $0x128] sm:$0xff]
        %v568 = vld [vmem:[%s364 + $0x138] sm:$0xff]
        %v569 = vld [vmem:[%s364 + $0x140] sm:$0xff]
        %v570 = vld [vmem:[%s364 + $0x150] sm:$0xff]
        %v571 = vld [vmem:[%s364 + $0x158] sm:$0xff]
        %v572 = vld [vmem:[%s364 + $0x168] sm:$0xff]
        %v573 = vld [vmem:[%s364 + $0x170] sm:$0xff]
        %v574 = vpack.c.bf16 %v543, %v542
        %v575 = vpack.c.bf16 %v545, %v544
        %v576 = vpack.c.bf16 %v547, %v546
        %v577 = vpack.c.bf16 %v549, %v548
        %v578 = vpack.c.bf16 %v551, %v550
        %v579 = vpack.c.bf16 %v553, %v552
        %v580 = vpack.c.bf16 %v555, %v554
        %v581 = vpack.c.bf16 %v557, %v556
        %v582 = vpack.c.bf16 %v559, %v558
        %v583 = vpack.c.bf16 %v561, %v560
        %v584 = vpack.c.bf16 %v563, %v562
        %v585 = vpack.c.bf16 %v565, %v564
        %v586 = vpack.c.bf16 %v567, %v566
        %v587 = vpack.c.bf16 %v569, %v568
        %v588 = vpack.c.bf16 %v571, %v570
        %v589 = vpack.c.bf16 %v573, %v572
        %v590 = vld [vmem:[%s364 + $0x1] sm:$0xff]
        %v591 = vld [vmem:[%s364 + $0x9] sm:$0xff]
        %v592 = vld [vmem:[%s364 + $0x19] sm:$0xff]
        %v593 = vld [vmem:[%s364 + $0x21] sm:$0xff]
        %v594 = vld [vmem:[%s364 + $0x31] sm:$0xff]
        %v595 = vld [vmem:[%s364 + $0x39] sm:$0xff]
        %v596 = vld [vmem:[%s364 + $0x49] sm:$0xff]
        %v597 = vld [vmem:[%s364 + $0x51] sm:$0xff]
        %v598 = vld [vmem:[%s364 + $0x61] sm:$0xff]
        %v599 = vld [vmem:[%s364 + $0x69] sm:$0xff]
        %v600 = vld [vmem:[%s364 + $0x79] sm:$0xff]
        %v601 = vld [vmem:[%s364 + $0x81] sm:$0xff]
        %v602 = vld [vmem:[%s364 + $0x91] sm:$0xff]
        %v603 = vld [vmem:[%s364 + $0x99] sm:$0xff]
        %v604 = vld [vmem:[%s364 + $0xa9] sm:$0xff]
        %v605 = vld [vmem:[%s364 + $0xb1] sm:$0xff]
        %v606 = vld [vmem:[%s364 + $0xc1] sm:$0xff]
        %v607 = vld [vmem:[%s364 + $0xc9] sm:$0xff]
        %v608 = vld [vmem:[%s364 + $0xd9] sm:$0xff]
        %v609 = vld [vmem:[%s364 + $0xe1] sm:$0xff]
        %v610 = vld [vmem:[%s364 + $0xf1] sm:$0xff]
        %v611 = vld [vmem:[%s364 + $0xf9] sm:$0xff]
        %v612 = vld [vmem:[%s364 + $0x109] sm:$0xff]
        %v613 = vld [vmem:[%s364 + $0x111] sm:$0xff]
        %v614 = vld [vmem:[%s364 + $0x121] sm:$0xff]
        %v615 = vld [vmem:[%s364 + $0x129] sm:$0xff]
        %v616 = vld [vmem:[%s364 + $0x139] sm:$0xff]
        %v617 = vld [vmem:[%s364 + $0x141] sm:$0xff]
        %v618 = vld [vmem:[%s364 + $0x151] sm:$0xff]
        %v619 = vld [vmem:[%s364 + $0x159] sm:$0xff]
        %v620 = vld [vmem:[%s364 + $0x169] sm:$0xff]
        %v621 = vld [vmem:[%s364 + $0x171] sm:$0xff]
        %v622 = vpack.c.bf16 %v591, %v590
        %v623 = vpack.c.bf16 %v593, %v592
        %v624 = vpack.c.bf16 %v595, %v594
        %v625 = vpack.c.bf16 %v597, %v596
        %v626 = vpack.c.bf16 %v599, %v598
        %v627 = vpack.c.bf16 %v601, %v600
        %v628 = vpack.c.bf16 %v603, %v602
        %v629 = vpack.c.bf16 %v605, %v604
        %v630 = vpack.c.bf16 %v607, %v606
        %v631 = vpack.c.bf16 %v609, %v608
        %v632 = vpack.c.bf16 %v611, %v610
        %v633 = vpack.c.bf16 %v613, %v612
        %v634 = vpack.c.bf16 %v615, %v614
        %v635 = vpack.c.bf16 %v617, %v616
        %v636 = vpack.c.bf16 %v619, %v618
        %v637 = vpack.c.bf16 %v621, %v620
        %v638 = vld [vmem:[%s364 + $0x2] sm:$0xff]
        %v639 = vld [vmem:[%s364 + $0xa] sm:$0xff]
        %v640 = vld [vmem:[%s364 + $0x1a] sm:$0xff]
        %v641 = vld [vmem:[%s364 + $0x22] sm:$0xff]
        %v642 = vld [vmem:[%s364 + $0x32] sm:$0xff]
        %v643 = vld [vmem:[%s364 + $0x3a] sm:$0xff]
        %v644 = vld [vmem:[%s364 + $0x4a] sm:$0xff]
        %v645 = vld [vmem:[%s364 + $0x52] sm:$0xff]
        %v646 = vld [vmem:[%s364 + $0x62] sm:$0xff]
        %v647 = vld [vmem:[%s364 + $0x6a] sm:$0xff]
        %v648 = vld [vmem:[%s364 + $0x7a] sm:$0xff]
        %v649 = vld [vmem:[%s364 + $0x82] sm:$0xff]
        %v650 = vld [vmem:[%s364 + $0x92] sm:$0xff]
        %v651 = vld [vmem:[%s364 + $0x9a] sm:$0xff]
        %v652 = vld [vmem:[%s364 + $0xaa] sm:$0xff]
        %v653 = vld [vmem:[%s364 + $0xb2] sm:$0xff]
        %v654 = vld [vmem:[%s364 + $0xc2] sm:$0xff]
        %v655 = vld [vmem:[%s364 + $0xca] sm:$0xff]
        %v656 = vld [vmem:[%s364 + $0xda] sm:$0xff]
        %v657 = vld [vmem:[%s364 + $0xe2] sm:$0xff]
        %v658 = vld [vmem:[%s364 + $0xf2] sm:$0xff]
        %v659 = vld [vmem:[%s364 + $0xfa] sm:$0xff]
        %v660 = vld [vmem:[%s364 + $0x10a] sm:$0xff]
        %v661 = vld [vmem:[%s364 + $0x112] sm:$0xff]
        %v662 = vld [vmem:[%s364 + $0x122] sm:$0xff]
        %v663 = vld [vmem:[%s364 + $0x12a] sm:$0xff]
        %v664 = vld [vmem:[%s364 + $0x13a] sm:$0xff]
        %v665 = vld [vmem:[%s364 + $0x142] sm:$0xff]
        %v666 = vld [vmem:[%s364 + $0x152] sm:$0xff]
        %v667 = vld [vmem:[%s364 + $0x15a] sm:$0xff]
        %v668 = vld [vmem:[%s364 + $0x16a] sm:$0xff]
        %v669 = vld [vmem:[%s364 + $0x172] sm:$0xff]
        %v670 = vpack.c.bf16 %v639, %v638
        %v671 = vpack.c.bf16 %v641, %v640
        %v672 = vpack.c.bf16 %v643, %v642
        %v673 = vpack.c.bf16 %v645, %v644
        %v674 = vpack.c.bf16 %v647, %v646
        %v675 = vpack.c.bf16 %v649, %v648
        %v676 = vpack.c.bf16 %v651, %v650
        %v677 = vpack.c.bf16 %v653, %v652
        %v678 = vpack.c.bf16 %v655, %v654
        %v679 = vpack.c.bf16 %v657, %v656
        %v680 = vpack.c.bf16 %v659, %v658
        %v681 = vpack.c.bf16 %v661, %v660
        %v682 = vpack.c.bf16 %v663, %v662
        %v683 = vpack.c.bf16 %v665, %v664
        %v684 = vpack.c.bf16 %v667, %v666
        %v685 = vpack.c.bf16 %v669, %v668
        %s686 = scalar_lea.vmem [#allocation2], 48
        %v687 = vld [vmem:[%s686] sm:$0xff]
        %v688 = vld [vmem:[%s686 + $0x8] sm:$0xff]
        %v689 = vld [vmem:[%s686 + $0x18] sm:$0xff]
        %v690 = vld [vmem:[%s686 + $0x20] sm:$0xff]
        %v691 = vld [vmem:[%s686 + $0x30] sm:$0xff]
        %v692 = vld [vmem:[%s686 + $0x38] sm:$0xff]
        %v693 = vld [vmem:[%s686 + $0x48] sm:$0xff]
        %v694 = vld [vmem:[%s686 + $0x50] sm:$0xff]
        %v695 = vld [vmem:[%s686 + $0x60] sm:$0xff]
        %v696 = vld [vmem:[%s686 + $0x68] sm:$0xff]
        %v697 = vld [vmem:[%s686 + $0x78] sm:$0xff]
        %v698 = vld [vmem:[%s686 + $0x80] sm:$0xff]
        %v699 = vld [vmem:[%s686 + $0x90] sm:$0xff]
        %v700 = vld [vmem:[%s686 + $0x98] sm:$0xff]
        %v701 = vld [vmem:[%s686 + $0xa8] sm:$0xff]
        %v702 = vld [vmem:[%s686 + $0xb0] sm:$0xff]
        %v703 = vld [vmem:[%s686 + $0xc0] sm:$0xff]
        %v704 = vld [vmem:[%s686 + $0xc8] sm:$0xff]
        %v705 = vld [vmem:[%s686 + $0xd8] sm:$0xff]
        %v706 = vld [vmem:[%s686 + $0xe0] sm:$0xff]
        %v707 = vld [vmem:[%s686 + $0xf0] sm:$0xff]
        %v708 = vld [vmem:[%s686 + $0xf8] sm:$0xff]
        %v709 = vld [vmem:[%s686 + $0x108] sm:$0xff]
        %v710 = vld [vmem:[%s686 + $0x110] sm:$0xff]
        %v711 = vld [vmem:[%s686 + $0x120] sm:$0xff]
        %v712 = vld [vmem:[%s686 + $0x128] sm:$0xff]
        %v713 = vld [vmem:[%s686 + $0x138] sm:$0xff]
        %v714 = vld [vmem:[%s686 + $0x140] sm:$0xff]
        %v715 = vld [vmem:[%s686 + $0x150] sm:$0xff]
        %v716 = vld [vmem:[%s686 + $0x158] sm:$0xff]
        %v717 = vld [vmem:[%s686 + $0x168] sm:$0xff]
        %v718 = vld [vmem:[%s686 + $0x170] sm:$0xff]
        %v719 = vpack.c.bf16 %v688, %v687
        %v720 = vpack.c.bf16 %v690, %v689
        %v721 = vpack.c.bf16 %v692, %v691
        %v722 = vpack.c.bf16 %v694, %v693
        %v723 = vpack.c.bf16 %v696, %v695
        %v724 = vpack.c.bf16 %v698, %v697
        %v725 = vpack.c.bf16 %v700, %v699
        %v726 = vpack.c.bf16 %v702, %v701
        %v727 = vpack.c.bf16 %v704, %v703
        %v728 = vpack.c.bf16 %v706, %v705
        %v729 = vpack.c.bf16 %v708, %v707
        %v730 = vpack.c.bf16 %v710, %v709
        %v731 = vpack.c.bf16 %v712, %v711
        %v732 = vpack.c.bf16 %v714, %v713
        %v733 = vpack.c.bf16 %v716, %v715
        %v734 = vpack.c.bf16 %v718, %v717
        %v735 = vld [vmem:[%s686 + $0x1] sm:$0xff]
        %v736 = vld [vmem:[%s686 + $0x9] sm:$0xff]
        %v737 = vld [vmem:[%s686 + $0x19] sm:$0xff]
        %v738 = vld [vmem:[%s686 + $0x21] sm:$0xff]
        %v739 = vld [vmem:[%s686 + $0x31] sm:$0xff]
        %v740 = vld [vmem:[%s686 + $0x39] sm:$0xff]
        %v741 = vld [vmem:[%s686 + $0x49] sm:$0xff]
        %v742 = vld [vmem:[%s686 + $0x51] sm:$0xff]
        %v743 = vld [vmem:[%s686 + $0x61] sm:$0xff]
        %v744 = vld [vmem:[%s686 + $0x69] sm:$0xff]
        %v745 = vld [vmem:[%s686 + $0x79] sm:$0xff]
        %v746 = vld [vmem:[%s686 + $0x81] sm:$0xff]
        %v747 = vld [vmem:[%s686 + $0x91] sm:$0xff]
        %v748 = vld [vmem:[%s686 + $0x99] sm:$0xff]
        %v749 = vld [vmem:[%s686 + $0xa9] sm:$0xff]
        %v750 = vld [vmem:[%s686 + $0xb1] sm:$0xff]
        %v751 = vld [vmem:[%s686 + $0xc1] sm:$0xff]
        %v752 = vld [vmem:[%s686 + $0xc9] sm:$0xff]
        %v753 = vld [vmem:[%s686 + $0xd9] sm:$0xff]
        %v754 = vld [vmem:[%s686 + $0xe1] sm:$0xff]
        %v755 = vld [vmem:[%s686 + $0xf1] sm:$0xff]
        %v756 = vld [vmem:[%s686 + $0xf9] sm:$0xff]
        %v757 = vld [vmem:[%s686 + $0x109] sm:$0xff]
        %v758 = vld [vmem:[%s686 + $0x111] sm:$0xff]
        %v759 = vld [vmem:[%s686 + $0x121] sm:$0xff]
        %v760 = vld [vmem:[%s686 + $0x129] sm:$0xff]
        %v761 = vld [vmem:[%s686 + $0x139] sm:$0xff]
        %v762 = vld [vmem:[%s686 + $0x141] sm:$0xff]
        %v763 = vld [vmem:[%s686 + $0x151] sm:$0xff]
        %v764 = vld [vmem:[%s686 + $0x159] sm:$0xff]
        %v765 = vld [vmem:[%s686 + $0x169] sm:$0xff]
        %v766 = vld [vmem:[%s686 + $0x171] sm:$0xff]
        %v767 = vpack.c.bf16 %v736, %v735
        %v768 = vpack.c.bf16 %v738, %v737
        %v769 = vpack.c.bf16 %v740, %v739
        %v770 = vpack.c.bf16 %v742, %v741
        %v771 = vpack.c.bf16 %v744, %v743
        %v772 = vpack.c.bf16 %v746, %v745
        %v773 = vpack.c.bf16 %v748, %v747
        %v774 = vpack.c.bf16 %v750, %v749
        %v775 = vpack.c.bf16 %v752, %v751
        %v776 = vpack.c.bf16 %v754, %v753
        %v777 = vpack.c.bf16 %v756, %v755
        %v778 = vpack.c.bf16 %v758, %v757
        %v779 = vpack.c.bf16 %v760, %v759
        %v780 = vpack.c.bf16 %v762, %v761
        %v781 = vpack.c.bf16 %v764, %v763
        %v782 = vpack.c.bf16 %v766, %v765
        %v783 = vld [vmem:[%s686 + $0x2] sm:$0xff]
        %v784 = vld [vmem:[%s686 + $0xa] sm:$0xff]
        %v785 = vld [vmem:[%s686 + $0x1a] sm:$0xff]
        %v786 = vld [vmem:[%s686 + $0x22] sm:$0xff]
        %v787 = vld [vmem:[%s686 + $0x32] sm:$0xff]
        %v788 = vld [vmem:[%s686 + $0x3a] sm:$0xff]
        %v789 = vld [vmem:[%s686 + $0x4a] sm:$0xff]
        %v790 = vld [vmem:[%s686 + $0x52] sm:$0xff]
        %v791 = vld [vmem:[%s686 + $0x62] sm:$0xff]
        %v792 = vld [vmem:[%s686 + $0x6a] sm:$0xff]
        %v793 = vld [vmem:[%s686 + $0x7a] sm:$0xff]
        %v794 = vld [vmem:[%s686 + $0x82] sm:$0xff]
        %v795 = vld [vmem:[%s686 + $0x92] sm:$0xff]
        %v796 = vld [vmem:[%s686 + $0x9a] sm:$0xff]
        %v797 = vld [vmem:[%s686 + $0xaa] sm:$0xff]
        %v798 = vld [vmem:[%s686 + $0xb2] sm:$0xff]
        %v799 = vld [vmem:[%s686 + $0xc2] sm:$0xff]
        %v800 = vld [vmem:[%s686 + $0xca] sm:$0xff]
        %v801 = vld [vmem:[%s686 + $0xda] sm:$0xff]
        %v802 = vld [vmem:[%s686 + $0xe2] sm:$0xff]
        %v803 = vld [vmem:[%s686 + $0xf2] sm:$0xff]
        %v804 = vld [vmem:[%s686 + $0xfa] sm:$0xff]
        %v805 = vld [vmem:[%s686 + $0x10a] sm:$0xff]
        %v806 = vld [vmem:[%s686 + $0x112] sm:$0xff]
        %v807 = vld [vmem:[%s686 + $0x122] sm:$0xff]
        %v808 = vld [vmem:[%s686 + $0x12a] sm:$0xff]
        %v809 = vld [vmem:[%s686 + $0x13a] sm:$0xff]
        %v810 = vld [vmem:[%s686 + $0x142] sm:$0xff]
        %v811 = vld [vmem:[%s686 + $0x152] sm:$0xff]
        %v812 = vld [vmem:[%s686 + $0x15a] sm:$0xff]
        %v813 = vld [vmem:[%s686 + $0x16a] sm:$0xff]
        %v814 = vld [vmem:[%s686 + $0x172] sm:$0xff]
        %v815 = vpack.c.bf16 %v784, %v783
        %v816 = vpack.c.bf16 %v786, %v785
        %v817 = vpack.c.bf16 %v788, %v787
        %v818 = vpack.c.bf16 %v790, %v789
        %v819 = vpack.c.bf16 %v792, %v791
        %v820 = vpack.c.bf16 %v794, %v793
        %v821 = vpack.c.bf16 %v796, %v795
        %v822 = vpack.c.bf16 %v798, %v797
        %v823 = vpack.c.bf16 %v800, %v799
        %v824 = vpack.c.bf16 %v802, %v801
        %v825 = vpack.c.bf16 %v804, %v803
        %v826 = vpack.c.bf16 %v806, %v805
        %v827 = vpack.c.bf16 %v808, %v807
        %v828 = vpack.c.bf16 %v810, %v809
        %v829 = vpack.c.bf16 %v812, %v811
        %v830 = vpack.c.bf16 %v814, %v813
        %v831 = vld [vmem:[%s1] sm:$0xf]
        %v832 = vld [vmem:[%s1 + $0x4] sm:$0xf]
        %v833 = vld [vmem:[%s1 + $0x8] sm:$0xf]
        %v834 = vld [vmem:[%s1 + $0xc] sm:$0xf]
        %v835 = vld [vmem:[%s1 + $0x10] sm:$0xf]
        %v836 = vld [vmem:[%s1 + $0x14] sm:$0xf]
        %v837 = vld [vmem:[%s1 + $0x18] sm:$0xf]
        %v838 = vld [vmem:[%s1 + $0x1c] sm:$0xf]
        %v839 = vld [vmem:[%s1 + $0x20] sm:$0xf]
        %v840 = vld [vmem:[%s1 + $0x24] sm:$0xf]
        %v841 = vld [vmem:[%s1 + $0x28] sm:$0xf]
        %v842 = vld [vmem:[%s1 + $0x2c] sm:$0xf]
        %v843 = vld [vmem:[%s1 + $0x30] sm:$0xf]
        %v844 = vld [vmem:[%s1 + $0x34] sm:$0xf]
        %v845 = vld [vmem:[%s1 + $0x38] sm:$0xf]
        %v846 = vld [vmem:[%s1 + $0x3c] sm:$0xf]
        %v847 = vld [vmem:[%s1 + $0x40] sm:$0xf]
        %v848 = vld [vmem:[%s1 + $0x44] sm:$0xf]
        %v849 = vld [vmem:[%s1 + $0x48] sm:$0xf]
        %v850 = vld [vmem:[%s1 + $0x4c] sm:$0xf]
        %v851 = vld [vmem:[%s1 + $0x50] sm:$0xf]
        %v852 = vld [vmem:[%s1 + $0x54] sm:$0xf]
        %v853 = vld [vmem:[%s1 + $0x58] sm:$0xf]
        %v854 = vld [vmem:[%s1 + $0x5c] sm:$0xf]
        %v855 = vld [vmem:[%s1 + $0x60] sm:$0xf]
        %v856 = vld [vmem:[%s1 + $0x64] sm:$0xf]
        %v857 = vld [vmem:[%s1 + $0x68] sm:$0xf]
        %v858 = vld [vmem:[%s1 + $0x6c] sm:$0xf]
        %v859 = vld [vmem:[%s1 + $0x70] sm:$0xf]
        %v860 = vld [vmem:[%s1 + $0x74] sm:$0xf]
        %v861 = vld [vmem:[%s1 + $0x78] sm:$0xf]
        %v862 = vld [vmem:[%s1 + $0x7c] sm:$0xf]
        %v863 = vld [vmem:[%s1 + $0x80] sm:$0xf]
        %v864 = vld [vmem:[%s1 + $0x84] sm:$0xf]
        %v865 = vld [vmem:[%s1 + $0x88] sm:$0xf]
        %v866 = vld [vmem:[%s1 + $0x8c] sm:$0xf]
        %v867 = vld [vmem:[%s1 + $0x90] sm:$0xf]
        %v868 = vld [vmem:[%s1 + $0x94] sm:$0xf]
        %v869 = vld [vmem:[%s1 + $0x98] sm:$0xf]
        %v870 = vld [vmem:[%s1 + $0x9c] sm:$0xf]
        %v871 = vld [vmem:[%s1 + $0xa0] sm:$0xf]
        %v872 = vld [vmem:[%s1 + $0xa4] sm:$0xf]
        %v873 = vld [vmem:[%s1 + $0xa8] sm:$0xf]
        %v874 = vld [vmem:[%s1 + $0xac] sm:$0xf]
        %v875 = vld [vmem:[%s1 + $0xb0] sm:$0xf]
        %v876 = vld [vmem:[%s1 + $0xb4] sm:$0xf]
        %v877 = vld [vmem:[%s1 + $0xb8] sm:$0xf]
        %v878 = vld [vmem:[%s1 + $0xbc] sm:$0xf]
        %v879 = vld [vmem:[%s1 + $0xc0] sm:$0xf]
        %v880 = vld [vmem:[%s1 + $0xc4] sm:$0xf]
        %v881 = vld [vmem:[%s1 + $0xc8] sm:$0xf]
        %v882 = vld [vmem:[%s1 + $0xcc] sm:$0xf]
        %v883 = vld [vmem:[%s1 + $0xd0] sm:$0xf]
        %v884 = vld [vmem:[%s1 + $0xd4] sm:$0xf]
        %v885 = vld [vmem:[%s1 + $0xd8] sm:$0xf]
        %v886 = vld [vmem:[%s1 + $0xdc] sm:$0xf]
        %v887 = vld [vmem:[%s1 + $0xe0] sm:$0xf]
        %v888 = vld [vmem:[%s1 + $0xe4] sm:$0xf]
        %v889 = vld [vmem:[%s1 + $0xe8] sm:$0xf]
        %v890 = vld [vmem:[%s1 + $0xec] sm:$0xf]
        %v891 = vld [vmem:[%s1 + $0xf0] sm:$0xf]
        %v892 = vld [vmem:[%s1 + $0xf4] sm:$0xf]
        %v893 = vld [vmem:[%s1 + $0xf8] sm:$0xf]
        %v894 = vld [vmem:[%s1 + $0xfc] sm:$0xf]
        %v895 = vld [vmem:[%s1 + $0x100] sm:$0xf]
        %v896 = vld [vmem:[%s1 + $0x104] sm:$0xf]
        %v897 = vld [vmem:[%s1 + $0x108] sm:$0xf]
        %v898 = vld [vmem:[%s1 + $0x10c] sm:$0xf]
        %v899 = vld [vmem:[%s1 + $0x110] sm:$0xf]
        %v900 = vld [vmem:[%s1 + $0x114] sm:$0xf]
        %v901 = vld [vmem:[%s1 + $0x118] sm:$0xf]
        %v902 = vld [vmem:[%s1 + $0x11c] sm:$0xf]
        %v903 = vld [vmem:[%s1 + $0x120] sm:$0xf]
        %v904 = vld [vmem:[%s1 + $0x124] sm:$0xf]
        %v905 = vld [vmem:[%s1 + $0x128] sm:$0xf]
        %v906 = vld [vmem:[%s1 + $0x12c] sm:$0xf]
        %v907 = vld [vmem:[%s1 + $0x130] sm:$0xf]
        %v908 = vld [vmem:[%s1 + $0x134] sm:$0xf]
        %v909 = vld [vmem:[%s1 + $0x138] sm:$0xf]
        %v910 = vld [vmem:[%s1 + $0x13c] sm:$0xf]
        %v911 = vld [vmem:[%s1 + $0x140] sm:$0xf]
        %v912 = vld [vmem:[%s1 + $0x144] sm:$0xf]
        %v913 = vld [vmem:[%s1 + $0x148] sm:$0xf]
        %v914 = vld [vmem:[%s1 + $0x14c] sm:$0xf]
        %v915 = vld [vmem:[%s1 + $0x150] sm:$0xf]
        %v916 = vld [vmem:[%s1 + $0x154] sm:$0xf]
        %v917 = vld [vmem:[%s1 + $0x158] sm:$0xf]
        %v918 = vld [vmem:[%s1 + $0x15c] sm:$0xf]
        %v919 = vld [vmem:[%s1 + $0x160] sm:$0xf]
        %v920 = vld [vmem:[%s1 + $0x164] sm:$0xf]
        %v921 = vld [vmem:[%s1 + $0x168] sm:$0xf]
        %v922 = vld [vmem:[%s1 + $0x16c] sm:$0xf]
        %v923 = vld [vmem:[%s1 + $0x170] sm:$0xf]
        %v924 = vld [vmem:[%s1 + $0x174] sm:$0xf]
        %v925 = vld [vmem:[%s1 + $0x178] sm:$0xf]
        %v926 = vld [vmem:[%s1 + $0x17c] sm:$0xf]
        %v927 = vld [vmem:[%s1 + $0x180] sm:$0xf]
        %v928 = vld [vmem:[%s1 + $0x184] sm:$0xf]
        %v929 = vld [vmem:[%s1 + $0x188] sm:$0xf]
        %v930 = vld [vmem:[%s1 + $0x18c] sm:$0xf]
        %v931 = vld [vmem:[%s1 + $0x190] sm:$0xf]
        %v932 = vld [vmem:[%s1 + $0x194] sm:$0xf]
        %v933 = vld [vmem:[%s1 + $0x198] sm:$0xf]
        %v934 = vld [vmem:[%s1 + $0x19c] sm:$0xf]
        %v935 = vld [vmem:[%s1 + $0x1a0] sm:$0xf]
        %v936 = vld [vmem:[%s1 + $0x1a4] sm:$0xf]
        %v937 = vld [vmem:[%s1 + $0x1a8] sm:$0xf]
        %v938 = vld [vmem:[%s1 + $0x1ac] sm:$0xf]
        %v939 = vld [vmem:[%s1 + $0x1b0] sm:$0xf]
        %v940 = vld [vmem:[%s1 + $0x1b4] sm:$0xf]
        %v941 = vld [vmem:[%s1 + $0x1b8] sm:$0xf]
        %v942 = vld [vmem:[%s1 + $0x1bc] sm:$0xf]
        %v943 = vld [vmem:[%s1 + $0x1c0] sm:$0xf]
        %v944 = vld [vmem:[%s1 + $0x1c4] sm:$0xf]
        %v945 = vld [vmem:[%s1 + $0x1c8] sm:$0xf]
        %v946 = vld [vmem:[%s1 + $0x1cc] sm:$0xf]
        %v947 = vld [vmem:[%s1 + $0x1d0] sm:$0xf]
        %v948 = vld [vmem:[%s1 + $0x1d4] sm:$0xf]
        %v949 = vld [vmem:[%s1 + $0x1d8] sm:$0xf]
        %v950 = vld [vmem:[%s1 + $0x1dc] sm:$0xf]
        %v951 = vld [vmem:[%s1 + $0x1e0] sm:$0xf]
        %v952 = vld [vmem:[%s1 + $0x1e4] sm:$0xf]
        %v953 = vld [vmem:[%s1 + $0x1e8] sm:$0xf]
        %v954 = vld [vmem:[%s1 + $0x1ec] sm:$0xf]
        %v955 = vld [vmem:[%s1 + $0x1f0] sm:$0xf]
        %v956 = vld [vmem:[%s1 + $0x1f4] sm:$0xf]
        %v957 = vld [vmem:[%s1 + $0x1f8] sm:$0xf]
        %v958 = vld [vmem:[%s1 + $0x1fc] sm:$0xf]
        %v959 = vld [vmem:[%s1 + $0x200] sm:$0xf]
        %v960 = vld [vmem:[%s1 + $0x204] sm:$0xf]
        %v961 = vld [vmem:[%s1 + $0x208] sm:$0xf]
        %v962 = vld [vmem:[%s1 + $0x20c] sm:$0xf]
        %v963 = vld [vmem:[%s1 + $0x210] sm:$0xf]
        %v964 = vld [vmem:[%s1 + $0x214] sm:$0xf]
        %v965 = vld [vmem:[%s1 + $0x218] sm:$0xf]
        %v966 = vld [vmem:[%s1 + $0x21c] sm:$0xf]
        %v967 = vld [vmem:[%s1 + $0x220] sm:$0xf]
        %v968 = vld [vmem:[%s1 + $0x224] sm:$0xf]
        %v969 = vld [vmem:[%s1 + $0x228] sm:$0xf]
        %v970 = vld [vmem:[%s1 + $0x22c] sm:$0xf]
        %v971 = vld [vmem:[%s1 + $0x230] sm:$0xf]
        %v972 = vld [vmem:[%s1 + $0x234] sm:$0xf]
        %v973 = vld [vmem:[%s1 + $0x238] sm:$0xf]
        %v974 = vld [vmem:[%s1 + $0x23c] sm:$0xf]
        %v975 = vld [vmem:[%s2] sm:$0x1]
        %v977 = vlaneseq
        %v978 = vshrl.u32 %v977, 7
        %v979 = vsub.s32 0, %v978
        %v980 = vrot.slane %v975, %v979
        %v1126 = vunpack.c.l.b16 %v831
        %v1127 = vunpack.c.l.b16 %v832
        %v1128 = vunpack.c.l.b16 %v833
        %v1129 = vunpack.c.l.b16 %v834
        %v1130 = vunpack.c.l.b16 %v835
        %v1131 = vunpack.c.l.b16 %v836
        %v1132 = vunpack.c.l.b16 %v837
        %v1133 = vunpack.c.l.b16 %v838
        %v1134 = vunpack.c.l.b16 %v839
        %v1135 = vunpack.c.l.b16 %v840
        %v1136 = vunpack.c.l.b16 %v841
        %v1137 = vunpack.c.l.b16 %v842
        %v1138 = vunpack.c.l.b16 %v843
        %v1139 = vunpack.c.l.b16 %v844
        %v1140 = vunpack.c.l.b16 %v845
        %v1141 = vunpack.c.l.b16 %v846
        %v1142 = vunpack.c.l.b16 %v847
        %v1143 = vunpack.c.l.b16 %v848
        %v1144 = vunpack.c.l.b16 %v849
        %v1145 = vunpack.c.l.b16 %v850
        %v1146 = vunpack.c.l.b16 %v851
        %v1147 = vunpack.c.l.b16 %v852
        %v1148 = vunpack.c.l.b16 %v853
        %v1149 = vunpack.c.l.b16 %v854
        %v1150 = vunpack.c.l.b16 %v855
        %v1151 = vunpack.c.l.b16 %v856
        %v1152 = vunpack.c.l.b16 %v857
        %v1153 = vunpack.c.l.b16 %v858
        %v1154 = vunpack.c.l.b16 %v859
        %v1155 = vunpack.c.l.b16 %v860
        %v1156 = vunpack.c.l.b16 %v861
        %v1157 = vunpack.c.l.b16 %v862
        %v1158 = vunpack.c.l.b16 %v863
        %v1159 = vunpack.c.l.b16 %v864
        %v1160 = vunpack.c.l.b16 %v865
        %v1161 = vunpack.c.l.b16 %v866
        %v1162 = vunpack.c.l.b16 %v867
        %v1163 = vunpack.c.l.b16 %v868
        %v1164 = vunpack.c.l.b16 %v869
        %v1165 = vunpack.c.l.b16 %v870
        %v1166 = vunpack.c.l.b16 %v871
        %v1167 = vunpack.c.l.b16 %v872
        %v1168 = vunpack.c.l.b16 %v873
        %v1169 = vunpack.c.l.b16 %v874
        %v1170 = vunpack.c.l.b16 %v875
        %v1171 = vunpack.c.l.b16 %v876
        %v1172 = vunpack.c.l.b16 %v877
        %v1173 = vunpack.c.l.b16 %v878
        %v1174 = vunpack.c.l.b16 %v879
        %v1175 = vunpack.c.l.b16 %v880
        %v1176 = vunpack.c.l.b16 %v881
        %v1177 = vunpack.c.l.b16 %v882
        %v1178 = vunpack.c.l.b16 %v883
        %v1179 = vunpack.c.l.b16 %v884
        %v1180 = vunpack.c.l.b16 %v885
        %v1181 = vunpack.c.l.b16 %v886
        %v1182 = vunpack.c.l.b16 %v887
        %v1183 = vunpack.c.l.b16 %v888
        %v1184 = vunpack.c.l.b16 %v889
        %v1185 = vunpack.c.l.b16 %v890
        %v1186 = vunpack.c.l.b16 %v891
        %v1187 = vunpack.c.l.b16 %v892
        %v1188 = vunpack.c.l.b16 %v893
        %v1189 = vunpack.c.l.b16 %v894
        %v1190 = vunpack.c.l.b16 %v895
        %v1191 = vunpack.c.l.b16 %v896
        %v1192 = vunpack.c.l.b16 %v897
        %v1193 = vunpack.c.l.b16 %v898
        %v1194 = vunpack.c.l.b16 %v899
        %v1195 = vunpack.c.l.b16 %v900
        %v1196 = vunpack.c.l.b16 %v901
        %v1197 = vunpack.c.l.b16 %v902
        %v1198 = vunpack.c.l.b16 %v903
        %v1199 = vunpack.c.l.b16 %v904
        %v1200 = vunpack.c.l.b16 %v905
        %v1201 = vunpack.c.l.b16 %v906
        %v1202 = vunpack.c.l.b16 %v907
        %v1203 = vunpack.c.l.b16 %v908
        %v1204 = vunpack.c.l.b16 %v909
        %v1205 = vunpack.c.l.b16 %v910
        %v1206 = vunpack.c.l.b16 %v911
        %v1207 = vunpack.c.l.b16 %v912
        %v1208 = vunpack.c.l.b16 %v913
        %v1209 = vunpack.c.l.b16 %v914
        %v1210 = vunpack.c.l.b16 %v915
        %v1211 = vunpack.c.l.b16 %v916
        %v1212 = vunpack.c.l.b16 %v917
        %v1213 = vunpack.c.l.b16 %v918
        %v1214 = vunpack.c.l.b16 %v919
        %v1215 = vunpack.c.l.b16 %v920
        %v1216 = vunpack.c.l.b16 %v921
        %v1217 = vunpack.c.l.b16 %v922
        %v1218 = vunpack.c.l.b16 %v923
        %v1219 = vunpack.c.l.b16 %v924
        %v1220 = vunpack.c.l.b16 %v925
        %v1221 = vunpack.c.l.b16 %v926
        %v1222 = vunpack.c.l.b16 %v927
        %v1223 = vunpack.c.l.b16 %v928
        %v1224 = vunpack.c.l.b16 %v929
        %v1225 = vunpack.c.l.b16 %v930
        %v1226 = vunpack.c.l.b16 %v931
        %v1227 = vunpack.c.l.b16 %v932
        %v1228 = vunpack.c.l.b16 %v933
        %v1229 = vunpack.c.l.b16 %v934
        %v1230 = vunpack.c.l.b16 %v935
        %v1231 = vunpack.c.l.b16 %v936
        %v1232 = vunpack.c.l.b16 %v937
        %v1233 = vunpack.c.l.b16 %v938
        %v1234 = vunpack.c.l.b16 %v939
        %v1235 = vunpack.c.l.b16 %v940
        %v1236 = vunpack.c.l.b16 %v941
        %v1237 = vunpack.c.l.b16 %v942
        %v1238 = vunpack.c.l.b16 %v943
        %v1239 = vunpack.c.l.b16 %v944
        %v1240 = vunpack.c.l.b16 %v945
        %v1241 = vunpack.c.l.b16 %v946
        %v1242 = vunpack.c.l.b16 %v947
        %v1243 = vunpack.c.l.b16 %v948
        %v1244 = vunpack.c.l.b16 %v949
        %v1245 = vunpack.c.l.b16 %v950
        %v1246 = vunpack.c.l.b16 %v951
        %v1247 = vunpack.c.l.b16 %v952
        %v1248 = vunpack.c.l.b16 %v953
        %v1249 = vunpack.c.l.b16 %v954
        %v1250 = vunpack.c.l.b16 %v955
        %v1251 = vunpack.c.l.b16 %v956
        %v1252 = vunpack.c.l.b16 %v957
        %v1253 = vunpack.c.l.b16 %v958
        %v1254 = vunpack.c.l.b16 %v959
        %v1255 = vunpack.c.l.b16 %v960
        %v1256 = vunpack.c.l.b16 %v961
        %v1257 = vunpack.c.l.b16 %v962
        %v1258 = vunpack.c.l.b16 %v963
        %v1259 = vunpack.c.l.b16 %v964
        %v1260 = vunpack.c.l.b16 %v965
        %v1261 = vunpack.c.l.b16 %v966
        %v1262 = vunpack.c.l.b16 %v967
        %v1263 = vunpack.c.l.b16 %v968
        %v1264 = vunpack.c.l.b16 %v969
        %v1265 = vunpack.c.l.b16 %v970
        %v1266 = vunpack.c.l.b16 %v971
        %v1267 = vunpack.c.l.b16 %v972
        %v1268 = vunpack.c.l.b16 %v973
        %v1269 = vunpack.c.l.b16 %v974
        %v1270 = vpack.c.b16 %v1127, %v1126
        %v1271 = vpack.c.b16 %v1129, %v1128
        %v1272 = vpack.c.b16 %v1131, %v1130
        %v1273 = vpack.c.b16 %v1133, %v1132
        %v1274 = vpack.c.b16 %v1135, %v1134
        %v1275 = vpack.c.b16 %v1137, %v1136
        %v1276 = vpack.c.b16 %v1139, %v1138
        %v1277 = vpack.c.b16 %v1141, %v1140
        %v1278 = vpack.c.b16 %v1143, %v1142
        %v1279 = vpack.c.b16 %v1145, %v1144
        %v1280 = vpack.c.b16 %v1147, %v1146
        %v1281 = vpack.c.b16 %v1149, %v1148
        %v1282 = vpack.c.b16 %v1151, %v1150
        %v1283 = vpack.c.b16 %v1153, %v1152
        %v1284 = vpack.c.b16 %v1155, %v1154
        %v1285 = vpack.c.b16 %v1157, %v1156
        %v1286 = vpack.c.b16 %v1159, %v1158
        %v1287 = vpack.c.b16 %v1161, %v1160
        %v1288 = vpack.c.b16 %v1163, %v1162
        %v1289 = vpack.c.b16 %v1165, %v1164
        %v1290 = vpack.c.b16 %v1167, %v1166
        %v1291 = vpack.c.b16 %v1169, %v1168
        %v1292 = vpack.c.b16 %v1171, %v1170
        %v1293 = vpack.c.b16 %v1173, %v1172
        %v1294 = vpack.c.b16 %v1175, %v1174
        %v1295 = vpack.c.b16 %v1177, %v1176
        %v1296 = vpack.c.b16 %v1179, %v1178
        %v1297 = vpack.c.b16 %v1181, %v1180
        %v1298 = vpack.c.b16 %v1183, %v1182
        %v1299 = vpack.c.b16 %v1185, %v1184
        %v1300 = vpack.c.b16 %v1187, %v1186
        %v1301 = vpack.c.b16 %v1189, %v1188
        %v1302 = vpack.c.b16 %v1191, %v1190
        %v1303 = vpack.c.b16 %v1193, %v1192
        %v1304 = vpack.c.b16 %v1195, %v1194
        %v1305 = vpack.c.b16 %v1197, %v1196
        %v1306 = vpack.c.b16 %v1199, %v1198
        %v1307 = vpack.c.b16 %v1201, %v1200
        %v1308 = vpack.c.b16 %v1203, %v1202
        %v1309 = vpack.c.b16 %v1205, %v1204
        %v1310 = vpack.c.b16 %v1207, %v1206
        %v1311 = vpack.c.b16 %v1209, %v1208
        %v1312 = vpack.c.b16 %v1211, %v1210
        %v1313 = vpack.c.b16 %v1213, %v1212
        %v1314 = vpack.c.b16 %v1215, %v1214
        %v1315 = vpack.c.b16 %v1217, %v1216
        %v1316 = vpack.c.b16 %v1219, %v1218
        %v1317 = vpack.c.b16 %v1221, %v1220
        %v1318 = vpack.c.b16 %v1223, %v1222
        %v1319 = vpack.c.b16 %v1225, %v1224
        %v1320 = vpack.c.b16 %v1227, %v1226
        %v1321 = vpack.c.b16 %v1229, %v1228
        %v1322 = vpack.c.b16 %v1231, %v1230
        %v1323 = vpack.c.b16 %v1233, %v1232
        %v1324 = vpack.c.b16 %v1235, %v1234
        %v1325 = vpack.c.b16 %v1237, %v1236
        %v1326 = vpack.c.b16 %v1239, %v1238
        %v1327 = vpack.c.b16 %v1241, %v1240
        %v1328 = vpack.c.b16 %v1243, %v1242
        %v1329 = vpack.c.b16 %v1245, %v1244
        %v1330 = vpack.c.b16 %v1247, %v1246
        %v1331 = vpack.c.b16 %v1249, %v1248
        %v1332 = vpack.c.b16 %v1251, %v1250
        %v1333 = vpack.c.b16 %v1253, %v1252
        %v1334 = vpack.c.b16 %v1255, %v1254
        %v1335 = vpack.c.b16 %v1257, %v1256
        %v1336 = vpack.c.b16 %v1259, %v1258
        %v1337 = vpack.c.b16 %v1261, %v1260
        %v1338 = vpack.c.b16 %v1263, %v1262
        %v1339 = vpack.c.b16 %v1265, %v1264
        %v1340 = vpack.c.b16 %v1267, %v1266
        %v1341 = vpack.c.b16 %v1269, %v1268
        %1414 = vmatprep.subr.bf16.mxu0 0
        %1415 = vmatpush1.bf16.msra.mxu0 %v1270
        %1416 = vmatprep.subr.bf16.mxu0 0
        %1417 = vmatpush1.bf16.msra.mxu0 %v1271
        %1418 = vmatprep.subr.bf16.mxu0 0
        %1419 = vmatpush1.bf16.msra.mxu0 %v1272
        %1420 = vmatprep.subr.bf16.mxu0 0
        %1421 = vmatpush1.bf16.msra.mxu0 %v1273
        %1422 = vmatprep.subr.bf16.mxu0 0
        %1423 = vmatpush1.bf16.msra.mxu0 %v1274
        %1424 = vmatprep.subr.bf16.mxu0 0
        %1425 = vmatpush1.bf16.msra.mxu0 %v1275
        %1426 = vmatprep.subr.bf16.mxu0 0
        %1427 = vmatpush1.bf16.msra.mxu0 %v1276
        %1428 = vmatprep.subr.bf16.mxu0 0
        %1429 = vmatpush1.bf16.msra.mxu0 %v1277
        %1430 = vmatprep.subr.bf16.mxu0 0
        %1431 = vmatpush1.bf16.msra.mxu0 %v1278
        %1432 = vmatprep.subr.bf16.mxu0 0
        %1433 = vmatpush1.bf16.msra.mxu0 %v1279
        %1434 = vmatprep.subr.bf16.mxu0 0
        %1435 = vmatpush1.bf16.msra.mxu0 %v1280
        %1436 = vmatprep.subr.bf16.mxu0 0
        %1437 = vmatpush1.bf16.msra.mxu0 %v1281
        %1438 = vmatprep.subr.bf16.mxu0 0
        %1439 = vmatpush1.bf16.msra.mxu0 %v1282
        %1440 = vmatprep.subr.bf16.mxu0 0
        %1441 = vmatpush1.bf16.msra.mxu0 %v1283
        %1442 = vmatprep.subr.bf16.mxu0 0
        %1443 = vmatpush1.bf16.msra.mxu0 %v1284
        %1444 = vmatprep.subr.bf16.mxu0 0
        %1445 = vmatpush1.bf16.msra.mxu0 %v1285
        %1446 = vmatprep.mubr.bf16.mxu0 %v478
        %1447 = vmatmul.mubr.bf16.gmra.mrb[0].mxu0 %v430
        %v1448 = vpop.f32.mrb[0].mxu0
        %v1449 = vadd.f32 %v980, %v1448
        %v1450 = vpop.f32.mrb[0].mxu0
        %v1451 = vpop.f32.mrb[0].mxu0
        %v1452 = vadd.f32 %v980, %v1451
        %v1453 = vpop.f32.mrb[0].mxu0
        %1454 = vmatprep.mubr.bf16.mxu0 %v479
        %1455 = vmatmul.mubr.bf16.gmra.mrb[0].mxu0 %v431
        %v1456 = vpop.f32.mrb[0].mxu0
        %v1457 = vadd.f32 %v980, %v1456
        %v1458 = vpop.f32.mrb[0].mxu0
        %v1459 = vpop.f32.mrb[0].mxu0
        %v1460 = vadd.f32 %v980, %v1459
        %v1461 = vpop.f32.mrb[0].mxu0
        %1462 = vmatprep.mubr.bf16.mxu0 %v480
        %1463 = vmatmul.mubr.bf16.gmra.mrb[0].mxu0 %v432
        %v1464 = vpop.f32.mrb[0].mxu0
        %v1465 = vadd.f32 %v980, %v1464
        %v1466 = vpop.f32.mrb[0].mxu0
        %v1467 = vpop.f32.mrb[0].mxu0
        %v1468 = vadd.f32 %v980, %v1467
        %v1469 = vpop.f32.mrb[0].mxu0
        %1470 = vmatprep.mubr.bf16.mxu0 %v481
        %1471 = vmatmul.mubr.bf16.gmra.mrb[0].mxu0 %v433
        %v1472 = vpop.f32.mrb[0].mxu0
        %v1473 = vadd.f32 %v980, %v1472
        %v1474 = vpop.f32.mrb[0].mxu0
        %v1475 = vpop.f32.mrb[0].mxu0
        %v1476 = vadd.f32 %v980, %v1475
        %v1477 = vpop.f32.mrb[0].mxu0
        %1478 = vmatprep.mubr.bf16.mxu0 %v482
        %1479 = vmatmul.mubr.bf16.gmra.mrb[0].mxu0 %v434
        %v1480 = vpop.f32.mrb[0].mxu0
        %v1481 = vadd.f32 %v980, %v1480
        %v1482 = vpop.f32.mrb[0].mxu0
        %v1483 = vpop.f32.mrb[0].mxu0
        %v1484 = vadd.f32 %v980, %v1483
        %v1485 = vpop.f32.mrb[0].mxu0
        %1486 = vmatprep.mubr.bf16.mxu0 %v483
        %1487 = vmatmul.mubr.bf16.gmra.mrb[0].mxu0 %v435
        %v1488 = vpop.f32.mrb[0].mxu0
        %v1489 = vadd.f32 %v980, %v1488
        %v1490 = vpop.f32.mrb[0].mxu0
        %v1491 = vpop.f32.mrb[0].mxu0
        %v1492 = vadd.f32 %v980, %v1491
        %v1493 = vpop.f32.mrb[0].mxu0
        %1494 = vmatprep.mubr.bf16.mxu0 %v484
        %1495 = vmatmul.mubr.bf16.gmra.mrb[0].mxu0 %v436
        %v1496 = vpop.f32.mrb[0].mxu0
        %v1497 = vadd.f32 %v980, %v1496
        %v1498 = vpop.f32.mrb[0].mxu0
        %v1499 = vpop.f32.mrb[0].mxu0
        %v1500 = vadd.f32 %v980, %v1499
        %v1501 = vpop.f32.mrb[0].mxu0
        %1502 = vmatprep.mubr.bf16.mxu0 %v485
        %1503 = vmatmul.mubr.bf16.gmra.mrb[0].mxu0 %v437
        %v1504 = vpop.f32.mrb[0].mxu0
        %v1505 = vadd.f32 %v980, %v1504
        %v1506 = vpop.f32.mrb[0].mxu0
        %v1507 = vpop.f32.mrb[0].mxu0
        %v1508 = vadd.f32 %v980, %v1507
        %v1509 = vpop.f32.mrb[0].mxu0
        %1510 = vmatprep.mubr.bf16.mxu0 %v486
        %1511 = vmatmul.mubr.bf16.gmra.mrb[0].mxu0 %v438
        %v1512 = vpop.f32.mrb[0].mxu0
        %v1513 = vadd.f32 %v980, %v1512
        %v1514 = vpop.f32.mrb[0].mxu0
        %v1515 = vpop.f32.mrb[0].mxu0
        %v1516 = vadd.f32 %v980, %v1515
        %v1517 = vpop.f32.mrb[0].mxu0
        %1518 = vmatprep.mubr.bf16.mxu0 %v487
        %1519 = vmatmul.mubr.bf16.gmra.mrb[0].mxu0 %v439
        %v1520 = vpop.f32.mrb[0].mxu0
        %v1521 = vadd.f32 %v980, %v1520
        %v1522 = vpop.f32.mrb[0].mxu0
        %v1523 = vpop.f32.mrb[0].mxu0
        %v1524 = vadd.f32 %v980, %v1523
        %v1525 = vpop.f32.mrb[0].mxu0
        %1526 = vmatprep.mubr.bf16.mxu0 %v488
        %1527 = vmatmul.mubr.bf16.gmra.mrb[0].mxu0 %v440
        %v1528 = vpop.f32.mrb[0].mxu0
        %v1529 = vadd.f32 %v980, %v1528
        %v1530 = vpop.f32.mrb[0].mxu0
        %v1531 = vpop.f32.mrb[0].mxu0
        %v1532 = vadd.f32 %v980, %v1531
        %v1533 = vpop.f32.mrb[0].mxu0
        %1534 = vmatprep.mubr.bf16.mxu0 %v489
        %1535 = vmatmul.mubr.bf16.gmra.mrb[0].mxu0 %v441
        %v1536 = vpop.f32.mrb[0].mxu0
        %v1537 = vadd.f32 %v980, %v1536
        %v1538 = vpop.f32.mrb[0].mxu0
        %v1539 = vpop.f32.mrb[0].mxu0
        %v1540 = vadd.f32 %v980, %v1539
        %v1541 = vpop.f32.mrb[0].mxu0
        %1542 = vmatprep.mubr.bf16.mxu0 %v490
        %1543 = vmatmul.mubr.bf16.gmra.mrb[0].mxu0 %v442
        %v1544 = vpop.f32.mrb[0].mxu0
        %v1545 = vadd.f32 %v980, %v1544
        %v1546 = vpop.f32.mrb[0].mxu0
        %v1547 = vpop.f32.mrb[0].mxu0
        %v1548 = vadd.f32 %v980, %v1547
        %v1549 = vpop.f32.mrb[0].mxu0
        %1550 = vmatprep.mubr.bf16.mxu0 %v491
        %1551 = vmatmul.mubr.bf16.gmra.mrb[0].mxu0 %v443
        %v1552 = vpop.f32.mrb[0].mxu0
        %v1553 = vadd.f32 %v980, %v1552
        %v1554 = vpop.f32.mrb[0].mxu0
        %v1555 = vpop.f32.mrb[0].mxu0
        %v1556 = vadd.f32 %v980, %v1555
        %v1557 = vpop.f32.mrb[0].mxu0
        %1558 = vmatprep.mubr.bf16.mxu0 %v492
        %1559 = vmatmul.mubr.bf16.gmra.mrb[0].mxu0 %v444
        %v1560 = vpop.f32.mrb[0].mxu0
        %v1561 = vadd.f32 %v980, %v1560
        %v1562 = vpop.f32.mrb[0].mxu0
        %v1563 = vpop.f32.mrb[0].mxu0
        %v1564 = vadd.f32 %v980, %v1563
        %v1565 = vpop.f32.mrb[0].mxu0
        %1566 = vmatprep.mubr.bf16.mxu0 %v493
        %1567 = vmatmul.mubr.bf16.gmra.mrb[0].mxu0 %v445
        %v1568 = vpop.f32.mrb[0].mxu0
        %v1569 = vadd.f32 %v980, %v1568
        %v1570 = vpop.f32.mrb[0].mxu0
        %v1571 = vpop.f32.mrb[0].mxu0
        %v1572 = vadd.f32 %v980, %v1571
        %v1573 = vpop.f32.mrb[0].mxu0
        %1574 = vdwg.mxu0
        %1575 = vmatprep.subr.bf16.mxu0 0
        %1576 = vmatpush1.bf16.msra.mxu0 %v1286
        %1577 = vmatprep.subr.bf16.mxu0 0
        %1578 = vmatpush1.bf16.msra.mxu0 %v1287
        %1579 = vmatprep.subr.bf16.mxu0 0
        %1580 = vmatpush1.bf16.msra.mxu0 %v1288
        %1581 = vmatprep.subr.bf16.mxu0 0
        %1582 = vmatpush1.bf16.msra.mxu0 %v1289
        %1583 = vmatprep.subr.bf16.mxu0 0
        %1584 = vmatpush1.bf16.msra.mxu0 %v1290
        %1585 = vmatprep.subr.bf16.mxu0 0
        %1586 = vmatpush1.bf16.msra.mxu0 %v1291
        %1587 = vmatprep.subr.bf16.mxu0 0
        %1588 = vmatpush1.bf16.msra.mxu0 %v1292
        %1589 = vmatprep.subr.bf16.mxu0 0
        %1590 = vmatpush1.bf16.msra.mxu0 %v1293
        %1591 = vmatprep.subr.bf16.mxu0 0
        %1592 = vmatpush1.bf16.msra.mxu0 %v1294
        %1593 = vmatprep.subr.bf16.mxu0 0
        %1594 = vmatpush1.bf16.msra.mxu0 %v1295
        %1595 = vmatprep.subr.bf16.mxu0 0
        %1596 = vmatpush1.bf16.msra.mxu0 %v1296
        %1597 = vmatprep.subr.bf16.mxu0 0
        %1598 = vmatpush1.bf16.msra.mxu0 %v1297
        %1599 = vmatprep.subr.bf16.mxu0 0
        %1600 = vmatpush1.bf16.msra.mxu0 %v1298
        %1601 = vmatprep.subr.bf16.mxu0 0
        %1602 = vmatpush1.bf16.msra.mxu0 %v1299
        %1603 = vmatprep.subr.bf16.mxu0 0
        %1604 = vmatpush1.bf16.msra.mxu0 %v1300
        %1605 = vmatprep.subr.bf16.mxu0 0
        %1606 = vmatpush1.bf16.msra.mxu0 %v1301
        %1607 = vmatprep.mubr.bf16.mxu0 %v574
        %1608 = vmatmul.mubr.bf16.gmra.mrb[0].mxu0 %v526
        %v1609 = vpop.f32.mrb[0].mxu0
        %v1610 = vadd.f32 %v1449, %v1609
        %v1611 = vpop.f32.mrb[0].mxu0
        %v1612 = vpop.f32.mrb[0].mxu0
        %v1613 = vadd.f32 %v1452, %v1612
        %v1614 = vpop.f32.mrb[0].mxu0
        %1615 = vmatprep.mubr.bf16.mxu0 %v575
        %1616 = vmatmul.mubr.bf16.gmra.mrb[0].mxu0 %v527
        %v1617 = vpop.f32.mrb[0].mxu0
        %v1618 = vadd.f32 %v1457, %v1617
        %v1619 = vpop.f32.mrb[0].mxu0
        %v1620 = vpop.f32.mrb[0].mxu0
        %v1621 = vadd.f32 %v1460, %v1620
        %v1622 = vpop.f32.mrb[0].mxu0
        %1623 = vmatprep.mubr.bf16.mxu0 %v576
        %1624 = vmatmul.mubr.bf16.gmra.mrb[0].mxu0 %v528
        %v1625 = vpop.f32.mrb[0].mxu0
        %v1626 = vadd.f32 %v1465, %v1625
        %v1627 = vpop.f32.mrb[0].mxu0
        %v1628 = vpop.f32.mrb[0].mxu0
        %v1629 = vadd.f32 %v1468, %v1628
        %v1630 = vpop.f32.mrb[0].mxu0
        %1631 = vmatprep.mubr.bf16.mxu0 %v577
        %1632 = vmatmul.mubr.bf16.gmra.mrb[0].mxu0 %v529
        %v1633 = vpop.f32.mrb[0].mxu0
        %v1634 = vadd.f32 %v1473, %v1633
        %v1635 = vpop.f32.mrb[0].mxu0
        %v1636 = vpop.f32.mrb[0].mxu0
        %v1637 = vadd.f32 %v1476, %v1636
        %v1638 = vpop.f32.mrb[0].mxu0
        %1639 = vmatprep.mubr.bf16.mxu0 %v578
        %1640 = vmatmul.mubr.bf16.gmra.mrb[0].mxu0 %v530
        %v1641 = vpop.f32.mrb[0].mxu0
        %v1642 = vadd.f32 %v1481, %v1641
        %v1643 = vpop.f32.mrb[0].mxu0
        %v1644 = vpop.f32.mrb[0].mxu0
        %v1645 = vadd.f32 %v1484, %v1644
        %v1646 = vpop.f32.mrb[0].mxu0
        %1647 = vmatprep.mubr.bf16.mxu0 %v579
        %1648 = vmatmul.mubr.bf16.gmra.mrb[0].mxu0 %v531
        %v1649 = vpop.f32.mrb[0].mxu0
        %v1650 = vadd.f32 %v1489, %v1649
        %v1651 = vpop.f32.mrb[0].mxu0
        %v1652 = vpop.f32.mrb[0].mxu0
        %v1653 = vadd.f32 %v1492, %v1652
        %v1654 = vpop.f32.mrb[0].mxu0
        %1655 = vmatprep.mubr.bf16.mxu0 %v580
        %1656 = vmatmul.mubr.bf16.gmra.mrb[0].mxu0 %v532
        %v1657 = vpop.f32.mrb[0].mxu0
        %v1658 = vadd.f32 %v1497, %v1657
        %v1659 = vpop.f32.mrb[0].mxu0
        %v1660 = vpop.f32.mrb[0].mxu0
        %v1661 = vadd.f32 %v1500, %v1660
        %v1662 = vpop.f32.mrb[0].mxu0
        %1663 = vmatprep.mubr.bf16.mxu0 %v581
        %1664 = vmatmul.mubr.bf16.gmra.mrb[0].mxu0 %v533
        %v1665 = vpop.f32.mrb[0].mxu0
        %v1666 = vadd.f32 %v1505, %v1665
        %v1667 = vpop.f32.mrb[0].mxu0
        %v1668 = vpop.f32.mrb[0].mxu0
        %v1669 = vadd.f32 %v1508, %v1668
        %v1670 = vpop.f32.mrb[0].mxu0
        %1671 = vmatprep.mubr.bf16.mxu0 %v582
        %1672 = vmatmul.mubr.bf16.gmra.mrb[0].mxu0 %v534
        %v1673 = vpop.f32.mrb[0].mxu0
        %v1674 = vadd.f32 %v1513, %v1673
        %v1675 = vpop.f32.mrb[0].mxu0
        %v1676 = vpop.f32.mrb[0].mxu0
        %v1677 = vadd.f32 %v1516, %v1676
        %v1678 = vpop.f32.mrb[0].mxu0
        %1679 = vmatprep.mubr.bf16.mxu0 %v583
        %1680 = vmatmul.mubr.bf16.gmra.mrb[0].mxu0 %v535
        %v1681 = vpop.f32.mrb[0].mxu0
        %v1682 = vadd.f32 %v1521, %v1681
        %v1683 = vpop.f32.mrb[0].mxu0
        %v1684 = vpop.f32.mrb[0].mxu0
        %v1685 = vadd.f32 %v1524, %v1684
        %v1686 = vpop.f32.mrb[0].mxu0
        %1687 = vmatprep.mubr.bf16.mxu0 %v584
        %1688 = vmatmul.mubr.bf16.gmra.mrb[0].mxu0 %v536
        %v1689 = vpop.f32.mrb[0].mxu0
        %v1690 = vadd.f32 %v1529, %v1689
        %v1691 = vpop.f32.mrb[0].mxu0
        %v1692 = vpop.f32.mrb[0].mxu0
        %v1693 = vadd.f32 %v1532, %v1692
        %v1694 = vpop.f32.mrb[0].mxu0
        %1695 = vmatprep.mubr.bf16.mxu0 %v585
        %1696 = vmatmul.mubr.bf16.gmra.mrb[0].mxu0 %v537
        %v1697 = vpop.f32.mrb[0].mxu0
        %v1698 = vadd.f32 %v1537, %v1697
        %v1699 = vpop.f32.mrb[0].mxu0
        %v1700 = vpop.f32.mrb[0].mxu0
        %v1701 = vadd.f32 %v1540, %v1700
        %v1702 = vpop.f32.mrb[0].mxu0
        %1703 = vmatprep.mubr.bf16.mxu0 %v586
        %1704 = vmatmul.mubr.bf16.gmra.mrb[0].mxu0 %v538
        %v1705 = vpop.f32.mrb[0].mxu0
        %v1706 = vadd.f32 %v1545, %v1705
        %v1707 = vpop.f32.mrb[0].mxu0
        %v1708 = vpop.f32.mrb[0].mxu0
        %v1709 = vadd.f32 %v1548, %v1708
        %v1710 = vpop.f32.mrb[0].mxu0
        %1711 = vmatprep.mubr.bf16.mxu0 %v587
        %1712 = vmatmul.mubr.bf16.gmra.mrb[0].mxu0 %v539
        %v1713 = vpop.f32.mrb[0].mxu0
        %v1714 = vadd.f32 %v1553, %v1713
        %v1715 = vpop.f32.mrb[0].mxu0
        %v1716 = vpop.f32.mrb[0].mxu0
        %v1717 = vadd.f32 %v1556, %v1716
        %v1718 = vpop.f32.mrb[0].mxu0
        %1719 = vmatprep.mubr.bf16.mxu0 %v588
        %1720 = vmatmul.mubr.bf16.gmra.mrb[0].mxu0 %v540
        %v1721 = vpop.f32.mrb[0].mxu0
        %v1722 = vadd.f32 %v1561, %v1721
        %v1723 = vpop.f32.mrb[0].mxu0
        %v1724 = vpop.f32.mrb[0].mxu0
        %v1725 = vadd.f32 %v1564, %v1724
        %v1726 = vpop.f32.mrb[0].mxu0
        %1727 = vmatprep.mubr.bf16.mxu0 %v589
        %1728 = vmatmul.mubr.bf16.gmra.mrb[0].mxu0 %v541
        %v1729 = vpop.f32.mrb[0].mxu0
        %v1730 = vadd.f32 %v1569, %v1729
        %v1731 = vpop.f32.mrb[0].mxu0
        %v1732 = vpop.f32.mrb[0].mxu0
        %v1733 = vadd.f32 %v1572, %v1732
        %v1734 = vpop.f32.mrb[0].mxu0
        %1735 = vdwg.mxu0
        %1736 = vmatprep.subr.bf16.mxu0 0
        %1737 = vmatpush1.bf16.msra.mxu0 %v1302
        %1738 = vmatprep.subr.bf16.mxu0 0
        %1739 = vmatpush1.bf16.msra.mxu0 %v1303
        %1740 = vmatprep.subr.bf16.mxu0 0
        %1741 = vmatpush1.bf16.msra.mxu0 %v1304
        %1742 = vmatprep.subr.bf16.mxu0 0
        %1743 = vmatpush1.bf16.msra.mxu0 %v1305
        %1744 = vmatprep.subr.bf16.mxu0 0
        %1745 = vmatpush1.bf16.msra.mxu0 %v1306
        %1746 = vmatprep.subr.bf16.mxu0 0
        %1747 = vmatpush1.bf16.msra.mxu0 %v1307
        %1748 = vmatprep.subr.bf16.mxu0 0
        %1749 = vmatpush1.bf16.msra.mxu0 %v1308
        %1750 = vmatprep.subr.bf16.mxu0 0
        %1751 = vmatpush1.bf16.msra.mxu0 %v1309
        %1752 = vmatprep.subr.bf16.mxu0 0
        %1753 = vmatpush1.bf16.msra.mxu0 %v1310
        %1754 = vmatprep.subr.bf16.mxu0 0
        %1755 = vmatpush1.bf16.msra.mxu0 %v1311
        %1756 = vmatprep.subr.bf16.mxu0 0
        %1757 = vmatpush1.bf16.msra.mxu0 %v1312
        %1758 = vmatprep.subr.bf16.mxu0 0
        %1759 = vmatpush1.bf16.msra.mxu0 %v1313
        %1760 = vmatprep.subr.bf16.mxu0 0
        %1761 = vmatpush1.bf16.msra.mxu0 %v1314
        %1762 = vmatprep.subr.bf16.mxu0 0
        %1763 = vmatpush1.bf16.msra.mxu0 %v1315
        %1764 = vmatprep.subr.bf16.mxu0 0
        %1765 = vmatpush1.bf16.msra.mxu0 %v1316
        %1766 = vmatprep.subr.bf16.mxu0 0
        %1767 = vmatpush1.bf16.msra.mxu0 %v1317
        %1768 = vmatprep.mubr.bf16.mxu0 %v670
        %1769 = vmatmul.mubr.bf16.gmra.mrb[0].mxu0 %v622
        %v1770 = vpop.f32.mrb[0].mxu0
        %v1771 = vadd.f32 %v1610, %v1770
        %v1772 = vpop.f32.mrb[0].mxu0
        %v1773 = vpop.f32.mrb[0].mxu0
        %v1774 = vadd.f32 %v1613, %v1773
        %v1775 = vpop.f32.mrb[0].mxu0
        %1776 = vmatprep.mubr.bf16.mxu0 %v671
        %1777 = vmatmul.mubr.bf16.gmra.mrb[0].mxu0 %v623
        %v1778 = vpop.f32.mrb[0].mxu0
        %v1779 = vadd.f32 %v1618, %v1778
        %v1780 = vpop.f32.mrb[0].mxu0
        %v1781 = vpop.f32.mrb[0].mxu0
        %v1782 = vadd.f32 %v1621, %v1781
        %v1783 = vpop.f32.mrb[0].mxu0
        %1784 = vmatprep.mubr.bf16.mxu0 %v672
        %1785 = vmatmul.mubr.bf16.gmra.mrb[0].mxu0 %v624
        %v1786 = vpop.f32.mrb[0].mxu0
        %v1787 = vadd.f32 %v1626, %v1786
        %v1788 = vpop.f32.mrb[0].mxu0
        %v1789 = vpop.f32.mrb[0].mxu0
        %v1790 = vadd.f32 %v1629, %v1789
        %v1791 = vpop.f32.mrb[0].mxu0
        %1792 = vmatprep.mubr.bf16.mxu0 %v673
        %1793 = vmatmul.mubr.bf16.gmra.mrb[0].mxu0 %v625
        %v1794 = vpop.f32.mrb[0].mxu0
        %v1795 = vadd.f32 %v1634, %v1794
        %v1796 = vpop.f32.mrb[0].mxu0
        %v1797 = vpop.f32.mrb[0].mxu0
        %v1798 = vadd.f32 %v1637, %v1797
        %v1799 = vpop.f32.mrb[0].mxu0
        %1800 = vmatprep.mubr.bf16.mxu0 %v674
        %1801 = vmatmul.mubr.bf16.gmra.mrb[0].mxu0 %v626
        %v1802 = vpop.f32.mrb[0].mxu0
        %v1803 = vadd.f32 %v1642, %v1802
        %v1804 = vpop.f32.mrb[0].mxu0
        %v1805 = vpop.f32.mrb[0].mxu0
        %v1806 = vadd.f32 %v1645, %v1805
        %v1807 = vpop.f32.mrb[0].mxu0
        %1808 = vmatprep.mubr.bf16.mxu0 %v675
        %1809 = vmatmul.mubr.bf16.gmra.mrb[0].mxu0 %v627
        %v1810 = vpop.f32.mrb[0].mxu0
        %v1811 = vadd.f32 %v1650, %v1810
        %v1812 = vpop.f32.mrb[0].mxu0
        %v1813 = vpop.f32.mrb[0].mxu0
        %v1814 = vadd.f32 %v1653, %v1813
        %v1815 = vpop.f32.mrb[0].mxu0
        %1816 = vmatprep.mubr.bf16.mxu0 %v676
        %1817 = vmatmul.mubr.bf16.gmra.mrb[0].mxu0 %v628
        %v1818 = vpop.f32.mrb[0].mxu0
        %v1819 = vadd.f32 %v1658, %v1818
        %v1820 = vpop.f32.mrb[0].mxu0
        %v1821 = vpop.f32.mrb[0].mxu0
        %v1822 = vadd.f32 %v1661, %v1821
        %v1823 = vpop.f32.mrb[0].mxu0
        %1824 = vmatprep.mubr.bf16.mxu0 %v677
        %1825 = vmatmul.mubr.bf16.gmra.mrb[0].mxu0 %v629
        %v1826 = vpop.f32.mrb[0].mxu0
        %v1827 = vadd.f32 %v1666, %v1826
        %v1828 = vpop.f32.mrb[0].mxu0
        %v1829 = vpop.f32.mrb[0].mxu0
        %v1830 = vadd.f32 %v1669, %v1829
        %v1831 = vpop.f32.mrb[0].mxu0
        %1832 = vmatprep.mubr.bf16.mxu0 %v678
        %1833 = vmatmul.mubr.bf16.gmra.mrb[0].mxu0 %v630
        %v1834 = vpop.f32.mrb[0].mxu0
        %v1835 = vadd.f32 %v1674, %v1834
        %v1836 = vpop.f32.mrb[0].mxu0
        %v1837 = vpop.f32.mrb[0].mxu0
        %v1838 = vadd.f32 %v1677, %v1837
        %v1839 = vpop.f32.mrb[0].mxu0
        %1840 = vmatprep.mubr.bf16.mxu0 %v679
        %1841 = vmatmul.mubr.bf16.gmra.mrb[0].mxu0 %v631
        %v1842 = vpop.f32.mrb[0].mxu0
        %v1843 = vadd.f32 %v1682, %v1842
        %v1844 = vpop.f32.mrb[0].mxu0
        %v1845 = vpop.f32.mrb[0].mxu0
        %v1846 = vadd.f32 %v1685, %v1845
        %v1847 = vpop.f32.mrb[0].mxu0
        %1848 = vmatprep.mubr.bf16.mxu0 %v680
        %1849 = vmatmul.mubr.bf16.gmra.mrb[0].mxu0 %v632
        %v1850 = vpop.f32.mrb[0].mxu0
        %v1851 = vadd.f32 %v1690, %v1850
        %v1852 = vpop.f32.mrb[0].mxu0
        %v1853 = vpop.f32.mrb[0].mxu0
        %v1854 = vadd.f32 %v1693, %v1853
        %v1855 = vpop.f32.mrb[0].mxu0
        %1856 = vmatprep.mubr.bf16.mxu0 %v681
        %1857 = vmatmul.mubr.bf16.gmra.mrb[0].mxu0 %v633
        %v1858 = vpop.f32.mrb[0].mxu0
        %v1859 = vadd.f32 %v1698, %v1858
        %v1860 = vpop.f32.mrb[0].mxu0
        %v1861 = vpop.f32.mrb[0].mxu0
        %v1862 = vadd.f32 %v1701, %v1861
        %v1863 = vpop.f32.mrb[0].mxu0
        %1864 = vmatprep.mubr.bf16.mxu0 %v682
        %1865 = vmatmul.mubr.bf16.gmra.mrb[0].mxu0 %v634
        %v1866 = vpop.f32.mrb[0].mxu0
        %v1867 = vadd.f32 %v1706, %v1866
        %v1868 = vpop.f32.mrb[0].mxu0
        %v1869 = vpop.f32.mrb[0].mxu0
        %v1870 = vadd.f32 %v1709, %v1869
        %v1871 = vpop.f32.mrb[0].mxu0
        %1872 = vmatprep.mubr.bf16.mxu0 %v683
        %1873 = vmatmul.mubr.bf16.gmra.mrb[0].mxu0 %v635
        %v1874 = vpop.f32.mrb[0].mxu0
        %v1875 = vadd.f32 %v1714, %v1874
        %v1876 = vpop.f32.mrb[0].mxu0
        %v1877 = vpop.f32.mrb[0].mxu0
        %v1878 = vadd.f32 %v1717, %v1877
        %v1879 = vpop.f32.mrb[0].mxu0
        %1880 = vmatprep.mubr.bf16.mxu0 %v684
        %1881 = vmatmul.mubr.bf16.gmra.mrb[0].mxu0 %v636
        %v1882 = vpop.f32.mrb[0].mxu0
        %v1883 = vadd.f32 %v1722, %v1882
        %v1884 = vpop.f32.mrb[0].mxu0
        %v1885 = vpop.f32.mrb[0].mxu0
        %v1886 = vadd.f32 %v1725, %v1885
        %v1887 = vpop.f32.mrb[0].mxu0
        %1888 = vmatprep.mubr.bf16.mxu0 %v685
        %1889 = vmatmul.mubr.bf16.gmra.mrb[0].mxu0 %v637
        %v1890 = vpop.f32.mrb[0].mxu0
        %v1891 = vadd.f32 %v1730, %v1890
        %v1892 = vpop.f32.mrb[0].mxu0
        %v1893 = vpop.f32.mrb[0].mxu0
        %v1894 = vadd.f32 %v1733, %v1893
        %v1895 = vpop.f32.mrb[0].mxu0
        %1896 = vdwg.mxu0
        %1897 = vmatprep.subr.bf16.mxu0 0
        %1898 = vmatpush1.bf16.msra.mxu0 %v1318
        %1899 = vmatprep.subr.bf16.mxu0 0
        %1900 = vmatpush1.bf16.msra.mxu0 %v1319
        %1901 = vmatprep.subr.bf16.mxu0 0
        %1902 = vmatpush1.bf16.msra.mxu0 %v1320
        %1903 = vmatprep.subr.bf16.mxu0 0
        %1904 = vmatpush1.bf16.msra.mxu0 %v1321
        %1905 = vmatprep.subr.bf16.mxu0 0
        %1906 = vmatpush1.bf16.msra.mxu0 %v1322
        %1907 = vmatprep.subr.bf16.mxu0 0
        %1908 = vmatpush1.bf16.msra.mxu0 %v1323
        %1909 = vmatprep.subr.bf16.mxu0 0
        %1910 = vmatpush1.bf16.msra.mxu0 %v1324
        %1911 = vmatprep.subr.bf16.mxu0 0
        %1912 = vmatpush1.bf16.msra.mxu0 %v1325
        %1913 = vmatprep.subr.bf16.mxu0 0
        %1914 = vmatpush1.bf16.msra.mxu0 %v1326
        %1915 = vmatprep.subr.bf16.mxu0 0
        %1916 = vmatpush1.bf16.msra.mxu0 %v1327
        %1917 = vmatprep.subr.bf16.mxu0 0
        %1918 = vmatpush1.bf16.msra.mxu0 %v1328
        %1919 = vmatprep.subr.bf16.mxu0 0
        %1920 = vmatpush1.bf16.msra.mxu0 %v1329
        %1921 = vmatprep.subr.bf16.mxu0 0
        %1922 = vmatpush1.bf16.msra.mxu0 %v1330
        %1923 = vmatprep.subr.bf16.mxu0 0
        %1924 = vmatpush1.bf16.msra.mxu0 %v1331
        %1925 = vmatprep.subr.bf16.mxu0 0
        %1926 = vmatpush1.bf16.msra.mxu0 %v1332
        %1927 = vmatprep.subr.bf16.mxu0 0
        %1928 = vmatpush1.bf16.msra.mxu0 %v1333
        %1929 = vmatprep.mubr.bf16.mxu0 %v767
        %1930 = vmatmul.mubr.bf16.gmra.mrb[0].mxu0 %v719
        %v1931 = vpop.f32.mrb[0].mxu0
        %v1932 = vadd.f32 %v1771, %v1931
        %v1933 = vpop.f32.mrb[0].mxu0
        %v1934 = vpop.f32.mrb[0].mxu0
        %v1935 = vadd.f32 %v1774, %v1934
        %v1936 = vpop.f32.mrb[0].mxu0
        %1937 = vmatprep.mubr.bf16.mxu0 %v768
        %1938 = vmatmul.mubr.bf16.gmra.mrb[0].mxu0 %v720
        %v1939 = vpop.f32.mrb[0].mxu0
        %v1940 = vadd.f32 %v1779, %v1939
        %v1941 = vpop.f32.mrb[0].mxu0
        %v1942 = vpop.f32.mrb[0].mxu0
        %v1943 = vadd.f32 %v1782, %v1942
        %v1944 = vpop.f32.mrb[0].mxu0
        %1945 = vmatprep.mubr.bf16.mxu0 %v769
        %1946 = vmatmul.mubr.bf16.gmra.mrb[0].mxu0 %v721
        %v1947 = vpop.f32.mrb[0].mxu0
        %v1948 = vadd.f32 %v1787, %v1947
        %v1949 = vpop.f32.mrb[0].mxu0
        %v1950 = vpop.f32.mrb[0].mxu0
        %v1951 = vadd.f32 %v1790, %v1950
        %v1952 = vpop.f32.mrb[0].mxu0
        %1953 = vmatprep.mubr.bf16.mxu0 %v770
        %1954 = vmatmul.mubr.bf16.gmra.mrb[0].mxu0 %v722
        %v1955 = vpop.f32.mrb[0].mxu0
        %v1956 = vadd.f32 %v1795, %v1955
        %v1957 = vpop.f32.mrb[0].mxu0
        %v1958 = vpop.f32.mrb[0].mxu0
        %v1959 = vadd.f32 %v1798, %v1958
        %v1960 = vpop.f32.mrb[0].mxu0
        %1961 = vmatprep.mubr.bf16.mxu0 %v771
        %1962 = vmatmul.mubr.bf16.gmra.mrb[0].mxu0 %v723
        %v1963 = vpop.f32.mrb[0].mxu0
        %v1964 = vadd.f32 %v1803, %v1963
        %v1965 = vpop.f32.mrb[0].mxu0
        %v1966 = vpop.f32.mrb[0].mxu0
        %v1967 = vadd.f32 %v1806, %v1966
        %v1968 = vpop.f32.mrb[0].mxu0
        %1969 = vmatprep.mubr.bf16.mxu0 %v772
        %1970 = vmatmul.mubr.bf16.gmra.mrb[0].mxu0 %v724
        %v1971 = vpop.f32.mrb[0].mxu0
        %v1972 = vadd.f32 %v1811, %v1971
        %v1973 = vpop.f32.mrb[0].mxu0
        %v1974 = vpop.f32.mrb[0].mxu0
        %v1975 = vadd.f32 %v1814, %v1974
        %v1976 = vpop.f32.mrb[0].mxu0
        %1977 = vmatprep.mubr.bf16.mxu0 %v773
        %1978 = vmatmul.mubr.bf16.gmra.mrb[0].mxu0 %v725
        %v1979 = vpop.f32.mrb[0].mxu0
        %v1980 = vadd.f32 %v1819, %v1979
        %v1981 = vpop.f32.mrb[0].mxu0
        %v1982 = vpop.f32.mrb[0].mxu0
        %v1983 = vadd.f32 %v1822, %v1982
        %v1984 = vpop.f32.mrb[0].mxu0
        %1985 = vmatprep.mubr.bf16.mxu0 %v774
        %1986 = vmatmul.mubr.bf16.gmra.mrb[0].mxu0 %v726
        %v1987 = vpop.f32.mrb[0].mxu0
        %v1988 = vadd.f32 %v1827, %v1987
        %v1989 = vpop.f32.mrb[0].mxu0
        %v1990 = vpop.f32.mrb[0].mxu0
        %v1991 = vadd.f32 %v1830, %v1990
        %v1992 = vpop.f32.mrb[0].mxu0
        %1993 = vmatprep.mubr.bf16.mxu0 %v775
        %1994 = vmatmul.mubr.bf16.gmra.mrb[0].mxu0 %v727
        %v1995 = vpop.f32.mrb[0].mxu0
        %v1996 = vadd.f32 %v1835, %v1995
        %v1997 = vpop.f32.mrb[0].mxu0
        %v1998 = vpop.f32.mrb[0].mxu0
        %v1999 = vadd.f32 %v1838, %v1998
        %v2000 = vpop.f32.mrb[0].mxu0
        %2001 = vmatprep.mubr.bf16.mxu0 %v776
        %2002 = vmatmul.mubr.bf16.gmra.mrb[0].mxu0 %v728
        %v2003 = vpop.f32.mrb[0].mxu0
        %v2004 = vadd.f32 %v1843, %v2003
        %v2005 = vpop.f32.mrb[0].mxu0
        %v2006 = vpop.f32.mrb[0].mxu0
        %v2007 = vadd.f32 %v1846, %v2006
        %v2008 = vpop.f32.mrb[0].mxu0
        %2009 = vmatprep.mubr.bf16.mxu0 %v777
        %2010 = vmatmul.mubr.bf16.gmra.mrb[0].mxu0 %v729
        %v2011 = vpop.f32.mrb[0].mxu0
        %v2012 = vadd.f32 %v1851, %v2011
        %v2013 = vpop.f32.mrb[0].mxu0
        %v2014 = vpop.f32.mrb[0].mxu0
        %v2015 = vadd.f32 %v1854, %v2014
        %v2016 = vpop.f32.mrb[0].mxu0
        %2017 = vmatprep.mubr.bf16.mxu0 %v778
        %2018 = vmatmul.mubr.bf16.gmra.mrb[0].mxu0 %v730
        %v2019 = vpop.f32.mrb[0].mxu0
        %v2020 = vadd.f32 %v1859, %v2019
        %v2021 = vpop.f32.mrb[0].mxu0
        %v2022 = vpop.f32.mrb[0].mxu0
        %v2023 = vadd.f32 %v1862, %v2022
        %v2024 = vpop.f32.mrb[0].mxu0
        %2025 = vmatprep.mubr.bf16.mxu0 %v779
        %2026 = vmatmul.mubr.bf16.gmra.mrb[0].mxu0 %v731
        %v2027 = vpop.f32.mrb[0].mxu0
        %v2028 = vadd.f32 %v1867, %v2027
        %v2029 = vpop.f32.mrb[0].mxu0
        %v2030 = vpop.f32.mrb[0].mxu0
        %v2031 = vadd.f32 %v1870, %v2030
        %v2032 = vpop.f32.mrb[0].mxu0
        %2033 = vmatprep.mubr.bf16.mxu0 %v780
        %2034 = vmatmul.mubr.bf16.gmra.mrb[0].mxu0 %v732
        %v2035 = vpop.f32.mrb[0].mxu0
        %v2036 = vadd.f32 %v1875, %v2035
        %v2037 = vpop.f32.mrb[0].mxu0
        %v2038 = vpop.f32.mrb[0].mxu0
        %v2039 = vadd.f32 %v1878, %v2038
        %v2040 = vpop.f32.mrb[0].mxu0
        %2041 = vmatprep.mubr.bf16.mxu0 %v781
        %2042 = vmatmul.mubr.bf16.gmra.mrb[0].mxu0 %v733
        %v2043 = vpop.f32.mrb[0].mxu0
        %v2044 = vadd.f32 %v1883, %v2043
        %v2045 = vpop.f32.mrb[0].mxu0
        %v2046 = vpop.f32.mrb[0].mxu0
        %v2047 = vadd.f32 %v1886, %v2046
        %v2048 = vpop.f32.mrb[0].mxu0
        %2049 = vmatprep.mubr.bf16.mxu0 %v782
        %2050 = vmatmul.mubr.bf16.gmra.mrb[0].mxu0 %v734
        %v2051 = vpop.f32.mrb[0].mxu0
        %v2052 = vadd.f32 %v1891, %v2051
        %v2053 = vpop.f32.mrb[0].mxu0
        %v2054 = vpop.f32.mrb[0].mxu0
        %v2055 = vadd.f32 %v1894, %v2054
        %v2056 = vpop.f32.mrb[0].mxu0
        %2057 = vdwg.mxu0
        %2058 = vmatprep.subr.bf16.mxu0 0
        %2059 = vmatpush1.bf16.msra.mxu0 %v1334
        %2060 = vmatprep.subr.bf16.mxu0 0
        %2061 = vmatpush1.bf16.msra.mxu0 %v1335
        %2062 = vmatprep.subr.bf16.mxu0 0
        %2063 = vmatpush1.bf16.msra.mxu0 %v1336
        %2064 = vmatprep.subr.bf16.mxu0 0
        %2065 = vmatpush1.bf16.msra.mxu0 %v1337
        %2066 = vmatprep.subr.bf16.mxu0 0
        %2067 = vmatpush1.bf16.msra.mxu0 %v1338
        %2068 = vmatprep.subr.bf16.mxu0 0
        %2069 = vmatpush1.bf16.msra.mxu0 %v1339
        %2070 = vmatprep.subr.bf16.mxu0 0
        %2071 = vmatpush1.bf16.msra.mxu0 %v1340
        %2072 = vmatprep.subr.bf16.mxu0 0
        %2073 = vmatpush1.bf16.msra.mxu0 %v1341
        %2074 = vmatprep.subr.bf16.mxu0 0
        %2075 = vmatpush1.bf16.msra.mxu0 0
        %2076 = vmatprep.subr.bf16.mxu0 0
        %2077 = vmatpush1.bf16.msra.mxu0 0
        %2078 = vmatprep.subr.bf16.mxu0 0
        %2079 = vmatpush1.bf16.msra.mxu0 0
        %2080 = vmatprep.subr.bf16.mxu0 0
        %2081 = vmatpush1.bf16.msra.mxu0 0
        %2082 = vmatprep.subr.bf16.mxu0 0
        %2083 = vmatpush1.bf16.msra.mxu0 0
        %2084 = vmatprep.subr.bf16.mxu0 0
        %2085 = vmatpush1.bf16.msra.mxu0 0
        %2086 = vmatprep.subr.bf16.mxu0 0
        %2087 = vmatpush1.bf16.msra.mxu0 0
        %2088 = vmatprep.subr.bf16.mxu0 0
        %2089 = vmatpush1.bf16.msra.mxu0 0
        %2090 = vmatprep.mubr.bf16.mxu0 0
        %2091 = vmatmul.mubr.bf16.gmra.mrb[0].mxu0 %v815
        %v2092 = vpop.f32.mrb[0].mxu0
        %v2093 = vadd.f32 %v1932, %v2092
        %v2094 = vpop.f32.mrb[0].mxu0
        %v2095 = vpop.f32.mrb[0].mxu0
        %v2096 = vadd.f32 %v1935, %v2095
        %v2097 = vpop.f32.mrb[0].mxu0
        %2098 = vmatprep.mubr.bf16.mxu0 0
        %2099 = vmatmul.mubr.bf16.gmra.mrb[0].mxu0 %v816
        %v2100 = vpop.f32.mrb[0].mxu0
        %v2101 = vadd.f32 %v1940, %v2100
        %v2102 = vpop.f32.mrb[0].mxu0
        %v2103 = vpop.f32.mrb[0].mxu0
        %v2104 = vadd.f32 %v1943, %v2103
        %v2105 = vpop.f32.mrb[0].mxu0
        %2106 = vmatprep.mubr.bf16.mxu0 0
        %2107 = vmatmul.mubr.bf16.gmra.mrb[0].mxu0 %v817
        %v2108 = vpop.f32.mrb[0].mxu0
        %v2109 = vadd.f32 %v1948, %v2108
        %v2110 = vpop.f32.mrb[0].mxu0
        %v2111 = vpop.f32.mrb[0].mxu0
        %v2112 = vadd.f32 %v1951, %v2111
        %v2113 = vpop.f32.mrb[0].mxu0
        %2114 = vmatprep.mubr.bf16.mxu0 0
        %2115 = vmatmul.mubr.bf16.gmra.mrb[0].mxu0 %v818
        %v2116 = vpop.f32.mrb[0].mxu0
        %v2117 = vadd.f32 %v1956, %v2116
        %v2118 = vpop.f32.mrb[0].mxu0
        %v2119 = vpop.f32.mrb[0].mxu0
        %v2120 = vadd.f32 %v1959, %v2119
        %v2121 = vpop.f32.mrb[0].mxu0
        %2122 = vmatprep.mubr.bf16.mxu0 0
        %2123 = vmatmul.mubr.bf16.gmra.mrb[0].mxu0 %v819
        %v2124 = vpop.f32.mrb[0].mxu0
        %v2125 = vadd.f32 %v1964, %v2124
        %v2126 = vpop.f32.mrb[0].mxu0
        %v2127 = vpop.f32.mrb[0].mxu0
        %v2128 = vadd.f32 %v1967, %v2127
        %v2129 = vpop.f32.mrb[0].mxu0
        %2130 = vmatprep.mubr.bf16.mxu0 0
        %2131 = vmatmul.mubr.bf16.gmra.mrb[0].mxu0 %v820
        %v2132 = vpop.f32.mrb[0].mxu0
        %v2133 = vadd.f32 %v1972, %v2132
        %v2134 = vpop.f32.mrb[0].mxu0
        %v2135 = vpop.f32.mrb[0].mxu0
        %v2136 = vadd.f32 %v1975, %v2135
        %v2137 = vpop.f32.mrb[0].mxu0
        %2138 = vmatprep.mubr.bf16.mxu0 0
        %2139 = vmatmul.mubr.bf16.gmra.mrb[0].mxu0 %v821
        %v2140 = vpop.f32.mrb[0].mxu0
        %v2141 = vadd.f32 %v1980, %v2140
        %v2142 = vpop.f32.mrb[0].mxu0
        %v2143 = vpop.f32.mrb[0].mxu0
        %v2144 = vadd.f32 %v1983, %v2143
        %v2145 = vpop.f32.mrb[0].mxu0
        %2146 = vmatprep.mubr.bf16.mxu0 0
        %2147 = vmatmul.mubr.bf16.gmra.mrb[0].mxu0 %v822
        %v2148 = vpop.f32.mrb[0].mxu0
        %v2149 = vadd.f32 %v1988, %v2148
        %v2150 = vpop.f32.mrb[0].mxu0
        %v2151 = vpop.f32.mrb[0].mxu0
        %v2152 = vadd.f32 %v1991, %v2151
        %v2153 = vpop.f32.mrb[0].mxu0
        %2154 = vmatprep.mubr.bf16.mxu0 0
        %2155 = vmatmul.mubr.bf16.gmra.mrb[0].mxu0 %v823
        %v2156 = vpop.f32.mrb[0].mxu0
        %v2157 = vadd.f32 %v1996, %v2156
        %v2158 = vpop.f32.mrb[0].mxu0
        %v2159 = vpop.f32.mrb[0].mxu0
        %v2160 = vadd.f32 %v1999, %v2159
        %v2161 = vpop.f32.mrb[0].mxu0
        %2162 = vmatprep.mubr.bf16.mxu0 0
        %2163 = vmatmul.mubr.bf16.gmra.mrb[0].mxu0 %v824
        %v2164 = vpop.f32.mrb[0].mxu0
        %v2165 = vadd.f32 %v2004, %v2164
        %v2166 = vpop.f32.mrb[0].mxu0
        %v2167 = vpop.f32.mrb[0].mxu0
        %v2168 = vadd.f32 %v2007, %v2167
        %v2169 = vpop.f32.mrb[0].mxu0
        %2170 = vmatprep.mubr.bf16.mxu0 0
        %2171 = vmatmul.mubr.bf16.gmra.mrb[0].mxu0 %v825
        %v2172 = vpop.f32.mrb[0].mxu0
        %v2173 = vadd.f32 %v2012, %v2172
        %v2174 = vpop.f32.mrb[0].mxu0
        %v2175 = vpop.f32.mrb[0].mxu0
        %v2176 = vadd.f32 %v2015, %v2175
        %v2177 = vpop.f32.mrb[0].mxu0
        %2178 = vmatprep.mubr.bf16.mxu0 0
        %2179 = vmatmul.mubr.bf16.gmra.mrb[0].mxu0 %v826
        %v2180 = vpop.f32.mrb[0].mxu0
        %v2181 = vadd.f32 %v2020, %v2180
        %v2182 = vpop.f32.mrb[0].mxu0
        %v2183 = vpop.f32.mrb[0].mxu0
        %v2184 = vadd.f32 %v2023, %v2183
        %v2185 = vpop.f32.mrb[0].mxu0
        %2186 = vmatprep.mubr.bf16.mxu0 0
        %2187 = vmatmul.mubr.bf16.gmra.mrb[0].mxu0 %v827
        %v2188 = vpop.f32.mrb[0].mxu0
        %v2189 = vadd.f32 %v2028, %v2188
        %v2190 = vpop.f32.mrb[0].mxu0
        %v2191 = vpop.f32.mrb[0].mxu0
        %v2192 = vadd.f32 %v2031, %v2191
        %v2193 = vpop.f32.mrb[0].mxu0
        %2194 = vmatprep.mubr.bf16.mxu0 0
        %2195 = vmatmul.mubr.bf16.gmra.mrb[0].mxu0 %v828
        %v2196 = vpop.f32.mrb[0].mxu0
        %v2197 = vadd.f32 %v2036, %v2196
        %v2198 = vpop.f32.mrb[0].mxu0
        %v2199 = vpop.f32.mrb[0].mxu0
        %v2200 = vadd.f32 %v2039, %v2199
        %v2201 = vpop.f32.mrb[0].mxu0
        %2202 = vmatprep.mubr.bf16.mxu0 0
        %2203 = vmatmul.mubr.bf16.gmra.mrb[0].mxu0 %v829
        %v2204 = vpop.f32.mrb[0].mxu0
        %v2205 = vadd.f32 %v2044, %v2204
        %v2206 = vpop.f32.mrb[0].mxu0
        %v2207 = vpop.f32.mrb[0].mxu0
        %v2208 = vadd.f32 %v2047, %v2207
        %v2209 = vpop.f32.mrb[0].mxu0
        %2210 = vmatprep.mubr.bf16.mxu0 0
        %2211 = vmatmul.mubr.bf16.gmra.mrb[0].mxu0 %v830
        %v2212 = vpop.f32.mrb[0].mxu0
        %v2213 = vadd.f32 %v2052, %v2212
        %v2214 = vpop.f32.mrb[0].mxu0
        %v2215 = vpop.f32.mrb[0].mxu0
        %v2216 = vadd.f32 %v2055, %v2215
        %v2217 = vpop.f32.mrb[0].mxu0
        %2218 = vdwg.mxu0
        %v2219 = vmax.f32 %v2093, 0.0
        %v2220 = vmax.f32 %v2096, 0.0
        %v2221 = vmax.f32 %v2101, 0.0
        %v2222 = vmax.f32 %v2104, 0.0
        %v2223 = vmax.f32 %v2109, 0.0
        %v2224 = vmax.f32 %v2112, 0.0
        %v2225 = vmax.f32 %v2117, 0.0
        %v2226 = vmax.f32 %v2120, 0.0
        %v2227 = vmax.f32 %v2125, 0.0
        %v2228 = vmax.f32 %v2128, 0.0
        %v2229 = vmax.f32 %v2133, 0.0
        %v2230 = vmax.f32 %v2136, 0.0
        %v2231 = vmax.f32 %v2141, 0.0
        %v2232 = vmax.f32 %v2144, 0.0
        %v2233 = vmax.f32 %v2149, 0.0
        %v2234 = vmax.f32 %v2152, 0.0
        %v2235 = vmax.f32 %v2157, 0.0
        %v2236 = vmax.f32 %v2160, 0.0
        %v2237 = vmax.f32 %v2165, 0.0
        %v2238 = vmax.f32 %v2168, 0.0
        %v2239 = vmax.f32 %v2173, 0.0
        %v2240 = vmax.f32 %v2176, 0.0
        %v2241 = vmax.f32 %v2181, 0.0
        %v2242 = vmax.f32 %v2184, 0.0
        %v2243 = vmax.f32 %v2189, 0.0
        %v2244 = vmax.f32 %v2192, 0.0
        %v2245 = vmax.f32 %v2197, 0.0
        %v2246 = vmax.f32 %v2200, 0.0
        %v2247 = vmax.f32 %v2205, 0.0
        %v2248 = vmax.f32 %v2208, 0.0
        %v2249 = vmax.f32 %v2213, 0.0
        %v2250 = vmax.f32 %v2216, 0.0
        %v2283 = vcombine.high %v2219, %v2219
        %v2285 = vunpack.c.l.s4 1983009808
        %v2286 = vunpack.c.0.s8 %v2285
        %v2287 = vlaneseq
        %v2288 = vshrl.u32 %v2287, 7
        %v2289 = vsub.s32 %v2286, %v2288
        %v2290 = vrot.slane %v2219, %v2289
        %v2292 = vunpack.c.l.s4 1983009808
        %v2293 = vunpack.c.0.s8 %v2292
        %v2294 = vlaneseq
        %v2295 = vshrl.u32 %v2294, 7
        %v2296 = vsub.s32 %v2293, %v2295
        %v2297 = vrot.slane %v2283, %v2296
        %v2298 = vcombine.high %v2290, %v2290
        %v2299 = vcombine.high %v2297, %v2297
        %v2300 = vcombine.high %v2220, %v2220
        %v2302 = vunpack.c.l.s4 1983009808
        %v2303 = vunpack.c.0.s8 %v2302
        %v2304 = vlaneseq
        %v2305 = vshrl.u32 %v2304, 7
        %v2306 = vsub.s32 %v2303, %v2305
        %v2307 = vrot.slane %v2220, %v2306
        %v2309 = vunpack.c.l.s4 1983009808
        %v2310 = vunpack.c.0.s8 %v2309
        %v2311 = vlaneseq
        %v2312 = vshrl.u32 %v2311, 7
        %v2313 = vsub.s32 %v2310, %v2312
        %v2314 = vrot.slane %v2300, %v2313
        %v2315 = vcombine.high %v2307, %v2307
        %v2316 = vcombine.high %v2314, %v2314
        %v2317 = vcombine.high %v2221, %v2221
        %v2319 = vunpack.c.l.s4 1983009808
        %v2320 = vunpack.c.0.s8 %v2319
        %v2321 = vlaneseq
        %v2322 = vshrl.u32 %v2321, 7
        %v2323 = vsub.s32 %v2320, %v2322
        %v2324 = vrot.slane %v2221, %v2323
        %v2326 = vunpack.c.l.s4 1983009808
        %v2327 = vunpack.c.0.s8 %v2326
        %v2328 = vlaneseq
        %v2329 = vshrl.u32 %v2328, 7
        %v2330 = vsub.s32 %v2327, %v2329
        %v2331 = vrot.slane %v2317, %v2330
        %v2332 = vcombine.high %v2324, %v2324
        %v2333 = vcombine.high %v2331, %v2331
        %v2334 = vcombine.high %v2222, %v2222
        %v2336 = vunpack.c.l.s4 1983009808
        %v2337 = vunpack.c.0.s8 %v2336
        %v2338 = vlaneseq
        %v2339 = vshrl.u32 %v2338, 7
        %v2340 = vsub.s32 %v2337, %v2339
        %v2341 = vrot.slane %v2222, %v2340
        %v2343 = vunpack.c.l.s4 1983009808
        %v2344 = vunpack.c.0.s8 %v2343
        %v2345 = vlaneseq
        %v2346 = vshrl.u32 %v2345, 7
        %v2347 = vsub.s32 %v2344, %v2346
        %v2348 = vrot.slane %v2334, %v2347
        %v2349 = vcombine.high %v2341, %v2341
        %v2350 = vcombine.high %v2348, %v2348
        %v2351 = vcombine.high %v2223, %v2223
        %v2353 = vunpack.c.l.s4 1983009808
        %v2354 = vunpack.c.0.s8 %v2353
        %v2355 = vlaneseq
        %v2356 = vshrl.u32 %v2355, 7
        %v2357 = vsub.s32 %v2354, %v2356
        %v2358 = vrot.slane %v2223, %v2357
        %v2360 = vunpack.c.l.s4 1983009808
        %v2361 = vunpack.c.0.s8 %v2360
        %v2362 = vlaneseq
        %v2363 = vshrl.u32 %v2362, 7
        %v2364 = vsub.s32 %v2361, %v2363
        %v2365 = vrot.slane %v2351, %v2364
        %v2366 = vcombine.high %v2358, %v2358
        %v2367 = vcombine.high %v2365, %v2365
        %v2368 = vcombine.high %v2224, %v2224
        %v2370 = vunpack.c.l.s4 1983009808
        %v2371 = vunpack.c.0.s8 %v2370
        %v2372 = vlaneseq
        %v2373 = vshrl.u32 %v2372, 7
        %v2374 = vsub.s32 %v2371, %v2373
        %v2375 = vrot.slane %v2224, %v2374
        %v2377 = vunpack.c.l.s4 1983009808
        %v2378 = vunpack.c.0.s8 %v2377
        %v2379 = vlaneseq
        %v2380 = vshrl.u32 %v2379, 7
        %v2381 = vsub.s32 %v2378, %v2380
        %v2382 = vrot.slane %v2368, %v2381
        %v2383 = vcombine.high %v2375, %v2375
        %v2384 = vcombine.high %v2382, %v2382
        %v2385 = vcombine.high %v2225, %v2225
        %v2387 = vunpack.c.l.s4 1983009808
        %v2388 = vunpack.c.0.s8 %v2387
        %v2389 = vlaneseq
        %v2390 = vshrl.u32 %v2389, 7
        %v2391 = vsub.s32 %v2388, %v2390
        %v2392 = vrot.slane %v2225, %v2391
        %v2394 = vunpack.c.l.s4 1983009808
        %v2395 = vunpack.c.0.s8 %v2394
        %v2396 = vlaneseq
        %v2397 = vshrl.u32 %v2396, 7
        %v2398 = vsub.s32 %v2395, %v2397
        %v2399 = vrot.slane %v2385, %v2398
        %v2400 = vcombine.high %v2392, %v2392
        %v2401 = vcombine.high %v2399, %v2399
        %v2402 = vcombine.high %v2226, %v2226
        %v2404 = vunpack.c.l.s4 1983009808
        %v2405 = vunpack.c.0.s8 %v2404
        %v2406 = vlaneseq
        %v2407 = vshrl.u32 %v2406, 7
        %v2408 = vsub.s32 %v2405, %v2407
        %v2409 = vrot.slane %v2226, %v2408
        %v2411 = vunpack.c.l.s4 1983009808
        %v2412 = vunpack.c.0.s8 %v2411
        %v2413 = vlaneseq
        %v2414 = vshrl.u32 %v2413, 7
        %v2415 = vsub.s32 %v2412, %v2414
        %v2416 = vrot.slane %v2402, %v2415
        %v2417 = vcombine.high %v2409, %v2409
        %v2418 = vcombine.high %v2416, %v2416
        %v2419 = vcombine.high %v2227, %v2227
        %v2421 = vunpack.c.l.s4 1983009808
        %v2422 = vunpack.c.0.s8 %v2421
        %v2423 = vlaneseq
        %v2424 = vshrl.u32 %v2423, 7
        %v2425 = vsub.s32 %v2422, %v2424
        %v2426 = vrot.slane %v2227, %v2425
        %v2428 = vunpack.c.l.s4 1983009808
        %v2429 = vunpack.c.0.s8 %v2428
        %v2430 = vlaneseq
        %v2431 = vshrl.u32 %v2430, 7
        %v2432 = vsub.s32 %v2429, %v2431
        %v2433 = vrot.slane %v2419, %v2432
        %v2434 = vcombine.high %v2426, %v2426
        %v2435 = vcombine.high %v2433, %v2433
        %v2436 = vcombine.high %v2228, %v2228
        %v2438 = vunpack.c.l.s4 1983009808
        %v2439 = vunpack.c.0.s8 %v2438
        %v2440 = vlaneseq
        %v2441 = vshrl.u32 %v2440, 7
        %v2442 = vsub.s32 %v2439, %v2441
        %v2443 = vrot.slane %v2228, %v2442
        %v2445 = vunpack.c.l.s4 1983009808
        %v2446 = vunpack.c.0.s8 %v2445
        %v2447 = vlaneseq
        %v2448 = vshrl.u32 %v2447, 7
        %v2449 = vsub.s32 %v2446, %v2448
        %v2450 = vrot.slane %v2436, %v2449
        %v2451 = vcombine.high %v2443, %v2443
        %v2452 = vcombine.high %v2450, %v2450
        %v2453 = vcombine.high %v2229, %v2229
        %v2455 = vunpack.c.l.s4 1983009808
        %v2456 = vunpack.c.0.s8 %v2455
        %v2457 = vlaneseq
        %v2458 = vshrl.u32 %v2457, 7
        %v2459 = vsub.s32 %v2456, %v2458
        %v2460 = vrot.slane %v2229, %v2459
        %v2462 = vunpack.c.l.s4 1983009808
        %v2463 = vunpack.c.0.s8 %v2462
        %v2464 = vlaneseq
        %v2465 = vshrl.u32 %v2464, 7
        %v2466 = vsub.s32 %v2463, %v2465
        %v2467 = vrot.slane %v2453, %v2466
        %v2468 = vcombine.high %v2460, %v2460
        %v2469 = vcombine.high %v2467, %v2467
        %v2470 = vcombine.high %v2230, %v2230
        %v2472 = vunpack.c.l.s4 1983009808
        %v2473 = vunpack.c.0.s8 %v2472
        %v2474 = vlaneseq
        %v2475 = vshrl.u32 %v2474, 7
        %v2476 = vsub.s32 %v2473, %v2475
        %v2477 = vrot.slane %v2230, %v2476
        %v2479 = vunpack.c.l.s4 1983009808
        %v2480 = vunpack.c.0.s8 %v2479
        %v2481 = vlaneseq
        %v2482 = vshrl.u32 %v2481, 7
        %v2483 = vsub.s32 %v2480, %v2482
        %v2484 = vrot.slane %v2470, %v2483
        %v2485 = vcombine.high %v2477, %v2477
        %v2486 = vcombine.high %v2484, %v2484
        %v2487 = vcombine.high %v2231, %v2231
        %v2489 = vunpack.c.l.s4 1983009808
        %v2490 = vunpack.c.0.s8 %v2489
        %v2491 = vlaneseq
        %v2492 = vshrl.u32 %v2491, 7
        %v2493 = vsub.s32 %v2490, %v2492
        %v2494 = vrot.slane %v2231, %v2493
        %v2496 = vunpack.c.l.s4 1983009808
        %v2497 = vunpack.c.0.s8 %v2496
        %v2498 = vlaneseq
        %v2499 = vshrl.u32 %v2498, 7
        %v2500 = vsub.s32 %v2497, %v2499
        %v2501 = vrot.slane %v2487, %v2500
        %v2502 = vcombine.high %v2494, %v2494
        %v2503 = vcombine.high %v2501, %v2501
        %v2504 = vcombine.high %v2232, %v2232
        %v2506 = vunpack.c.l.s4 1983009808
        %v2507 = vunpack.c.0.s8 %v2506
        %v2508 = vlaneseq
        %v2509 = vshrl.u32 %v2508, 7
        %v2510 = vsub.s32 %v2507, %v2509
        %v2511 = vrot.slane %v2232, %v2510
        %v2513 = vunpack.c.l.s4 1983009808
        %v2514 = vunpack.c.0.s8 %v2513
        %v2515 = vlaneseq
        %v2516 = vshrl.u32 %v2515, 7
        %v2517 = vsub.s32 %v2514, %v2516
        %v2518 = vrot.slane %v2504, %v2517
        %v2519 = vcombine.high %v2511, %v2511
        %v2520 = vcombine.high %v2518, %v2518
        %v2521 = vcombine.high %v2233, %v2233
        %v2523 = vunpack.c.l.s4 1983009808
        %v2524 = vunpack.c.0.s8 %v2523
        %v2525 = vlaneseq
        %v2526 = vshrl.u32 %v2525, 7
        %v2527 = vsub.s32 %v2524, %v2526
        %v2528 = vrot.slane %v2233, %v2527
        %v2530 = vunpack.c.l.s4 1983009808
        %v2531 = vunpack.c.0.s8 %v2530
        %v2532 = vlaneseq
        %v2533 = vshrl.u32 %v2532, 7
        %v2534 = vsub.s32 %v2531, %v2533
        %v2535 = vrot.slane %v2521, %v2534
        %v2536 = vcombine.high %v2528, %v2528
        %v2537 = vcombine.high %v2535, %v2535
        %v2538 = vcombine.high %v2234, %v2234
        %v2540 = vunpack.c.l.s4 1983009808
        %v2541 = vunpack.c.0.s8 %v2540
        %v2542 = vlaneseq
        %v2543 = vshrl.u32 %v2542, 7
        %v2544 = vsub.s32 %v2541, %v2543
        %v2545 = vrot.slane %v2234, %v2544
        %v2547 = vunpack.c.l.s4 1983009808
        %v2548 = vunpack.c.0.s8 %v2547
        %v2549 = vlaneseq
        %v2550 = vshrl.u32 %v2549, 7
        %v2551 = vsub.s32 %v2548, %v2550
        %v2552 = vrot.slane %v2538, %v2551
        %v2553 = vcombine.high %v2545, %v2545
        %v2554 = vcombine.high %v2552, %v2552
        %v2555 = vcombine.high %v2235, %v2235
        %v2557 = vunpack.c.l.s4 1983009808
        %v2558 = vunpack.c.0.s8 %v2557
        %v2559 = vlaneseq
        %v2560 = vshrl.u32 %v2559, 7
        %v2561 = vsub.s32 %v2558, %v2560
        %v2562 = vrot.slane %v2235, %v2561
        %v2564 = vunpack.c.l.s4 1983009808
        %v2565 = vunpack.c.0.s8 %v2564
        %v2566 = vlaneseq
        %v2567 = vshrl.u32 %v2566, 7
        %v2568 = vsub.s32 %v2565, %v2567
        %v2569 = vrot.slane %v2555, %v2568
        %v2570 = vcombine.high %v2562, %v2562
        %v2571 = vcombine.high %v2569, %v2569
        %v2572 = vcombine.high %v2236, %v2236
        %v2574 = vunpack.c.l.s4 1983009808
        %v2575 = vunpack.c.0.s8 %v2574
        %v2576 = vlaneseq
        %v2577 = vshrl.u32 %v2576, 7
        %v2578 = vsub.s32 %v2575, %v2577
        %v2579 = vrot.slane %v2236, %v2578
        %v2581 = vunpack.c.l.s4 1983009808
        %v2582 = vunpack.c.0.s8 %v2581
        %v2583 = vlaneseq
        %v2584 = vshrl.u32 %v2583, 7
        %v2585 = vsub.s32 %v2582, %v2584
        %v2586 = vrot.slane %v2572, %v2585
        %v2587 = vcombine.high %v2579, %v2579
        %v2588 = vcombine.high %v2586, %v2586
        %v2589 = vcombine.high %v2237, %v2237
        %v2591 = vunpack.c.l.s4 1983009808
        %v2592 = vunpack.c.0.s8 %v2591
        %v2593 = vlaneseq
        %v2594 = vshrl.u32 %v2593, 7
        %v2595 = vsub.s32 %v2592, %v2594
        %v2596 = vrot.slane %v2237, %v2595
        %v2598 = vunpack.c.l.s4 1983009808
        %v2599 = vunpack.c.0.s8 %v2598
        %v2600 = vlaneseq
        %v2601 = vshrl.u32 %v2600, 7
        %v2602 = vsub.s32 %v2599, %v2601
        %v2603 = vrot.slane %v2589, %v2602
        %v2604 = vcombine.high %v2596, %v2596
        %v2605 = vcombine.high %v2603, %v2603
        %v2606 = vcombine.high %v2238, %v2238
        %v2608 = vunpack.c.l.s4 1983009808
        %v2609 = vunpack.c.0.s8 %v2608
        %v2610 = vlaneseq
        %v2611 = vshrl.u32 %v2610, 7
        %v2612 = vsub.s32 %v2609, %v2611
        %v2613 = vrot.slane %v2238, %v2612
        %v2615 = vunpack.c.l.s4 1983009808
        %v2616 = vunpack.c.0.s8 %v2615
        %v2617 = vlaneseq
        %v2618 = vshrl.u32 %v2617, 7
        %v2619 = vsub.s32 %v2616, %v2618
        %v2620 = vrot.slane %v2606, %v2619
        %v2621 = vcombine.high %v2613, %v2613
        %v2622 = vcombine.high %v2620, %v2620
        %v2623 = vcombine.high %v2239, %v2239
        %v2625 = vunpack.c.l.s4 1983009808
        %v2626 = vunpack.c.0.s8 %v2625
        %v2627 = vlaneseq
        %v2628 = vshrl.u32 %v2627, 7
        %v2629 = vsub.s32 %v2626, %v2628
        %v2630 = vrot.slane %v2239, %v2629
        %v2632 = vunpack.c.l.s4 1983009808
        %v2633 = vunpack.c.0.s8 %v2632
        %v2634 = vlaneseq
        %v2635 = vshrl.u32 %v2634, 7
        %v2636 = vsub.s32 %v2633, %v2635
        %v2637 = vrot.slane %v2623, %v2636
        %v2638 = vcombine.high %v2630, %v2630
        %v2639 = vcombine.high %v2637, %v2637
        %v2640 = vcombine.high %v2240, %v2240
        %v2642 = vunpack.c.l.s4 1983009808
        %v2643 = vunpack.c.0.s8 %v2642
        %v2644 = vlaneseq
        %v2645 = vshrl.u32 %v2644, 7
        %v2646 = vsub.s32 %v2643, %v2645
        %v2647 = vrot.slane %v2240, %v2646
        %v2649 = vunpack.c.l.s4 1983009808
        %v2650 = vunpack.c.0.s8 %v2649
        %v2651 = vlaneseq
        %v2652 = vshrl.u32 %v2651, 7
        %v2653 = vsub.s32 %v2650, %v2652
        %v2654 = vrot.slane %v2640, %v2653
        %v2655 = vcombine.high %v2647, %v2647
        %v2656 = vcombine.high %v2654, %v2654
        %v2657 = vcombine.high %v2241, %v2241
        %v2659 = vunpack.c.l.s4 1983009808
        %v2660 = vunpack.c.0.s8 %v2659
        %v2661 = vlaneseq
        %v2662 = vshrl.u32 %v2661, 7
        %v2663 = vsub.s32 %v2660, %v2662
        %v2664 = vrot.slane %v2241, %v2663
        %v2666 = vunpack.c.l.s4 1983009808
        %v2667 = vunpack.c.0.s8 %v2666
        %v2668 = vlaneseq
        %v2669 = vshrl.u32 %v2668, 7
        %v2670 = vsub.s32 %v2667, %v2669
        %v2671 = vrot.slane %v2657, %v2670
        %v2672 = vcombine.high %v2664, %v2664
        %v2673 = vcombine.high %v2671, %v2671
        %v2674 = vcombine.high %v2242, %v2242
        %v2676 = vunpack.c.l.s4 1983009808
        %v2677 = vunpack.c.0.s8 %v2676
        %v2678 = vlaneseq
        %v2679 = vshrl.u32 %v2678, 7
        %v2680 = vsub.s32 %v2677, %v2679
        %v2681 = vrot.slane %v2242, %v2680
        %v2683 = vunpack.c.l.s4 1983009808
        %v2684 = vunpack.c.0.s8 %v2683
        %v2685 = vlaneseq
        %v2686 = vshrl.u32 %v2685, 7
        %v2687 = vsub.s32 %v2684, %v2686
        %v2688 = vrot.slane %v2674, %v2687
        %v2689 = vcombine.high %v2681, %v2681
        %v2690 = vcombine.high %v2688, %v2688
        %v2691 = vcombine.high %v2243, %v2243
        %v2693 = vunpack.c.l.s4 1983009808
        %v2694 = vunpack.c.0.s8 %v2693
        %v2695 = vlaneseq
        %v2696 = vshrl.u32 %v2695, 7
        %v2697 = vsub.s32 %v2694, %v2696
        %v2698 = vrot.slane %v2243, %v2697
        %v2700 = vunpack.c.l.s4 1983009808
        %v2701 = vunpack.c.0.s8 %v2700
        %v2702 = vlaneseq
        %v2703 = vshrl.u32 %v2702, 7
        %v2704 = vsub.s32 %v2701, %v2703
        %v2705 = vrot.slane %v2691, %v2704
        %v2706 = vcombine.high %v2698, %v2698
        %v2707 = vcombine.high %v2705, %v2705
        %v2708 = vcombine.high %v2244, %v2244
        %v2710 = vunpack.c.l.s4 1983009808
        %v2711 = vunpack.c.0.s8 %v2710
        %v2712 = vlaneseq
        %v2713 = vshrl.u32 %v2712, 7
        %v2714 = vsub.s32 %v2711, %v2713
        %v2715 = vrot.slane %v2244, %v2714
        %v2717 = vunpack.c.l.s4 1983009808
        %v2718 = vunpack.c.0.s8 %v2717
        %v2719 = vlaneseq
        %v2720 = vshrl.u32 %v2719, 7
        %v2721 = vsub.s32 %v2718, %v2720
        %v2722 = vrot.slane %v2708, %v2721
        %v2723 = vcombine.high %v2715, %v2715
        %v2724 = vcombine.high %v2722, %v2722
        %v2725 = vcombine.high %v2245, %v2245
        %v2727 = vunpack.c.l.s4 1983009808
        %v2728 = vunpack.c.0.s8 %v2727
        %v2729 = vlaneseq
        %v2730 = vshrl.u32 %v2729, 7
        %v2731 = vsub.s32 %v2728, %v2730
        %v2732 = vrot.slane %v2245, %v2731
        %v2734 = vunpack.c.l.s4 1983009808
        %v2735 = vunpack.c.0.s8 %v2734
        %v2736 = vlaneseq
        %v2737 = vshrl.u32 %v2736, 7
        %v2738 = vsub.s32 %v2735, %v2737
        %v2739 = vrot.slane %v2725, %v2738
        %v2740 = vcombine.high %v2732, %v2732
        %v2741 = vcombine.high %v2739, %v2739
        %v2742 = vcombine.high %v2246, %v2246
        %v2744 = vunpack.c.l.s4 1983009808
        %v2745 = vunpack.c.0.s8 %v2744
        %v2746 = vlaneseq
        %v2747 = vshrl.u32 %v2746, 7
        %v2748 = vsub.s32 %v2745, %v2747
        %v2749 = vrot.slane %v2246, %v2748
        %v2751 = vunpack.c.l.s4 1983009808
        %v2752 = vunpack.c.0.s8 %v2751
        %v2753 = vlaneseq
        %v2754 = vshrl.u32 %v2753, 7
        %v2755 = vsub.s32 %v2752, %v2754
        %v2756 = vrot.slane %v2742, %v2755
        %v2757 = vcombine.high %v2749, %v2749
        %v2758 = vcombine.high %v2756, %v2756
        %v2759 = vcombine.high %v2247, %v2247
        %v2761 = vunpack.c.l.s4 1983009808
        %v2762 = vunpack.c.0.s8 %v2761
        %v2763 = vlaneseq
        %v2764 = vshrl.u32 %v2763, 7
        %v2765 = vsub.s32 %v2762, %v2764
        %v2766 = vrot.slane %v2247, %v2765
        %v2768 = vunpack.c.l.s4 1983009808
        %v2769 = vunpack.c.0.s8 %v2768
        %v2770 = vlaneseq
        %v2771 = vshrl.u32 %v2770, 7
        %v2772 = vsub.s32 %v2769, %v2771
        %v2773 = vrot.slane %v2759, %v2772
        %v2774 = vcombine.high %v2766, %v2766
        %v2775 = vcombine.high %v2773, %v2773
        %v2776 = vcombine.high %v2248, %v2248
        %v2778 = vunpack.c.l.s4 1983009808
        %v2779 = vunpack.c.0.s8 %v2778
        %v2780 = vlaneseq
        %v2781 = vshrl.u32 %v2780, 7
        %v2782 = vsub.s32 %v2779, %v2781
        %v2783 = vrot.slane %v2248, %v2782
        %v2785 = vunpack.c.l.s4 1983009808
        %v2786 = vunpack.c.0.s8 %v2785
        %v2787 = vlaneseq
        %v2788 = vshrl.u32 %v2787, 7
        %v2789 = vsub.s32 %v2786, %v2788
        %v2790 = vrot.slane %v2776, %v2789
        %v2791 = vcombine.high %v2783, %v2783
        %v2792 = vcombine.high %v2790, %v2790
        %v2793 = vcombine.high %v2249, %v2249
        %v2795 = vunpack.c.l.s4 1983009808
        %v2796 = vunpack.c.0.s8 %v2795
        %v2797 = vlaneseq
        %v2798 = vshrl.u32 %v2797, 7
        %v2799 = vsub.s32 %v2796, %v2798
        %v2800 = vrot.slane %v2249, %v2799
        %v2802 = vunpack.c.l.s4 1983009808
        %v2803 = vunpack.c.0.s8 %v2802
        %v2804 = vlaneseq
        %v2805 = vshrl.u32 %v2804, 7
        %v2806 = vsub.s32 %v2803, %v2805
        %v2807 = vrot.slane %v2793, %v2806
        %v2808 = vcombine.high %v2800, %v2800
        %v2809 = vcombine.high %v2807, %v2807
        %v2810 = vcombine.high %v2250, %v2250
        %v2812 = vunpack.c.l.s4 1983009808
        %v2813 = vunpack.c.0.s8 %v2812
        %v2814 = vlaneseq
        %v2815 = vshrl.u32 %v2814, 7
        %v2816 = vsub.s32 %v2813, %v2815
        %v2817 = vrot.slane %v2250, %v2816
        %v2819 = vunpack.c.l.s4 1983009808
        %v2820 = vunpack.c.0.s8 %v2819
        %v2821 = vlaneseq
        %v2822 = vshrl.u32 %v2821, 7
        %v2823 = vsub.s32 %v2820, %v2822
        %v2824 = vrot.slane %v2810, %v2823
        %v2825 = vcombine.high %v2817, %v2817
        %v2826 = vcombine.high %v2824, %v2824
        %vm2955 = vcmask 517120
        %v2956 = vsel %vm2955, %v2290, -inf
        %v2957 = vrot.slane %v2956, 4
        %v2958 = vmax.f32 %v2956, %v2957
        %v2959 = vrot.slane %v2958, 2
        %v2960 = vmax.f32 %v2958, %v2959
        %v2961 = vrot.slane %v2960, 1
        %v2962 = vmax.f32 %v2960, %v2961
        %v2963 = vsel %vm2955, %v2298, -inf
        %v2964 = vrot.slane %v2963, 4
        %v2965 = vmax.f32 %v2963, %v2964
        %v2966 = vrot.slane %v2965, 2
        %v2967 = vmax.f32 %v2965, %v2966
        %v2968 = vrot.slane %v2967, 1
        %v2969 = vmax.f32 %v2967, %v2968
        %v2970 = vsel %vm2955, %v2297, -inf
        %v2971 = vrot.slane %v2970, 4
        %v2972 = vmax.f32 %v2970, %v2971
        %v2973 = vrot.slane %v2972, 2
        %v2974 = vmax.f32 %v2972, %v2973
        %v2975 = vrot.slane %v2974, 1
        %v2976 = vmax.f32 %v2974, %v2975
        %v2977 = vsel %vm2955, %v2299, -inf
        %v2978 = vrot.slane %v2977, 4
        %v2979 = vmax.f32 %v2977, %v2978
        %v2980 = vrot.slane %v2979, 2
        %v2981 = vmax.f32 %v2979, %v2980
        %v2982 = vrot.slane %v2981, 1
        %v2983 = vmax.f32 %v2981, %v2982
        %v2984 = vsel %vm2955, %v2307, -inf
        %v2985 = vrot.slane %v2984, 4
        %v2986 = vmax.f32 %v2984, %v2985
        %v2987 = vrot.slane %v2986, 2
        %v2988 = vmax.f32 %v2986, %v2987
        %v2989 = vrot.slane %v2988, 1
        %v2990 = vmax.f32 %v2988, %v2989
        %v2991 = vsel %vm2955, %v2315, -inf
        %v2992 = vrot.slane %v2991, 4
        %v2993 = vmax.f32 %v2991, %v2992
        %v2994 = vrot.slane %v2993, 2
        %v2995 = vmax.f32 %v2993, %v2994
        %v2996 = vrot.slane %v2995, 1
        %v2997 = vmax.f32 %v2995, %v2996
        %v2998 = vsel %vm2955, %v2314, -inf
        %v2999 = vrot.slane %v2998, 4
        %v3000 = vmax.f32 %v2998, %v2999
        %v3001 = vrot.slane %v3000, 2
        %v3002 = vmax.f32 %v3000, %v3001
        %v3003 = vrot.slane %v3002, 1
        %v3004 = vmax.f32 %v3002, %v3003
        %v3005 = vsel %vm2955, %v2316, -inf
        %v3006 = vrot.slane %v3005, 4
        %v3007 = vmax.f32 %v3005, %v3006
        %v3008 = vrot.slane %v3007, 2
        %v3009 = vmax.f32 %v3007, %v3008
        %v3010 = vrot.slane %v3009, 1
        %v3011 = vmax.f32 %v3009, %v3010
        %v3012 = vsel %vm2955, %v2324, -inf
        %v3013 = vrot.slane %v3012, 4
        %v3014 = vmax.f32 %v3012, %v3013
        %v3015 = vrot.slane %v3014, 2
        %v3016 = vmax.f32 %v3014, %v3015
        %v3017 = vrot.slane %v3016, 1
        %v3018 = vmax.f32 %v3016, %v3017
        %v3019 = vsel %vm2955, %v2332, -inf
        %v3020 = vrot.slane %v3019, 4
        %v3021 = vmax.f32 %v3019, %v3020
        %v3022 = vrot.slane %v3021, 2
        %v3023 = vmax.f32 %v3021, %v3022
        %v3024 = vrot.slane %v3023, 1
        %v3025 = vmax.f32 %v3023, %v3024
        %v3026 = vsel %vm2955, %v2331, -inf
        %v3027 = vrot.slane %v3026, 4
        %v3028 = vmax.f32 %v3026, %v3027
        %v3029 = vrot.slane %v3028, 2
        %v3030 = vmax.f32 %v3028, %v3029
        %v3031 = vrot.slane %v3030, 1
        %v3032 = vmax.f32 %v3030, %v3031
        %v3033 = vsel %vm2955, %v2333, -inf
        %v3034 = vrot.slane %v3033, 4
        %v3035 = vmax.f32 %v3033, %v3034
        %v3036 = vrot.slane %v3035, 2
        %v3037 = vmax.f32 %v3035, %v3036
        %v3038 = vrot.slane %v3037, 1
        %v3039 = vmax.f32 %v3037, %v3038
        %v3040 = vsel %vm2955, %v2341, -inf
        %v3041 = vrot.slane %v3040, 4
        %v3042 = vmax.f32 %v3040, %v3041
        %v3043 = vrot.slane %v3042, 2
        %v3044 = vmax.f32 %v3042, %v3043
        %v3045 = vrot.slane %v3044, 1
        %v3046 = vmax.f32 %v3044, %v3045
        %v3047 = vsel %vm2955, %v2349, -inf
        %v3048 = vrot.slane %v3047, 4
        %v3049 = vmax.f32 %v3047, %v3048
        %v3050 = vrot.slane %v3049, 2
        %v3051 = vmax.f32 %v3049, %v3050
        %v3052 = vrot.slane %v3051, 1
        %v3053 = vmax.f32 %v3051, %v3052
        %v3054 = vsel %vm2955, %v2348, -inf
        %v3055 = vrot.slane %v3054, 4
        %v3056 = vmax.f32 %v3054, %v3055
        %v3057 = vrot.slane %v3056, 2
        %v3058 = vmax.f32 %v3056, %v3057
        %v3059 = vrot.slane %v3058, 1
        %v3060 = vmax.f32 %v3058, %v3059
        %v3061 = vsel %vm2955, %v2350, -inf
        %v3062 = vrot.slane %v3061, 4
        %v3063 = vmax.f32 %v3061, %v3062
        %v3064 = vrot.slane %v3063, 2
        %v3065 = vmax.f32 %v3063, %v3064
        %v3066 = vrot.slane %v3065, 1
        %v3067 = vmax.f32 %v3065, %v3066
        %v3068 = vsel %vm2955, %v2358, -inf
        %v3069 = vrot.slane %v3068, 4
        %v3070 = vmax.f32 %v3068, %v3069
        %v3071 = vrot.slane %v3070, 2
        %v3072 = vmax.f32 %v3070, %v3071
        %v3073 = vrot.slane %v3072, 1
        %v3074 = vmax.f32 %v3072, %v3073
        %v3075 = vsel %vm2955, %v2366, -inf
        %v3076 = vrot.slane %v3075, 4
        %v3077 = vmax.f32 %v3075, %v3076
        %v3078 = vrot.slane %v3077, 2
        %v3079 = vmax.f32 %v3077, %v3078
        %v3080 = vrot.slane %v3079, 1
        %v3081 = vmax.f32 %v3079, %v3080
        %v3082 = vsel %vm2955, %v2365, -inf
        %v3083 = vrot.slane %v3082, 4
        %v3084 = vmax.f32 %v3082, %v3083
        %v3085 = vrot.slane %v3084, 2
        %v3086 = vmax.f32 %v3084, %v3085
        %v3087 = vrot.slane %v3086, 1
        %v3088 = vmax.f32 %v3086, %v3087
        %v3089 = vsel %vm2955, %v2367, -inf
        %v3090 = vrot.slane %v3089, 4
        %v3091 = vmax.f32 %v3089, %v3090
        %v3092 = vrot.slane %v3091, 2
        %v3093 = vmax.f32 %v3091, %v3092
        %v3094 = vrot.slane %v3093, 1
        %v3095 = vmax.f32 %v3093, %v3094
        %v3096 = vsel %vm2955, %v2375, -inf
        %v3097 = vrot.slane %v3096, 4
        %v3098 = vmax.f32 %v3096, %v3097
        %v3099 = vrot.slane %v3098, 2
        %v3100 = vmax.f32 %v3098, %v3099
        %v3101 = vrot.slane %v3100, 1
        %v3102 = vmax.f32 %v3100, %v3101
        %v3103 = vsel %vm2955, %v2383, -inf
        %v3104 = vrot.slane %v3103, 4
        %v3105 = vmax.f32 %v3103, %v3104
        %v3106 = vrot.slane %v3105, 2
        %v3107 = vmax.f32 %v3105, %v3106
        %v3108 = vrot.slane %v3107, 1
        %v3109 = vmax.f32 %v3107, %v3108
        %v3110 = vsel %vm2955, %v2382, -inf
        %v3111 = vrot.slane %v3110, 4
        %v3112 = vmax.f32 %v3110, %v3111
        %v3113 = vrot.slane %v3112, 2
        %v3114 = vmax.f32 %v3112, %v3113
        %v3115 = vrot.slane %v3114, 1
        %v3116 = vmax.f32 %v3114, %v3115
        %v3117 = vsel %vm2955, %v2384, -inf
        %v3118 = vrot.slane %v3117, 4
        %v3119 = vmax.f32 %v3117, %v3118
        %v3120 = vrot.slane %v3119, 2
        %v3121 = vmax.f32 %v3119, %v3120
        %v3122 = vrot.slane %v3121, 1
        %v3123 = vmax.f32 %v3121, %v3122
        %v3124 = vsel %vm2955, %v2392, -inf
        %v3125 = vrot.slane %v3124, 4
        %v3126 = vmax.f32 %v3124, %v3125
        %v3127 = vrot.slane %v3126, 2
        %v3128 = vmax.f32 %v3126, %v3127
        %v3129 = vrot.slane %v3128, 1
        %v3130 = vmax.f32 %v3128, %v3129
        %v3131 = vsel %vm2955, %v2400, -inf
        %v3132 = vrot.slane %v3131, 4
        %v3133 = vmax.f32 %v3131, %v3132
        %v3134 = vrot.slane %v3133, 2
        %v3135 = vmax.f32 %v3133, %v3134
        %v3136 = vrot.slane %v3135, 1
        %v3137 = vmax.f32 %v3135, %v3136
        %v3138 = vsel %vm2955, %v2399, -inf
        %v3139 = vrot.slane %v3138, 4
        %v3140 = vmax.f32 %v3138, %v3139
        %v3141 = vrot.slane %v3140, 2
        %v3142 = vmax.f32 %v3140, %v3141
        %v3143 = vrot.slane %v3142, 1
        %v3144 = vmax.f32 %v3142, %v3143
        %v3145 = vsel %vm2955, %v2401, -inf
        %v3146 = vrot.slane %v3145, 4
        %v3147 = vmax.f32 %v3145, %v3146
        %v3148 = vrot.slane %v3147, 2
        %v3149 = vmax.f32 %v3147, %v3148
        %v3150 = vrot.slane %v3149, 1
        %v3151 = vmax.f32 %v3149, %v3150
        %v3152 = vsel %vm2955, %v2409, -inf
        %v3153 = vrot.slane %v3152, 4
        %v3154 = vmax.f32 %v3152, %v3153
        %v3155 = vrot.slane %v3154, 2
        %v3156 = vmax.f32 %v3154, %v3155
        %v3157 = vrot.slane %v3156, 1
        %v3158 = vmax.f32 %v3156, %v3157
        %v3159 = vsel %vm2955, %v2417, -inf
        %v3160 = vrot.slane %v3159, 4
        %v3161 = vmax.f32 %v3159, %v3160
        %v3162 = vrot.slane %v3161, 2
        %v3163 = vmax.f32 %v3161, %v3162
        %v3164 = vrot.slane %v3163, 1
        %v3165 = vmax.f32 %v3163, %v3164
        %v3166 = vsel %vm2955, %v2416, -inf
        %v3167 = vrot.slane %v3166, 4
        %v3168 = vmax.f32 %v3166, %v3167
        %v3169 = vrot.slane %v3168, 2
        %v3170 = vmax.f32 %v3168, %v3169
        %v3171 = vrot.slane %v3170, 1
        %v3172 = vmax.f32 %v3170, %v3171
        %v3173 = vsel %vm2955, %v2418, -inf
        %v3174 = vrot.slane %v3173, 4
        %v3175 = vmax.f32 %v3173, %v3174
        %v3176 = vrot.slane %v3175, 2
        %v3177 = vmax.f32 %v3175, %v3176
        %v3178 = vrot.slane %v3177, 1
        %v3179 = vmax.f32 %v3177, %v3178
        %v3180 = vsel %vm2955, %v2426, -inf
        %v3181 = vrot.slane %v3180, 4
        %v3182 = vmax.f32 %v3180, %v3181
        %v3183 = vrot.slane %v3182, 2
        %v3184 = vmax.f32 %v3182, %v3183
        %v3185 = vrot.slane %v3184, 1
        %v3186 = vmax.f32 %v3184, %v3185
        %v3187 = vsel %vm2955, %v2434, -inf
        %v3188 = vrot.slane %v3187, 4
        %v3189 = vmax.f32 %v3187, %v3188
        %v3190 = vrot.slane %v3189, 2
        %v3191 = vmax.f32 %v3189, %v3190
        %v3192 = vrot.slane %v3191, 1
        %v3193 = vmax.f32 %v3191, %v3192
        %v3194 = vsel %vm2955, %v2433, -inf
        %v3195 = vrot.slane %v3194, 4
        %v3196 = vmax.f32 %v3194, %v3195
        %v3197 = vrot.slane %v3196, 2
        %v3198 = vmax.f32 %v3196, %v3197
        %v3199 = vrot.slane %v3198, 1
        %v3200 = vmax.f32 %v3198, %v3199
        %v3201 = vsel %vm2955, %v2435, -inf
        %v3202 = vrot.slane %v3201, 4
        %v3203 = vmax.f32 %v3201, %v3202
        %v3204 = vrot.slane %v3203, 2
        %v3205 = vmax.f32 %v3203, %v3204
        %v3206 = vrot.slane %v3205, 1
        %v3207 = vmax.f32 %v3205, %v3206
        %v3208 = vsel %vm2955, %v2443, -inf
        %v3209 = vrot.slane %v3208, 4
        %v3210 = vmax.f32 %v3208, %v3209
        %v3211 = vrot.slane %v3210, 2
        %v3212 = vmax.f32 %v3210, %v3211
        %v3213 = vrot.slane %v3212, 1
        %v3214 = vmax.f32 %v3212, %v3213
        %v3215 = vsel %vm2955, %v2451, -inf
        %v3216 = vrot.slane %v3215, 4
        %v3217 = vmax.f32 %v3215, %v3216
        %v3218 = vrot.slane %v3217, 2
        %v3219 = vmax.f32 %v3217, %v3218
        %v3220 = vrot.slane %v3219, 1
        %v3221 = vmax.f32 %v3219, %v3220
        %v3222 = vsel %vm2955, %v2450, -inf
        %v3223 = vrot.slane %v3222, 4
        %v3224 = vmax.f32 %v3222, %v3223
        %v3225 = vrot.slane %v3224, 2
        %v3226 = vmax.f32 %v3224, %v3225
        %v3227 = vrot.slane %v3226, 1
        %v3228 = vmax.f32 %v3226, %v3227
        %v3229 = vsel %vm2955, %v2452, -inf
        %v3230 = vrot.slane %v3229, 4
        %v3231 = vmax.f32 %v3229, %v3230
        %v3232 = vrot.slane %v3231, 2
        %v3233 = vmax.f32 %v3231, %v3232
        %v3234 = vrot.slane %v3233, 1
        %v3235 = vmax.f32 %v3233, %v3234
        %v3236 = vsel %vm2955, %v2460, -inf
        %v3237 = vrot.slane %v3236, 4
        %v3238 = vmax.f32 %v3236, %v3237
        %v3239 = vrot.slane %v3238, 2
        %v3240 = vmax.f32 %v3238, %v3239
        %v3241 = vrot.slane %v3240, 1
        %v3242 = vmax.f32 %v3240, %v3241
        %v3243 = vsel %vm2955, %v2468, -inf
        %v3244 = vrot.slane %v3243, 4
        %v3245 = vmax.f32 %v3243, %v3244
        %v3246 = vrot.slane %v3245, 2
        %v3247 = vmax.f32 %v3245, %v3246
        %v3248 = vrot.slane %v3247, 1
        %v3249 = vmax.f32 %v3247, %v3248
        %v3250 = vsel %vm2955, %v2467, -inf
        %v3251 = vrot.slane %v3250, 4
        %v3252 = vmax.f32 %v3250, %v3251
        %v3253 = vrot.slane %v3252, 2
        %v3254 = vmax.f32 %v3252, %v3253
        %v3255 = vrot.slane %v3254, 1
        %v3256 = vmax.f32 %v3254, %v3255
        %v3257 = vsel %vm2955, %v2469, -inf
        %v3258 = vrot.slane %v3257, 4
        %v3259 = vmax.f32 %v3257, %v3258
        %v3260 = vrot.slane %v3259, 2
        %v3261 = vmax.f32 %v3259, %v3260
        %v3262 = vrot.slane %v3261, 1
        %v3263 = vmax.f32 %v3261, %v3262
        %v3264 = vsel %vm2955, %v2477, -inf
        %v3265 = vrot.slane %v3264, 4
        %v3266 = vmax.f32 %v3264, %v3265
        %v3267 = vrot.slane %v3266, 2
        %v3268 = vmax.f32 %v3266, %v3267
        %v3269 = vrot.slane %v3268, 1
        %v3270 = vmax.f32 %v3268, %v3269
        %v3271 = vsel %vm2955, %v2485, -inf
        %v3272 = vrot.slane %v3271, 4
        %v3273 = vmax.f32 %v3271, %v3272
        %v3274 = vrot.slane %v3273, 2
        %v3275 = vmax.f32 %v3273, %v3274
        %v3276 = vrot.slane %v3275, 1
        %v3277 = vmax.f32 %v3275, %v3276
        %v3278 = vsel %vm2955, %v2484, -inf
        %v3279 = vrot.slane %v3278, 4
        %v3280 = vmax.f32 %v3278, %v3279
        %v3281 = vrot.slane %v3280, 2
        %v3282 = vmax.f32 %v3280, %v3281
        %v3283 = vrot.slane %v3282, 1
        %v3284 = vmax.f32 %v3282, %v3283
        %v3285 = vsel %vm2955, %v2486, -inf
        %v3286 = vrot.slane %v3285, 4
        %v3287 = vmax.f32 %v3285, %v3286
        %v3288 = vrot.slane %v3287, 2
        %v3289 = vmax.f32 %v3287, %v3288
        %v3290 = vrot.slane %v3289, 1
        %v3291 = vmax.f32 %v3289, %v3290
        %v3292 = vsel %vm2955, %v2494, -inf
        %v3293 = vrot.slane %v3292, 4
        %v3294 = vmax.f32 %v3292, %v3293
        %v3295 = vrot.slane %v3294, 2
        %v3296 = vmax.f32 %v3294, %v3295
        %v3297 = vrot.slane %v3296, 1
        %v3298 = vmax.f32 %v3296, %v3297
        %v3299 = vsel %vm2955, %v2502, -inf
        %v3300 = vrot.slane %v3299, 4
        %v3301 = vmax.f32 %v3299, %v3300
        %v3302 = vrot.slane %v3301, 2
        %v3303 = vmax.f32 %v3301, %v3302
        %v3304 = vrot.slane %v3303, 1
        %v3305 = vmax.f32 %v3303, %v3304
        %v3306 = vsel %vm2955, %v2501, -inf
        %v3307 = vrot.slane %v3306, 4
        %v3308 = vmax.f32 %v3306, %v3307
        %v3309 = vrot.slane %v3308, 2
        %v3310 = vmax.f32 %v3308, %v3309
        %v3311 = vrot.slane %v3310, 1
        %v3312 = vmax.f32 %v3310, %v3311
        %v3313 = vsel %vm2955, %v2503, -inf
        %v3314 = vrot.slane %v3313, 4
        %v3315 = vmax.f32 %v3313, %v3314
        %v3316 = vrot.slane %v3315, 2
        %v3317 = vmax.f32 %v3315, %v3316
        %v3318 = vrot.slane %v3317, 1
        %v3319 = vmax.f32 %v3317, %v3318
        %v3320 = vsel %vm2955, %v2511, -inf
        %v3321 = vrot.slane %v3320, 4
        %v3322 = vmax.f32 %v3320, %v3321
        %v3323 = vrot.slane %v3322, 2
        %v3324 = vmax.f32 %v3322, %v3323
        %v3325 = vrot.slane %v3324, 1
        %v3326 = vmax.f32 %v3324, %v3325
        %v3327 = vsel %vm2955, %v2519, -inf
        %v3328 = vrot.slane %v3327, 4
        %v3329 = vmax.f32 %v3327, %v3328
        %v3330 = vrot.slane %v3329, 2
        %v3331 = vmax.f32 %v3329, %v3330
        %v3332 = vrot.slane %v3331, 1
        %v3333 = vmax.f32 %v3331, %v3332
        %v3334 = vsel %vm2955, %v2518, -inf
        %v3335 = vrot.slane %v3334, 4
        %v3336 = vmax.f32 %v3334, %v3335
        %v3337 = vrot.slane %v3336, 2
        %v3338 = vmax.f32 %v3336, %v3337
        %v3339 = vrot.slane %v3338, 1
        %v3340 = vmax.f32 %v3338, %v3339
        %v3341 = vsel %vm2955, %v2520, -inf
        %v3342 = vrot.slane %v3341, 4
        %v3343 = vmax.f32 %v3341, %v3342
        %v3344 = vrot.slane %v3343, 2
        %v3345 = vmax.f32 %v3343, %v3344
        %v3346 = vrot.slane %v3345, 1
        %v3347 = vmax.f32 %v3345, %v3346
        %v3348 = vsel %vm2955, %v2528, -inf
        %v3349 = vrot.slane %v3348, 4
        %v3350 = vmax.f32 %v3348, %v3349
        %v3351 = vrot.slane %v3350, 2
        %v3352 = vmax.f32 %v3350, %v3351
        %v3353 = vrot.slane %v3352, 1
        %v3354 = vmax.f32 %v3352, %v3353
        %v3355 = vsel %vm2955, %v2536, -inf
        %v3356 = vrot.slane %v3355, 4
        %v3357 = vmax.f32 %v3355, %v3356
        %v3358 = vrot.slane %v3357, 2
        %v3359 = vmax.f32 %v3357, %v3358
        %v3360 = vrot.slane %v3359, 1
        %v3361 = vmax.f32 %v3359, %v3360
        %v3362 = vsel %vm2955, %v2535, -inf
        %v3363 = vrot.slane %v3362, 4
        %v3364 = vmax.f32 %v3362, %v3363
        %v3365 = vrot.slane %v3364, 2
        %v3366 = vmax.f32 %v3364, %v3365
        %v3367 = vrot.slane %v3366, 1
        %v3368 = vmax.f32 %v3366, %v3367
        %v3369 = vsel %vm2955, %v2537, -inf
        %v3370 = vrot.slane %v3369, 4
        %v3371 = vmax.f32 %v3369, %v3370
        %v3372 = vrot.slane %v3371, 2
        %v3373 = vmax.f32 %v3371, %v3372
        %v3374 = vrot.slane %v3373, 1
        %v3375 = vmax.f32 %v3373, %v3374
        %v3376 = vsel %vm2955, %v2545, -inf
        %v3377 = vrot.slane %v3376, 4
        %v3378 = vmax.f32 %v3376, %v3377
        %v3379 = vrot.slane %v3378, 2
        %v3380 = vmax.f32 %v3378, %v3379
        %v3381 = vrot.slane %v3380, 1
        %v3382 = vmax.f32 %v3380, %v3381
        %v3383 = vsel %vm2955, %v2553, -inf
        %v3384 = vrot.slane %v3383, 4
        %v3385 = vmax.f32 %v3383, %v3384
        %v3386 = vrot.slane %v3385, 2
        %v3387 = vmax.f32 %v3385, %v3386
        %v3388 = vrot.slane %v3387, 1
        %v3389 = vmax.f32 %v3387, %v3388
        %v3390 = vsel %vm2955, %v2552, -inf
        %v3391 = vrot.slane %v3390, 4
        %v3392 = vmax.f32 %v3390, %v3391
        %v3393 = vrot.slane %v3392, 2
        %v3394 = vmax.f32 %v3392, %v3393
        %v3395 = vrot.slane %v3394, 1
        %v3396 = vmax.f32 %v3394, %v3395
        %v3397 = vsel %vm2955, %v2554, -inf
        %v3398 = vrot.slane %v3397, 4
        %v3399 = vmax.f32 %v3397, %v3398
        %v3400 = vrot.slane %v3399, 2
        %v3401 = vmax.f32 %v3399, %v3400
        %v3402 = vrot.slane %v3401, 1
        %v3403 = vmax.f32 %v3401, %v3402
        %v3404 = vsel %vm2955, %v2562, -inf
        %v3405 = vrot.slane %v3404, 4
        %v3406 = vmax.f32 %v3404, %v3405
        %v3407 = vrot.slane %v3406, 2
        %v3408 = vmax.f32 %v3406, %v3407
        %v3409 = vrot.slane %v3408, 1
        %v3410 = vmax.f32 %v3408, %v3409
        %v3411 = vsel %vm2955, %v2570, -inf
        %v3412 = vrot.slane %v3411, 4
        %v3413 = vmax.f32 %v3411, %v3412
        %v3414 = vrot.slane %v3413, 2
        %v3415 = vmax.f32 %v3413, %v3414
        %v3416 = vrot.slane %v3415, 1
        %v3417 = vmax.f32 %v3415, %v3416
        %v3418 = vsel %vm2955, %v2569, -inf
        %v3419 = vrot.slane %v3418, 4
        %v3420 = vmax.f32 %v3418, %v3419
        %v3421 = vrot.slane %v3420, 2
        %v3422 = vmax.f32 %v3420, %v3421
        %v3423 = vrot.slane %v3422, 1
        %v3424 = vmax.f32 %v3422, %v3423
        %v3425 = vsel %vm2955, %v2571, -inf
        %v3426 = vrot.slane %v3425, 4
        %v3427 = vmax.f32 %v3425, %v3426
        %v3428 = vrot.slane %v3427, 2
        %v3429 = vmax.f32 %v3427, %v3428
        %v3430 = vrot.slane %v3429, 1
        %v3431 = vmax.f32 %v3429, %v3430
        %v3432 = vsel %vm2955, %v2579, -inf
        %v3433 = vrot.slane %v3432, 4
        %v3434 = vmax.f32 %v3432, %v3433
        %v3435 = vrot.slane %v3434, 2
        %v3436 = vmax.f32 %v3434, %v3435
        %v3437 = vrot.slane %v3436, 1
        %v3438 = vmax.f32 %v3436, %v3437
        %v3439 = vsel %vm2955, %v2587, -inf
        %v3440 = vrot.slane %v3439, 4
        %v3441 = vmax.f32 %v3439, %v3440
        %v3442 = vrot.slane %v3441, 2
        %v3443 = vmax.f32 %v3441, %v3442
        %v3444 = vrot.slane %v3443, 1
        %v3445 = vmax.f32 %v3443, %v3444
        %v3446 = vsel %vm2955, %v2586, -inf
        %v3447 = vrot.slane %v3446, 4
        %v3448 = vmax.f32 %v3446, %v3447
        %v3449 = vrot.slane %v3448, 2
        %v3450 = vmax.f32 %v3448, %v3449
        %v3451 = vrot.slane %v3450, 1
        %v3452 = vmax.f32 %v3450, %v3451
        %v3453 = vsel %vm2955, %v2588, -inf
        %v3454 = vrot.slane %v3453, 4
        %v3455 = vmax.f32 %v3453, %v3454
        %v3456 = vrot.slane %v3455, 2
        %v3457 = vmax.f32 %v3455, %v3456
        %v3458 = vrot.slane %v3457, 1
        %v3459 = vmax.f32 %v3457, %v3458
        %v3460 = vsel %vm2955, %v2596, -inf
        %v3461 = vrot.slane %v3460, 4
        %v3462 = vmax.f32 %v3460, %v3461
        %v3463 = vrot.slane %v3462, 2
        %v3464 = vmax.f32 %v3462, %v3463
        %v3465 = vrot.slane %v3464, 1
        %v3466 = vmax.f32 %v3464, %v3465
        %v3467 = vsel %vm2955, %v2604, -inf
        %v3468 = vrot.slane %v3467, 4
        %v3469 = vmax.f32 %v3467, %v3468
        %v3470 = vrot.slane %v3469, 2
        %v3471 = vmax.f32 %v3469, %v3470
        %v3472 = vrot.slane %v3471, 1
        %v3473 = vmax.f32 %v3471, %v3472
        %v3474 = vsel %vm2955, %v2603, -inf
        %v3475 = vrot.slane %v3474, 4
        %v3476 = vmax.f32 %v3474, %v3475
        %v3477 = vrot.slane %v3476, 2
        %v3478 = vmax.f32 %v3476, %v3477
        %v3479 = vrot.slane %v3478, 1
        %v3480 = vmax.f32 %v3478, %v3479
        %v3481 = vsel %vm2955, %v2605, -inf
        %v3482 = vrot.slane %v3481, 4
        %v3483 = vmax.f32 %v3481, %v3482
        %v3484 = vrot.slane %v3483, 2
        %v3485 = vmax.f32 %v3483, %v3484
        %v3486 = vrot.slane %v3485, 1
        %v3487 = vmax.f32 %v3485, %v3486
        %v3488 = vsel %vm2955, %v2613, -inf
        %v3489 = vrot.slane %v3488, 4
        %v3490 = vmax.f32 %v3488, %v3489
        %v3491 = vrot.slane %v3490, 2
        %v3492 = vmax.f32 %v3490, %v3491
        %v3493 = vrot.slane %v3492, 1
        %v3494 = vmax.f32 %v3492, %v3493
        %v3495 = vsel %vm2955, %v2621, -inf
        %v3496 = vrot.slane %v3495, 4
        %v3497 = vmax.f32 %v3495, %v3496
        %v3498 = vrot.slane %v3497, 2
        %v3499 = vmax.f32 %v3497, %v3498
        %v3500 = vrot.slane %v3499, 1
        %v3501 = vmax.f32 %v3499, %v3500
        %v3502 = vsel %vm2955, %v2620, -inf
        %v3503 = vrot.slane %v3502, 4
        %v3504 = vmax.f32 %v3502, %v3503
        %v3505 = vrot.slane %v3504, 2
        %v3506 = vmax.f32 %v3504, %v3505
        %v3507 = vrot.slane %v3506, 1
        %v3508 = vmax.f32 %v3506, %v3507
        %v3509 = vsel %vm2955, %v2622, -inf
        %v3510 = vrot.slane %v3509, 4
        %v3511 = vmax.f32 %v3509, %v3510
        %v3512 = vrot.slane %v3511, 2
        %v3513 = vmax.f32 %v3511, %v3512
        %v3514 = vrot.slane %v3513, 1
        %v3515 = vmax.f32 %v3513, %v3514
        %v3516 = vsel %vm2955, %v2630, -inf
        %v3517 = vrot.slane %v3516, 4
        %v3518 = vmax.f32 %v3516, %v3517
        %v3519 = vrot.slane %v3518, 2
        %v3520 = vmax.f32 %v3518, %v3519
        %v3521 = vrot.slane %v3520, 1
        %v3522 = vmax.f32 %v3520, %v3521
        %v3523 = vsel %vm2955, %v2638, -inf
        %v3524 = vrot.slane %v3523, 4
        %v3525 = vmax.f32 %v3523, %v3524
        %v3526 = vrot.slane %v3525, 2
        %v3527 = vmax.f32 %v3525, %v3526
        %v3528 = vrot.slane %v3527, 1
        %v3529 = vmax.f32 %v3527, %v3528
        %v3530 = vsel %vm2955, %v2637, -inf
        %v3531 = vrot.slane %v3530, 4
        %v3532 = vmax.f32 %v3530, %v3531
        %v3533 = vrot.slane %v3532, 2
        %v3534 = vmax.f32 %v3532, %v3533
        %v3535 = vrot.slane %v3534, 1
        %v3536 = vmax.f32 %v3534, %v3535
        %v3537 = vsel %vm2955, %v2639, -inf
        %v3538 = vrot.slane %v3537, 4
        %v3539 = vmax.f32 %v3537, %v3538
        %v3540 = vrot.slane %v3539, 2
        %v3541 = vmax.f32 %v3539, %v3540
        %v3542 = vrot.slane %v3541, 1
        %v3543 = vmax.f32 %v3541, %v3542
        %v3544 = vsel %vm2955, %v2647, -inf
        %v3545 = vrot.slane %v3544, 4
        %v3546 = vmax.f32 %v3544, %v3545
        %v3547 = vrot.slane %v3546, 2
        %v3548 = vmax.f32 %v3546, %v3547
        %v3549 = vrot.slane %v3548, 1
        %v3550 = vmax.f32 %v3548, %v3549
        %v3551 = vsel %vm2955, %v2655, -inf
        %v3552 = vrot.slane %v3551, 4
        %v3553 = vmax.f32 %v3551, %v3552
        %v3554 = vrot.slane %v3553, 2
        %v3555 = vmax.f32 %v3553, %v3554
        %v3556 = vrot.slane %v3555, 1
        %v3557 = vmax.f32 %v3555, %v3556
        %v3558 = vsel %vm2955, %v2654, -inf
        %v3559 = vrot.slane %v3558, 4
        %v3560 = vmax.f32 %v3558, %v3559
        %v3561 = vrot.slane %v3560, 2
        %v3562 = vmax.f32 %v3560, %v3561
        %v3563 = vrot.slane %v3562, 1
        %v3564 = vmax.f32 %v3562, %v3563
        %v3565 = vsel %vm2955, %v2656, -inf
        %v3566 = vrot.slane %v3565, 4
        %v3567 = vmax.f32 %v3565, %v3566
        %v3568 = vrot.slane %v3567, 2
        %v3569 = vmax.f32 %v3567, %v3568
        %v3570 = vrot.slane %v3569, 1
        %v3571 = vmax.f32 %v3569, %v3570
        %v3572 = vsel %vm2955, %v2664, -inf
        %v3573 = vrot.slane %v3572, 4
        %v3574 = vmax.f32 %v3572, %v3573
        %v3575 = vrot.slane %v3574, 2
        %v3576 = vmax.f32 %v3574, %v3575
        %v3577 = vrot.slane %v3576, 1
        %v3578 = vmax.f32 %v3576, %v3577
        %v3579 = vsel %vm2955, %v2672, -inf
        %v3580 = vrot.slane %v3579, 4
        %v3581 = vmax.f32 %v3579, %v3580
        %v3582 = vrot.slane %v3581, 2
        %v3583 = vmax.f32 %v3581, %v3582
        %v3584 = vrot.slane %v3583, 1
        %v3585 = vmax.f32 %v3583, %v3584
        %v3586 = vsel %vm2955, %v2671, -inf
        %v3587 = vrot.slane %v3586, 4
        %v3588 = vmax.f32 %v3586, %v3587
        %v3589 = vrot.slane %v3588, 2
        %v3590 = vmax.f32 %v3588, %v3589
        %v3591 = vrot.slane %v3590, 1
        %v3592 = vmax.f32 %v3590, %v3591
        %v3593 = vsel %vm2955, %v2673, -inf
        %v3594 = vrot.slane %v3593, 4
        %v3595 = vmax.f32 %v3593, %v3594
        %v3596 = vrot.slane %v3595, 2
        %v3597 = vmax.f32 %v3595, %v3596
        %v3598 = vrot.slane %v3597, 1
        %v3599 = vmax.f32 %v3597, %v3598
        %v3600 = vsel %vm2955, %v2681, -inf
        %v3601 = vrot.slane %v3600, 4
        %v3602 = vmax.f32 %v3600, %v3601
        %v3603 = vrot.slane %v3602, 2
        %v3604 = vmax.f32 %v3602, %v3603
        %v3605 = vrot.slane %v3604, 1
        %v3606 = vmax.f32 %v3604, %v3605
        %v3607 = vsel %vm2955, %v2689, -inf
        %v3608 = vrot.slane %v3607, 4
        %v3609 = vmax.f32 %v3607, %v3608
        %v3610 = vrot.slane %v3609, 2
        %v3611 = vmax.f32 %v3609, %v3610
        %v3612 = vrot.slane %v3611, 1
        %v3613 = vmax.f32 %v3611, %v3612
        %v3614 = vsel %vm2955, %v2688, -inf
        %v3615 = vrot.slane %v3614, 4
        %v3616 = vmax.f32 %v3614, %v3615
        %v3617 = vrot.slane %v3616, 2
        %v3618 = vmax.f32 %v3616, %v3617
        %v3619 = vrot.slane %v3618, 1
        %v3620 = vmax.f32 %v3618, %v3619
        %v3621 = vsel %vm2955, %v2690, -inf
        %v3622 = vrot.slane %v3621, 4
        %v3623 = vmax.f32 %v3621, %v3622
        %v3624 = vrot.slane %v3623, 2
        %v3625 = vmax.f32 %v3623, %v3624
        %v3626 = vrot.slane %v3625, 1
        %v3627 = vmax.f32 %v3625, %v3626
        %v3628 = vsel %vm2955, %v2698, -inf
        %v3629 = vrot.slane %v3628, 4
        %v3630 = vmax.f32 %v3628, %v3629
        %v3631 = vrot.slane %v3630, 2
        %v3632 = vmax.f32 %v3630, %v3631
        %v3633 = vrot.slane %v3632, 1
        %v3634 = vmax.f32 %v3632, %v3633
        %v3635 = vsel %vm2955, %v2706, -inf
        %v3636 = vrot.slane %v3635, 4
        %v3637 = vmax.f32 %v3635, %v3636
        %v3638 = vrot.slane %v3637, 2
        %v3639 = vmax.f32 %v3637, %v3638
        %v3640 = vrot.slane %v3639, 1
        %v3641 = vmax.f32 %v3639, %v3640
        %v3642 = vsel %vm2955, %v2705, -inf
        %v3643 = vrot.slane %v3642, 4
        %v3644 = vmax.f32 %v3642, %v3643
        %v3645 = vrot.slane %v3644, 2
        %v3646 = vmax.f32 %v3644, %v3645
        %v3647 = vrot.slane %v3646, 1
        %v3648 = vmax.f32 %v3646, %v3647
        %v3649 = vsel %vm2955, %v2707, -inf
        %v3650 = vrot.slane %v3649, 4
        %v3651 = vmax.f32 %v3649, %v3650
        %v3652 = vrot.slane %v3651, 2
        %v3653 = vmax.f32 %v3651, %v3652
        %v3654 = vrot.slane %v3653, 1
        %v3655 = vmax.f32 %v3653, %v3654
        %v3656 = vsel %vm2955, %v2715, -inf
        %v3657 = vrot.slane %v3656, 4
        %v3658 = vmax.f32 %v3656, %v3657
        %v3659 = vrot.slane %v3658, 2
        %v3660 = vmax.f32 %v3658, %v3659
        %v3661 = vrot.slane %v3660, 1
        %v3662 = vmax.f32 %v3660, %v3661
        %v3663 = vsel %vm2955, %v2723, -inf
        %v3664 = vrot.slane %v3663, 4
        %v3665 = vmax.f32 %v3663, %v3664
        %v3666 = vrot.slane %v3665, 2
        %v3667 = vmax.f32 %v3665, %v3666
        %v3668 = vrot.slane %v3667, 1
        %v3669 = vmax.f32 %v3667, %v3668
        %v3670 = vsel %vm2955, %v2722, -inf
        %v3671 = vrot.slane %v3670, 4
        %v3672 = vmax.f32 %v3670, %v3671
        %v3673 = vrot.slane %v3672, 2
        %v3674 = vmax.f32 %v3672, %v3673
        %v3675 = vrot.slane %v3674, 1
        %v3676 = vmax.f32 %v3674, %v3675
        %v3677 = vsel %vm2955, %v2724, -inf
        %v3678 = vrot.slane %v3677, 4
        %v3679 = vmax.f32 %v3677, %v3678
        %v3680 = vrot.slane %v3679, 2
        %v3681 = vmax.f32 %v3679, %v3680
        %v3682 = vrot.slane %v3681, 1
        %v3683 = vmax.f32 %v3681, %v3682
        %v3684 = vsel %vm2955, %v2732, -inf
        %v3685 = vrot.slane %v3684, 4
        %v3686 = vmax.f32 %v3684, %v3685
        %v3687 = vrot.slane %v3686, 2
        %v3688 = vmax.f32 %v3686, %v3687
        %v3689 = vrot.slane %v3688, 1
        %v3690 = vmax.f32 %v3688, %v3689
        %v3691 = vsel %vm2955, %v2740, -inf
        %v3692 = vrot.slane %v3691, 4
        %v3693 = vmax.f32 %v3691, %v3692
        %v3694 = vrot.slane %v3693, 2
        %v3695 = vmax.f32 %v3693, %v3694
        %v3696 = vrot.slane %v3695, 1
        %v3697 = vmax.f32 %v3695, %v3696
        %v3698 = vsel %vm2955, %v2739, -inf
        %v3699 = vrot.slane %v3698, 4
        %v3700 = vmax.f32 %v3698, %v3699
        %v3701 = vrot.slane %v3700, 2
        %v3702 = vmax.f32 %v3700, %v3701
        %v3703 = vrot.slane %v3702, 1
        %v3704 = vmax.f32 %v3702, %v3703
        %v3705 = vsel %vm2955, %v2741, -inf
        %v3706 = vrot.slane %v3705, 4
        %v3707 = vmax.f32 %v3705, %v3706
        %v3708 = vrot.slane %v3707, 2
        %v3709 = vmax.f32 %v3707, %v3708
        %v3710 = vrot.slane %v3709, 1
        %v3711 = vmax.f32 %v3709, %v3710
        %v3712 = vsel %vm2955, %v2749, -inf
        %v3713 = vrot.slane %v3712, 4
        %v3714 = vmax.f32 %v3712, %v3713
        %v3715 = vrot.slane %v3714, 2
        %v3716 = vmax.f32 %v3714, %v3715
        %v3717 = vrot.slane %v3716, 1
        %v3718 = vmax.f32 %v3716, %v3717
        %v3719 = vsel %vm2955, %v2757, -inf
        %v3720 = vrot.slane %v3719, 4
        %v3721 = vmax.f32 %v3719, %v3720
        %v3722 = vrot.slane %v3721, 2
        %v3723 = vmax.f32 %v3721, %v3722
        %v3724 = vrot.slane %v3723, 1
        %v3725 = vmax.f32 %v3723, %v3724
        %v3726 = vsel %vm2955, %v2756, -inf
        %v3727 = vrot.slane %v3726, 4
        %v3728 = vmax.f32 %v3726, %v3727
        %v3729 = vrot.slane %v3728, 2
        %v3730 = vmax.f32 %v3728, %v3729
        %v3731 = vrot.slane %v3730, 1
        %v3732 = vmax.f32 %v3730, %v3731
        %v3733 = vsel %vm2955, %v2758, -inf
        %v3734 = vrot.slane %v3733, 4
        %v3735 = vmax.f32 %v3733, %v3734
        %v3736 = vrot.slane %v3735, 2
        %v3737 = vmax.f32 %v3735, %v3736
        %v3738 = vrot.slane %v3737, 1
        %v3739 = vmax.f32 %v3737, %v3738
        %v3740 = vsel %vm2955, %v2766, -inf
        %v3741 = vrot.slane %v3740, 4
        %v3742 = vmax.f32 %v3740, %v3741
        %v3743 = vrot.slane %v3742, 2
        %v3744 = vmax.f32 %v3742, %v3743
        %v3745 = vrot.slane %v3744, 1
        %v3746 = vmax.f32 %v3744, %v3745
        %v3747 = vsel %vm2955, %v2774, -inf
        %v3748 = vrot.slane %v3747, 4
        %v3749 = vmax.f32 %v3747, %v3748
        %v3750 = vrot.slane %v3749, 2
        %v3751 = vmax.f32 %v3749, %v3750
        %v3752 = vrot.slane %v3751, 1
        %v3753 = vmax.f32 %v3751, %v3752
        %v3754 = vsel %vm2955, %v2773, -inf
        %v3755 = vrot.slane %v3754, 4
        %v3756 = vmax.f32 %v3754, %v3755
        %v3757 = vrot.slane %v3756, 2
        %v3758 = vmax.f32 %v3756, %v3757
        %v3759 = vrot.slane %v3758, 1
        %v3760 = vmax.f32 %v3758, %v3759
        %v3761 = vsel %vm2955, %v2775, -inf
        %v3762 = vrot.slane %v3761, 4
        %v3763 = vmax.f32 %v3761, %v3762
        %v3764 = vrot.slane %v3763, 2
        %v3765 = vmax.f32 %v3763, %v3764
        %v3766 = vrot.slane %v3765, 1
        %v3767 = vmax.f32 %v3765, %v3766
        %v3768 = vsel %vm2955, %v2783, -inf
        %v3769 = vrot.slane %v3768, 4
        %v3770 = vmax.f32 %v3768, %v3769
        %v3771 = vrot.slane %v3770, 2
        %v3772 = vmax.f32 %v3770, %v3771
        %v3773 = vrot.slane %v3772, 1
        %v3774 = vmax.f32 %v3772, %v3773
        %v3775 = vsel %vm2955, %v2791, -inf
        %v3776 = vrot.slane %v3775, 4
        %v3777 = vmax.f32 %v3775, %v3776
        %v3778 = vrot.slane %v3777, 2
        %v3779 = vmax.f32 %v3777, %v3778
        %v3780 = vrot.slane %v3779, 1
        %v3781 = vmax.f32 %v3779, %v3780
        %v3782 = vsel %vm2955, %v2790, -inf
        %v3783 = vrot.slane %v3782, 4
        %v3784 = vmax.f32 %v3782, %v3783
        %v3785 = vrot.slane %v3784, 2
        %v3786 = vmax.f32 %v3784, %v3785
        %v3787 = vrot.slane %v3786, 1
        %v3788 = vmax.f32 %v3786, %v3787
        %v3789 = vsel %vm2955, %v2792, -inf
        %v3790 = vrot.slane %v3789, 4
        %v3791 = vmax.f32 %v3789, %v3790
        %v3792 = vrot.slane %v3791, 2
        %v3793 = vmax.f32 %v3791, %v3792
        %v3794 = vrot.slane %v3793, 1
        %v3795 = vmax.f32 %v3793, %v3794
        %v3796 = vsel %vm2955, %v2800, -inf
        %v3797 = vrot.slane %v3796, 4
        %v3798 = vmax.f32 %v3796, %v3797
        %v3799 = vrot.slane %v3798, 2
        %v3800 = vmax.f32 %v3798, %v3799
        %v3801 = vrot.slane %v3800, 1
        %v3802 = vmax.f32 %v3800, %v3801
        %v3803 = vsel %vm2955, %v2808, -inf
        %v3804 = vrot.slane %v3803, 4
        %v3805 = vmax.f32 %v3803, %v3804
        %v3806 = vrot.slane %v3805, 2
        %v3807 = vmax.f32 %v3805, %v3806
        %v3808 = vrot.slane %v3807, 1
        %v3809 = vmax.f32 %v3807, %v3808
        %v3810 = vsel %vm2955, %v2807, -inf
        %v3811 = vrot.slane %v3810, 4
        %v3812 = vmax.f32 %v3810, %v3811
        %v3813 = vrot.slane %v3812, 2
        %v3814 = vmax.f32 %v3812, %v3813
        %v3815 = vrot.slane %v3814, 1
        %v3816 = vmax.f32 %v3814, %v3815
        %v3817 = vsel %vm2955, %v2809, -inf
        %v3818 = vrot.slane %v3817, 4
        %v3819 = vmax.f32 %v3817, %v3818
        %v3820 = vrot.slane %v3819, 2
        %v3821 = vmax.f32 %v3819, %v3820
        %v3822 = vrot.slane %v3821, 1
        %v3823 = vmax.f32 %v3821, %v3822
        %v3824 = vsel %vm2955, %v2817, -inf
        %v3825 = vrot.slane %v3824, 4
        %v3826 = vmax.f32 %v3824, %v3825
        %v3827 = vrot.slane %v3826, 2
        %v3828 = vmax.f32 %v3826, %v3827
        %v3829 = vrot.slane %v3828, 1
        %v3830 = vmax.f32 %v3828, %v3829
        %v3831 = vsel %vm2955, %v2825, -inf
        %v3832 = vrot.slane %v3831, 4
        %v3833 = vmax.f32 %v3831, %v3832
        %v3834 = vrot.slane %v3833, 2
        %v3835 = vmax.f32 %v3833, %v3834
        %v3836 = vrot.slane %v3835, 1
        %v3837 = vmax.f32 %v3835, %v3836
        %v3838 = vsel %vm2955, %v2824, -inf
        %v3839 = vrot.slane %v3838, 4
        %v3840 = vmax.f32 %v3838, %v3839
        %v3841 = vrot.slane %v3840, 2
        %v3842 = vmax.f32 %v3840, %v3841
        %v3843 = vrot.slane %v3842, 1
        %v3844 = vmax.f32 %v3842, %v3843
        %v3845 = vsel %vm2955, %v2826, -inf
        %v3846 = vrot.slane %v3845, 4
        %v3847 = vmax.f32 %v3845, %v3846
        %v3848 = vrot.slane %v3847, 2
        %v3849 = vmax.f32 %v3847, %v3848
        %v3850 = vrot.slane %v3849, 1
        %v3851 = vmax.f32 %v3849, %v3850
        %vm3852 = vcmask 523264
        %v3853 = vsel %vm3852, %v2962, -inf
        %v3854 = vsel %vm3852, %v3018, -inf
        %v3855 = vmax.f32 %v3853, %v3854
        %v3856 = vsel %vm3852, %v2969, -inf
        %v3857 = vsel %vm3852, %v3025, -inf
        %v3858 = vmax.f32 %v3856, %v3857
        %v3859 = vsel %vm3852, %v2976, -inf
        %v3860 = vsel %vm3852, %v3032, -inf
        %v3861 = vmax.f32 %v3859, %v3860
        %v3862 = vsel %vm3852, %v2983, -inf
        %v3863 = vsel %vm3852, %v3039, -inf
        %v3864 = vmax.f32 %v3862, %v3863
        %v3865 = vsel %vm3852, %v2990, -inf
        %v3866 = vsel %vm3852, %v3046, -inf
        %v3867 = vmax.f32 %v3865, %v3866
        %v3868 = vsel %vm3852, %v2997, -inf
        %v3869 = vsel %vm3852, %v3053, -inf
        %v3870 = vmax.f32 %v3868, %v3869
        %v3871 = vsel %vm3852, %v3004, -inf
        %v3872 = vsel %vm3852, %v3060, -inf
        %v3873 = vmax.f32 %v3871, %v3872
        %v3874 = vsel %vm3852, %v3011, -inf
        %v3875 = vsel %vm3852, %v3067, -inf
        %v3876 = vmax.f32 %v3874, %v3875
        %v3877 = vsel %vm3852, %v3074, -inf
        %v3878 = vsel %vm3852, %v3130, -inf
        %v3879 = vmax.f32 %v3877, %v3878
        %v3880 = vsel %vm3852, %v3081, -inf
        %v3881 = vsel %vm3852, %v3137, -inf
        %v3882 = vmax.f32 %v3880, %v3881
        %v3883 = vsel %vm3852, %v3088, -inf
        %v3884 = vsel %vm3852, %v3144, -inf
        %v3885 = vmax.f32 %v3883, %v3884
        %v3886 = vsel %vm3852, %v3095, -inf
        %v3887 = vsel %vm3852, %v3151, -inf
        %v3888 = vmax.f32 %v3886, %v3887
        %v3889 = vsel %vm3852, %v3102, -inf
        %v3890 = vsel %vm3852, %v3158, -inf
        %v3891 = vmax.f32 %v3889, %v3890
        %v3892 = vsel %vm3852, %v3109, -inf
        %v3893 = vsel %vm3852, %v3165, -inf
        %v3894 = vmax.f32 %v3892, %v3893
        %v3895 = vsel %vm3852, %v3116, -inf
        %v3896 = vsel %vm3852, %v3172, -inf
        %v3897 = vmax.f32 %v3895, %v3896
        %v3898 = vsel %vm3852, %v3123, -inf
        %v3899 = vsel %vm3852, %v3179, -inf
        %v3900 = vmax.f32 %v3898, %v3899
        %v3901 = vsel %vm3852, %v3186, -inf
        %v3902 = vsel %vm3852, %v3242, -inf
        %v3903 = vmax.f32 %v3901, %v3902
        %v3904 = vsel %vm3852, %v3193, -inf
        %v3905 = vsel %vm3852, %v3249, -inf
        %v3906 = vmax.f32 %v3904, %v3905
        %v3907 = vsel %vm3852, %v3200, -inf
        %v3908 = vsel %vm3852, %v3256, -inf
        %v3909 = vmax.f32 %v3907, %v3908
        %v3910 = vsel %vm3852, %v3207, -inf
        %v3911 = vsel %vm3852, %v3263, -inf
        %v3912 = vmax.f32 %v3910, %v3911
        %v3913 = vsel %vm3852, %v3214, -inf
        %v3914 = vsel %vm3852, %v3270, -inf
        %v3915 = vmax.f32 %v3913, %v3914
        %v3916 = vsel %vm3852, %v3221, -inf
        %v3917 = vsel %vm3852, %v3277, -inf
        %v3918 = vmax.f32 %v3916, %v3917
        %v3919 = vsel %vm3852, %v3228, -inf
        %v3920 = vsel %vm3852, %v3284, -inf
        %v3921 = vmax.f32 %v3919, %v3920
        %v3922 = vsel %vm3852, %v3235, -inf
        %v3923 = vsel %vm3852, %v3291, -inf
        %v3924 = vmax.f32 %v3922, %v3923
        %v3925 = vsel %vm3852, %v3298, -inf
        %v3926 = vsel %vm3852, %v3354, -inf
        %v3927 = vmax.f32 %v3925, %v3926
        %v3928 = vsel %vm3852, %v3305, -inf
        %v3929 = vsel %vm3852, %v3361, -inf
        %v3930 = vmax.f32 %v3928, %v3929
        %v3931 = vsel %vm3852, %v3312, -inf
        %v3932 = vsel %vm3852, %v3368, -inf
        %v3933 = vmax.f32 %v3931, %v3932
        %v3934 = vsel %vm3852, %v3319, -inf
        %v3935 = vsel %vm3852, %v3375, -inf
        %v3936 = vmax.f32 %v3934, %v3935
        %v3937 = vsel %vm3852, %v3326, -inf
        %v3938 = vsel %vm3852, %v3382, -inf
        %v3939 = vmax.f32 %v3937, %v3938
        %v3940 = vsel %vm3852, %v3333, -inf
        %v3941 = vsel %vm3852, %v3389, -inf
        %v3942 = vmax.f32 %v3940, %v3941
        %v3943 = vsel %vm3852, %v3340, -inf
        %v3944 = vsel %vm3852, %v3396, -inf
        %v3945 = vmax.f32 %v3943, %v3944
        %v3946 = vsel %vm3852, %v3347, -inf
        %v3947 = vsel %vm3852, %v3403, -inf
        %v3948 = vmax.f32 %v3946, %v3947
        %v3949 = vsel %vm3852, %v3410, -inf
        %v3950 = vsel %vm3852, %v3466, -inf
        %v3951 = vmax.f32 %v3949, %v3950
        %v3952 = vsel %vm3852, %v3417, -inf
        %v3953 = vsel %vm3852, %v3473, -inf
        %v3954 = vmax.f32 %v3952, %v3953
        %v3955 = vsel %vm3852, %v3424, -inf
        %v3956 = vsel %vm3852, %v3480, -inf
        %v3957 = vmax.f32 %v3955, %v3956
        %v3958 = vsel %vm3852, %v3431, -inf
        %v3959 = vsel %vm3852, %v3487, -inf
        %v3960 = vmax.f32 %v3958, %v3959
        %v3961 = vsel %vm3852, %v3438, -inf
        %v3962 = vsel %vm3852, %v3494, -inf
        %v3963 = vmax.f32 %v3961, %v3962
        %v3964 = vsel %vm3852, %v3445, -inf
        %v3965 = vsel %vm3852, %v3501, -inf
        %v3966 = vmax.f32 %v3964, %v3965
        %v3967 = vsel %vm3852, %v3452, -inf
        %v3968 = vsel %vm3852, %v3508, -inf
        %v3969 = vmax.f32 %v3967, %v3968
        %v3970 = vsel %vm3852, %v3459, -inf
        %v3971 = vsel %vm3852, %v3515, -inf
        %v3972 = vmax.f32 %v3970, %v3971
        %v3973 = vsel %vm3852, %v3522, -inf
        %v3974 = vsel %vm3852, %v3578, -inf
        %v3975 = vmax.f32 %v3973, %v3974
        %v3976 = vsel %vm3852, %v3529, -inf
        %v3977 = vsel %vm3852, %v3585, -inf
        %v3978 = vmax.f32 %v3976, %v3977
        %v3979 = vsel %vm3852, %v3536, -inf
        %v3980 = vsel %vm3852, %v3592, -inf
        %v3981 = vmax.f32 %v3979, %v3980
        %v3982 = vsel %vm3852, %v3543, -inf
        %v3983 = vsel %vm3852, %v3599, -inf
        %v3984 = vmax.f32 %v3982, %v3983
        %v3985 = vsel %vm3852, %v3550, -inf
        %v3986 = vsel %vm3852, %v3606, -inf
        %v3987 = vmax.f32 %v3985, %v3986
        %v3988 = vsel %vm3852, %v3557, -inf
        %v3989 = vsel %vm3852, %v3613, -inf
        %v3990 = vmax.f32 %v3988, %v3989
        %v3991 = vsel %vm3852, %v3564, -inf
        %v3992 = vsel %vm3852, %v3620, -inf
        %v3993 = vmax.f32 %v3991, %v3992
        %v3994 = vsel %vm3852, %v3571, -inf
        %v3995 = vsel %vm3852, %v3627, -inf
        %v3996 = vmax.f32 %v3994, %v3995
        %v3997 = vsel %vm3852, %v3634, -inf
        %v3998 = vsel %vm3852, %v3690, -inf
        %v3999 = vmax.f32 %v3997, %v3998
        %v4000 = vsel %vm3852, %v3641, -inf
        %v4001 = vsel %vm3852, %v3697, -inf
        %v4002 = vmax.f32 %v4000, %v4001
        %v4003 = vsel %vm3852, %v3648, -inf
        %v4004 = vsel %vm3852, %v3704, -inf
        %v4005 = vmax.f32 %v4003, %v4004
        %v4006 = vsel %vm3852, %v3655, -inf
        %v4007 = vsel %vm3852, %v3711, -inf
        %v4008 = vmax.f32 %v4006, %v4007
        %v4009 = vsel %vm3852, %v3662, -inf
        %v4010 = vsel %vm3852, %v3718, -inf
        %v4011 = vmax.f32 %v4009, %v4010
        %v4012 = vsel %vm3852, %v3669, -inf
        %v4013 = vsel %vm3852, %v3725, -inf
        %v4014 = vmax.f32 %v4012, %v4013
        %v4015 = vsel %vm3852, %v3676, -inf
        %v4016 = vsel %vm3852, %v3732, -inf
        %v4017 = vmax.f32 %v4015, %v4016
        %v4018 = vsel %vm3852, %v3683, -inf
        %v4019 = vsel %vm3852, %v3739, -inf
        %v4020 = vmax.f32 %v4018, %v4019
        %v4021 = vsel %vm3852, %v3746, -inf
        %v4022 = vsel %vm3852, %v3802, -inf
        %v4023 = vmax.f32 %v4021, %v4022
        %v4024 = vsel %vm3852, %v3753, -inf
        %v4025 = vsel %vm3852, %v3809, -inf
        %v4026 = vmax.f32 %v4024, %v4025
        %v4027 = vsel %vm3852, %v3760, -inf
        %v4028 = vsel %vm3852, %v3816, -inf
        %v4029 = vmax.f32 %v4027, %v4028
        %v4030 = vsel %vm3852, %v3767, -inf
        %v4031 = vsel %vm3852, %v3823, -inf
        %v4032 = vmax.f32 %v4030, %v4031
        %v4033 = vsel %vm3852, %v3774, -inf
        %v4034 = vsel %vm3852, %v3830, -inf
        %v4035 = vmax.f32 %v4033, %v4034
        %v4036 = vsel %vm3852, %v3781, -inf
        %v4037 = vsel %vm3852, %v3837, -inf
        %v4038 = vmax.f32 %v4036, %v4037
        %v4039 = vsel %vm3852, %v3788, -inf
        %v4040 = vsel %vm3852, %v3844, -inf
        %v4041 = vmax.f32 %v4039, %v4040
        %v4042 = vsel %vm3852, %v3795, -inf
        %v4043 = vsel %vm3852, %v3851, -inf
        %v4044 = vmax.f32 %v4042, %v4043
        %4045 = vst [vmem:[#allocation3] sm:$0xff] 0.0
        %4046 = vst [vmem:[#allocation3 + $0x8] sm:$0x3] 0.0
        %4047 = vst [vmem:[#allocation3 + $0x10] sm:$0xff] 0.0
        %4048 = vst [vmem:[#allocation3 + $0x18] sm:$0x3] 0.0
        %4049 = vst [vmem:[#allocation3 + $0x20] sm:$0xff] 0.0
        %4050 = vst [vmem:[#allocation3 + $0x28] sm:$0x3] 0.0
        %4051 = vst [vmem:[#allocation3 + $0x30] sm:$0xff] 0.0
        %4052 = vst [vmem:[#allocation3 + $0x38] sm:$0x3] 0.0
        %4053 = vst [vmem:[#allocation3 + $0x40] sm:$0xff] 0.0
        %4054 = vst [vmem:[#allocation3 + $0x48] sm:$0x3] 0.0
        %4055 = vst [vmem:[#allocation3 + $0x50] sm:$0xff] 0.0
        %4056 = vst [vmem:[#allocation3 + $0x58] sm:$0x3] 0.0
        %4057 = vst [vmem:[#allocation3 + $0x60] sm:$0xff] 0.0
        %4058 = vst [vmem:[#allocation3 + $0x68] sm:$0x3] 0.0
        %4059 = vst [vmem:[#allocation3 + $0x70] sm:$0xff] 0.0
        %4060 = vst [vmem:[#allocation3 + $0x78] sm:$0x3] 0.0
        %4061 = vst [vmem:[#allocation3 + $0x80] sm:$0xff] 0.0
        %4062 = vst [vmem:[#allocation3 + $0x88] sm:$0x3] 0.0
        %4063 = vst [vmem:[#allocation3 + $0x90] sm:$0xff] 0.0
        %4064 = vst [vmem:[#allocation3 + $0x98] sm:$0x3] 0.0
        %vm4129 = vcmask 1041409
        %v4130 = vsel %vm4129, %v3858, %v3855
        %vm4131 = vcmask 1042434
        %v4132 = vsel %vm4131, %v3861, %v4130
        %vm4133 = vcmask 1043459
        %v4134 = vsel %vm4133, %v3864, %v4132
        %vm4135 = vcmask 1044484
        %v4136 = vsel %vm4135, %v3867, %v4134
        %vm4137 = vcmask 1045509
        %v4138 = vsel %vm4137, %v3870, %v4136
        %vm4139 = vcmask 1046534
        %v4140 = vsel %vm4139, %v3873, %v4138
        %vm4141 = vcmask 1047559
        %v4142 = vsel %vm4141, %v3876, %v4140
        %v4143 = vsel %vm4129, %v3882, %v3879
        %v4144 = vsel %vm4131, %v3885, %v4143
        %v4145 = vsel %vm4133, %v3888, %v4144
        %v4146 = vsel %vm4135, %v3891, %v4145
        %v4147 = vsel %vm4137, %v3894, %v4146
        %v4148 = vsel %vm4139, %v3897, %v4147
        %v4149 = vsel %vm4141, %v3900, %v4148
        %v4150 = vsel %vm4129, %v3906, %v3903
        %v4151 = vsel %vm4131, %v3909, %v4150
        %v4152 = vsel %vm4133, %v3912, %v4151
        %v4153 = vsel %vm4135, %v3915, %v4152
        %v4154 = vsel %vm4137, %v3918, %v4153
        %v4155 = vsel %vm4139, %v3921, %v4154
        %v4156 = vsel %vm4141, %v3924, %v4155
        %v4157 = vsel %vm4129, %v3930, %v3927
        %v4158 = vsel %vm4131, %v3933, %v4157
        %v4159 = vsel %vm4133, %v3936, %v4158
        %v4160 = vsel %vm4135, %v3939, %v4159
        %v4161 = vsel %vm4137, %v3942, %v4160
        %v4162 = vsel %vm4139, %v3945, %v4161
        %v4163 = vsel %vm4141, %v3948, %v4162
        %v4164 = vsel %vm4129, %v3954, %v3951
        %v4165 = vsel %vm4131, %v3957, %v4164
        %v4166 = vsel %vm4133, %v3960, %v4165
        %v4167 = vsel %vm4135, %v3963, %v4166
        %v4168 = vsel %vm4137, %v3966, %v4167
        %v4169 = vsel %vm4139, %v3969, %v4168
        %v4170 = vsel %vm4141, %v3972, %v4169
        %v4171 = vsel %vm4129, %v3978, %v3975
        %v4172 = vsel %vm4131, %v3981, %v4171
        %v4173 = vsel %vm4133, %v3984, %v4172
        %v4174 = vsel %vm4135, %v3987, %v4173
        %v4175 = vsel %vm4137, %v3990, %v4174
        %v4176 = vsel %vm4139, %v3993, %v4175
        %v4177 = vsel %vm4141, %v3996, %v4176
        %v4178 = vsel %vm4129, %v4002, %v3999
        %v4179 = vsel %vm4131, %v4005, %v4178
        %v4180 = vsel %vm4133, %v4008, %v4179
        %v4181 = vsel %vm4135, %v4011, %v4180
        %v4182 = vsel %vm4137, %v4014, %v4181
        %v4183 = vsel %vm4139, %v4017, %v4182
        %v4184 = vsel %vm4141, %v4020, %v4183
        %v4185 = vsel %vm4129, %v4026, %v4023
        %v4186 = vsel %vm4131, %v4029, %v4185
        %v4187 = vsel %vm4133, %v4032, %v4186
        %v4188 = vsel %vm4135, %v4035, %v4187
        %v4189 = vsel %vm4137, %v4038, %v4188
        %v4190 = vsel %vm4139, %v4041, %v4189
        %v4191 = vsel %vm4141, %v4044, %v4190
        %s4200 = scalar_lea.vmem [#allocation3], 16
        %4201 = vst.msk [vmem:[%s4200 + $0x1] sm:$0xff] %vm3852, %v4142
        %4202 = vst.msk [vmem:[%s4200 + $0x11] sm:$0xff] %vm3852, %v4149
        %4203 = vst.msk [vmem:[%s4200 + $0x21] sm:$0xff] %vm3852, %v4156
        %4204 = vst.msk [vmem:[%s4200 + $0x31] sm:$0xff] %vm3852, %v4163
        %4205 = vst.msk [vmem:[%s4200 + $0x41] sm:$0xff] %vm3852, %v4170
        %4206 = vst.msk [vmem:[%s4200 + $0x51] sm:$0xff] %vm3852, %v4177
        %4207 = vst.msk [vmem:[%s4200 + $0x61] sm:$0xff] %vm3852, %v4184
        %4208 = vst.msk [vmem:[%s4200 + $0x71] sm:$0xff] %vm3852, %v4191
        %v4209 = vld [vmem:[#allocation3] sm:$0xff]
        %v4210 = vld [vmem:[#allocation3 + $0x10] sm:$0xff]
        %v4211 = vld [vmem:[#allocation3 + $0x20] sm:$0xff]
        %v4212 = vld [vmem:[#allocation3 + $0x30] sm:$0xff]
        %v4213 = vld [vmem:[#allocation3 + $0x40] sm:$0xff]
        %v4214 = vld [vmem:[#allocation3 + $0x50] sm:$0xff]
        %v4215 = vld [vmem:[#allocation3 + $0x60] sm:$0xff]
        %v4216 = vld [vmem:[#allocation3 + $0x70] sm:$0xff]
        %v4217 = vpack.c.bf16 %v4210, %v4209
        %v4218 = vpack.c.bf16 %v4212, %v4211
        %v4219 = vpack.c.bf16 %v4214, %v4213
        %v4220 = vpack.c.bf16 %v4216, %v4215
        %v4221 = vld [vmem:[#allocation3 + $0x1] sm:$0xff]
        %v4222 = vld [vmem:[#allocation3 + $0x11] sm:$0xff]
        %v4223 = vld [vmem:[#allocation3 + $0x21] sm:$0xff]
        %v4224 = vld [vmem:[#allocation3 + $0x31] sm:$0xff]
        %v4225 = vld [vmem:[#allocation3 + $0x41] sm:$0xff]
        %v4226 = vld [vmem:[#allocation3 + $0x51] sm:$0xff]
        %v4227 = vld [vmem:[#allocation3 + $0x61] sm:$0xff]
        %v4228 = vld [vmem:[#allocation3 + $0x71] sm:$0xff]
        %v4229 = vpack.c.bf16 %v4222, %v4221
        %v4230 = vpack.c.bf16 %v4224, %v4223
        %v4231 = vpack.c.bf16 %v4226, %v4225
        %v4232 = vpack.c.bf16 %v4228, %v4227
        %v4233 = vld [vmem:[#allocation3 + $0x2] sm:$0xff]
        %v4234 = vld [vmem:[#allocation3 + $0x12] sm:$0xff]
        %v4235 = vld [vmem:[#allocation3 + $0x22] sm:$0xff]
        %v4236 = vld [vmem:[#allocation3 + $0x32] sm:$0xff]
        %v4237 = vld [vmem:[#allocation3 + $0x42] sm:$0xff]
        %v4238 = vld [vmem:[#allocation3 + $0x52] sm:$0xff]
        %v4239 = vld [vmem:[#allocation3 + $0x62] sm:$0xff]
        %v4240 = vld [vmem:[#allocation3 + $0x72] sm:$0xff]
        %v4241 = vpack.c.bf16 %v4234, %v4233
        %v4242 = vpack.c.bf16 %v4236, %v4235
        %v4243 = vpack.c.bf16 %v4238, %v4237
        %v4244 = vpack.c.bf16 %v4240, %v4239
        %v4245 = vld [vmem:[%s4200] sm:$0xff]
        %v4246 = vld [vmem:[%s4200 + $0x10] sm:$0xff]
        %v4247 = vld [vmem:[%s4200 + $0x20] sm:$0xff]
        %v4248 = vld [vmem:[%s4200 + $0x30] sm:$0xff]
        %v4249 = vld [vmem:[%s4200 + $0x40] sm:$0xff]
        %v4250 = vld [vmem:[%s4200 + $0x50] sm:$0xff]
        %v4251 = vld [vmem:[%s4200 + $0x60] sm:$0xff]
        %v4252 = vld [vmem:[%s4200 + $0x70] sm:$0xff]
        %v4253 = vpack.c.bf16 %v4246, %v4245
        %v4254 = vpack.c.bf16 %v4248, %v4247
        %v4255 = vpack.c.bf16 %v4250, %v4249
        %v4256 = vpack.c.bf16 %v4252, %v4251
        %v4257 = vld [vmem:[%s4200 + $0x1] sm:$0xff]
        %v4258 = vld [vmem:[%s4200 + $0x11] sm:$0xff]
        %v4259 = vld [vmem:[%s4200 + $0x21] sm:$0xff]
        %v4260 = vld [vmem:[%s4200 + $0x31] sm:$0xff]
        %v4261 = vld [vmem:[%s4200 + $0x41] sm:$0xff]
        %v4262 = vld [vmem:[%s4200 + $0x51] sm:$0xff]
        %v4263 = vld [vmem:[%s4200 + $0x61] sm:$0xff]
        %v4264 = vld [vmem:[%s4200 + $0x71] sm:$0xff]
        %v4265 = vpack.c.bf16 %v4258, %v4257
        %v4266 = vpack.c.bf16 %v4260, %v4259
        %v4267 = vpack.c.bf16 %v4262, %v4261
        %v4268 = vpack.c.bf16 %v4264, %v4263
        %v4269 = vld [vmem:[%s4200 + $0x2] sm:$0xff]
        %v4270 = vld [vmem:[%s4200 + $0x12] sm:$0xff]
        %v4271 = vld [vmem:[%s4200 + $0x22] sm:$0xff]
        %v4272 = vld [vmem:[%s4200 + $0x32] sm:$0xff]
        %v4273 = vld [vmem:[%s4200 + $0x42] sm:$0xff]
        %v4274 = vld [vmem:[%s4200 + $0x52] sm:$0xff]
        %v4275 = vld [vmem:[%s4200 + $0x62] sm:$0xff]
        %v4276 = vld [vmem:[%s4200 + $0x72] sm:$0xff]
        %v4277 = vpack.c.bf16 %v4270, %v4269
        %v4278 = vpack.c.bf16 %v4272, %v4271
        %v4279 = vpack.c.bf16 %v4274, %v4273
        %v4280 = vpack.c.bf16 %v4276, %v4275
        %s4281 = scalar_lea.vmem [#allocation3], 32
        %v4282 = vld [vmem:[%s4281] sm:$0xff]
        %v4283 = vld [vmem:[%s4281 + $0x10] sm:$0xff]
        %v4284 = vld [vmem:[%s4281 + $0x20] sm:$0xff]
        %v4285 = vld [vmem:[%s4281 + $0x30] sm:$0xff]
        %v4286 = vld [vmem:[%s4281 + $0x40] sm:$0xff]
        %v4287 = vld [vmem:[%s4281 + $0x50] sm:$0xff]
        %v4288 = vld [vmem:[%s4281 + $0x60] sm:$0xff]
        %v4289 = vld [vmem:[%s4281 + $0x70] sm:$0xff]
        %v4290 = vpack.c.bf16 %v4283, %v4282
        %v4291 = vpack.c.bf16 %v4285, %v4284
        %v4292 = vpack.c.bf16 %v4287, %v4286
        %v4293 = vpack.c.bf16 %v4289, %v4288
        %v4294 = vld [vmem:[%s4281 + $0x1] sm:$0xff]
        %v4295 = vld [vmem:[%s4281 + $0x11] sm:$0xff]
        %v4296 = vld [vmem:[%s4281 + $0x21] sm:$0xff]
        %v4297 = vld [vmem:[%s4281 + $0x31] sm:$0xff]
        %v4298 = vld [vmem:[%s4281 + $0x41] sm:$0xff]
        %v4299 = vld [vmem:[%s4281 + $0x51] sm:$0xff]
        %v4300 = vld [vmem:[%s4281 + $0x61] sm:$0xff]
        %v4301 = vld [vmem:[%s4281 + $0x71] sm:$0xff]
        %v4302 = vpack.c.bf16 %v4295, %v4294
        %v4303 = vpack.c.bf16 %v4297, %v4296
        %v4304 = vpack.c.bf16 %v4299, %v4298
        %v4305 = vpack.c.bf16 %v4301, %v4300
        %v4306 = vld [vmem:[%s4281 + $0x2] sm:$0xff]
        %v4307 = vld [vmem:[%s4281 + $0x12] sm:$0xff]
        %v4308 = vld [vmem:[%s4281 + $0x22] sm:$0xff]
        %v4309 = vld [vmem:[%s4281 + $0x32] sm:$0xff]
        %v4310 = vld [vmem:[%s4281 + $0x42] sm:$0xff]
        %v4311 = vld [vmem:[%s4281 + $0x52] sm:$0xff]
        %v4312 = vld [vmem:[%s4281 + $0x62] sm:$0xff]
        %v4313 = vld [vmem:[%s4281 + $0x72] sm:$0xff]
        %v4314 = vpack.c.bf16 %v4307, %v4306
        %v4315 = vpack.c.bf16 %v4309, %v4308
        %v4316 = vpack.c.bf16 %v4311, %v4310
        %v4317 = vpack.c.bf16 %v4313, %v4312
        %v4318 = vld [vmem:[%s3] sm:$0xf]
        %v4319 = vld [vmem:[%s3 + $0x4] sm:$0xf]
        %v4320 = vld [vmem:[%s3 + $0x8] sm:$0xf]
        %v4321 = vld [vmem:[%s3 + $0xc] sm:$0xf]
        %v4322 = vld [vmem:[%s3 + $0x10] sm:$0xf]
        %v4323 = vld [vmem:[%s3 + $0x14] sm:$0xf]
        %v4324 = vld [vmem:[%s3 + $0x18] sm:$0xf]
        %v4325 = vld [vmem:[%s3 + $0x1c] sm:$0xf]
        %v4326 = vld [vmem:[%s3 + $0x20] sm:$0xf]
        %v4327 = vld [vmem:[%s3 + $0x24] sm:$0xf]
        %v4328 = vld [vmem:[%s3 + $0x28] sm:$0xf]
        %v4329 = vld [vmem:[%s3 + $0x2c] sm:$0xf]
        %v4330 = vld [vmem:[%s3 + $0x30] sm:$0xf]
        %v4331 = vld [vmem:[%s3 + $0x34] sm:$0xf]
        %v4332 = vld [vmem:[%s3 + $0x38] sm:$0xf]
        %v4333 = vld [vmem:[%s3 + $0x3c] sm:$0xf]
        %v4334 = vld [vmem:[%s3 + $0x40] sm:$0xf]
        %v4335 = vld [vmem:[%s3 + $0x44] sm:$0xf]
        %v4336 = vld [vmem:[%s3 + $0x48] sm:$0xf]
        %v4337 = vld [vmem:[%s3 + $0x4c] sm:$0xf]
        %v4338 = vld [vmem:[%s3 + $0x50] sm:$0xf]
        %v4339 = vld [vmem:[%s3 + $0x54] sm:$0xf]
        %v4340 = vld [vmem:[%s3 + $0x58] sm:$0xf]
        %v4341 = vld [vmem:[%s3 + $0x5c] sm:$0xf]
        %v4342 = vld [vmem:[%s3 + $0x60] sm:$0xf]
        %v4343 = vld [vmem:[%s3 + $0x64] sm:$0xf]
        %v4344 = vld [vmem:[%s3 + $0x68] sm:$0xf]
        %v4345 = vld [vmem:[%s3 + $0x6c] sm:$0xf]
        %v4346 = vld [vmem:[%s3 + $0x70] sm:$0xf]
        %v4347 = vld [vmem:[%s3 + $0x74] sm:$0xf]
        %v4348 = vld [vmem:[%s3 + $0x78] sm:$0xf]
        %v4349 = vld [vmem:[%s3 + $0x7c] sm:$0xf]
        %v4350 = vld [vmem:[%s3 + $0x80] sm:$0xf]
        %v4351 = vld [vmem:[%s3 + $0x84] sm:$0xf]
        %v4352 = vld [vmem:[%s3 + $0x88] sm:$0xf]
        %v4353 = vld [vmem:[%s3 + $0x8c] sm:$0xf]
        %v4354 = vld [vmem:[%s3 + $0x90] sm:$0xf]
        %v4355 = vld [vmem:[%s3 + $0x94] sm:$0xf]
        %v4356 = vld [vmem:[%s3 + $0x98] sm:$0xf]
        %v4357 = vld [vmem:[%s3 + $0x9c] sm:$0xf]
        %v4358 = vld [vmem:[%s3 + $0xa0] sm:$0xf]
        %v4359 = vld [vmem:[%s3 + $0xa4] sm:$0xf]
        %v4360 = vld [vmem:[%s3 + $0xa8] sm:$0xf]
        %v4361 = vld [vmem:[%s3 + $0xac] sm:$0xf]
        %v4362 = vld [vmem:[%s3 + $0xb0] sm:$0xf]
        %v4363 = vld [vmem:[%s3 + $0xb4] sm:$0xf]
        %v4364 = vld [vmem:[%s3 + $0xb8] sm:$0xf]
        %v4365 = vld [vmem:[%s3 + $0xbc] sm:$0xf]
        %v4366 = vld [vmem:[%s3 + $0xc0] sm:$0xf]
        %v4367 = vld [vmem:[%s3 + $0xc4] sm:$0xf]
        %v4368 = vld [vmem:[%s3 + $0xc8] sm:$0xf]
        %v4369 = vld [vmem:[%s3 + $0xcc] sm:$0xf]
        %v4370 = vld [vmem:[%s3 + $0xd0] sm:$0xf]
        %v4371 = vld [vmem:[%s3 + $0xd4] sm:$0xf]
        %v4372 = vld [vmem:[%s3 + $0xd8] sm:$0xf]
        %v4373 = vld [vmem:[%s3 + $0xdc] sm:$0xf]
        %v4374 = vld [vmem:[%s3 + $0xe0] sm:$0xf]
        %v4375 = vld [vmem:[%s3 + $0xe4] sm:$0xf]
        %v4376 = vld [vmem:[%s3 + $0xe8] sm:$0xf]
        %v4377 = vld [vmem:[%s3 + $0xec] sm:$0xf]
        %v4378 = vld [vmem:[%s3 + $0xf0] sm:$0xf]
        %v4379 = vld [vmem:[%s3 + $0xf4] sm:$0xf]
        %v4380 = vld [vmem:[%s3 + $0xf8] sm:$0xf]
        %v4381 = vld [vmem:[%s3 + $0xfc] sm:$0xf]
        %v4382 = vld [vmem:[%s3 + $0x100] sm:$0xf]
        %v4383 = vld [vmem:[%s3 + $0x104] sm:$0xf]
        %v4384 = vld [vmem:[%s3 + $0x108] sm:$0xf]
        %v4385 = vld [vmem:[%s3 + $0x10c] sm:$0xf]
        %v4386 = vld [vmem:[%s3 + $0x110] sm:$0xf]
        %v4387 = vld [vmem:[%s3 + $0x114] sm:$0xf]
        %v4388 = vld [vmem:[%s3 + $0x118] sm:$0xf]
        %v4389 = vld [vmem:[%s3 + $0x11c] sm:$0xf]
        %v4390 = vld [vmem:[%s3 + $0x120] sm:$0xf]
        %v4391 = vld [vmem:[%s3 + $0x124] sm:$0xf]
        %v4392 = vld [vmem:[%s3 + $0x128] sm:$0xf]
        %v4393 = vld [vmem:[%s3 + $0x12c] sm:$0xf]
        %v4394 = vld [vmem:[%s3 + $0x130] sm:$0xf]
        %v4395 = vld [vmem:[%s3 + $0x134] sm:$0xf]
        %v4396 = vld [vmem:[%s3 + $0x138] sm:$0xf]
        %v4397 = vld [vmem:[%s3 + $0x13c] sm:$0xf]
        %v4398 = vld [vmem:[%s3 + $0x140] sm:$0xf]
        %v4399 = vld [vmem:[%s3 + $0x144] sm:$0xf]
        %v4400 = vld [vmem:[%s3 + $0x148] sm:$0xf]
        %v4401 = vld [vmem:[%s3 + $0x14c] sm:$0xf]
        %v4402 = vld [vmem:[%s3 + $0x150] sm:$0xf]
        %v4403 = vld [vmem:[%s3 + $0x154] sm:$0xf]
        %v4404 = vld [vmem:[%s3 + $0x158] sm:$0xf]
        %v4405 = vld [vmem:[%s3 + $0x15c] sm:$0xf]
        %v4406 = vld [vmem:[%s3 + $0x160] sm:$0xf]
        %v4407 = vld [vmem:[%s3 + $0x164] sm:$0xf]
        %v4408 = vld [vmem:[%s3 + $0x168] sm:$0xf]
        %v4409 = vld [vmem:[%s3 + $0x16c] sm:$0xf]
        %v4410 = vld [vmem:[%s3 + $0x170] sm:$0xf]
        %v4411 = vld [vmem:[%s3 + $0x174] sm:$0xf]
        %v4412 = vld [vmem:[%s3 + $0x178] sm:$0xf]
        %v4413 = vld [vmem:[%s3 + $0x17c] sm:$0xf]
        %v4414 = vld [vmem:[%s3 + $0x180] sm:$0xf]
        %v4415 = vld [vmem:[%s3 + $0x184] sm:$0xf]
        %v4416 = vld [vmem:[%s3 + $0x188] sm:$0xf]
        %v4417 = vld [vmem:[%s3 + $0x18c] sm:$0xf]
        %v4418 = vld [vmem:[%s3 + $0x190] sm:$0xf]
        %v4419 = vld [vmem:[%s3 + $0x194] sm:$0xf]
        %v4420 = vld [vmem:[%s3 + $0x198] sm:$0xf]
        %v4421 = vld [vmem:[%s3 + $0x19c] sm:$0xf]
        %v4422 = vld [vmem:[%s3 + $0x1a0] sm:$0xf]
        %v4423 = vld [vmem:[%s3 + $0x1a4] sm:$0xf]
        %v4424 = vld [vmem:[%s3 + $0x1a8] sm:$0xf]
        %v4425 = vld [vmem:[%s3 + $0x1ac] sm:$0xf]
        %v4426 = vld [vmem:[%s3 + $0x1b0] sm:$0xf]
        %v4427 = vld [vmem:[%s3 + $0x1b4] sm:$0xf]
        %v4428 = vld [vmem:[%s3 + $0x1b8] sm:$0xf]
        %v4429 = vld [vmem:[%s3 + $0x1bc] sm:$0xf]
        %v4430 = vld [vmem:[%s3 + $0x1c0] sm:$0xf]
        %v4431 = vld [vmem:[%s3 + $0x1c4] sm:$0xf]
        %v4432 = vld [vmem:[%s3 + $0x1c8] sm:$0xf]
        %v4433 = vld [vmem:[%s3 + $0x1cc] sm:$0xf]
        %v4434 = vld [vmem:[%s3 + $0x1d0] sm:$0xf]
        %v4435 = vld [vmem:[%s3 + $0x1d4] sm:$0xf]
        %v4436 = vld [vmem:[%s3 + $0x1d8] sm:$0xf]
        %v4437 = vld [vmem:[%s3 + $0x1dc] sm:$0xf]
        %v4438 = vld [vmem:[%s3 + $0x1e0] sm:$0xf]
        %v4439 = vld [vmem:[%s3 + $0x1e4] sm:$0xf]
        %v4440 = vld [vmem:[%s3 + $0x1e8] sm:$0xf]
        %v4441 = vld [vmem:[%s3 + $0x1ec] sm:$0xf]
        %v4442 = vld [vmem:[%s3 + $0x1f0] sm:$0xf]
        %v4443 = vld [vmem:[%s3 + $0x1f4] sm:$0xf]
        %v4444 = vld [vmem:[%s3 + $0x1f8] sm:$0xf]
        %v4445 = vld [vmem:[%s3 + $0x1fc] sm:$0xf]
        %v4446 = vld [vmem:[%s3 + $0x200] sm:$0xf]
        %v4447 = vld [vmem:[%s3 + $0x204] sm:$0xf]
        %v4448 = vld [vmem:[%s3 + $0x208] sm:$0xf]
        %v4449 = vld [vmem:[%s3 + $0x20c] sm:$0xf]
        %v4450 = vld [vmem:[%s3 + $0x210] sm:$0xf]
        %v4451 = vld [vmem:[%s3 + $0x214] sm:$0xf]
        %v4452 = vld [vmem:[%s3 + $0x218] sm:$0xf]
        %v4453 = vld [vmem:[%s3 + $0x21c] sm:$0xf]
        %v4454 = vld [vmem:[%s3 + $0x220] sm:$0xf]
        %v4455 = vld [vmem:[%s3 + $0x224] sm:$0xf]
        %v4456 = vld [vmem:[%s3 + $0x228] sm:$0xf]
        %v4457 = vld [vmem:[%s3 + $0x22c] sm:$0xf]
        %v4458 = vld [vmem:[%s3 + $0x230] sm:$0xf]
        %v4459 = vld [vmem:[%s3 + $0x234] sm:$0xf]
        %v4460 = vld [vmem:[%s3 + $0x238] sm:$0xf]
        %v4461 = vld [vmem:[%s3 + $0x23c] sm:$0xf]
        %v4462 = vld [vmem:[%s4] sm:$0x1]
        %v4464 = vlaneseq
        %v4465 = vshrl.u32 %v4464, 7
        %v4466 = vsub.s32 0, %v4465
        %v4467 = vrot.slane %v4462, %v4466
        %v4613 = vunpack.c.l.b16 %v4318
        %v4614 = vunpack.c.l.b16 %v4319
        %v4615 = vunpack.c.l.b16 %v4320
        %v4616 = vunpack.c.l.b16 %v4321
        %v4617 = vunpack.c.l.b16 %v4322
        %v4618 = vunpack.c.l.b16 %v4323
        %v4619 = vunpack.c.l.b16 %v4324
        %v4620 = vunpack.c.l.b16 %v4325
        %v4621 = vunpack.c.l.b16 %v4326
        %v4622 = vunpack.c.l.b16 %v4327
        %v4623 = vunpack.c.l.b16 %v4328
        %v4624 = vunpack.c.l.b16 %v4329
        %v4625 = vunpack.c.l.b16 %v4330
        %v4626 = vunpack.c.l.b16 %v4331
        %v4627 = vunpack.c.l.b16 %v4332
        %v4628 = vunpack.c.l.b16 %v4333
        %v4629 = vunpack.c.l.b16 %v4334
        %v4630 = vunpack.c.l.b16 %v4335
        %v4631 = vunpack.c.l.b16 %v4336
        %v4632 = vunpack.c.l.b16 %v4337
        %v4633 = vunpack.c.l.b16 %v4338
        %v4634 = vunpack.c.l.b16 %v4339
        %v4635 = vunpack.c.l.b16 %v4340
        %v4636 = vunpack.c.l.b16 %v4341
        %v4637 = vunpack.c.l.b16 %v4342
        %v4638 = vunpack.c.l.b16 %v4343
        %v4639 = vunpack.c.l.b16 %v4344
        %v4640 = vunpack.c.l.b16 %v4345
        %v4641 = vunpack.c.l.b16 %v4346
        %v4642 = vunpack.c.l.b16 %v4347
        %v4643 = vunpack.c.l.b16 %v4348
        %v4644 = vunpack.c.l.b16 %v4349
        %v4645 = vunpack.c.l.b16 %v4350
        %v4646 = vunpack.c.l.b16 %v4351
        %v4647 = vunpack.c.l.b16 %v4352
        %v4648 = vunpack.c.l.b16 %v4353
        %v4649 = vunpack.c.l.b16 %v4354
        %v4650 = vunpack.c.l.b16 %v4355
        %v4651 = vunpack.c.l.b16 %v4356
        %v4652 = vunpack.c.l.b16 %v4357
        %v4653 = vunpack.c.l.b16 %v4358
        %v4654 = vunpack.c.l.b16 %v4359
        %v4655 = vunpack.c.l.b16 %v4360
        %v4656 = vunpack.c.l.b16 %v4361
        %v4657 = vunpack.c.l.b16 %v4362
        %v4658 = vunpack.c.l.b16 %v4363
        %v4659 = vunpack.c.l.b16 %v4364
        %v4660 = vunpack.c.l.b16 %v4365
        %v4661 = vunpack.c.l.b16 %v4366
        %v4662 = vunpack.c.l.b16 %v4367
        %v4663 = vunpack.c.l.b16 %v4368
        %v4664 = vunpack.c.l.b16 %v4369
        %v4665 = vunpack.c.l.b16 %v4370
        %v4666 = vunpack.c.l.b16 %v4371
        %v4667 = vunpack.c.l.b16 %v4372
        %v4668 = vunpack.c.l.b16 %v4373
        %v4669 = vunpack.c.l.b16 %v4374
        %v4670 = vunpack.c.l.b16 %v4375
        %v4671 = vunpack.c.l.b16 %v4376
        %v4672 = vunpack.c.l.b16 %v4377
        %v4673 = vunpack.c.l.b16 %v4378
        %v4674 = vunpack.c.l.b16 %v4379
        %v4675 = vunpack.c.l.b16 %v4380
        %v4676 = vunpack.c.l.b16 %v4381
        %v4677 = vunpack.c.l.b16 %v4382
        %v4678 = vunpack.c.l.b16 %v4383
        %v4679 = vunpack.c.l.b16 %v4384
        %v4680 = vunpack.c.l.b16 %v4385
        %v4681 = vunpack.c.l.b16 %v4386
        %v4682 = vunpack.c.l.b16 %v4387
        %v4683 = vunpack.c.l.b16 %v4388
        %v4684 = vunpack.c.l.b16 %v4389
        %v4685 = vunpack.c.l.b16 %v4390
        %v4686 = vunpack.c.l.b16 %v4391
        %v4687 = vunpack.c.l.b16 %v4392
        %v4688 = vunpack.c.l.b16 %v4393
        %v4689 = vunpack.c.l.b16 %v4394
        %v4690 = vunpack.c.l.b16 %v4395
        %v4691 = vunpack.c.l.b16 %v4396
        %v4692 = vunpack.c.l.b16 %v4397
        %v4693 = vunpack.c.l.b16 %v4398
        %v4694 = vunpack.c.l.b16 %v4399
        %v4695 = vunpack.c.l.b16 %v4400
        %v4696 = vunpack.c.l.b16 %v4401
        %v4697 = vunpack.c.l.b16 %v4402
        %v4698 = vunpack.c.l.b16 %v4403
        %v4699 = vunpack.c.l.b16 %v4404
        %v4700 = vunpack.c.l.b16 %v4405
        %v4701 = vunpack.c.l.b16 %v4406
        %v4702 = vunpack.c.l.b16 %v4407
        %v4703 = vunpack.c.l.b16 %v4408
        %v4704 = vunpack.c.l.b16 %v4409
        %v4705 = vunpack.c.l.b16 %v4410
        %v4706 = vunpack.c.l.b16 %v4411
        %v4707 = vunpack.c.l.b16 %v4412
        %v4708 = vunpack.c.l.b16 %v4413
        %v4709 = vunpack.c.l.b16 %v4414
        %v4710 = vunpack.c.l.b16 %v4415
        %v4711 = vunpack.c.l.b16 %v4416
        %v4712 = vunpack.c.l.b16 %v4417
        %v4713 = vunpack.c.l.b16 %v4418
        %v4714 = vunpack.c.l.b16 %v4419
        %v4715 = vunpack.c.l.b16 %v4420
        %v4716 = vunpack.c.l.b16 %v4421
        %v4717 = vunpack.c.l.b16 %v4422
        %v4718 = vunpack.c.l.b16 %v4423
        %v4719 = vunpack.c.l.b16 %v4424
        %v4720 = vunpack.c.l.b16 %v4425
        %v4721 = vunpack.c.l.b16 %v4426
        %v4722 = vunpack.c.l.b16 %v4427
        %v4723 = vunpack.c.l.b16 %v4428
        %v4724 = vunpack.c.l.b16 %v4429
        %v4725 = vunpack.c.l.b16 %v4430
        %v4726 = vunpack.c.l.b16 %v4431
        %v4727 = vunpack.c.l.b16 %v4432
        %v4728 = vunpack.c.l.b16 %v4433
        %v4729 = vunpack.c.l.b16 %v4434
        %v4730 = vunpack.c.l.b16 %v4435
        %v4731 = vunpack.c.l.b16 %v4436
        %v4732 = vunpack.c.l.b16 %v4437
        %v4733 = vunpack.c.l.b16 %v4438
        %v4734 = vunpack.c.l.b16 %v4439
        %v4735 = vunpack.c.l.b16 %v4440
        %v4736 = vunpack.c.l.b16 %v4441
        %v4737 = vunpack.c.l.b16 %v4442
        %v4738 = vunpack.c.l.b16 %v4443
        %v4739 = vunpack.c.l.b16 %v4444
        %v4740 = vunpack.c.l.b16 %v4445
        %v4741 = vunpack.c.l.b16 %v4446
        %v4742 = vunpack.c.l.b16 %v4447
        %v4743 = vunpack.c.l.b16 %v4448
        %v4744 = vunpack.c.l.b16 %v4449
        %v4745 = vunpack.c.l.b16 %v4450
        %v4746 = vunpack.c.l.b16 %v4451
        %v4747 = vunpack.c.l.b16 %v4452
        %v4748 = vunpack.c.l.b16 %v4453
        %v4749 = vunpack.c.l.b16 %v4454
        %v4750 = vunpack.c.l.b16 %v4455
        %v4751 = vunpack.c.l.b16 %v4456
        %v4752 = vunpack.c.l.b16 %v4457
        %v4753 = vunpack.c.l.b16 %v4458
        %v4754 = vunpack.c.l.b16 %v4459
        %v4755 = vunpack.c.l.b16 %v4460
        %v4756 = vunpack.c.l.b16 %v4461
        %v4757 = vpack.c.b16 %v4614, %v4613
        %v4758 = vpack.c.b16 %v4616, %v4615
        %v4759 = vpack.c.b16 %v4618, %v4617
        %v4760 = vpack.c.b16 %v4620, %v4619
        %v4761 = vpack.c.b16 %v4622, %v4621
        %v4762 = vpack.c.b16 %v4624, %v4623
        %v4763 = vpack.c.b16 %v4626, %v4625
        %v4764 = vpack.c.b16 %v4628, %v4627
        %v4765 = vpack.c.b16 %v4630, %v4629
        %v4766 = vpack.c.b16 %v4632, %v4631
        %v4767 = vpack.c.b16 %v4634, %v4633
        %v4768 = vpack.c.b16 %v4636, %v4635
        %v4769 = vpack.c.b16 %v4638, %v4637
        %v4770 = vpack.c.b16 %v4640, %v4639
        %v4771 = vpack.c.b16 %v4642, %v4641
        %v4772 = vpack.c.b16 %v4644, %v4643
        %v4773 = vpack.c.b16 %v4646, %v4645
        %v4774 = vpack.c.b16 %v4648, %v4647
        %v4775 = vpack.c.b16 %v4650, %v4649
        %v4776 = vpack.c.b16 %v4652, %v4651
        %v4777 = vpack.c.b16 %v4654, %v4653
        %v4778 = vpack.c.b16 %v4656, %v4655
        %v4779 = vpack.c.b16 %v4658, %v4657
        %v4780 = vpack.c.b16 %v4660, %v4659
        %v4781 = vpack.c.b16 %v4662, %v4661
        %v4782 = vpack.c.b16 %v4664, %v4663
        %v4783 = vpack.c.b16 %v4666, %v4665
        %v4784 = vpack.c.b16 %v4668, %v4667
        %v4785 = vpack.c.b16 %v4670, %v4669
        %v4786 = vpack.c.b16 %v4672, %v4671
        %v4787 = vpack.c.b16 %v4674, %v4673
        %v4788 = vpack.c.b16 %v4676, %v4675
        %v4789 = vpack.c.b16 %v4678, %v4677
        %v4790 = vpack.c.b16 %v4680, %v4679
        %v4791 = vpack.c.b16 %v4682, %v4681
        %v4792 = vpack.c.b16 %v4684, %v4683
        %v4793 = vpack.c.b16 %v4686, %v4685
        %v4794 = vpack.c.b16 %v4688, %v4687
        %v4795 = vpack.c.b16 %v4690, %v4689
        %v4796 = vpack.c.b16 %v4692, %v4691
        %v4797 = vpack.c.b16 %v4694, %v4693
        %v4798 = vpack.c.b16 %v4696, %v4695
        %v4799 = vpack.c.b16 %v4698, %v4697
        %v4800 = vpack.c.b16 %v4700, %v4699
        %v4801 = vpack.c.b16 %v4702, %v4701
        %v4802 = vpack.c.b16 %v4704, %v4703
        %v4803 = vpack.c.b16 %v4706, %v4705
        %v4804 = vpack.c.b16 %v4708, %v4707
        %v4805 = vpack.c.b16 %v4710, %v4709
        %v4806 = vpack.c.b16 %v4712, %v4711
        %v4807 = vpack.c.b16 %v4714, %v4713
        %v4808 = vpack.c.b16 %v4716, %v4715
        %v4809 = vpack.c.b16 %v4718, %v4717
        %v4810 = vpack.c.b16 %v4720, %v4719
        %v4811 = vpack.c.b16 %v4722, %v4721
        %v4812 = vpack.c.b16 %v4724, %v4723
        %v4813 = vpack.c.b16 %v4726, %v4725
        %v4814 = vpack.c.b16 %v4728, %v4727
        %v4815 = vpack.c.b16 %v4730, %v4729
        %v4816 = vpack.c.b16 %v4732, %v4731
        %v4817 = vpack.c.b16 %v4734, %v4733
        %v4818 = vpack.c.b16 %v4736, %v4735
        %v4819 = vpack.c.b16 %v4738, %v4737
        %v4820 = vpack.c.b16 %v4740, %v4739
        %v4821 = vpack.c.b16 %v4742, %v4741
        %v4822 = vpack.c.b16 %v4744, %v4743
        %v4823 = vpack.c.b16 %v4746, %v4745
        %v4824 = vpack.c.b16 %v4748, %v4747
        %v4825 = vpack.c.b16 %v4750, %v4749
        %v4826 = vpack.c.b16 %v4752, %v4751
        %v4827 = vpack.c.b16 %v4754, %v4753
        %v4828 = vpack.c.b16 %v4756, %v4755
        %4901 = vmatprep.subr.bf16.mxu0 0
        %4902 = vmatpush1.bf16.msra.mxu0 %v4757
        %4903 = vmatprep.subr.bf16.mxu0 0
        %4904 = vmatpush1.bf16.msra.mxu0 %v4758
        %4905 = vmatprep.subr.bf16.mxu0 0
        %4906 = vmatpush1.bf16.msra.mxu0 %v4759
        %4907 = vmatprep.subr.bf16.mxu0 0
        %4908 = vmatpush1.bf16.msra.mxu0 %v4760
        %4909 = vmatprep.subr.bf16.mxu0 0
        %4910 = vmatpush1.bf16.msra.mxu0 %v4761
        %4911 = vmatprep.subr.bf16.mxu0 0
        %4912 = vmatpush1.bf16.msra.mxu0 %v4762
        %4913 = vmatprep.subr.bf16.mxu0 0
        %4914 = vmatpush1.bf16.msra.mxu0 %v4763
        %4915 = vmatprep.subr.bf16.mxu0 0
        %4916 = vmatpush1.bf16.msra.mxu0 %v4764
        %4917 = vmatprep.subr.bf16.mxu0 0
        %4918 = vmatpush1.bf16.msra.mxu0 %v4765
        %4919 = vmatprep.subr.bf16.mxu0 0
        %4920 = vmatpush1.bf16.msra.mxu0 %v4766
        %4921 = vmatprep.subr.bf16.mxu0 0
        %4922 = vmatpush1.bf16.msra.mxu0 %v4767
        %4923 = vmatprep.subr.bf16.mxu0 0
        %4924 = vmatpush1.bf16.msra.mxu0 %v4768
        %4925 = vmatprep.subr.bf16.mxu0 0
        %4926 = vmatpush1.bf16.msra.mxu0 %v4769
        %4927 = vmatprep.subr.bf16.mxu0 0
        %4928 = vmatpush1.bf16.msra.mxu0 %v4770
        %4929 = vmatprep.subr.bf16.mxu0 0
        %4930 = vmatpush1.bf16.msra.mxu0 %v4771
        %4931 = vmatprep.subr.bf16.mxu0 0
        %4932 = vmatpush1.bf16.msra.mxu0 %v4772
        %4933 = vmatprep.mubr.bf16.mxu0 %v4229
        %4934 = vmatmul.mubr.bf16.gmra.mrb[0].mxu0 %v4217
        %v4935 = vpop.f32.mrb[0].mxu0
        %v4936 = vadd.f32 %v4467, %v4935
        %v4937 = vpop.f32.mrb[0].mxu0
        %v4938 = vpop.f32.mrb[0].mxu0
        %v4939 = vadd.f32 %v4467, %v4938
        %v4940 = vpop.f32.mrb[0].mxu0
        %4941 = vmatprep.mubr.bf16.mxu0 %v4230
        %4942 = vmatmul.mubr.bf16.gmra.mrb[0].mxu0 %v4218
        %v4943 = vpop.f32.mrb[0].mxu0
        %v4944 = vadd.f32 %v4467, %v4943
        %v4945 = vpop.f32.mrb[0].mxu0
        %v4946 = vpop.f32.mrb[0].mxu0
        %v4947 = vadd.f32 %v4467, %v4946
        %v4948 = vpop.f32.mrb[0].mxu0
        %4949 = vmatprep.mubr.bf16.mxu0 %v4231
        %4950 = vmatmul.mubr.bf16.gmra.mrb[0].mxu0 %v4219
        %v4951 = vpop.f32.mrb[0].mxu0
        %v4952 = vadd.f32 %v4467, %v4951
        %v4953 = vpop.f32.mrb[0].mxu0
        %v4954 = vpop.f32.mrb[0].mxu0
        %v4955 = vadd.f32 %v4467, %v4954
        %v4956 = vpop.f32.mrb[0].mxu0
        %4957 = vmatprep.mubr.bf16.mxu0 %v4232
        %4958 = vmatmul.mubr.bf16.gmra.mrb[0].mxu0 %v4220
        %v4959 = vpop.f32.mrb[0].mxu0
        %v4960 = vadd.f32 %v4467, %v4959
        %v4961 = vpop.f32.mrb[0].mxu0
        %v4962 = vpop.f32.mrb[0].mxu0
        %v4963 = vadd.f32 %v4467, %v4962
        %v4964 = vpop.f32.mrb[0].mxu0
        %4965 = vdwg.mxu0
        %4966 = vmatprep.subr.bf16.mxu0 0
        %4967 = vmatpush1.bf16.msra.mxu0 %v4773
        %4968 = vmatprep.subr.bf16.mxu0 0
        %4969 = vmatpush1.bf16.msra.mxu0 %v4774
        %4970 = vmatprep.subr.bf16.mxu0 0
        %4971 = vmatpush1.bf16.msra.mxu0 %v4775
        %4972 = vmatprep.subr.bf16.mxu0 0
        %4973 = vmatpush1.bf16.msra.mxu0 %v4776
        %4974 = vmatprep.subr.bf16.mxu0 0
        %4975 = vmatpush1.bf16.msra.mxu0 %v4777
        %4976 = vmatprep.subr.bf16.mxu0 0
        %4977 = vmatpush1.bf16.msra.mxu0 %v4778
        %4978 = vmatprep.subr.bf16.mxu0 0
        %4979 = vmatpush1.bf16.msra.mxu0 %v4779
        %4980 = vmatprep.subr.bf16.mxu0 0
        %4981 = vmatpush1.bf16.msra.mxu0 %v4780
        %4982 = vmatprep.subr.bf16.mxu0 0
        %4983 = vmatpush1.bf16.msra.mxu0 %v4781
        %4984 = vmatprep.subr.bf16.mxu0 0
        %4985 = vmatpush1.bf16.msra.mxu0 %v4782
        %4986 = vmatprep.subr.bf16.mxu0 0
        %4987 = vmatpush1.bf16.msra.mxu0 %v4783
        %4988 = vmatprep.subr.bf16.mxu0 0
        %4989 = vmatpush1.bf16.msra.mxu0 %v4784
        %4990 = vmatprep.subr.bf16.mxu0 0
        %4991 = vmatpush1.bf16.msra.mxu0 %v4785
        %4992 = vmatprep.subr.bf16.mxu0 0
        %4993 = vmatpush1.bf16.msra.mxu0 %v4786
        %4994 = vmatprep.subr.bf16.mxu0 0
        %4995 = vmatpush1.bf16.msra.mxu0 %v4787
        %4996 = vmatprep.subr.bf16.mxu0 0
        %4997 = vmatpush1.bf16.msra.mxu0 %v4788
        %4998 = vmatprep.mubr.bf16.mxu0 %v4253
        %4999 = vmatmul.mubr.bf16.gmra.mrb[0].mxu0 %v4241
        %v5000 = vpop.f32.mrb[0].mxu0
        %v5001 = vadd.f32 %v4936, %v5000
        %v5002 = vpop.f32.mrb[0].mxu0
        %v5003 = vpop.f32.mrb[0].mxu0
        %v5004 = vadd.f32 %v4939, %v5003
        %v5005 = vpop.f32.mrb[0].mxu0
        %5006 = vmatprep.mubr.bf16.mxu0 %v4254
        %5007 = vmatmul.mubr.bf16.gmra.mrb[0].mxu0 %v4242
        %v5008 = vpop.f32.mrb[0].mxu0
        %v5009 = vadd.f32 %v4944, %v5008
        %v5010 = vpop.f32.mrb[0].mxu0
        %v5011 = vpop.f32.mrb[0].mxu0
        %v5012 = vadd.f32 %v4947, %v5011
        %v5013 = vpop.f32.mrb[0].mxu0
        %5014 = vmatprep.mubr.bf16.mxu0 %v4255
        %5015 = vmatmul.mubr.bf16.gmra.mrb[0].mxu0 %v4243
        %v5016 = vpop.f32.mrb[0].mxu0
        %v5017 = vadd.f32 %v4952, %v5016
        %v5018 = vpop.f32.mrb[0].mxu0
        %v5019 = vpop.f32.mrb[0].mxu0
        %v5020 = vadd.f32 %v4955, %v5019
        %v5021 = vpop.f32.mrb[0].mxu0
        %5022 = vmatprep.mubr.bf16.mxu0 %v4256
        %5023 = vmatmul.mubr.bf16.gmra.mrb[0].mxu0 %v4244
        %v5024 = vpop.f32.mrb[0].mxu0
        %v5025 = vadd.f32 %v4960, %v5024
        %v5026 = vpop.f32.mrb[0].mxu0
        %v5027 = vpop.f32.mrb[0].mxu0
        %v5028 = vadd.f32 %v4963, %v5027
        %v5029 = vpop.f32.mrb[0].mxu0
        %5030 = vdwg.mxu0
        %5031 = vmatprep.subr.bf16.mxu0 0
        %5032 = vmatpush1.bf16.msra.mxu0 %v4789
        %5033 = vmatprep.subr.bf16.mxu0 0
        %5034 = vmatpush1.bf16.msra.mxu0 %v4790
        %5035 = vmatprep.subr.bf16.mxu0 0
        %5036 = vmatpush1.bf16.msra.mxu0 %v4791
        %5037 = vmatprep.subr.bf16.mxu0 0
        %5038 = vmatpush1.bf16.msra.mxu0 %v4792
        %5039 = vmatprep.subr.bf16.mxu0 0
        %5040 = vmatpush1.bf16.msra.mxu0 %v4793
        %5041 = vmatprep.subr.bf16.mxu0 0
        %5042 = vmatpush1.bf16.msra.mxu0 %v4794
        %5043 = vmatprep.subr.bf16.mxu0 0
        %5044 = vmatpush1.bf16.msra.mxu0 %v4795
        %5045 = vmatprep.subr.bf16.mxu0 0
        %5046 = vmatpush1.bf16.msra.mxu0 %v4796
        %5047 = vmatprep.subr.bf16.mxu0 0
        %5048 = vmatpush1.bf16.msra.mxu0 %v4797
        %5049 = vmatprep.subr.bf16.mxu0 0
        %5050 = vmatpush1.bf16.msra.mxu0 %v4798
        %5051 = vmatprep.subr.bf16.mxu0 0
        %5052 = vmatpush1.bf16.msra.mxu0 %v4799
        %5053 = vmatprep.subr.bf16.mxu0 0
        %5054 = vmatpush1.bf16.msra.mxu0 %v4800
        %5055 = vmatprep.subr.bf16.mxu0 0
        %5056 = vmatpush1.bf16.msra.mxu0 %v4801
        %5057 = vmatprep.subr.bf16.mxu0 0
        %5058 = vmatpush1.bf16.msra.mxu0 %v4802
        %5059 = vmatprep.subr.bf16.mxu0 0
        %5060 = vmatpush1.bf16.msra.mxu0 %v4803
        %5061 = vmatprep.subr.bf16.mxu0 0
        %5062 = vmatpush1.bf16.msra.mxu0 %v4804
        %5063 = vmatprep.mubr.bf16.mxu0 %v4277
        %5064 = vmatmul.mubr.bf16.gmra.mrb[0].mxu0 %v4265
        %v5065 = vpop.f32.mrb[0].mxu0
        %v5066 = vadd.f32 %v5001, %v5065
        %v5067 = vpop.f32.mrb[0].mxu0
        %v5068 = vpop.f32.mrb[0].mxu0
        %v5069 = vadd.f32 %v5004, %v5068
        %v5070 = vpop.f32.mrb[0].mxu0
        %5071 = vmatprep.mubr.bf16.mxu0 %v4278
        %5072 = vmatmul.mubr.bf16.gmra.mrb[0].mxu0 %v4266
        %v5073 = vpop.f32.mrb[0].mxu0
        %v5074 = vadd.f32 %v5009, %v5073
        %v5075 = vpop.f32.mrb[0].mxu0
        %v5076 = vpop.f32.mrb[0].mxu0
        %v5077 = vadd.f32 %v5012, %v5076
        %v5078 = vpop.f32.mrb[0].mxu0
        %5079 = vmatprep.mubr.bf16.mxu0 %v4279
        %5080 = vmatmul.mubr.bf16.gmra.mrb[0].mxu0 %v4267
        %v5081 = vpop.f32.mrb[0].mxu0
        %v5082 = vadd.f32 %v5017, %v5081
        %v5083 = vpop.f32.mrb[0].mxu0
        %v5084 = vpop.f32.mrb[0].mxu0
        %v5085 = vadd.f32 %v5020, %v5084
        %v5086 = vpop.f32.mrb[0].mxu0
        %5087 = vmatprep.mubr.bf16.mxu0 %v4280
        %5088 = vmatmul.mubr.bf16.gmra.mrb[0].mxu0 %v4268
        %v5089 = vpop.f32.mrb[0].mxu0
        %v5090 = vadd.f32 %v5025, %v5089
        %v5091 = vpop.f32.mrb[0].mxu0
        %v5092 = vpop.f32.mrb[0].mxu0
        %v5093 = vadd.f32 %v5028, %v5092
        %v5094 = vpop.f32.mrb[0].mxu0
        %5095 = vdwg.mxu0
        %5096 = vmatprep.subr.bf16.mxu0 0
        %5097 = vmatpush1.bf16.msra.mxu0 %v4805
        %5098 = vmatprep.subr.bf16.mxu0 0
        %5099 = vmatpush1.bf16.msra.mxu0 %v4806
        %5100 = vmatprep.subr.bf16.mxu0 0
        %5101 = vmatpush1.bf16.msra.mxu0 %v4807
        %5102 = vmatprep.subr.bf16.mxu0 0
        %5103 = vmatpush1.bf16.msra.mxu0 %v4808
        %5104 = vmatprep.subr.bf16.mxu0 0
        %5105 = vmatpush1.bf16.msra.mxu0 %v4809
        %5106 = vmatprep.subr.bf16.mxu0 0
        %5107 = vmatpush1.bf16.msra.mxu0 %v4810
        %5108 = vmatprep.subr.bf16.mxu0 0
        %5109 = vmatpush1.bf16.msra.mxu0 %v4811
        %5110 = vmatprep.subr.bf16.mxu0 0
        %5111 = vmatpush1.bf16.msra.mxu0 %v4812
        %5112 = vmatprep.subr.bf16.mxu0 0
        %5113 = vmatpush1.bf16.msra.mxu0 %v4813
        %5114 = vmatprep.subr.bf16.mxu0 0
        %5115 = vmatpush1.bf16.msra.mxu0 %v4814
        %5116 = vmatprep.subr.bf16.mxu0 0
        %5117 = vmatpush1.bf16.msra.mxu0 %v4815
        %5118 = vmatprep.subr.bf16.mxu0 0
        %5119 = vmatpush1.bf16.msra.mxu0 %v4816
        %5120 = vmatprep.subr.bf16.mxu0 0
        %5121 = vmatpush1.bf16.msra.mxu0 %v4817
        %5122 = vmatprep.subr.bf16.mxu0 0
        %5123 = vmatpush1.bf16.msra.mxu0 %v4818
        %5124 = vmatprep.subr.bf16.mxu0 0
        %5125 = vmatpush1.bf16.msra.mxu0 %v4819
        %5126 = vmatprep.subr.bf16.mxu0 0
        %5127 = vmatpush1.bf16.msra.mxu0 %v4820
        %5128 = vmatprep.mubr.bf16.mxu0 %v4302
        %5129 = vmatmul.mubr.bf16.gmra.mrb[0].mxu0 %v4290
        %v5130 = vpop.f32.mrb[0].mxu0
        %v5131 = vadd.f32 %v5066, %v5130
        %v5132 = vpop.f32.mrb[0].mxu0
        %v5133 = vpop.f32.mrb[0].mxu0
        %v5134 = vadd.f32 %v5069, %v5133
        %v5135 = vpop.f32.mrb[0].mxu0
        %5136 = vmatprep.mubr.bf16.mxu0 %v4303
        %5137 = vmatmul.mubr.bf16.gmra.mrb[0].mxu0 %v4291
        %v5138 = vpop.f32.mrb[0].mxu0
        %v5139 = vadd.f32 %v5074, %v5138
        %v5140 = vpop.f32.mrb[0].mxu0
        %v5141 = vpop.f32.mrb[0].mxu0
        %v5142 = vadd.f32 %v5077, %v5141
        %v5143 = vpop.f32.mrb[0].mxu0
        %5144 = vmatprep.mubr.bf16.mxu0 %v4304
        %5145 = vmatmul.mubr.bf16.gmra.mrb[0].mxu0 %v4292
        %v5146 = vpop.f32.mrb[0].mxu0
        %v5147 = vadd.f32 %v5082, %v5146
        %v5148 = vpop.f32.mrb[0].mxu0
        %v5149 = vpop.f32.mrb[0].mxu0
        %v5150 = vadd.f32 %v5085, %v5149
        %v5151 = vpop.f32.mrb[0].mxu0
        %5152 = vmatprep.mubr.bf16.mxu0 %v4305
        %5153 = vmatmul.mubr.bf16.gmra.mrb[0].mxu0 %v4293
        %v5154 = vpop.f32.mrb[0].mxu0
        %v5155 = vadd.f32 %v5090, %v5154
        %v5156 = vpop.f32.mrb[0].mxu0
        %v5157 = vpop.f32.mrb[0].mxu0
        %v5158 = vadd.f32 %v5093, %v5157
        %v5159 = vpop.f32.mrb[0].mxu0
        %5160 = vdwg.mxu0
        %5161 = vmatprep.subr.bf16.mxu0 0
        %5162 = vmatpush1.bf16.msra.mxu0 %v4821
        %5163 = vmatprep.subr.bf16.mxu0 0
        %5164 = vmatpush1.bf16.msra.mxu0 %v4822
        %5165 = vmatprep.subr.bf16.mxu0 0
        %5166 = vmatpush1.bf16.msra.mxu0 %v4823
        %5167 = vmatprep.subr.bf16.mxu0 0
        %5168 = vmatpush1.bf16.msra.mxu0 %v4824
        %5169 = vmatprep.subr.bf16.mxu0 0
        %5170 = vmatpush1.bf16.msra.mxu0 %v4825
        %5171 = vmatprep.subr.bf16.mxu0 0
        %5172 = vmatpush1.bf16.msra.mxu0 %v4826
        %5173 = vmatprep.subr.bf16.mxu0 0
        %5174 = vmatpush1.bf16.msra.mxu0 %v4827
        %5175 = vmatprep.subr.bf16.mxu0 0
        %5176 = vmatpush1.bf16.msra.mxu0 %v4828
        %5177 = vmatprep.subr.bf16.mxu0 0
        %5178 = vmatpush1.bf16.msra.mxu0 0
        %5179 = vmatprep.subr.bf16.mxu0 0
        %5180 = vmatpush1.bf16.msra.mxu0 0
        %5181 = vmatprep.subr.bf16.mxu0 0
        %5182 = vmatpush1.bf16.msra.mxu0 0
        %5183 = vmatprep.subr.bf16.mxu0 0
        %5184 = vmatpush1.bf16.msra.mxu0 0
        %5185 = vmatprep.subr.bf16.mxu0 0
        %5186 = vmatpush1.bf16.msra.mxu0 0
        %5187 = vmatprep.subr.bf16.mxu0 0
        %5188 = vmatpush1.bf16.msra.mxu0 0
        %5189 = vmatprep.subr.bf16.mxu0 0
        %5190 = vmatpush1.bf16.msra.mxu0 0
        %5191 = vmatprep.subr.bf16.mxu0 0
        %5192 = vmatpush1.bf16.msra.mxu0 0
        %5193 = vmatprep.mubr.bf16.mxu0 0
        %5194 = vmatmul.mubr.bf16.gmra.mrb[0].mxu0 %v4314
        %v5195 = vpop.f32.mrb[0].mxu0
        %v5196 = vadd.f32 %v5131, %v5195
        %v5197 = vpop.f32.mrb[0].mxu0
        %v5198 = vpop.f32.mrb[0].mxu0
        %v5199 = vadd.f32 %v5134, %v5198
        %v5200 = vpop.f32.mrb[0].mxu0
        %5201 = vmatprep.mubr.bf16.mxu0 0
        %5202 = vmatmul.mubr.bf16.gmra.mrb[0].mxu0 %v4315
        %v5203 = vpop.f32.mrb[0].mxu0
        %v5204 = vadd.f32 %v5139, %v5203
        %v5205 = vpop.f32.mrb[0].mxu0
        %v5206 = vpop.f32.mrb[0].mxu0
        %v5207 = vadd.f32 %v5142, %v5206
        %v5208 = vpop.f32.mrb[0].mxu0
        %5209 = vmatprep.mubr.bf16.mxu0 0
        %5210 = vmatmul.mubr.bf16.gmra.mrb[0].mxu0 %v4316
        %v5211 = vpop.f32.mrb[0].mxu0
        %v5212 = vadd.f32 %v5147, %v5211
        %v5213 = vpop.f32.mrb[0].mxu0
        %v5214 = vpop.f32.mrb[0].mxu0
        %v5215 = vadd.f32 %v5150, %v5214
        %v5216 = vpop.f32.mrb[0].mxu0
        %5217 = vmatprep.mubr.bf16.mxu0 0
        %5218 = vmatmul.mubr.bf16.gmra.mrb[0].mxu0 %v4317
        %v5219 = vpop.f32.mrb[0].mxu0
        %v5220 = vadd.f32 %v5155, %v5219
        %v5221 = vpop.f32.mrb[0].mxu0
        %v5222 = vpop.f32.mrb[0].mxu0
        %v5223 = vadd.f32 %v5158, %v5222
        %v5224 = vpop.f32.mrb[0].mxu0
        %5225 = vdwg.mxu0
        %v5226 = vmax.f32 %v5196, 0.0
        %v5227 = vmax.f32 %v5199, 0.0
        %v5228 = vmax.f32 %v5204, 0.0
        %v5229 = vmax.f32 %v5207, 0.0
        %v5230 = vmax.f32 %v5212, 0.0
        %v5231 = vmax.f32 %v5215, 0.0
        %v5232 = vmax.f32 %v5220, 0.0
        %v5233 = vmax.f32 %v5223, 0.0
        %v5242 = vcombine.high %v5226, %v5226
        %v5244 = vunpack.c.l.s4 1983009808
        %v5245 = vunpack.c.0.s8 %v5244
        %v5246 = vlaneseq
        %v5247 = vshrl.u32 %v5246, 7
        %v5248 = vsub.s32 %v5245, %v5247
        %v5249 = vrot.slane %v5226, %v5248
        %v5251 = vunpack.c.l.s4 1983009808
        %v5252 = vunpack.c.0.s8 %v5251
        %v5253 = vlaneseq
        %v5254 = vshrl.u32 %v5253, 7
        %v5255 = vsub.s32 %v5252, %v5254
        %v5256 = vrot.slane %v5242, %v5255
        %v5257 = vcombine.high %v5249, %v5249
        %v5258 = vcombine.high %v5256, %v5256
        %v5259 = vcombine.high %v5227, %v5227
        %v5261 = vunpack.c.l.s4 1983009808
        %v5262 = vunpack.c.0.s8 %v5261
        %v5263 = vlaneseq
        %v5264 = vshrl.u32 %v5263, 7
        %v5265 = vsub.s32 %v5262, %v5264
        %v5266 = vrot.slane %v5227, %v5265
        %v5268 = vunpack.c.l.s4 1983009808
        %v5269 = vunpack.c.0.s8 %v5268
        %v5270 = vlaneseq
        %v5271 = vshrl.u32 %v5270, 7
        %v5272 = vsub.s32 %v5269, %v5271
        %v5273 = vrot.slane %v5259, %v5272
        %v5274 = vcombine.high %v5266, %v5266
        %v5275 = vcombine.high %v5273, %v5273
        %v5276 = vcombine.high %v5228, %v5228
        %v5278 = vunpack.c.l.s4 1983009808
        %v5279 = vunpack.c.0.s8 %v5278
        %v5280 = vlaneseq
        %v5281 = vshrl.u32 %v5280, 7
        %v5282 = vsub.s32 %v5279, %v5281
        %v5283 = vrot.slane %v5228, %v5282
        %v5285 = vunpack.c.l.s4 1983009808
        %v5286 = vunpack.c.0.s8 %v5285
        %v5287 = vlaneseq
        %v5288 = vshrl.u32 %v5287, 7
        %v5289 = vsub.s32 %v5286, %v5288
        %v5290 = vrot.slane %v5276, %v5289
        %v5291 = vcombine.high %v5283, %v5283
        %v5292 = vcombine.high %v5290, %v5290
        %v5293 = vcombine.high %v5229, %v5229
        %v5295 = vunpack.c.l.s4 1983009808
        %v5296 = vunpack.c.0.s8 %v5295
        %v5297 = vlaneseq
        %v5298 = vshrl.u32 %v5297, 7
        %v5299 = vsub.s32 %v5296, %v5298
        %v5300 = vrot.slane %v5229, %v5299
        %v5302 = vunpack.c.l.s4 1983009808
        %v5303 = vunpack.c.0.s8 %v5302
        %v5304 = vlaneseq
        %v5305 = vshrl.u32 %v5304, 7
        %v5306 = vsub.s32 %v5303, %v5305
        %v5307 = vrot.slane %v5293, %v5306
        %v5308 = vcombine.high %v5300, %v5300
        %v5309 = vcombine.high %v5307, %v5307
        %v5310 = vcombine.high %v5230, %v5230
        %v5312 = vunpack.c.l.s4 1983009808
        %v5313 = vunpack.c.0.s8 %v5312
        %v5314 = vlaneseq
        %v5315 = vshrl.u32 %v5314, 7
        %v5316 = vsub.s32 %v5313, %v5315
        %v5317 = vrot.slane %v5230, %v5316
        %v5319 = vunpack.c.l.s4 1983009808
        %v5320 = vunpack.c.0.s8 %v5319
        %v5321 = vlaneseq
        %v5322 = vshrl.u32 %v5321, 7
        %v5323 = vsub.s32 %v5320, %v5322
        %v5324 = vrot.slane %v5310, %v5323
        %v5325 = vcombine.high %v5317, %v5317
        %v5326 = vcombine.high %v5324, %v5324
        %v5327 = vcombine.high %v5231, %v5231
        %v5329 = vunpack.c.l.s4 1983009808
        %v5330 = vunpack.c.0.s8 %v5329
        %v5331 = vlaneseq
        %v5332 = vshrl.u32 %v5331, 7
        %v5333 = vsub.s32 %v5330, %v5332
        %v5334 = vrot.slane %v5231, %v5333
        %v5336 = vunpack.c.l.s4 1983009808
        %v5337 = vunpack.c.0.s8 %v5336
        %v5338 = vlaneseq
        %v5339 = vshrl.u32 %v5338, 7
        %v5340 = vsub.s32 %v5337, %v5339
        %v5341 = vrot.slane %v5327, %v5340
        %v5342 = vcombine.high %v5334, %v5334
        %v5343 = vcombine.high %v5341, %v5341
        %v5344 = vcombine.high %v5232, %v5232
        %v5346 = vunpack.c.l.s4 1983009808
        %v5347 = vunpack.c.0.s8 %v5346
        %v5348 = vlaneseq
        %v5349 = vshrl.u32 %v5348, 7
        %v5350 = vsub.s32 %v5347, %v5349
        %v5351 = vrot.slane %v5232, %v5350
        %v5353 = vunpack.c.l.s4 1983009808
        %v5354 = vunpack.c.0.s8 %v5353
        %v5355 = vlaneseq
        %v5356 = vshrl.u32 %v5355, 7
        %v5357 = vsub.s32 %v5354, %v5356
        %v5358 = vrot.slane %v5344, %v5357
        %v5359 = vcombine.high %v5351, %v5351
        %v5360 = vcombine.high %v5358, %v5358
        %v5361 = vcombine.high %v5233, %v5233
        %v5363 = vunpack.c.l.s4 1983009808
        %v5364 = vunpack.c.0.s8 %v5363
        %v5365 = vlaneseq
        %v5366 = vshrl.u32 %v5365, 7
        %v5367 = vsub.s32 %v5364, %v5366
        %v5368 = vrot.slane %v5233, %v5367
        %v5370 = vunpack.c.l.s4 1983009808
        %v5371 = vunpack.c.0.s8 %v5370
        %v5372 = vlaneseq
        %v5373 = vshrl.u32 %v5372, 7
        %v5374 = vsub.s32 %v5371, %v5373
        %v5375 = vrot.slane %v5361, %v5374
        %v5376 = vcombine.high %v5368, %v5368
        %v5377 = vcombine.high %v5375, %v5375
        %vm5410 = vcmask 1041408
        %v5411 = vsel %vm5410, %v5249, -inf
        %v5412 = vrot.slane %v5411, 4
        %v5413 = vmax.f32 %v5411, %v5412
        %v5414 = vrot.slane %v5413, 2
        %v5415 = vmax.f32 %v5413, %v5414
        %v5416 = vrot.slane %v5415, 1
        %v5417 = vmax.f32 %v5415, %v5416
        %v5418 = vsel %vm5410, %v5257, -inf
        %v5419 = vrot.slane %v5418, 4
        %v5420 = vmax.f32 %v5418, %v5419
        %v5421 = vrot.slane %v5420, 2
        %v5422 = vmax.f32 %v5420, %v5421
        %v5423 = vrot.slane %v5422, 1
        %v5424 = vmax.f32 %v5422, %v5423
        %v5425 = vsel %vm5410, %v5256, -inf
        %v5426 = vrot.slane %v5425, 4
        %v5427 = vmax.f32 %v5425, %v5426
        %v5428 = vrot.slane %v5427, 2
        %v5429 = vmax.f32 %v5427, %v5428
        %v5430 = vrot.slane %v5429, 1
        %v5431 = vmax.f32 %v5429, %v5430
        %v5432 = vsel %vm5410, %v5258, -inf
        %v5433 = vrot.slane %v5432, 4
        %v5434 = vmax.f32 %v5432, %v5433
        %v5435 = vrot.slane %v5434, 2
        %v5436 = vmax.f32 %v5434, %v5435
        %v5437 = vrot.slane %v5436, 1
        %v5438 = vmax.f32 %v5436, %v5437
        %v5439 = vsel %vm5410, %v5266, -inf
        %v5440 = vrot.slane %v5439, 4
        %v5441 = vmax.f32 %v5439, %v5440
        %v5442 = vrot.slane %v5441, 2
        %v5443 = vmax.f32 %v5441, %v5442
        %v5444 = vrot.slane %v5443, 1
        %v5445 = vmax.f32 %v5443, %v5444
        %v5446 = vsel %vm5410, %v5274, -inf
        %v5447 = vrot.slane %v5446, 4
        %v5448 = vmax.f32 %v5446, %v5447
        %v5449 = vrot.slane %v5448, 2
        %v5450 = vmax.f32 %v5448, %v5449
        %v5451 = vrot.slane %v5450, 1
        %v5452 = vmax.f32 %v5450, %v5451
        %v5453 = vsel %vm5410, %v5273, -inf
        %v5454 = vrot.slane %v5453, 4
        %v5455 = vmax.f32 %v5453, %v5454
        %v5456 = vrot.slane %v5455, 2
        %v5457 = vmax.f32 %v5455, %v5456
        %v5458 = vrot.slane %v5457, 1
        %v5459 = vmax.f32 %v5457, %v5458
        %v5460 = vsel %vm5410, %v5275, -inf
        %v5461 = vrot.slane %v5460, 4
        %v5462 = vmax.f32 %v5460, %v5461
        %v5463 = vrot.slane %v5462, 2
        %v5464 = vmax.f32 %v5462, %v5463
        %v5465 = vrot.slane %v5464, 1
        %v5466 = vmax.f32 %v5464, %v5465
        %v5467 = vsel %vm5410, %v5283, -inf
        %v5468 = vrot.slane %v5467, 4
        %v5469 = vmax.f32 %v5467, %v5468
        %v5470 = vrot.slane %v5469, 2
        %v5471 = vmax.f32 %v5469, %v5470
        %v5472 = vrot.slane %v5471, 1
        %v5473 = vmax.f32 %v5471, %v5472
        %v5474 = vsel %vm5410, %v5291, -inf
        %v5475 = vrot.slane %v5474, 4
        %v5476 = vmax.f32 %v5474, %v5475
        %v5477 = vrot.slane %v5476, 2
        %v5478 = vmax.f32 %v5476, %v5477
        %v5479 = vrot.slane %v5478, 1
        %v5480 = vmax.f32 %v5478, %v5479
        %v5481 = vsel %vm5410, %v5290, -inf
        %v5482 = vrot.slane %v5481, 4
        %v5483 = vmax.f32 %v5481, %v5482
        %v5484 = vrot.slane %v5483, 2
        %v5485 = vmax.f32 %v5483, %v5484
        %v5486 = vrot.slane %v5485, 1
        %v5487 = vmax.f32 %v5485, %v5486
        %v5488 = vsel %vm5410, %v5292, -inf
        %v5489 = vrot.slane %v5488, 4
        %v5490 = vmax.f32 %v5488, %v5489
        %v5491 = vrot.slane %v5490, 2
        %v5492 = vmax.f32 %v5490, %v5491
        %v5493 = vrot.slane %v5492, 1
        %v5494 = vmax.f32 %v5492, %v5493
        %v5495 = vsel %vm5410, %v5300, -inf
        %v5496 = vrot.slane %v5495, 4
        %v5497 = vmax.f32 %v5495, %v5496
        %v5498 = vrot.slane %v5497, 2
        %v5499 = vmax.f32 %v5497, %v5498
        %v5500 = vrot.slane %v5499, 1
        %v5501 = vmax.f32 %v5499, %v5500
        %v5502 = vsel %vm5410, %v5308, -inf
        %v5503 = vrot.slane %v5502, 4
        %v5504 = vmax.f32 %v5502, %v5503
        %v5505 = vrot.slane %v5504, 2
        %v5506 = vmax.f32 %v5504, %v5505
        %v5507 = vrot.slane %v5506, 1
        %v5508 = vmax.f32 %v5506, %v5507
        %v5509 = vsel %vm5410, %v5307, -inf
        %v5510 = vrot.slane %v5509, 4
        %v5511 = vmax.f32 %v5509, %v5510
        %v5512 = vrot.slane %v5511, 2
        %v5513 = vmax.f32 %v5511, %v5512
        %v5514 = vrot.slane %v5513, 1
        %v5515 = vmax.f32 %v5513, %v5514
        %v5516 = vsel %vm5410, %v5309, -inf
        %v5517 = vrot.slane %v5516, 4
        %v5518 = vmax.f32 %v5516, %v5517
        %v5519 = vrot.slane %v5518, 2
        %v5520 = vmax.f32 %v5518, %v5519
        %v5521 = vrot.slane %v5520, 1
        %v5522 = vmax.f32 %v5520, %v5521
        %v5523 = vsel %vm5410, %v5317, -inf
        %v5524 = vrot.slane %v5523, 4
        %v5525 = vmax.f32 %v5523, %v5524
        %v5526 = vrot.slane %v5525, 2
        %v5527 = vmax.f32 %v5525, %v5526
        %v5528 = vrot.slane %v5527, 1
        %v5529 = vmax.f32 %v5527, %v5528
        %v5530 = vsel %vm5410, %v5325, -inf
        %v5531 = vrot.slane %v5530, 4
        %v5532 = vmax.f32 %v5530, %v5531
        %v5533 = vrot.slane %v5532, 2
        %v5534 = vmax.f32 %v5532, %v5533
        %v5535 = vrot.slane %v5534, 1
        %v5536 = vmax.f32 %v5534, %v5535
        %v5537 = vsel %vm5410, %v5324, -inf
        %v5538 = vrot.slane %v5537, 4
        %v5539 = vmax.f32 %v5537, %v5538
        %v5540 = vrot.slane %v5539, 2
        %v5541 = vmax.f32 %v5539, %v5540
        %v5542 = vrot.slane %v5541, 1
        %v5543 = vmax.f32 %v5541, %v5542
        %v5544 = vsel %vm5410, %v5326, -inf
        %v5545 = vrot.slane %v5544, 4
        %v5546 = vmax.f32 %v5544, %v5545
        %v5547 = vrot.slane %v5546, 2
        %v5548 = vmax.f32 %v5546, %v5547
        %v5549 = vrot.slane %v5548, 1
        %v5550 = vmax.f32 %v5548, %v5549
        %v5551 = vsel %vm5410, %v5334, -inf
        %v5552 = vrot.slane %v5551, 4
        %v5553 = vmax.f32 %v5551, %v5552
        %v5554 = vrot.slane %v5553, 2
        %v5555 = vmax.f32 %v5553, %v5554
        %v5556 = vrot.slane %v5555, 1
        %v5557 = vmax.f32 %v5555, %v5556
        %v5558 = vsel %vm5410, %v5342, -inf
        %v5559 = vrot.slane %v5558, 4
        %v5560 = vmax.f32 %v5558, %v5559
        %v5561 = vrot.slane %v5560, 2
        %v5562 = vmax.f32 %v5560, %v5561
        %v5563 = vrot.slane %v5562, 1
        %v5564 = vmax.f32 %v5562, %v5563
        %v5565 = vsel %vm5410, %v5341, -inf
        %v5566 = vrot.slane %v5565, 4
        %v5567 = vmax.f32 %v5565, %v5566
        %v5568 = vrot.slane %v5567, 2
        %v5569 = vmax.f32 %v5567, %v5568
        %v5570 = vrot.slane %v5569, 1
        %v5571 = vmax.f32 %v5569, %v5570
        %v5572 = vsel %vm5410, %v5343, -inf
        %v5573 = vrot.slane %v5572, 4
        %v5574 = vmax.f32 %v5572, %v5573
        %v5575 = vrot.slane %v5574, 2
        %v5576 = vmax.f32 %v5574, %v5575
        %v5577 = vrot.slane %v5576, 1
        %v5578 = vmax.f32 %v5576, %v5577
        %v5579 = vsel %vm5410, %v5351, -inf
        %v5580 = vrot.slane %v5579, 4
        %v5581 = vmax.f32 %v5579, %v5580
        %v5582 = vrot.slane %v5581, 2
        %v5583 = vmax.f32 %v5581, %v5582
        %v5584 = vrot.slane %v5583, 1
        %v5585 = vmax.f32 %v5583, %v5584
        %v5586 = vsel %vm5410, %v5359, -inf
        %v5587 = vrot.slane %v5586, 4
        %v5588 = vmax.f32 %v5586, %v5587
        %v5589 = vrot.slane %v5588, 2
        %v5590 = vmax.f32 %v5588, %v5589
        %v5591 = vrot.slane %v5590, 1
        %v5592 = vmax.f32 %v5590, %v5591
        %v5593 = vsel %vm5410, %v5358, -inf
        %v5594 = vrot.slane %v5593, 4
        %v5595 = vmax.f32 %v5593, %v5594
        %v5596 = vrot.slane %v5595, 2
        %v5597 = vmax.f32 %v5595, %v5596
        %v5598 = vrot.slane %v5597, 1
        %v5599 = vmax.f32 %v5597, %v5598
        %v5600 = vsel %vm5410, %v5360, -inf
        %v5601 = vrot.slane %v5600, 4
        %v5602 = vmax.f32 %v5600, %v5601
        %v5603 = vrot.slane %v5602, 2
        %v5604 = vmax.f32 %v5602, %v5603
        %v5605 = vrot.slane %v5604, 1
        %v5606 = vmax.f32 %v5604, %v5605
        %v5607 = vsel %vm5410, %v5368, -inf
        %v5608 = vrot.slane %v5607, 4
        %v5609 = vmax.f32 %v5607, %v5608
        %v5610 = vrot.slane %v5609, 2
        %v5611 = vmax.f32 %v5609, %v5610
        %v5612 = vrot.slane %v5611, 1
        %v5613 = vmax.f32 %v5611, %v5612
        %v5614 = vsel %vm5410, %v5376, -inf
        %v5615 = vrot.slane %v5614, 4
        %v5616 = vmax.f32 %v5614, %v5615
        %v5617 = vrot.slane %v5616, 2
        %v5618 = vmax.f32 %v5616, %v5617
        %v5619 = vrot.slane %v5618, 1
        %v5620 = vmax.f32 %v5618, %v5619
        %v5621 = vsel %vm5410, %v5375, -inf
        %v5622 = vrot.slane %v5621, 4
        %v5623 = vmax.f32 %v5621, %v5622
        %v5624 = vrot.slane %v5623, 2
        %v5625 = vmax.f32 %v5623, %v5624
        %v5626 = vrot.slane %v5625, 1
        %v5627 = vmax.f32 %v5625, %v5626
        %v5628 = vsel %vm5410, %v5377, -inf
        %v5629 = vrot.slane %v5628, 4
        %v5630 = vmax.f32 %v5628, %v5629
        %v5631 = vrot.slane %v5630, 2
        %v5632 = vmax.f32 %v5630, %v5631
        %v5633 = vrot.slane %v5632, 1
        %v5634 = vmax.f32 %v5632, %v5633
        %v5635 = vmax.f32 %v5417, %v5445
        %v5636 = vmax.f32 %v5424, %v5452
        %v5637 = vmax.f32 %v5431, %v5459
        %v5638 = vmax.f32 %v5438, %v5466
        %v5639 = vmax.f32 %v5473, %v5501
        %v5640 = vmax.f32 %v5480, %v5508
        %v5641 = vmax.f32 %v5487, %v5515
        %v5642 = vmax.f32 %v5494, %v5522
        %v5643 = vmax.f32 %v5529, %v5557
        %v5644 = vmax.f32 %v5536, %v5564
        %v5645 = vmax.f32 %v5543, %v5571
        %v5646 = vmax.f32 %v5550, %v5578
        %v5647 = vmax.f32 %v5585, %v5613
        %v5648 = vmax.f32 %v5592, %v5620
        %v5649 = vmax.f32 %v5599, %v5627
        %v5650 = vmax.f32 %v5606, %v5634
        %5651 = vst [vmem:[#allocation4] sm:$0x3f] 0.0
        %5652 = vst [vmem:[#allocation4 + $0x8] sm:$0x3f] 0.0
        %5653 = vst [vmem:[#allocation4 + $0x10] sm:$0x3f] 0.0
        %5654 = vst [vmem:[#allocation4 + $0x18] sm:$0x3f] 0.0
        %5655 = vst [vmem:[#allocation4 + $0x20] sm:$0x3f] 0.0
        %5656 = vst [vmem:[#allocation4 + $0x28] sm:$0x3f] 0.0
        %v5673 = vsel %vm4129, %v5636, %v5635
        %v5674 = vsel %vm4131, %v5637, %v5673
        %v5675 = vsel %vm4133, %v5638, %v5674
        %v5676 = vsel %vm4129, %v5640, %v5639
        %v5677 = vsel %vm4131, %v5641, %v5676
        %v5678 = vsel %vm4133, %v5642, %v5677
        %v5679 = vsel %vm4129, %v5644, %v5643
        %v5680 = vsel %vm4131, %v5645, %v5679
        %v5681 = vsel %vm4133, %v5646, %v5680
        %v5682 = vsel %vm4129, %v5648, %v5647
        %v5683 = vsel %vm4131, %v5649, %v5682
        %v5684 = vsel %vm4133, %v5650, %v5683
        %s5689 = scalar_lea.vmem [#allocation4], 8
        %5690 = vst [vmem:[%s5689 + $0x1] sm:$0xf] %v5675
        %5691 = vst [vmem:[%s5689 + $0x9] sm:$0xf] %v5678
        %5692 = vst [vmem:[%s5689 + $0x11] sm:$0xf] %v5681
        %5693 = vst [vmem:[%s5689 + $0x19] sm:$0xf] %v5684
        %v5694 = vld [vmem:[#allocation4] sm:$0xf]
        %v5695 = vld [vmem:[#allocation4 + $0x8] sm:$0xf]
        %v5696 = vld [vmem:[#allocation4 + $0x10] sm:$0xf]
        %v5697 = vld [vmem:[#allocation4 + $0x18] sm:$0xf]
        %v5702 = vcombine.low %v5694, %v5695
        %v5703 = vcombine.low %v5696, %v5697
        %v5706 = vpack.c.bf16 %v5703, %v5702
        %v5707 = vld [vmem:[#allocation4 + $0x1] sm:$0xf]
        %v5708 = vld [vmem:[#allocation4 + $0x9] sm:$0xf]
        %v5709 = vld [vmem:[#allocation4 + $0x11] sm:$0xf]
        %v5710 = vld [vmem:[#allocation4 + $0x19] sm:$0xf]
        %v5715 = vcombine.low %v5707, %v5708
        %v5716 = vcombine.low %v5709, %v5710
        %v5719 = vpack.c.bf16 %v5716, %v5715
        %v5720 = vld [vmem:[#allocation4 + $0x2] sm:$0xf]
        %v5721 = vld [vmem:[#allocation4 + $0xa] sm:$0xf]
        %v5722 = vld [vmem:[#allocation4 + $0x12] sm:$0xf]
        %v5723 = vld [vmem:[#allocation4 + $0x1a] sm:$0xf]
        %v5728 = vcombine.low %v5720, %v5721
        %v5729 = vcombine.low %v5722, %v5723
        %v5732 = vpack.c.bf16 %v5729, %v5728
        %v5733 = vld [vmem:[%s5689] sm:$0xf]
        %v5734 = vld [vmem:[%s5689 + $0x8] sm:$0xf]
        %v5735 = vld [vmem:[%s5689 + $0x10] sm:$0xf]
        %v5736 = vld [vmem:[%s5689 + $0x18] sm:$0xf]
        %v5741 = vcombine.low %v5733, %v5734
        %v5742 = vcombine.low %v5735, %v5736
        %v5745 = vpack.c.bf16 %v5742, %v5741
        %v5746 = vld [vmem:[%s5689 + $0x1] sm:$0xf]
        %v5747 = vld [vmem:[%s5689 + $0x9] sm:$0xf]
        %v5748 = vld [vmem:[%s5689 + $0x11] sm:$0xf]
        %v5749 = vld [vmem:[%s5689 + $0x19] sm:$0xf]
        %v5754 = vcombine.low %v5746, %v5747
        %v5755 = vcombine.low %v5748, %v5749
        %v5758 = vpack.c.bf16 %v5755, %v5754
        %v5759 = vld [vmem:[%s5689 + $0x2] sm:$0xf]
        %v5760 = vld [vmem:[%s5689 + $0xa] sm:$0xf]
        %v5761 = vld [vmem:[%s5689 + $0x12] sm:$0xf]
        %v5762 = vld [vmem:[%s5689 + $0x1a] sm:$0xf]
        %v5767 = vcombine.low %v5759, %v5760
        %v5768 = vcombine.low %v5761, %v5762
        %v5771 = vpack.c.bf16 %v5768, %v5767
        %s5772 = scalar_lea.vmem [#allocation4], 16
        %v5773 = vld [vmem:[%s5772] sm:$0xf]
        %v5774 = vld [vmem:[%s5772 + $0x8] sm:$0xf]
        %v5775 = vld [vmem:[%s5772 + $0x10] sm:$0xf]
        %v5776 = vld [vmem:[%s5772 + $0x18] sm:$0xf]
        %v5781 = vcombine.low %v5773, %v5774
        %v5782 = vcombine.low %v5775, %v5776
        %v5785 = vpack.c.bf16 %v5782, %v5781
        %v5786 = vld [vmem:[%s5772 + $0x1] sm:$0xf]
        %v5787 = vld [vmem:[%s5772 + $0x9] sm:$0xf]
        %v5788 = vld [vmem:[%s5772 + $0x11] sm:$0xf]
        %v5789 = vld [vmem:[%s5772 + $0x19] sm:$0xf]
        %v5794 = vcombine.low %v5786, %v5787
        %v5795 = vcombine.low %v5788, %v5789
        %v5798 = vpack.c.bf16 %v5795, %v5794
        %v5799 = vld [vmem:[%s5772 + $0x2] sm:$0xf]
        %v5800 = vld [vmem:[%s5772 + $0xa] sm:$0xf]
        %v5801 = vld [vmem:[%s5772 + $0x12] sm:$0xf]
        %v5802 = vld [vmem:[%s5772 + $0x1a] sm:$0xf]
        %v5807 = vcombine.low %v5799, %v5800
        %v5808 = vcombine.low %v5801, %v5802
        %v5811 = vpack.c.bf16 %v5808, %v5807
        %v5812 = vld [vmem:[%s5] sm:$0xff]
        %v5813 = vld [vmem:[%s5 + $0x8] sm:$0xff]
        %v5814 = vld [vmem:[%s5 + $0x10] sm:$0xff]
        %v5815 = vld [vmem:[%s5 + $0x18] sm:$0xff]
        %v5816 = vld [vmem:[%s5 + $0x20] sm:$0xff]
        %v5817 = vld [vmem:[%s5 + $0x28] sm:$0xff]
        %v5818 = vld [vmem:[%s5 + $0x30] sm:$0xff]
        %v5819 = vld [vmem:[%s5 + $0x38] sm:$0xff]
        %v5820 = vld [vmem:[%s5 + $0x40] sm:$0xff]
        %v5821 = vld [vmem:[%s5 + $0x48] sm:$0xff]
        %v5822 = vld [vmem:[%s5 + $0x50] sm:$0xff]
        %v5823 = vld [vmem:[%s5 + $0x58] sm:$0xff]
        %v5824 = vld [vmem:[%s5 + $0x60] sm:$0xff]
        %v5825 = vld [vmem:[%s5 + $0x68] sm:$0xff]
        %v5826 = vld [vmem:[%s5 + $0x70] sm:$0xff]
        %v5827 = vld [vmem:[%s5 + $0x78] sm:$0xff]
        %v5828 = vld [vmem:[%s5 + $0x80] sm:$0xff]
        %v5829 = vld [vmem:[%s5 + $0x88] sm:$0xff]
        %v5830 = vld [vmem:[%s5 + $0x90] sm:$0xff]
        %v5831 = vld [vmem:[%s5 + $0x98] sm:$0xff]
        %v5832 = vld [vmem:[%s5 + $0xa0] sm:$0xff]
        %v5833 = vld [vmem:[%s5 + $0xa8] sm:$0xff]
        %v5834 = vld [vmem:[%s5 + $0xb0] sm:$0xff]
        %v5835 = vld [vmem:[%s5 + $0xb8] sm:$0xff]
        %v5836 = vld [vmem:[%s5 + $0xc0] sm:$0xff]
        %v5837 = vld [vmem:[%s5 + $0xc8] sm:$0xff]
        %v5838 = vld [vmem:[%s5 + $0xd0] sm:$0xff]
        %v5839 = vld [vmem:[%s5 + $0xd8] sm:$0xff]
        %v5840 = vld [vmem:[%s5 + $0xe0] sm:$0xff]
        %v5841 = vld [vmem:[%s5 + $0xe8] sm:$0xff]
        %v5842 = vld [vmem:[%s5 + $0xf0] sm:$0xff]
        %v5843 = vld [vmem:[%s5 + $0xf8] sm:$0xff]
        %v5844 = vld [vmem:[%s5 + $0x100] sm:$0xff]
        %v5845 = vld [vmem:[%s5 + $0x108] sm:$0xff]
        %v5846 = vld [vmem:[%s5 + $0x110] sm:$0xff]
        %v5847 = vld [vmem:[%s5 + $0x118] sm:$0xff]
        %v5848 = vld [vmem:[%s5 + $0x120] sm:$0xff]
        %v5849 = vld [vmem:[%s5 + $0x128] sm:$0xff]
        %v5850 = vld [vmem:[%s5 + $0x130] sm:$0xff]
        %v5851 = vld [vmem:[%s5 + $0x138] sm:$0xff]
        %v5852 = vld [vmem:[%s5 + $0x140] sm:$0xff]
        %v5853 = vld [vmem:[%s5 + $0x148] sm:$0xff]
        %v5854 = vld [vmem:[%s5 + $0x150] sm:$0xff]
        %v5855 = vld [vmem:[%s5 + $0x158] sm:$0xff]
        %v5856 = vld [vmem:[%s5 + $0x160] sm:$0xff]
        %v5857 = vld [vmem:[%s5 + $0x168] sm:$0xff]
        %v5858 = vld [vmem:[%s5 + $0x170] sm:$0xff]
        %v5859 = vld [vmem:[%s5 + $0x178] sm:$0xff]
        %v5860 = vld [vmem:[%s5 + $0x180] sm:$0xff]
        %v5861 = vld [vmem:[%s5 + $0x188] sm:$0xff]
        %v5862 = vld [vmem:[%s5 + $0x190] sm:$0xff]
        %v5863 = vld [vmem:[%s5 + $0x198] sm:$0xff]
        %v5864 = vld [vmem:[%s5 + $0x1a0] sm:$0xff]
        %v5865 = vld [vmem:[%s5 + $0x1a8] sm:$0xff]
        %v5866 = vld [vmem:[%s5 + $0x1b0] sm:$0xff]
        %v5867 = vld [vmem:[%s5 + $0x1b8] sm:$0xff]
        %v5868 = vld [vmem:[%s5 + $0x1c0] sm:$0xff]
        %v5869 = vld [vmem:[%s5 + $0x1c8] sm:$0xff]
        %v5870 = vld [vmem:[%s5 + $0x1d0] sm:$0xff]
        %v5871 = vld [vmem:[%s5 + $0x1d8] sm:$0xff]
        %v5872 = vld [vmem:[%s5 + $0x1e0] sm:$0xff]
        %v5873 = vld [vmem:[%s5 + $0x1e8] sm:$0xff]
        %v5874 = vld [vmem:[%s5 + $0x1f0] sm:$0xff]
        %v5875 = vld [vmem:[%s5 + $0x1f8] sm:$0xff]
        %v5876 = vld [vmem:[%s5 + $0x200] sm:$0xff]
        %v5877 = vld [vmem:[%s5 + $0x208] sm:$0xff]
        %v5878 = vld [vmem:[%s5 + $0x210] sm:$0xff]
        %v5879 = vld [vmem:[%s5 + $0x218] sm:$0xff]
        %v5880 = vld [vmem:[%s5 + $0x220] sm:$0xff]
        %v5881 = vld [vmem:[%s5 + $0x228] sm:$0xff]
        %v5882 = vld [vmem:[%s5 + $0x230] sm:$0xff]
        %v5883 = vld [vmem:[%s5 + $0x238] sm:$0xff]
        %v5884 = vld [vmem:[%s5 + $0x240] sm:$0xff]
        %v5885 = vld [vmem:[%s5 + $0x248] sm:$0xff]
        %v5886 = vld [vmem:[%s5 + $0x250] sm:$0xff]
        %v5887 = vld [vmem:[%s5 + $0x258] sm:$0xff]
        %v5888 = vld [vmem:[%s5 + $0x260] sm:$0xff]
        %v5889 = vld [vmem:[%s5 + $0x268] sm:$0xff]
        %v5890 = vld [vmem:[%s5 + $0x270] sm:$0xff]
        %v5891 = vld [vmem:[%s5 + $0x278] sm:$0xff]
        %v5892 = vld [vmem:[%s5 + $0x280] sm:$0xff]
        %v5893 = vld [vmem:[%s5 + $0x288] sm:$0xff]
        %v5894 = vld [vmem:[%s5 + $0x290] sm:$0xff]
        %v5895 = vld [vmem:[%s5 + $0x298] sm:$0xff]
        %v5896 = vld [vmem:[%s5 + $0x2a0] sm:$0xff]
        %v5897 = vld [vmem:[%s5 + $0x2a8] sm:$0xff]
        %v5898 = vld [vmem:[%s5 + $0x2b0] sm:$0xff]
        %v5899 = vld [vmem:[%s5 + $0x2b8] sm:$0xff]
        %v5900 = vld [vmem:[%s5 + $0x2c0] sm:$0xff]
        %v5901 = vld [vmem:[%s5 + $0x2c8] sm:$0xff]
        %v5902 = vld [vmem:[%s5 + $0x2d0] sm:$0xff]
        %v5903 = vld [vmem:[%s5 + $0x2d8] sm:$0xff]
        %v5904 = vld [vmem:[%s5 + $0x2e0] sm:$0xff]
        %v5905 = vld [vmem:[%s5 + $0x2e8] sm:$0xff]
        %v5906 = vld [vmem:[%s5 + $0x2f0] sm:$0xff]
        %v5907 = vld [vmem:[%s5 + $0x2f8] sm:$0xff]
        %v5908 = vld [vmem:[%s5 + $0x300] sm:$0xff]
        %v5909 = vld [vmem:[%s5 + $0x308] sm:$0xff]
        %v5910 = vld [vmem:[%s5 + $0x310] sm:$0xff]
        %v5911 = vld [vmem:[%s5 + $0x318] sm:$0xff]
        %v5912 = vld [vmem:[%s5 + $0x320] sm:$0xff]
        %v5913 = vld [vmem:[%s5 + $0x328] sm:$0xff]
        %v5914 = vld [vmem:[%s5 + $0x330] sm:$0xff]
        %v5915 = vld [vmem:[%s5 + $0x338] sm:$0xff]
        %v5916 = vld [vmem:[%s5 + $0x340] sm:$0xff]
        %v5917 = vld [vmem:[%s5 + $0x348] sm:$0xff]
        %v5918 = vld [vmem:[%s5 + $0x350] sm:$0xff]
        %v5919 = vld [vmem:[%s5 + $0x358] sm:$0xff]
        %v5920 = vld [vmem:[%s5 + $0x360] sm:$0xff]
        %v5921 = vld [vmem:[%s5 + $0x368] sm:$0xff]
        %v5922 = vld [vmem:[%s5 + $0x370] sm:$0xff]
        %v5923 = vld [vmem:[%s5 + $0x378] sm:$0xff]
        %v5924 = vld [vmem:[%s5 + $0x380] sm:$0xff]
        %v5925 = vld [vmem:[%s5 + $0x388] sm:$0xff]
        %v5926 = vld [vmem:[%s5 + $0x390] sm:$0xff]
        %v5927 = vld [vmem:[%s5 + $0x398] sm:$0xff]
        %v5928 = vld [vmem:[%s5 + $0x3a0] sm:$0xff]
        %v5929 = vld [vmem:[%s5 + $0x3a8] sm:$0xff]
        %v5930 = vld [vmem:[%s5 + $0x3b0] sm:$0xff]
        %v5931 = vld [vmem:[%s5 + $0x3b8] sm:$0xff]
        %v5932 = vld [vmem:[%s5 + $0x3c0] sm:$0xff]
        %v5933 = vld [vmem:[%s5 + $0x3c8] sm:$0xff]
        %v5934 = vld [vmem:[%s5 + $0x3d0] sm:$0xff]
        %v5935 = vld [vmem:[%s5 + $0x3d8] sm:$0xff]
        %v5936 = vld [vmem:[%s5 + $0x3e0] sm:$0xff]
        %v5937 = vld [vmem:[%s5 + $0x3e8] sm:$0xff]
        %v5938 = vld [vmem:[%s5 + $0x3f0] sm:$0xff]
        %v5939 = vld [vmem:[%s5 + $0x3f8] sm:$0xff]
        %v5940 = vld [vmem:[%s5 + $0x400] sm:$0xff]
        %v5941 = vld [vmem:[%s5 + $0x408] sm:$0xff]
        %v5942 = vld [vmem:[%s5 + $0x410] sm:$0xff]
        %v5943 = vld [vmem:[%s5 + $0x418] sm:$0xff]
        %v5944 = vld [vmem:[%s5 + $0x420] sm:$0xff]
        %v5945 = vld [vmem:[%s5 + $0x428] sm:$0xff]
        %v5946 = vld [vmem:[%s5 + $0x430] sm:$0xff]
        %v5947 = vld [vmem:[%s5 + $0x438] sm:$0xff]
        %v5948 = vld [vmem:[%s5 + $0x440] sm:$0xff]
        %v5949 = vld [vmem:[%s5 + $0x448] sm:$0xff]
        %v5950 = vld [vmem:[%s5 + $0x450] sm:$0xff]
        %v5951 = vld [vmem:[%s5 + $0x458] sm:$0xff]
        %v5952 = vld [vmem:[%s5 + $0x460] sm:$0xff]
        %v5953 = vld [vmem:[%s5 + $0x468] sm:$0xff]
        %v5954 = vld [vmem:[%s5 + $0x470] sm:$0xff]
        %v5955 = vld [vmem:[%s5 + $0x478] sm:$0xff]
        %v5956 = vld [vmem:[%s6] sm:$0x3]
        %v5958 = vlaneseq
        %v5959 = vshrl.u32 %v5958, 7
        %v5960 = vsub.s32 0, %v5959
        %v5961 = vrot.slane %v5956, %v5960
        %v5962 = vlaneseq
        %v5963 = vshrl.u32 %v5962, 7
        %v5964 = vsub.s32 1, %v5963
        %v5965 = vrot.slane %v5956, %v5964
        %v6112 = vunpack.c.l.b16 %v5812
        %v6113 = vunpack.c.h.b16 %v5812
        %v6114 = vunpack.c.l.b16 %v5813
        %v6115 = vunpack.c.h.b16 %v5813
        %v6116 = vunpack.c.l.b16 %v5814
        %v6117 = vunpack.c.h.b16 %v5814
        %v6118 = vunpack.c.l.b16 %v5815
        %v6119 = vunpack.c.h.b16 %v5815
        %v6120 = vunpack.c.l.b16 %v5816
        %v6121 = vunpack.c.h.b16 %v5816
        %v6122 = vunpack.c.l.b16 %v5817
        %v6123 = vunpack.c.h.b16 %v5817
        %v6124 = vunpack.c.l.b16 %v5818
        %v6125 = vunpack.c.h.b16 %v5818
        %v6126 = vunpack.c.l.b16 %v5819
        %v6127 = vunpack.c.h.b16 %v5819
        %v6128 = vunpack.c.l.b16 %v5820
        %v6129 = vunpack.c.h.b16 %v5820
        %v6130 = vunpack.c.l.b16 %v5821
        %v6131 = vunpack.c.h.b16 %v5821
        %v6132 = vunpack.c.l.b16 %v5822
        %v6133 = vunpack.c.h.b16 %v5822
        %v6134 = vunpack.c.l.b16 %v5823
        %v6135 = vunpack.c.h.b16 %v5823
        %v6136 = vunpack.c.l.b16 %v5824
        %v6137 = vunpack.c.h.b16 %v5824
        %v6138 = vunpack.c.l.b16 %v5825
        %v6139 = vunpack.c.h.b16 %v5825
        %v6140 = vunpack.c.l.b16 %v5826
        %v6141 = vunpack.c.h.b16 %v5826
        %v6142 = vunpack.c.l.b16 %v5827
        %v6143 = vunpack.c.h.b16 %v5827
        %v6144 = vunpack.c.l.b16 %v5828
        %v6145 = vunpack.c.h.b16 %v5828
        %v6146 = vunpack.c.l.b16 %v5829
        %v6147 = vunpack.c.h.b16 %v5829
        %v6148 = vunpack.c.l.b16 %v5830
        %v6149 = vunpack.c.h.b16 %v5830
        %v6150 = vunpack.c.l.b16 %v5831
        %v6151 = vunpack.c.h.b16 %v5831
        %v6152 = vunpack.c.l.b16 %v5832
        %v6153 = vunpack.c.h.b16 %v5832
        %v6154 = vunpack.c.l.b16 %v5833
        %v6155 = vunpack.c.h.b16 %v5833
        %v6156 = vunpack.c.l.b16 %v5834
        %v6157 = vunpack.c.h.b16 %v5834
        %v6158 = vunpack.c.l.b16 %v5835
        %v6159 = vunpack.c.h.b16 %v5835
        %v6160 = vunpack.c.l.b16 %v5836
        %v6161 = vunpack.c.h.b16 %v5836
        %v6162 = vunpack.c.l.b16 %v5837
        %v6163 = vunpack.c.h.b16 %v5837
        %v6164 = vunpack.c.l.b16 %v5838
        %v6165 = vunpack.c.h.b16 %v5838
        %v6166 = vunpack.c.l.b16 %v5839
        %v6167 = vunpack.c.h.b16 %v5839
        %v6168 = vunpack.c.l.b16 %v5840
        %v6169 = vunpack.c.h.b16 %v5840
        %v6170 = vunpack.c.l.b16 %v5841
        %v6171 = vunpack.c.h.b16 %v5841
        %v6172 = vunpack.c.l.b16 %v5842
        %v6173 = vunpack.c.h.b16 %v5842
        %v6174 = vunpack.c.l.b16 %v5843
        %v6175 = vunpack.c.h.b16 %v5843
        %v6176 = vunpack.c.l.b16 %v5844
        %v6177 = vunpack.c.h.b16 %v5844
        %v6178 = vunpack.c.l.b16 %v5845
        %v6179 = vunpack.c.h.b16 %v5845
        %v6180 = vunpack.c.l.b16 %v5846
        %v6181 = vunpack.c.h.b16 %v5846
        %v6182 = vunpack.c.l.b16 %v5847
        %v6183 = vunpack.c.h.b16 %v5847
        %v6184 = vunpack.c.l.b16 %v5848
        %v6185 = vunpack.c.h.b16 %v5848
        %v6186 = vunpack.c.l.b16 %v5849
        %v6187 = vunpack.c.h.b16 %v5849
        %v6188 = vunpack.c.l.b16 %v5850
        %v6189 = vunpack.c.h.b16 %v5850
        %v6190 = vunpack.c.l.b16 %v5851
        %v6191 = vunpack.c.h.b16 %v5851
        %v6192 = vunpack.c.l.b16 %v5852
        %v6193 = vunpack.c.h.b16 %v5852
        %v6194 = vunpack.c.l.b16 %v5853
        %v6195 = vunpack.c.h.b16 %v5853
        %v6196 = vunpack.c.l.b16 %v5854
        %v6197 = vunpack.c.h.b16 %v5854
        %v6198 = vunpack.c.l.b16 %v5855
        %v6199 = vunpack.c.h.b16 %v5855
        %v6200 = vunpack.c.l.b16 %v5856
        %v6201 = vunpack.c.h.b16 %v5856
        %v6202 = vunpack.c.l.b16 %v5857
        %v6203 = vunpack.c.h.b16 %v5857
        %v6204 = vunpack.c.l.b16 %v5858
        %v6205 = vunpack.c.h.b16 %v5858
        %v6206 = vunpack.c.l.b16 %v5859
        %v6207 = vunpack.c.h.b16 %v5859
        %v6208 = vunpack.c.l.b16 %v5860
        %v6209 = vunpack.c.h.b16 %v5860
        %v6210 = vunpack.c.l.b16 %v5861
        %v6211 = vunpack.c.h.b16 %v5861
        %v6212 = vunpack.c.l.b16 %v5862
        %v6213 = vunpack.c.h.b16 %v5862
        %v6214 = vunpack.c.l.b16 %v5863
        %v6215 = vunpack.c.h.b16 %v5863
        %v6216 = vunpack.c.l.b16 %v5864
        %v6217 = vunpack.c.h.b16 %v5864
        %v6218 = vunpack.c.l.b16 %v5865
        %v6219 = vunpack.c.h.b16 %v5865
        %v6220 = vunpack.c.l.b16 %v5866
        %v6221 = vunpack.c.h.b16 %v5866
        %v6222 = vunpack.c.l.b16 %v5867
        %v6223 = vunpack.c.h.b16 %v5867
        %v6224 = vunpack.c.l.b16 %v5868
        %v6225 = vunpack.c.h.b16 %v5868
        %v6226 = vunpack.c.l.b16 %v5869
        %v6227 = vunpack.c.h.b16 %v5869
        %v6228 = vunpack.c.l.b16 %v5870
        %v6229 = vunpack.c.h.b16 %v5870
        %v6230 = vunpack.c.l.b16 %v5871
        %v6231 = vunpack.c.h.b16 %v5871
        %v6232 = vunpack.c.l.b16 %v5872
        %v6233 = vunpack.c.h.b16 %v5872
        %v6234 = vunpack.c.l.b16 %v5873
        %v6235 = vunpack.c.h.b16 %v5873
        %v6236 = vunpack.c.l.b16 %v5874
        %v6237 = vunpack.c.h.b16 %v5874
        %v6238 = vunpack.c.l.b16 %v5875
        %v6239 = vunpack.c.h.b16 %v5875
        %v6240 = vunpack.c.l.b16 %v5876
        %v6241 = vunpack.c.h.b16 %v5876
        %v6242 = vunpack.c.l.b16 %v5877
        %v6243 = vunpack.c.h.b16 %v5877
        %v6244 = vunpack.c.l.b16 %v5878
        %v6245 = vunpack.c.h.b16 %v5878
        %v6246 = vunpack.c.l.b16 %v5879
        %v6247 = vunpack.c.h.b16 %v5879
        %v6248 = vunpack.c.l.b16 %v5880
        %v6249 = vunpack.c.h.b16 %v5880
        %v6250 = vunpack.c.l.b16 %v5881
        %v6251 = vunpack.c.h.b16 %v5881
        %v6252 = vunpack.c.l.b16 %v5882
        %v6253 = vunpack.c.h.b16 %v5882
        %v6254 = vunpack.c.l.b16 %v5883
        %v6255 = vunpack.c.h.b16 %v5883
        %v6256 = vunpack.c.l.b16 %v5884
        %v6257 = vunpack.c.h.b16 %v5884
        %v6258 = vunpack.c.l.b16 %v5885
        %v6259 = vunpack.c.h.b16 %v5885
        %v6260 = vunpack.c.l.b16 %v5886
        %v6261 = vunpack.c.h.b16 %v5886
        %v6262 = vunpack.c.l.b16 %v5887
        %v6263 = vunpack.c.h.b16 %v5887
        %v6264 = vunpack.c.l.b16 %v5888
        %v6265 = vunpack.c.h.b16 %v5888
        %v6266 = vunpack.c.l.b16 %v5889
        %v6267 = vunpack.c.h.b16 %v5889
        %v6268 = vunpack.c.l.b16 %v5890
        %v6269 = vunpack.c.h.b16 %v5890
        %v6270 = vunpack.c.l.b16 %v5891
        %v6271 = vunpack.c.h.b16 %v5891
        %v6272 = vunpack.c.l.b16 %v5892
        %v6273 = vunpack.c.h.b16 %v5892
        %v6274 = vunpack.c.l.b16 %v5893
        %v6275 = vunpack.c.h.b16 %v5893
        %v6276 = vunpack.c.l.b16 %v5894
        %v6277 = vunpack.c.h.b16 %v5894
        %v6278 = vunpack.c.l.b16 %v5895
        %v6279 = vunpack.c.h.b16 %v5895
        %v6280 = vunpack.c.l.b16 %v5896
        %v6281 = vunpack.c.h.b16 %v5896
        %v6282 = vunpack.c.l.b16 %v5897
        %v6283 = vunpack.c.h.b16 %v5897
        %v6284 = vunpack.c.l.b16 %v5898
        %v6285 = vunpack.c.h.b16 %v5898
        %v6286 = vunpack.c.l.b16 %v5899
        %v6287 = vunpack.c.h.b16 %v5899
        %v6288 = vunpack.c.l.b16 %v5900
        %v6289 = vunpack.c.h.b16 %v5900
        %v6290 = vunpack.c.l.b16 %v5901
        %v6291 = vunpack.c.h.b16 %v5901
        %v6292 = vunpack.c.l.b16 %v5902
        %v6293 = vunpack.c.h.b16 %v5902
        %v6294 = vunpack.c.l.b16 %v5903
        %v6295 = vunpack.c.h.b16 %v5903
        %v6296 = vunpack.c.l.b16 %v5904
        %v6297 = vunpack.c.h.b16 %v5904
        %v6298 = vunpack.c.l.b16 %v5905
        %v6299 = vunpack.c.h.b16 %v5905
        %v6300 = vunpack.c.l.b16 %v5906
        %v6301 = vunpack.c.h.b16 %v5906
        %v6302 = vunpack.c.l.b16 %v5907
        %v6303 = vunpack.c.h.b16 %v5907
        %v6304 = vunpack.c.l.b16 %v5908
        %v6305 = vunpack.c.h.b16 %v5908
        %v6306 = vunpack.c.l.b16 %v5909
        %v6307 = vunpack.c.h.b16 %v5909
        %v6308 = vunpack.c.l.b16 %v5910
        %v6309 = vunpack.c.h.b16 %v5910
        %v6310 = vunpack.c.l.b16 %v5911
        %v6311 = vunpack.c.h.b16 %v5911
        %v6312 = vunpack.c.l.b16 %v5912
        %v6313 = vunpack.c.h.b16 %v5912
        %v6314 = vunpack.c.l.b16 %v5913
        %v6315 = vunpack.c.h.b16 %v5913
        %v6316 = vunpack.c.l.b16 %v5914
        %v6317 = vunpack.c.h.b16 %v5914
        %v6318 = vunpack.c.l.b16 %v5915
        %v6319 = vunpack.c.h.b16 %v5915
        %v6320 = vunpack.c.l.b16 %v5916
        %v6321 = vunpack.c.h.b16 %v5916
        %v6322 = vunpack.c.l.b16 %v5917
        %v6323 = vunpack.c.h.b16 %v5917
        %v6324 = vunpack.c.l.b16 %v5918
        %v6325 = vunpack.c.h.b16 %v5918
        %v6326 = vunpack.c.l.b16 %v5919
        %v6327 = vunpack.c.h.b16 %v5919
        %v6328 = vunpack.c.l.b16 %v5920
        %v6329 = vunpack.c.h.b16 %v5920
        %v6330 = vunpack.c.l.b16 %v5921
        %v6331 = vunpack.c.h.b16 %v5921
        %v6332 = vunpack.c.l.b16 %v5922
        %v6333 = vunpack.c.h.b16 %v5922
        %v6334 = vunpack.c.l.b16 %v5923
        %v6335 = vunpack.c.h.b16 %v5923
        %v6336 = vunpack.c.l.b16 %v5924
        %v6337 = vunpack.c.h.b16 %v5924
        %v6338 = vunpack.c.l.b16 %v5925
        %v6339 = vunpack.c.h.b16 %v5925
        %v6340 = vunpack.c.l.b16 %v5926
        %v6341 = vunpack.c.h.b16 %v5926
        %v6342 = vunpack.c.l.b16 %v5927
        %v6343 = vunpack.c.h.b16 %v5927
        %v6344 = vunpack.c.l.b16 %v5928
        %v6345 = vunpack.c.h.b16 %v5928
        %v6346 = vunpack.c.l.b16 %v5929
        %v6347 = vunpack.c.h.b16 %v5929
        %v6348 = vunpack.c.l.b16 %v5930
        %v6349 = vunpack.c.h.b16 %v5930
        %v6350 = vunpack.c.l.b16 %v5931
        %v6351 = vunpack.c.h.b16 %v5931
        %v6352 = vunpack.c.l.b16 %v5932
        %v6353 = vunpack.c.h.b16 %v5932
        %v6354 = vunpack.c.l.b16 %v5933
        %v6355 = vunpack.c.h.b16 %v5933
        %v6356 = vunpack.c.l.b16 %v5934
        %v6357 = vunpack.c.h.b16 %v5934
        %v6358 = vunpack.c.l.b16 %v5935
        %v6359 = vunpack.c.h.b16 %v5935
        %v6360 = vunpack.c.l.b16 %v5936
        %v6361 = vunpack.c.h.b16 %v5936
        %v6362 = vunpack.c.l.b16 %v5937
        %v6363 = vunpack.c.h.b16 %v5937
        %v6364 = vunpack.c.l.b16 %v5938
        %v6365 = vunpack.c.h.b16 %v5938
        %v6366 = vunpack.c.l.b16 %v5939
        %v6367 = vunpack.c.h.b16 %v5939
        %v6368 = vunpack.c.l.b16 %v5940
        %v6369 = vunpack.c.h.b16 %v5940
        %v6370 = vunpack.c.l.b16 %v5941
        %v6371 = vunpack.c.h.b16 %v5941
        %v6372 = vunpack.c.l.b16 %v5942
        %v6373 = vunpack.c.h.b16 %v5942
        %v6374 = vunpack.c.l.b16 %v5943
        %v6375 = vunpack.c.h.b16 %v5943
        %v6376 = vunpack.c.l.b16 %v5944
        %v6377 = vunpack.c.h.b16 %v5944
        %v6378 = vunpack.c.l.b16 %v5945
        %v6379 = vunpack.c.h.b16 %v5945
        %v6380 = vunpack.c.l.b16 %v5946
        %v6381 = vunpack.c.h.b16 %v5946
        %v6382 = vunpack.c.l.b16 %v5947
        %v6383 = vunpack.c.h.b16 %v5947
        %v6384 = vunpack.c.l.b16 %v5948
        %v6385 = vunpack.c.h.b16 %v5948
        %v6386 = vunpack.c.l.b16 %v5949
        %v6387 = vunpack.c.h.b16 %v5949
        %v6388 = vunpack.c.l.b16 %v5950
        %v6389 = vunpack.c.h.b16 %v5950
        %v6390 = vunpack.c.l.b16 %v5951
        %v6391 = vunpack.c.h.b16 %v5951
        %v6392 = vunpack.c.l.b16 %v5952
        %v6393 = vunpack.c.h.b16 %v5952
        %v6394 = vunpack.c.l.b16 %v5953
        %v6395 = vunpack.c.h.b16 %v5953
        %v6396 = vunpack.c.l.b16 %v5954
        %v6397 = vunpack.c.h.b16 %v5954
        %v6398 = vunpack.c.l.b16 %v5955
        %v6399 = vunpack.c.h.b16 %v5955
        %v6400 = vpack.c.b16 %v6114, %v6112
        %v6401 = vpack.c.b16 %v6115, %v6113
        %v6402 = vpack.c.b16 %v6118, %v6116
        %v6403 = vpack.c.b16 %v6119, %v6117
        %v6404 = vpack.c.b16 %v6122, %v6120
        %v6405 = vpack.c.b16 %v6123, %v6121
        %v6406 = vpack.c.b16 %v6126, %v6124
        %v6407 = vpack.c.b16 %v6127, %v6125
        %v6408 = vpack.c.b16 %v6130, %v6128
        %v6409 = vpack.c.b16 %v6131, %v6129
        %v6410 = vpack.c.b16 %v6134, %v6132
        %v6411 = vpack.c.b16 %v6135, %v6133
        %v6412 = vpack.c.b16 %v6138, %v6136
        %v6413 = vpack.c.b16 %v6139, %v6137
        %v6414 = vpack.c.b16 %v6142, %v6140
        %v6415 = vpack.c.b16 %v6143, %v6141
        %v6416 = vpack.c.b16 %v6146, %v6144
        %v6417 = vpack.c.b16 %v6147, %v6145
        %v6418 = vpack.c.b16 %v6150, %v6148
        %v6419 = vpack.c.b16 %v6151, %v6149
        %v6420 = vpack.c.b16 %v6154, %v6152
        %v6421 = vpack.c.b16 %v6155, %v6153
        %v6422 = vpack.c.b16 %v6158, %v6156
        %v6423 = vpack.c.b16 %v6159, %v6157
        %v6424 = vpack.c.b16 %v6162, %v6160
        %v6425 = vpack.c.b16 %v6163, %v6161
        %v6426 = vpack.c.b16 %v6166, %v6164
        %v6427 = vpack.c.b16 %v6167, %v6165
        %v6428 = vpack.c.b16 %v6170, %v6168
        %v6429 = vpack.c.b16 %v6171, %v6169
        %v6430 = vpack.c.b16 %v6174, %v6172
        %v6431 = vpack.c.b16 %v6175, %v6173
        %v6432 = vpack.c.b16 %v6178, %v6176
        %v6433 = vpack.c.b16 %v6179, %v6177
        %v6434 = vpack.c.b16 %v6182, %v6180
        %v6435 = vpack.c.b16 %v6183, %v6181
        %v6436 = vpack.c.b16 %v6186, %v6184
        %v6437 = vpack.c.b16 %v6187, %v6185
        %v6438 = vpack.c.b16 %v6190, %v6188
        %v6439 = vpack.c.b16 %v6191, %v6189
        %v6440 = vpack.c.b16 %v6194, %v6192
        %v6441 = vpack.c.b16 %v6195, %v6193
        %v6442 = vpack.c.b16 %v6198, %v6196
        %v6443 = vpack.c.b16 %v6199, %v6197
        %v6444 = vpack.c.b16 %v6202, %v6200
        %v6445 = vpack.c.b16 %v6203, %v6201
        %v6446 = vpack.c.b16 %v6206, %v6204
        %v6447 = vpack.c.b16 %v6207, %v6205
        %v6448 = vpack.c.b16 %v6210, %v6208
        %v6449 = vpack.c.b16 %v6211, %v6209
        %v6450 = vpack.c.b16 %v6214, %v6212
        %v6451 = vpack.c.b16 %v6215, %v6213
        %v6452 = vpack.c.b16 %v6218, %v6216
        %v6453 = vpack.c.b16 %v6219, %v6217
        %v6454 = vpack.c.b16 %v6222, %v6220
        %v6455 = vpack.c.b16 %v6223, %v6221
        %v6456 = vpack.c.b16 %v6226, %v6224
        %v6457 = vpack.c.b16 %v6227, %v6225
        %v6458 = vpack.c.b16 %v6230, %v6228
        %v6459 = vpack.c.b16 %v6231, %v6229
        %v6460 = vpack.c.b16 %v6234, %v6232
        %v6461 = vpack.c.b16 %v6235, %v6233
        %v6462 = vpack.c.b16 %v6238, %v6236
        %v6463 = vpack.c.b16 %v6239, %v6237
        %v6464 = vpack.c.b16 %v6242, %v6240
        %v6465 = vpack.c.b16 %v6243, %v6241
        %v6466 = vpack.c.b16 %v6246, %v6244
        %v6467 = vpack.c.b16 %v6247, %v6245
        %v6468 = vpack.c.b16 %v6250, %v6248
        %v6469 = vpack.c.b16 %v6251, %v6249
        %v6470 = vpack.c.b16 %v6254, %v6252
        %v6471 = vpack.c.b16 %v6255, %v6253
        %v6472 = vpack.c.b16 %v6258, %v6256
        %v6473 = vpack.c.b16 %v6259, %v6257
        %v6474 = vpack.c.b16 %v6262, %v6260
        %v6475 = vpack.c.b16 %v6263, %v6261
        %v6476 = vpack.c.b16 %v6266, %v6264
        %v6477 = vpack.c.b16 %v6267, %v6265
        %v6478 = vpack.c.b16 %v6270, %v6268
        %v6479 = vpack.c.b16 %v6271, %v6269
        %v6480 = vpack.c.b16 %v6274, %v6272
        %v6481 = vpack.c.b16 %v6275, %v6273
        %v6482 = vpack.c.b16 %v6278, %v6276
        %v6483 = vpack.c.b16 %v6279, %v6277
        %v6484 = vpack.c.b16 %v6282, %v6280
        %v6485 = vpack.c.b16 %v6283, %v6281
        %v6486 = vpack.c.b16 %v6286, %v6284
        %v6487 = vpack.c.b16 %v6287, %v6285
        %v6488 = vpack.c.b16 %v6290, %v6288
        %v6489 = vpack.c.b16 %v6291, %v6289
        %v6490 = vpack.c.b16 %v6294, %v6292
        %v6491 = vpack.c.b16 %v6295, %v6293
        %v6492 = vpack.c.b16 %v6298, %v6296
        %v6493 = vpack.c.b16 %v6299, %v6297
        %v6494 = vpack.c.b16 %v6302, %v6300
        %v6495 = vpack.c.b16 %v6303, %v6301
        %v6496 = vpack.c.b16 %v6306, %v6304
        %v6497 = vpack.c.b16 %v6307, %v6305
        %v6498 = vpack.c.b16 %v6310, %v6308
        %v6499 = vpack.c.b16 %v6311, %v6309
        %v6500 = vpack.c.b16 %v6314, %v6312
        %v6501 = vpack.c.b16 %v6315, %v6313
        %v6502 = vpack.c.b16 %v6318, %v6316
        %v6503 = vpack.c.b16 %v6319, %v6317
        %v6504 = vpack.c.b16 %v6322, %v6320
        %v6505 = vpack.c.b16 %v6323, %v6321
        %v6506 = vpack.c.b16 %v6326, %v6324
        %v6507 = vpack.c.b16 %v6327, %v6325
        %v6508 = vpack.c.b16 %v6330, %v6328
        %v6509 = vpack.c.b16 %v6331, %v6329
        %v6510 = vpack.c.b16 %v6334, %v6332
        %v6511 = vpack.c.b16 %v6335, %v6333
        %v6512 = vpack.c.b16 %v6338, %v6336
        %v6513 = vpack.c.b16 %v6339, %v6337
        %v6514 = vpack.c.b16 %v6342, %v6340
        %v6515 = vpack.c.b16 %v6343, %v6341
        %v6516 = vpack.c.b16 %v6346, %v6344
        %v6517 = vpack.c.b16 %v6347, %v6345
        %v6518 = vpack.c.b16 %v6350, %v6348
        %v6519 = vpack.c.b16 %v6351, %v6349
        %v6520 = vpack.c.b16 %v6354, %v6352
        %v6521 = vpack.c.b16 %v6355, %v6353
        %v6522 = vpack.c.b16 %v6358, %v6356
        %v6523 = vpack.c.b16 %v6359, %v6357
        %v6524 = vpack.c.b16 %v6362, %v6360
        %v6525 = vpack.c.b16 %v6363, %v6361
        %v6526 = vpack.c.b16 %v6366, %v6364
        %v6527 = vpack.c.b16 %v6367, %v6365
        %v6528 = vpack.c.b16 %v6370, %v6368
        %v6529 = vpack.c.b16 %v6371, %v6369
        %v6530 = vpack.c.b16 %v6374, %v6372
        %v6531 = vpack.c.b16 %v6375, %v6373
        %v6532 = vpack.c.b16 %v6378, %v6376
        %v6533 = vpack.c.b16 %v6379, %v6377
        %v6534 = vpack.c.b16 %v6382, %v6380
        %v6535 = vpack.c.b16 %v6383, %v6381
        %v6536 = vpack.c.b16 %v6386, %v6384
        %v6537 = vpack.c.b16 %v6387, %v6385
        %v6538 = vpack.c.b16 %v6390, %v6388
        %v6539 = vpack.c.b16 %v6391, %v6389
        %v6540 = vpack.c.b16 %v6394, %v6392
        %v6541 = vpack.c.b16 %v6395, %v6393
        %v6542 = vpack.c.b16 %v6398, %v6396
        %v6543 = vpack.c.b16 %v6399, %v6397
        %6688 = vmatprep.subr.bf16.mxu0 %v6401
        %6689 = vmatpush1.bf16.msra.mxu0 %v6400
        %6690 = vmatprep.subr.bf16.mxu0 %v6403
        %6691 = vmatpush1.bf16.msra.mxu0 %v6402
        %6692 = vmatprep.subr.bf16.mxu0 %v6405
        %6693 = vmatpush1.bf16.msra.mxu0 %v6404
        %6694 = vmatprep.subr.bf16.mxu0 %v6407
        %6695 = vmatpush1.bf16.msra.mxu0 %v6406
        %6696 = vmatprep.subr.bf16.mxu0 %v6409
        %6697 = vmatpush1.bf16.msra.mxu0 %v6408
        %6698 = vmatprep.subr.bf16.mxu0 %v6411
        %6699 = vmatpush1.bf16.msra.mxu0 %v6410
        %6700 = vmatprep.subr.bf16.mxu0 %v6413
        %6701 = vmatpush1.bf16.msra.mxu0 %v6412
        %6702 = vmatprep.subr.bf16.mxu0 %v6415
        %6703 = vmatpush1.bf16.msra.mxu0 %v6414
        %6704 = vmatprep.subr.bf16.mxu0 %v6417
        %6705 = vmatpush1.bf16.msra.mxu0 %v6416
        %6706 = vmatprep.subr.bf16.mxu0 %v6419
        %6707 = vmatpush1.bf16.msra.mxu0 %v6418
        %6708 = vmatprep.subr.bf16.mxu0 %v6421
        %6709 = vmatpush1.bf16.msra.mxu0 %v6420
        %6710 = vmatprep.subr.bf16.mxu0 %v6423
        %6711 = vmatpush1.bf16.msra.mxu0 %v6422
        %6712 = vmatprep.subr.bf16.mxu0 %v6425
        %6713 = vmatpush1.bf16.msra.mxu0 %v6424
        %6714 = vmatprep.subr.bf16.mxu0 %v6427
        %6715 = vmatpush1.bf16.msra.mxu0 %v6426
        %6716 = vmatprep.subr.bf16.mxu0 %v6429
        %6717 = vmatpush1.bf16.msra.mxu0 %v6428
        %6718 = vmatprep.subr.bf16.mxu0 %v6431
        %6719 = vmatpush1.bf16.msra.mxu0 %v6430
        %6720 = vmatprep.mubr.bf16.mxu0 %v5719
        %6721 = vmatmul.mubr.bf16.gmra.mrb[0].mxu0 %v5706
        %v6722 = vpop.f32.mrb[0].mxu0
        %v6723 = vadd.f32 %v5961, %v6722
        %v6724 = vpop.f32.mrb[0].mxu0
        %v6725 = vadd.f32 %v5965, %v6724
        %v6726 = vpop.f32.mrb[0].mxu0
        %v6727 = vadd.f32 %v5961, %v6726
        %v6728 = vpop.f32.mrb[0].mxu0
        %v6729 = vadd.f32 %v5965, %v6728
        %6730 = vdwg.mxu0
        %6731 = vmatprep.subr.bf16.mxu0 %v6433
        %6732 = vmatpush1.bf16.msra.mxu0 %v6432
        %6733 = vmatprep.subr.bf16.mxu0 %v6435
        %6734 = vmatpush1.bf16.msra.mxu0 %v6434
        %6735 = vmatprep.subr.bf16.mxu0 %v6437
        %6736 = vmatpush1.bf16.msra.mxu0 %v6436
        %6737 = vmatprep.subr.bf16.mxu0 %v6439
        %6738 = vmatpush1.bf16.msra.mxu0 %v6438
        %6739 = vmatprep.subr.bf16.mxu0 %v6441
        %6740 = vmatpush1.bf16.msra.mxu0 %v6440
        %6741 = vmatprep.subr.bf16.mxu0 %v6443
        %6742 = vmatpush1.bf16.msra.mxu0 %v6442
        %6743 = vmatprep.subr.bf16.mxu0 %v6445
        %6744 = vmatpush1.bf16.msra.mxu0 %v6444
        %6745 = vmatprep.subr.bf16.mxu0 %v6447
        %6746 = vmatpush1.bf16.msra.mxu0 %v6446
        %6747 = vmatprep.subr.bf16.mxu0 %v6449
        %6748 = vmatpush1.bf16.msra.mxu0 %v6448
        %6749 = vmatprep.subr.bf16.mxu0 %v6451
        %6750 = vmatpush1.bf16.msra.mxu0 %v6450
        %6751 = vmatprep.subr.bf16.mxu0 %v6453
        %6752 = vmatpush1.bf16.msra.mxu0 %v6452
        %6753 = vmatprep.subr.bf16.mxu0 %v6455
        %6754 = vmatpush1.bf16.msra.mxu0 %v6454
        %6755 = vmatprep.subr.bf16.mxu0 %v6457
        %6756 = vmatpush1.bf16.msra.mxu0 %v6456
        %6757 = vmatprep.subr.bf16.mxu0 %v6459
        %6758 = vmatpush1.bf16.msra.mxu0 %v6458
        %6759 = vmatprep.subr.bf16.mxu0 %v6461
        %6760 = vmatpush1.bf16.msra.mxu0 %v6460
        %6761 = vmatprep.subr.bf16.mxu0 %v6463
        %6762 = vmatpush1.bf16.msra.mxu0 %v6462
        %6763 = vmatprep.mubr.bf16.mxu0 %v5745
        %6764 = vmatmul.mubr.bf16.gmra.mrb[0].mxu0 %v5732
        %v6765 = vpop.f32.mrb[0].mxu0
        %v6766 = vadd.f32 %v6723, %v6765
        %v6767 = vpop.f32.mrb[0].mxu0
        %v6768 = vadd.f32 %v6725, %v6767
        %v6769 = vpop.f32.mrb[0].mxu0
        %v6770 = vadd.f32 %v6727, %v6769
        %v6771 = vpop.f32.mrb[0].mxu0
        %v6772 = vadd.f32 %v6729, %v6771
        %6773 = vdwg.mxu0
        %6774 = vmatprep.subr.bf16.mxu0 %v6465
        %6775 = vmatpush1.bf16.msra.mxu0 %v6464
        %6776 = vmatprep.subr.bf16.mxu0 %v6467
        %6777 = vmatpush1.bf16.msra.mxu0 %v6466
        %6778 = vmatprep.subr.bf16.mxu0 %v6469
        %6779 = vmatpush1.bf16.msra.mxu0 %v6468
        %6780 = vmatprep.subr.bf16.mxu0 %v6471
        %6781 = vmatpush1.bf16.msra.mxu0 %v6470
        %6782 = vmatprep.subr.bf16.mxu0 %v6473
        %6783 = vmatpush1.bf16.msra.mxu0 %v6472
        %6784 = vmatprep.subr.bf16.mxu0 %v6475
        %6785 = vmatpush1.bf16.msra.mxu0 %v6474
        %6786 = vmatprep.subr.bf16.mxu0 %v6477
        %6787 = vmatpush1.bf16.msra.mxu0 %v6476
        %6788 = vmatprep.subr.bf16.mxu0 %v6479
        %6789 = vmatpush1.bf16.msra.mxu0 %v6478
        %6790 = vmatprep.subr.bf16.mxu0 %v6481
        %6791 = vmatpush1.bf16.msra.mxu0 %v6480
        %6792 = vmatprep.subr.bf16.mxu0 %v6483
        %6793 = vmatpush1.bf16.msra.mxu0 %v6482
        %6794 = vmatprep.subr.bf16.mxu0 %v6485
        %6795 = vmatpush1.bf16.msra.mxu0 %v6484
        %6796 = vmatprep.subr.bf16.mxu0 %v6487
        %6797 = vmatpush1.bf16.msra.mxu0 %v6486
        %6798 = vmatprep.subr.bf16.mxu0 %v6489
        %6799 = vmatpush1.bf16.msra.mxu0 %v6488
        %6800 = vmatprep.subr.bf16.mxu0 %v6491
        %6801 = vmatpush1.bf16.msra.mxu0 %v6490
        %6802 = vmatprep.subr.bf16.mxu0 %v6493
        %6803 = vmatpush1.bf16.msra.mxu0 %v6492
        %6804 = vmatprep.subr.bf16.mxu0 %v6495
        %6805 = vmatpush1.bf16.msra.mxu0 %v6494
        %6806 = vmatprep.mubr.bf16.mxu0 %v5771
        %6807 = vmatmul.mubr.bf16.gmra.mrb[0].mxu0 %v5758
        %v6808 = vpop.f32.mrb[0].mxu0
        %v6809 = vadd.f32 %v6766, %v6808
        %v6810 = vpop.f32.mrb[0].mxu0
        %v6811 = vadd.f32 %v6768, %v6810
        %v6812 = vpop.f32.mrb[0].mxu0
        %v6813 = vadd.f32 %v6770, %v6812
        %v6814 = vpop.f32.mrb[0].mxu0
        %v6815 = vadd.f32 %v6772, %v6814
        %6816 = vdwg.mxu0
        %6817 = vmatprep.subr.bf16.mxu0 %v6497
        %6818 = vmatpush1.bf16.msra.mxu0 %v6496
        %6819 = vmatprep.subr.bf16.mxu0 %v6499
        %6820 = vmatpush1.bf16.msra.mxu0 %v6498
        %6821 = vmatprep.subr.bf16.mxu0 %v6501
        %6822 = vmatpush1.bf16.msra.mxu0 %v6500
        %6823 = vmatprep.subr.bf16.mxu0 %v6503
        %6824 = vmatpush1.bf16.msra.mxu0 %v6502
        %6825 = vmatprep.subr.bf16.mxu0 %v6505
        %6826 = vmatpush1.bf16.msra.mxu0 %v6504
        %6827 = vmatprep.subr.bf16.mxu0 %v6507
        %6828 = vmatpush1.bf16.msra.mxu0 %v6506
        %6829 = vmatprep.subr.bf16.mxu0 %v6509
        %6830 = vmatpush1.bf16.msra.mxu0 %v6508
        %6831 = vmatprep.subr.bf16.mxu0 %v6511
        %6832 = vmatpush1.bf16.msra.mxu0 %v6510
        %6833 = vmatprep.subr.bf16.mxu0 %v6513
        %6834 = vmatpush1.bf16.msra.mxu0 %v6512
        %6835 = vmatprep.subr.bf16.mxu0 %v6515
        %6836 = vmatpush1.bf16.msra.mxu0 %v6514
        %6837 = vmatprep.subr.bf16.mxu0 %v6517
        %6838 = vmatpush1.bf16.msra.mxu0 %v6516
        %6839 = vmatprep.subr.bf16.mxu0 %v6519
        %6840 = vmatpush1.bf16.msra.mxu0 %v6518
        %6841 = vmatprep.subr.bf16.mxu0 %v6521
        %6842 = vmatpush1.bf16.msra.mxu0 %v6520
        %6843 = vmatprep.subr.bf16.mxu0 %v6523
        %6844 = vmatpush1.bf16.msra.mxu0 %v6522
        %6845 = vmatprep.subr.bf16.mxu0 %v6525
        %6846 = vmatpush1.bf16.msra.mxu0 %v6524
        %6847 = vmatprep.subr.bf16.mxu0 %v6527
        %6848 = vmatpush1.bf16.msra.mxu0 %v6526
        %6849 = vmatprep.mubr.bf16.mxu0 %v5798
        %6850 = vmatmul.mubr.bf16.gmra.mrb[0].mxu0 %v5785
        %v6851 = vpop.f32.mrb[0].mxu0
        %v6852 = vadd.f32 %v6809, %v6851
        %v6853 = vpop.f32.mrb[0].mxu0
        %v6854 = vadd.f32 %v6811, %v6853
        %v6855 = vpop.f32.mrb[0].mxu0
        %v6856 = vadd.f32 %v6813, %v6855
        %v6857 = vpop.f32.mrb[0].mxu0
        %v6858 = vadd.f32 %v6815, %v6857
        %6859 = vdwg.mxu0
        %6860 = vmatprep.subr.bf16.mxu0 %v6529
        %6861 = vmatpush1.bf16.msra.mxu0 %v6528
        %6862 = vmatprep.subr.bf16.mxu0 %v6531
        %6863 = vmatpush1.bf16.msra.mxu0 %v6530
        %6864 = vmatprep.subr.bf16.mxu0 %v6533
        %6865 = vmatpush1.bf16.msra.mxu0 %v6532
        %6866 = vmatprep.subr.bf16.mxu0 %v6535
        %6867 = vmatpush1.bf16.msra.mxu0 %v6534
        %6868 = vmatprep.subr.bf16.mxu0 %v6537
        %6869 = vmatpush1.bf16.msra.mxu0 %v6536
        %6870 = vmatprep.subr.bf16.mxu0 %v6539
        %6871 = vmatpush1.bf16.msra.mxu0 %v6538
        %6872 = vmatprep.subr.bf16.mxu0 %v6541
        %6873 = vmatpush1.bf16.msra.mxu0 %v6540
        %6874 = vmatprep.subr.bf16.mxu0 %v6543
        %6875 = vmatpush1.bf16.msra.mxu0 %v6542
        %6876 = vmatprep.subr.bf16.mxu0 0
        %6877 = vmatpush1.bf16.msra.mxu0 0
        %6878 = vmatprep.subr.bf16.mxu0 0
        %6879 = vmatpush1.bf16.msra.mxu0 0
        %6880 = vmatprep.subr.bf16.mxu0 0
        %6881 = vmatpush1.bf16.msra.mxu0 0
        %6882 = vmatprep.subr.bf16.mxu0 0
        %6883 = vmatpush1.bf16.msra.mxu0 0
        %6884 = vmatprep.subr.bf16.mxu0 0
        %6885 = vmatpush1.bf16.msra.mxu0 0
        %6886 = vmatprep.subr.bf16.mxu0 0
        %6887 = vmatpush1.bf16.msra.mxu0 0
        %6888 = vmatprep.subr.bf16.mxu0 0
        %6889 = vmatpush1.bf16.msra.mxu0 0
        %6890 = vmatprep.subr.bf16.mxu0 0
        %6891 = vmatpush1.bf16.msra.mxu0 0
        %6892 = vmatprep.mubr.bf16.mxu0 0
        %6893 = vmatmul.mubr.bf16.gmra.mrb[0].mxu0 %v5811
        %v6894 = vpop.f32.mrb[0].mxu0
        %v6895 = vadd.f32 %v6852, %v6894
        %v6896 = vpop.f32.mrb[0].mxu0
        %v6897 = vadd.f32 %v6854, %v6896
        %v6898 = vpop.f32.mrb[0].mxu0
        %v6899 = vadd.f32 %v6856, %v6898
        %v6900 = vpop.f32.mrb[0].mxu0
        %v6901 = vadd.f32 %v6858, %v6900
        %6902 = vdwg.mxu0
        %v6903 = vmax.f32 %v6895, 0.0
        %v6904 = vmax.f32 %v6897, 0.0
        %v6905 = vmax.f32 %v6899, 0.0
        %v6906 = vmax.f32 %v6901, 0.0
        %v6911 = vcombine.low %v6903, %v6904
        %v6912 = vcombine.high %v6903, %v6904
        %v6914 = vunpack.c.l.s4 1983009808
        %v6915 = vunpack.c.0.s8 %v6914
        %v6916 = vlaneseq
        %v6917 = vshrl.u32 %v6916, 7
        %v6918 = vsub.s32 %v6915, %v6917
        %v6919 = vrot.slane %v6911, %v6918
        %v6921 = vunpack.c.l.s4 1983009808
        %v6922 = vunpack.c.0.s8 %v6921
        %v6923 = vlaneseq
        %v6924 = vshrl.u32 %v6923, 7
        %v6925 = vsub.s32 %v6922, %v6924
        %v6926 = vrot.slane %v6912, %v6925
        %v6927 = vcombine.high %v6919, %v6919
        %v6928 = vcombine.high %v6926, %v6926
        %v6929 = vcombine.low %v6905, %v6906
        %v6930 = vcombine.high %v6905, %v6906
        %v6932 = vunpack.c.l.s4 1983009808
        %v6933 = vunpack.c.0.s8 %v6932
        %v6934 = vlaneseq
        %v6935 = vshrl.u32 %v6934, 7
        %v6936 = vsub.s32 %v6933, %v6935
        %v6937 = vrot.slane %v6929, %v6936
        %v6939 = vunpack.c.l.s4 1983009808
        %v6940 = vunpack.c.0.s8 %v6939
        %v6941 = vlaneseq
        %v6942 = vshrl.u32 %v6941, 7
        %v6943 = vsub.s32 %v6940, %v6942
        %v6944 = vrot.slane %v6930, %v6943
        %v6945 = vcombine.high %v6937, %v6937
        %v6946 = vcombine.high %v6944, %v6944
        %v6948 = vunpack.c.l.s4 1983009808
        %v6949 = vunpack.c.0.s8 %v6948
        %v6950 = vlaneseq
        %v6951 = vshrl.u32 %v6950, 7
        %v6952 = vsub.s32 %v6949, %v6951
        %v6953 = vrot.slane %v6919, %v6952
        %v6954 = vcombine.high %v6953, %v6953
        %v6956 = vunpack.c.l.s4 1983009808
        %v6957 = vunpack.c.0.s8 %v6956
        %v6958 = vlaneseq
        %v6959 = vshrl.u32 %v6958, 7
        %v6960 = vsub.s32 %v6957, %v6959
        %v6961 = vrot.slane %v6927, %v6960
        %v6962 = vcombine.high %v6961, %v6961
        %v6964 = vunpack.c.l.s4 1983009808
        %v6965 = vunpack.c.0.s8 %v6964
        %v6966 = vlaneseq
        %v6967 = vshrl.u32 %v6966, 7
        %v6968 = vsub.s32 %v6965, %v6967
        %v6969 = vrot.slane %v6926, %v6968
        %v6970 = vcombine.high %v6969, %v6969
        %v6972 = vunpack.c.l.s4 1983009808
        %v6973 = vunpack.c.0.s8 %v6972
        %v6974 = vlaneseq
        %v6975 = vshrl.u32 %v6974, 7
        %v6976 = vsub.s32 %v6973, %v6975
        %v6977 = vrot.slane %v6928, %v6976
        %v6978 = vcombine.high %v6977, %v6977
        %v6980 = vunpack.c.l.s4 1983009808
        %v6981 = vunpack.c.0.s8 %v6980
        %v6982 = vlaneseq
        %v6983 = vshrl.u32 %v6982, 7
        %v6984 = vsub.s32 %v6981, %v6983
        %v6985 = vrot.slane %v6937, %v6984
        %v6986 = vcombine.high %v6985, %v6985
        %v6988 = vunpack.c.l.s4 1983009808
        %v6989 = vunpack.c.0.s8 %v6988
        %v6990 = vlaneseq
        %v6991 = vshrl.u32 %v6990, 7
        %v6992 = vsub.s32 %v6989, %v6991
        %v6993 = vrot.slane %v6945, %v6992
        %v6994 = vcombine.high %v6993, %v6993
        %v6996 = vunpack.c.l.s4 1983009808
        %v6997 = vunpack.c.0.s8 %v6996
        %v6998 = vlaneseq
        %v6999 = vshrl.u32 %v6998, 7
        %v7000 = vsub.s32 %v6997, %v6999
        %v7001 = vrot.slane %v6944, %v7000
        %v7002 = vcombine.high %v7001, %v7001
        %v7004 = vunpack.c.l.s4 1983009808
        %v7005 = vunpack.c.0.s8 %v7004
        %v7006 = vlaneseq
        %v7007 = vshrl.u32 %v7006, 7
        %v7008 = vsub.s32 %v7005, %v7007
        %v7009 = vrot.slane %v6946, %v7008
        %v7010 = vcombine.high %v7009, %v7009
        %v7027 = vsel %vm5410, %v6953, -inf
        %v7028 = vrot.slane %v7027, 4
        %v7029 = vmax.f32 %v7027, %v7028
        %v7030 = vrot.slane %v7029, 2
        %v7031 = vmax.f32 %v7029, %v7030
        %v7032 = vrot.slane %v7031, 1
        %v7033 = vmax.f32 %v7031, %v7032
        %v7034 = vsel %vm5410, %v6954, -inf
        %v7035 = vrot.slane %v7034, 4
        %v7036 = vmax.f32 %v7034, %v7035
        %v7037 = vrot.slane %v7036, 2
        %v7038 = vmax.f32 %v7036, %v7037
        %v7039 = vrot.slane %v7038, 1
        %v7040 = vmax.f32 %v7038, %v7039
        %v7041 = vsel %vm5410, %v6961, -inf
        %v7042 = vrot.slane %v7041, 4
        %v7043 = vmax.f32 %v7041, %v7042
        %v7044 = vrot.slane %v7043, 2
        %v7045 = vmax.f32 %v7043, %v7044
        %v7046 = vrot.slane %v7045, 1
        %v7047 = vmax.f32 %v7045, %v7046
        %v7048 = vsel %vm5410, %v6962, -inf
        %v7049 = vrot.slane %v7048, 4
        %v7050 = vmax.f32 %v7048, %v7049
        %v7051 = vrot.slane %v7050, 2
        %v7052 = vmax.f32 %v7050, %v7051
        %v7053 = vrot.slane %v7052, 1
        %v7054 = vmax.f32 %v7052, %v7053
        %v7055 = vsel %vm5410, %v6969, -inf
        %v7056 = vrot.slane %v7055, 4
        %v7057 = vmax.f32 %v7055, %v7056
        %v7058 = vrot.slane %v7057, 2
        %v7059 = vmax.f32 %v7057, %v7058
        %v7060 = vrot.slane %v7059, 1
        %v7061 = vmax.f32 %v7059, %v7060
        %v7062 = vsel %vm5410, %v6970, -inf
        %v7063 = vrot.slane %v7062, 4
        %v7064 = vmax.f32 %v7062, %v7063
        %v7065 = vrot.slane %v7064, 2
        %v7066 = vmax.f32 %v7064, %v7065
        %v7067 = vrot.slane %v7066, 1
        %v7068 = vmax.f32 %v7066, %v7067
        %v7069 = vsel %vm5410, %v6977, -inf
        %v7070 = vrot.slane %v7069, 4
        %v7071 = vmax.f32 %v7069, %v7070
        %v7072 = vrot.slane %v7071, 2
        %v7073 = vmax.f32 %v7071, %v7072
        %v7074 = vrot.slane %v7073, 1
        %v7075 = vmax.f32 %v7073, %v7074
        %v7076 = vsel %vm5410, %v6978, -inf
        %v7077 = vrot.slane %v7076, 4
        %v7078 = vmax.f32 %v7076, %v7077
        %v7079 = vrot.slane %v7078, 2
        %v7080 = vmax.f32 %v7078, %v7079
        %v7081 = vrot.slane %v7080, 1
        %v7082 = vmax.f32 %v7080, %v7081
        %v7083 = vsel %vm5410, %v6985, -inf
        %v7084 = vrot.slane %v7083, 4
        %v7085 = vmax.f32 %v7083, %v7084
        %v7086 = vrot.slane %v7085, 2
        %v7087 = vmax.f32 %v7085, %v7086
        %v7088 = vrot.slane %v7087, 1
        %v7089 = vmax.f32 %v7087, %v7088
        %v7090 = vsel %vm5410, %v6986, -inf
        %v7091 = vrot.slane %v7090, 4
        %v7092 = vmax.f32 %v7090, %v7091
        %v7093 = vrot.slane %v7092, 2
        %v7094 = vmax.f32 %v7092, %v7093
        %v7095 = vrot.slane %v7094, 1
        %v7096 = vmax.f32 %v7094, %v7095
        %v7097 = vsel %vm5410, %v6993, -inf
        %v7098 = vrot.slane %v7097, 4
        %v7099 = vmax.f32 %v7097, %v7098
        %v7100 = vrot.slane %v7099, 2
        %v7101 = vmax.f32 %v7099, %v7100
        %v7102 = vrot.slane %v7101, 1
        %v7103 = vmax.f32 %v7101, %v7102
        %v7104 = vsel %vm5410, %v6994, -inf
        %v7105 = vrot.slane %v7104, 4
        %v7106 = vmax.f32 %v7104, %v7105
        %v7107 = vrot.slane %v7106, 2
        %v7108 = vmax.f32 %v7106, %v7107
        %v7109 = vrot.slane %v7108, 1
        %v7110 = vmax.f32 %v7108, %v7109
        %v7111 = vsel %vm5410, %v7001, -inf
        %v7112 = vrot.slane %v7111, 4
        %v7113 = vmax.f32 %v7111, %v7112
        %v7114 = vrot.slane %v7113, 2
        %v7115 = vmax.f32 %v7113, %v7114
        %v7116 = vrot.slane %v7115, 1
        %v7117 = vmax.f32 %v7115, %v7116
        %v7118 = vsel %vm5410, %v7002, -inf
        %v7119 = vrot.slane %v7118, 4
        %v7120 = vmax.f32 %v7118, %v7119
        %v7121 = vrot.slane %v7120, 2
        %v7122 = vmax.f32 %v7120, %v7121
        %v7123 = vrot.slane %v7122, 1
        %v7124 = vmax.f32 %v7122, %v7123
        %v7125 = vsel %vm5410, %v7009, -inf
        %v7126 = vrot.slane %v7125, 4
        %v7127 = vmax.f32 %v7125, %v7126
        %v7128 = vrot.slane %v7127, 2
        %v7129 = vmax.f32 %v7127, %v7128
        %v7130 = vrot.slane %v7129, 1
        %v7131 = vmax.f32 %v7129, %v7130
        %v7132 = vsel %vm5410, %v7010, -inf
        %v7133 = vrot.slane %v7132, 4
        %v7134 = vmax.f32 %v7132, %v7133
        %v7135 = vrot.slane %v7134, 2
        %v7136 = vmax.f32 %v7134, %v7135
        %v7137 = vrot.slane %v7136, 1
        %v7138 = vmax.f32 %v7136, %v7137
        %v7139 = vmax.f32 %v7033, %v7061
        %v7140 = vmax.f32 %v7040, %v7068
        %v7141 = vmax.f32 %v7047, %v7075
        %v7142 = vmax.f32 %v7054, %v7082
        %v7143 = vmax.f32 %v7089, %v7117
        %v7144 = vmax.f32 %v7096, %v7124
        %v7145 = vmax.f32 %v7103, %v7131
        %v7146 = vmax.f32 %v7110, %v7138
        %v7155 = vcombine.low %v7139, %v7140
        %v7157 = vunpack.c.l.s4 1983009808
        %v7158 = vunpack.c.0.s8 %v7157
        %v7159 = vlaneseq
        %v7160 = vshrl.u32 %v7159, 7
        %v7161 = vsub.s32 %v7158, %v7160
        %v7162 = vrot.slane %v7155, %v7161
        %v7163 = vcombine.low %v7141, %v7142
        %v7165 = vunpack.c.l.s4 1983009808
        %v7166 = vunpack.c.0.s8 %v7165
        %v7167 = vlaneseq
        %v7168 = vshrl.u32 %v7167, 7
        %v7169 = vsub.s32 %v7166, %v7168
        %v7170 = vrot.slane %v7163, %v7169
        %v7171 = vcombine.low %v7143, %v7144
        %v7173 = vunpack.c.l.s4 1983009808
        %v7174 = vunpack.c.0.s8 %v7173
        %v7175 = vlaneseq
        %v7176 = vshrl.u32 %v7175, 7
        %v7177 = vsub.s32 %v7174, %v7176
        %v7178 = vrot.slane %v7171, %v7177
        %v7179 = vcombine.low %v7145, %v7146
        %v7181 = vunpack.c.l.s4 1983009808
        %v7182 = vunpack.c.0.s8 %v7181
        %v7183 = vlaneseq
        %v7184 = vshrl.u32 %v7183, 7
        %v7185 = vsub.s32 %v7182, %v7184
        %v7186 = vrot.slane %v7179, %v7185
        %v7187 = vsel %vm4135, %v7162, %v7162
        %v7188 = vsel %vm4139, %v7162, %v7187
        %v7189 = vrot.slane %v7170, 7
        %v7190 = vsel %vm4129, %v7189, %v7188
        %v7191 = vsel %vm4133, %v7189, %v7190
        %v7192 = vsel %vm4137, %v7189, %v7191
        %v7193 = vsel %vm4141, %v7189, %v7192
        %v7194 = vsel %vm4135, %v7178, %v7178
        %v7195 = vsel %vm4139, %v7178, %v7194
        %v7196 = vrot.slane %v7186, 7
        %v7197 = vsel %vm4129, %v7196, %v7195
        %v7198 = vsel %vm4133, %v7196, %v7197
        %v7199 = vsel %vm4137, %v7196, %v7198
        %v7200 = vsel %vm4141, %v7196, %v7199
        %7203 = vst [vmem:[%s271] sm:$0xf] %v7193
        %7204 = vst [vmem:[%s271 + $0x4] sm:$0xf] %v7200
        %s7205 = sand.u32 %s181, 1
        %s7206 = scalar_lea.sflag [#allocation6], %s7205
        %s7207 = sand.u32 %s181, 1
        %s7208 = smul.addr %s7207, 8
        %s7209 = scalar_lea.vmem [#allocation5], %s7208
        // Predicated region
        $region49: #{backbone_forward.1} parent=47 // pred_check
          %p7210 = pneg %p191
        $region50: #{backbone_forward.1} parent=47 // pred_check_branch
          %7212 = sbr.rel (%p7210) target = $region52
        $region51: #{backbone_forward.1} parent=47 // pred_region
          %s7214 = ssub.s32 128, 128
          %7215 = vsyncadd %s7206, %s7214
          %s7216 = smul.addr %s21, 4
          %s7217 = smul.addr %s7216, 32
          %s7218 = scalar_lea.hbm %s7, %s7217
          %s7219 = sshll.u32 %s7209, 4
          %s7220 = int_to_ptr.vmem [resolvable:$true] %s7219
          %7225 = dma.vmem_to_hbm [thread:$0]  %s7220, 128, %s7218, %s7206, 64, 64, 4
        $region52: #{backbone_forward.1} parent=47 // pred_fallthru
          _
      $region48: #{backbone_forward.1} parent=5 // pred_fallthru
        _
      %p7226 = scmp.le.s32.totalorder 2, %s16
      // Predicated region
      $region53: #{backbone_forward.1} parent=5 // pred_check
        %p7227 = pneg %p7226
      $region54: #{backbone_forward.1} parent=5 // pred_check_branch
        %7229 = sbr.rel (%p7227) target = $region56
      $region55: #{backbone_forward.1} parent=5 // pred_region
        %s7230 = ssub.s32 %s16, 2
        // Predicated region
        $region57: #{backbone_forward.1} parent=55 // pred_check
          %p7231 = pneg %p197
        $region58: #{backbone_forward.1} parent=55 // pred_check_branch
          %7233 = sbr.rel (%p7231) target = $region60
        $region59: #{backbone_forward.1} parent=55 // pred_region
          %s7234 = sand.u32 %s182, 1
          %s7235 = scalar_lea.sflag [#allocation6], %s7234
          %s7236 = sand.u32 %s182, 1
          %s7237 = smul.addr %s7236, 8
          %s7238 = scalar_lea.vmem [#allocation5], %s7237
          %7239 = dma.done %s7235, 128
        $region60: #{backbone_forward.1} parent=55 // pred_fallthru
          _
      $region56: #{backbone_forward.1} parent=5 // pred_fallthru
        _
    $region6: #{backbone_forward.1} parent=1 // loop_footer
      %s20 = sadd.s32 1, %s16
    $region7: #{backbone_forward.1} parent=1 // loop_footer_branch
      %15 = sbr.rel target = $region3
    $region8: #{backbone_forward.1} parent=1 // loop_exit
      _
    %7240 = vsyncpa [#allocation6], 1
    %s7241 = scalar_lea.sflag [#allocation6], 1
    %7242 = vsyncpa %s7241, 1

</llo_original>
